<compile_context>
chip_gen: v5e
topology: v5e:2x2
jax: 0.10.0
libtpu: 0.0.40
codegen_flags: <defaults>
</compile_context>

<pallas_src>
import jax
import jax.numpy as jnp
from jax import lax
from jax.experimental import pallas as pl
from jax.experimental.pallas import tpu as pltpu


def lenet_kernel(xq_ref, w1s_ref, b1_ref, w2s_ref, b2_ref,
                 w1l_ref, bl1_ref, w2l_ref, bl2_ref,
                 out_ref,
                 s_ref, p1e_ref, p1o_ref, t0_ref, t1_ref, feat_ref):
    """One batch block per grid step; batch on the lane axis.

    xq_ref   : (112, 7, B)  input, W deinterleaved by 4: row m*28+i holds x[i, 4t+m] at col t
    s_ref    : (112, 7, B)  scratch, horizontal pair-sums of x columns
    p1e_ref  : (36, 6, B)   scratch, pooled1 even W cols (row c*12 + hp)
    p1o_ref  : (36, 6, B)   scratch, pooled1 odd  W cols
    t0_ref   : (36, 6, B)   scratch, pooled1 pair-sums (even+odd)
    t1_ref   : (36, 5, B)   scratch, pooled1 pair-sums (odd + next even)
    feat_ref : (96, B)      scratch, flattened pooled2 features (torch flatten order)
    out_ref  : (10, B)      log-probs, classes on sublanes, batch on lanes
    """
    B = xq_ref.shape[-1]
    f32 = jnp.float32

    # ---- horizontal pair-sum planes of the input (absorbs the pool1 W-sum) -------------
    # rows [0:28]=X0+X1, [28:56]=X1+X2, [56:84]=X2+X3, [84:112]=X3 + X0 shifted by one quad
    s_ref[0:84, :, :] = xq_ref[0:84, :, :] + xq_ref[28:112, :, :]
    s_ref[84:112, 0:6, :] = xq_ref[84:112, 0:6, :] + xq_ref[0:28, 1:7, :]

    # ---- conv1 (1->3, 5x5, VALID) + 2x2 avg-pool, W-pool absorbed into the taps --------
    # Weights arrive pre-scaled by 0.25; bias is added once after pooling.
    def conv1_chan(c, carry):
        b1c = b1_ref[c]

        def conv1_strip(st, carry2):
            base = 8 * st                       # first conv-output row of this strip
            acc_e = jnp.zeros((8, 6, B), f32)   # pooled cols 0,2,...,10
            acc_o = jnp.zeros((8, 6, B), f32)   # pooled cols 1,3,...,11
            for di in range(5):
                r = base + di
                a01 = s_ref[pl.ds(r, 8), 0:6, :]
                a01p = s_ref[pl.ds(r, 8), 1:7, :]
                a12 = s_ref[pl.ds(28 + r, 8), 0:6, :]
                a12p = s_ref[pl.ds(28 + r, 8), 1:7, :]
                a23 = s_ref[pl.ds(56 + r, 8), 0:6, :]
                a23p = s_ref[pl.ds(56 + r, 8), 1:7, :]
                a30 = s_ref[pl.ds(84 + r, 8), 0:6, :]
                w0 = w1s_ref[c * 25 + di * 5 + 0]
                w1 = w1s_ref[c * 25 + di * 5 + 1]
                w2 = w1s_ref[c * 25 + di * 5 + 2]
                w3 = w1s_ref[c * 25 + di * 5 + 3]
                w4 = w1s_ref[c * 25 + di * 5 + 4]
                acc_e = acc_e + w0 * a01 + w1 * a12 + w2 * a23 + w3 * a30 + w4 * a01p
                acc_o = acc_o + w0 * a23 + w1 * a30 + w2 * a01p + w3 * a12p + w4 * a23p
            pe = acc_e.reshape(4, 2, 6, B)      # H-pool: outer-dim split + add
            po = acc_o.reshape(4, 2, 6, B)
            p1e_ref[pl.ds(c * 12 + 4 * st, 4), :, :] = pe[:, 0] + pe[:, 1] + b1c
            p1o_ref[pl.ds(c * 12 + 4 * st, 4), :, :] = po[:, 0] + po[:, 1] + b1c
            return carry2

        lax.fori_loop(0, 3, conv1_strip, 0)
        return carry

    lax.fori_loop(0, 3, conv1_chan, 0)

    # ---- pair-sum planes of pooled1 (absorbs the pool2 W-sum) ---------------------------
    t0_ref[...] = p1e_ref[...] + p1o_ref[...]                      # p1[:, 2t]   + p1[:, 2t+1]
    t1_ref[...] = p1o_ref[:, 0:5, :] + p1e_ref[:, 1:6, :]          # p1[:, 2t+1] + p1[:, 2t+2]

    # ---- conv2 (3->6, 5x5, VALID) + 2x2 avg-pool + flatten ------------------------------
    def conv2_chan(c2, carry):
        acc = jnp.zeros((8, 4, B), f32)         # 8 conv rows x 4 pooled cols, in registers
        for k in range(3):
            for di in range(5):
                r = k * 12 + di
                wb = c2 * 75 + k * 25 + di * 5
                w0 = w2s_ref[wb + 0]
                w1 = w2s_ref[wb + 1]
                w2 = w2s_ref[wb + 2]
                w3 = w2s_ref[wb + 3]
                w4 = w2s_ref[wb + 4]
                acc = (acc
                       + w0 * t0_ref[r:r + 8, 0:4, :]
                       + w1 * t1_ref[r:r + 8, 0:4, :]
                       + w2 * t0_ref[r:r + 8, 1:5, :]
                       + w3 * t1_ref[r:r + 8, 1:5, :]
                       + w4 * t0_ref[r:r + 8, 2:6, :])
        q = acc.reshape(4, 2, 4, B)             # H-pool
        p2 = q[:, 0] + q[:, 1] + b2_ref[c2]     # (4, 4, B), compact pooled2
        for h2 in range(4):                     # torch flatten order: c*16 + h*4 + w
            feat_ref[pl.ds(c2 * 16 + h2 * 4, 4), :] = p2[h2]
        return carry

    lax.fori_loop(0, 6, conv2_chan, 0)

    # ---- FC1 (one MXU matmul) + ReLU, FC2, log_softmax ----------------------------------
    h1 = jnp.dot(w1l_ref[...], feat_ref[...],
                 preferred_element_type=f32, precision=lax.Precision.HIGHEST)
    h1 = jnp.maximum(h1 + bl1_ref[...], 0.0)                               # (32, B)
    logits = jnp.dot(w2l_ref[...], h1,
                     preferred_element_type=f32, precision=lax.Precision.HIGHEST)
    logits = logits + bl2_ref[...]                                         # (10, B)
    m = jnp.max(logits, axis=0, keepdims=True)                             # XLU reduction
    sh = logits - m
    lse = jnp.log(jnp.sum(jnp.exp(sh), axis=0, keepdims=True))
    out_ref[...] = sh - lse


def lenet_forward(x, w1, b1, w2, b2, Wl1, bl1, Wl2, bl2, *, block_b=256):
    """x: (N, 1, 28, 28) float32, NCHW. Returns (N, 10) log-probs.

    block_b must be a multiple of 128.  256 amortizes per-grid-step overhead on v5e/v6e;
    batches >= 2*block_b give >= 2 grid blocks so the "parallel" axis uses both v7x cores.
    """
    N = x.shape[0]
    n_blocks = pl.cdiv(N, block_b)
    n_pad = n_blocks * block_b

    # NCHW -> (28, 28, N_pad): batch on the last (lane) axis.
    xT = jnp.transpose(x[:, 0, :, :].astype(jnp.float32), (1, 2, 0))
    if n_pad != N:
        xT = jnp.pad(xT, ((0, 0), (0, 0), (0, n_pad - N)))
    # Deinterleave the W axis by 4: row m*28 + i of xq holds x[i, 4t+m] at column t.
    xq = xT.reshape(28, 7, 4, n_pad)
    xq = jnp.transpose(xq, (2, 0, 1, 3)).reshape(112, 7, n_pad)

    # Conv weights pre-scaled by the avg-pool 0.25 and flattened for SMEM scalar access.
    w1q = (0.25 * w1.astype(jnp.float32)).reshape(75)        # c*25 + di*5 + dj
    w2q = (0.25 * w2.astype(jnp.float32)).reshape(450)       # c2*75 + k*25 + di*5 + dj
    b1f = b1.astype(jnp.float32)
    b2f = b2.astype(jnp.float32)

    W1m = Wl1.astype(jnp.float32)                            # (32, 96), torch flatten order
    bl1c = bl1.reshape(32, 1).astype(jnp.float32)
    W2m = Wl2.astype(jnp.float32)                            # (10, 32)
    bl2c = bl2.reshape(10, 1).astype(jnp.float32)

    out = pl.pallas_call(
        lenet_kernel,
        out_shape=jax.ShapeDtypeStruct((10, n_pad), jnp.float32),
        grid_spec=pltpu.PrefetchScalarGridSpec(
            num_scalar_prefetch=0,
            grid=(n_blocks,),
            in_specs=[
                pl.BlockSpec((112, 7, block_b), lambda n: (0, 0, n)),    # deinterleaved x
                pl.BlockSpec(memory_space=pltpu.MemorySpace.SMEM),       # conv1 weights
                pl.BlockSpec(memory_space=pltpu.MemorySpace.SMEM),       # conv1 bias
                pl.BlockSpec(memory_space=pltpu.MemorySpace.SMEM),       # conv2 weights
                pl.BlockSpec(memory_space=pltpu.MemorySpace.SMEM),       # conv2 bias
                pl.BlockSpec((32, 96), lambda n: (0, 0)),                # FC1 weights
                pl.BlockSpec((32, 1), lambda n: (0, 0)),                 # FC1 bias
                pl.BlockSpec((10, 32), lambda n: (0, 0)),                # FC2 weights
                pl.BlockSpec((10, 1), lambda n: (0, 0)),                 # FC2 bias
            ],
            out_specs=pl.BlockSpec((10, block_b), lambda n: (0, n)),     # lane-dense output
            scratch_shapes=[
                pltpu.VMEM((112, 7, block_b), jnp.float32),   # input pair-sum planes
                pltpu.VMEM((36, 6, block_b), jnp.float32),    # pooled1 even W cols
                pltpu.VMEM((36, 6, block_b), jnp.float32),    # pooled1 odd  W cols
                pltpu.VMEM((36, 6, block_b), jnp.float32),    # pooled1 pair-sums T0
                pltpu.VMEM((36, 5, block_b), jnp.float32),    # pooled1 pair-sums T1
                pltpu.VMEM((96, block_b), jnp.float32),       # flattened features
            ],
        ),
        compiler_params=pltpu.CompilerParams(
            dimension_semantics=("parallel",),
            vmem_limit_bytes=64 * 1024 * 1024,
        ),
    )(xq, w1q, b1f, w2q, b2f, W1m, bl1c, W2m, bl2c)

    return out.T[:N]                                          # (N, 10)


def ref_forward(x, w1, b1, w2, b2, Wl1, bl1, Wl2, bl2):
    """Pure-JAX reference mirroring the PyTorch module."""
    dn = ('NCHW', 'OIHW', 'NCHW')
    hp = lax.Precision.HIGHEST
    y = lax.conv_general_dilated(x, w1, (1, 1), 'VALID', dimension_numbers=dn, precision=hp)
    y = y + b1[None, :, None, None]
    y = lax.reduce_window(y, 0.0, lax.add, (1, 1, 2, 2), (1, 1, 2, 2), 'VALID') / 4.0
    y = lax.conv_general_dilated(y, w2, (1, 1), 'VALID', dimension_numbers=dn, precision=hp)
    y = y + b2[None, :, None, None]
    y = lax.reduce_window(y, 0.0, lax.add, (1, 1, 2, 2), (1, 1, 2, 2), 'VALID') / 4.0
    y = y.reshape(y.shape[0], -1)
    y = jnp.maximum(jnp.dot(y, Wl1.T, precision=hp) + bl1, 0.0)
    y = jnp.dot(y, Wl2.T, precision=hp) + bl2
    return jax.nn.log_softmax(y, axis=1)


if __name__ == "__main__":
    key = jax.random.PRNGKey(0)
    ks = jax.random.split(key, 9)
    # Small demo batch: 200 images, block_b=128 -> two lane-blocks (exercises the grid,
    # padding, and the v7x parallel axis).  Production default is block_b=256.
    N = 200
    x = jax.random.normal(ks[0], (N, 1, 28, 28), jnp.float32)

    # Deterministic synthetic parameters (shapes from Model.__init__).
    w1 = 0.1 * jax.random.normal(ks[1], (3, 1, 5, 5), jnp.float32)
    b1 = 0.1 * jax.random.normal(ks[2], (3,), jnp.float32)
    w2 = 0.1 * jax.random.normal(ks[3], (6, 3, 5, 5), jnp.float32)
    b2 = 0.1 * jax.random.normal(ks[4], (6,), jnp.float32)
    Wl1 = 0.1 * jax.random.normal(ks[5], (32, 96), jnp.float32)
    bl1 = 0.1 * jax.random.normal(ks[6], (32,), jnp.float32)
    Wl2 = 0.1 * jax.random.normal(ks[7], (10, 32), jnp.float32)
    bl2 = 0.1 * jax.random.normal(ks[8], (10,), jnp.float32)

    out = lenet_forward(x, w1, b1, w2, b2, Wl1, bl1, Wl2, bl2, block_b=128)
    out = jax.block_until_ready(out)

    ref = ref_forward(x, w1, b1, w2, b2, Wl1, bl1, Wl2, bl2)
    assert out.shape == (N, 10)
    assert jnp.allclose(out, ref, atol=1e-3, rtol=1e-3), float(jnp.max(jnp.abs(out - ref)))
    print("KERNEL_OK")
</pallas_src>

<mosaic_0001>
module attributes {stable_mosaic.version = 11 : i64} {
  func.func @lenet_kernel(%arg0: i32, %arg1: memref<112x7x128xf32, #tpu.memory_space<vmem>>, %arg2: memref<75xf32, #tpu.memory_space<smem>>, %arg3: memref<3xf32, #tpu.memory_space<smem>>, %arg4: memref<450xf32, #tpu.memory_space<smem>>, %arg5: memref<6xf32, #tpu.memory_space<smem>>, %arg6: memref<32x96xf32, #tpu.memory_space<vmem>>, %arg7: memref<32x1xf32, #tpu.memory_space<vmem>>, %arg8: memref<10x32xf32, #tpu.memory_space<vmem>>, %arg9: memref<10x1xf32, #tpu.memory_space<vmem>>, %arg10: memref<10x128xf32, #tpu.memory_space<vmem>>, %arg11: memref<112x7x128xf32, #tpu.memory_space<vmem>>, %arg12: memref<36x6x128xf32, #tpu.memory_space<vmem>>, %arg13: memref<36x6x128xf32, #tpu.memory_space<vmem>>, %arg14: memref<36x6x128xf32, #tpu.memory_space<vmem>>, %arg15: memref<36x5x128xf32, #tpu.memory_space<vmem>>, %arg16: memref<96x128xf32, #tpu.memory_space<vmem>>) attributes {dimension_semantics = [#tpu.dimension_semantics<parallel>], iteration_bounds = array<i64: 2>, scalar_prefetch = 0 : i64, scratch_operands = 6 : i64, tpu.core_type = #tpu.core_type<tc>, window_params = [{transform_indices = @transform_0, window_bounds = array<i64: 112, 7, 128>}, {transform_indices = @transform_1, window_bounds = array<i64: 75>}, {transform_indices = @transform_2, window_bounds = array<i64: 3>}, {transform_indices = @transform_3, window_bounds = array<i64: 450>}, {transform_indices = @transform_4, window_bounds = array<i64: 6>}, {pipeline_mode = #tpu.pipeline_mode<synchronous>, transform_indices = @transform_5, window_bounds = array<i64: 32, 96>}, {pipeline_mode = #tpu.pipeline_mode<synchronous>, transform_indices = @transform_6, window_bounds = array<i64: 32, 1>}, {pipeline_mode = #tpu.pipeline_mode<synchronous>, transform_indices = @transform_7, window_bounds = array<i64: 10, 32>}, {pipeline_mode = #tpu.pipeline_mode<synchronous>, transform_indices = @transform_8, window_bounds = array<i64: 10, 1>}, {transform_indices = @transform_9, window_bounds = array<i64: 10, 128>}]} {
    %c0 = arith.constant 0 : index
    %c0_0 = arith.constant 0 : index
    %c0_1 = arith.constant 0 : index
    %0 = vector.load %arg1[%c0, %c0_0, %c0_1] : memref<112x7x128xf32, #tpu.memory_space<vmem>>, vector<84x7x128xf32>
    %c28 = arith.constant 28 : index
    %c0_2 = arith.constant 0 : index
    %c0_3 = arith.constant 0 : index
    %1 = vector.load %arg1[%c28, %c0_2, %c0_3] : memref<112x7x128xf32, #tpu.memory_space<vmem>>, vector<84x7x128xf32>
    %2 = arith.addf %0, %1 : vector<84x7x128xf32>
    %c0_4 = arith.constant 0 : index
    %c0_5 = arith.constant 0 : index
    %c0_6 = arith.constant 0 : index
    %3 = vector.load %arg11[%c0_4, %c0_5, %c0_6] : memref<112x7x128xf32, #tpu.memory_space<vmem>>, vector<84x7x128xf32>
    tpu.vector_store %arg11[%c0_4, %c0_5, %c0_6], %2 {strides = array<i32>} : memref<112x7x128xf32, #tpu.memory_space<vmem>>, vector<84x7x128xf32>,
    %c84 = arith.constant 84 : index
    %c0_7 = arith.constant 0 : index
    %c0_8 = arith.constant 0 : index
    %4 = vector.load %arg1[%c84, %c0_7, %c0_8] : memref<112x7x128xf32, #tpu.memory_space<vmem>>, vector<28x6x128xf32>
    %c0_9 = arith.constant 0 : index
    %c1 = arith.constant 1 : index
    %c0_10 = arith.constant 0 : index
    %5 = vector.load %arg1[%c0_9, %c1, %c0_10] : memref<112x7x128xf32, #tpu.memory_space<vmem>>, vector<28x6x128xf32>
    %6 = arith.addf %4, %5 : vector<28x6x128xf32>
    %c84_11 = arith.constant 84 : index
    %c0_12 = arith.constant 0 : index
    %c0_13 = arith.constant 0 : index
    %7 = vector.load %arg11[%c84_11, %c0_12, %c0_13] : memref<112x7x128xf32, #tpu.memory_space<vmem>>, vector<28x6x128xf32>
    tpu.vector_store %arg11[%c84_11, %c0_12, %c0_13], %6 {strides = array<i32>} : memref<112x7x128xf32, #tpu.memory_space<vmem>>, vector<28x6x128xf32>,
    %c0_i32 = arith.constant 0 : i32
    %c3_i32 = arith.constant 3 : i32
    %8 = arith.addi %c0_i32, %c3_i32 : i32
    %c1_i32 = arith.constant 1 : i32
    scf.for %arg17 = %c0_i32 to %8 step %c1_i32  : i32 {
      %42 = arith.index_cast %arg17 : i32 to index
      %43 = memref.load %arg3[%42] : memref<3xf32, #tpu.memory_space<smem>>
      %c0_i32_52 = arith.constant 0 : i32
      %c3_i32_53 = arith.constant 3 : i32
      %44 = arith.addi %c0_i32_52, %c3_i32_53 : i32
      %c1_i32_54 = arith.constant 1 : i32
      scf.for %arg18 = %c0_i32_52 to %44 step %c1_i32_54  : i32 {
        %c8_i32 = arith.constant 8 : i32
        %45 = arith.muli %c8_i32, %arg18 : i32
        %cst_56 = arith.constant 0.000000e+00 : f32
        %46 = vector.broadcast %cst_56 : f32 to vector<8x6x128xf32>
        %cst_57 = arith.constant 0.000000e+00 : f32
        %47 = vector.broadcast %cst_57 : f32 to vector<8x6x128xf32>
        %c0_i32_58 = arith.constant 0 : i32
        %48 = arith.addi %45, %c0_i32_58 : i32
        %49 = arith.index_cast %48 : i32 to index
        %c0_59 = arith.constant 0 : index
        %c0_60 = arith.constant 0 : index
        %50 = vector.load %arg11[%49, %c0_59, %c0_60] : memref<112x7x128xf32, #tpu.memory_space<vmem>>, vector<8x6x128xf32>
        %51 = arith.index_cast %48 : i32 to index
        %c1_61 = arith.constant 1 : index
        %c0_62 = arith.constant 0 : index
        %52 = vector.load %arg11[%51, %c1_61, %c0_62] : memref<112x7x128xf32, #tpu.memory_space<vmem>>, vector<8x6x128xf32>
        %c28_i32 = arith.constant 28 : i32
        %53 = arith.addi %c28_i32, %48 : i32
        %54 = arith.index_cast %53 : i32 to index
        %c0_63 = arith.constant 0 : index
        %c0_64 = arith.constant 0 : index
        %55 = vector.load %arg11[%54, %c0_63, %c0_64] : memref<112x7x128xf32, #tpu.memory_space<vmem>>, vector<8x6x128xf32>
        %c28_i32_65 = arith.constant 28 : i32
        %56 = arith.addi %c28_i32_65, %48 : i32
        %57 = arith.index_cast %56 : i32 to index
        %c1_66 = arith.constant 1 : index
        %c0_67 = arith.constant 0 : index
        %58 = vector.load %arg11[%57, %c1_66, %c0_67] : memref<112x7x128xf32, #tpu.memory_space<vmem>>, vector<8x6x128xf32>
        %c56_i32 = arith.constant 56 : i32
        %59 = arith.addi %c56_i32, %48 : i32
        %60 = arith.index_cast %59 : i32 to index
        %c0_68 = arith.constant 0 : index
        %c0_69 = arith.constant 0 : index
        %61 = vector.load %arg11[%60, %c0_68, %c0_69] : memref<112x7x128xf32, #tpu.memory_space<vmem>>, vector<8x6x128xf32>
        %c56_i32_70 = arith.constant 56 : i32
        %62 = arith.addi %c56_i32_70, %48 : i32
        %63 = arith.index_cast %62 : i32 to index
        %c1_71 = arith.constant 1 : index
        %c0_72 = arith.constant 0 : index
        %64 = vector.load %arg11[%63, %c1_71, %c0_72] : memref<112x7x128xf32, #tpu.memory_space<vmem>>, vector<8x6x128xf32>
        %c84_i32 = arith.constant 84 : i32
        %65 = arith.addi %c84_i32, %48 : i32
        %66 = arith.index_cast %65 : i32 to index
        %c0_73 = arith.constant 0 : index
        %c0_74 = arith.constant 0 : index
        %67 = vector.load %arg11[%66, %c0_73, %c0_74] : memref<112x7x128xf32, #tpu.memory_space<vmem>>, vector<8x6x128xf32>
        %c25_i32 = arith.constant 25 : i32
        %68 = arith.muli %arg17, %c25_i32 : i32
        %c0_i32_75 = arith.constant 0 : i32
        %69 = arith.addi %68, %c0_i32_75 : i32
        %c0_i32_76 = arith.constant 0 : i32
        %70 = arith.addi %69, %c0_i32_76 : i32
        %71 = arith.index_cast %70 : i32 to index
        %72 = memref.load %arg2[%71] : memref<75xf32, #tpu.memory_space<smem>>
        %c25_i32_77 = arith.constant 25 : i32
        %73 = arith.muli %arg17, %c25_i32_77 : i32
        %c0_i32_78 = arith.constant 0 : i32
        %74 = arith.addi %73, %c0_i32_78 : i32
        %c1_i32_79 = arith.constant 1 : i32
        %75 = arith.addi %74, %c1_i32_79 : i32
        %76 = arith.index_cast %75 : i32 to index
        %77 = memref.load %arg2[%76] : memref<75xf32, #tpu.memory_space<smem>>
        %c25_i32_80 = arith.constant 25 : i32
        %78 = arith.muli %arg17, %c25_i32_80 : i32
        %c0_i32_81 = arith.constant 0 : i32
        %79 = arith.addi %78, %c0_i32_81 : i32
        %c2_i32 = arith.constant 2 : i32
        %80 = arith.addi %79, %c2_i32 : i32
        %81 = arith.index_cast %80 : i32 to index
        %82 = memref.load %arg2[%81] : memref<75xf32, #tpu.memory_space<smem>>
        %c25_i32_82 = arith.constant 25 : i32
        %83 = arith.muli %arg17, %c25_i32_82 : i32
        %c0_i32_83 = arith.constant 0 : i32
        %84 = arith.addi %83, %c0_i32_83 : i32
        %c3_i32_84 = arith.constant 3 : i32
        %85 = arith.addi %84, %c3_i32_84 : i32
        %86 = arith.index_cast %85 : i32 to index
        %87 = memref.load %arg2[%86] : memref<75xf32, #tpu.memory_space<smem>>
        %c25_i32_85 = arith.constant 25 : i32
        %88 = arith.muli %arg17, %c25_i32_85 : i32
        %c0_i32_86 = arith.constant 0 : i32
        %89 = arith.addi %88, %c0_i32_86 : i32
        %c4_i32 = arith.constant 4 : i32
        %90 = arith.addi %89, %c4_i32 : i32
        %91 = arith.index_cast %90 : i32 to index
        %92 = memref.load %arg2[%91] : memref<75xf32, #tpu.memory_space<smem>>
        %93 = vector.broadcast %72 : f32 to vector<8x6x128xf32>
        %94 = arith.mulf %93, %50 : vector<8x6x128xf32>
        %95 = arith.addf %46, %94 : vector<8x6x128xf32>
        %96 = vector.broadcast %77 : f32 to vector<8x6x128xf32>
        %97 = arith.mulf %96, %55 : vector<8x6x128xf32>
        %98 = arith.addf %95, %97 : vector<8x6x128xf32>
        %99 = vector.broadcast %82 : f32 to vector<8x6x128xf32>
        %100 = arith.mulf %99, %61 : vector<8x6x128xf32>
        %101 = arith.addf %98, %100 : vector<8x6x128xf32>
        %102 = vector.broadcast %87 : f32 to vector<8x6x128xf32>
        %103 = arith.mulf %102, %67 : vector<8x6x128xf32>
        %104 = arith.addf %101, %103 : vector<8x6x128xf32>
        %105 = vector.broadcast %92 : f32 to vector<8x6x128xf32>
        %106 = arith.mulf %105, %52 : vector<8x6x128xf32>
        %107 = arith.addf %104, %106 : vector<8x6x128xf32>
        %108 = vector.broadcast %72 : f32 to vector<8x6x128xf32>
        %109 = arith.mulf %108, %61 : vector<8x6x128xf32>
        %110 = arith.addf %47, %109 : vector<8x6x128xf32>
        %111 = vector.broadcast %77 : f32 to vector<8x6x128xf32>
        %112 = arith.mulf %111, %67 : vector<8x6x128xf32>
        %113 = arith.addf %110, %112 : vector<8x6x128xf32>
        %114 = vector.broadcast %82 : f32 to vector<8x6x128xf32>
        %115 = arith.mulf %114, %52 : vector<8x6x128xf32>
        %116 = arith.addf %113, %115 : vector<8x6x128xf32>
        %117 = vector.broadcast %87 : f32 to vector<8x6x128xf32>
        %118 = arith.mulf %117, %58 : vector<8x6x128xf32>
        %119 = arith.addf %116, %118 : vector<8x6x128xf32>
        %120 = vector.broadcast %92 : f32 to vector<8x6x128xf32>
        %121 = arith.mulf %120, %64 : vector<8x6x128xf32>
        %122 = arith.addf %119, %121 : vector<8x6x128xf32>
        %c1_i32_87 = arith.constant 1 : i32
        %123 = arith.addi %45, %c1_i32_87 : i32
        %124 = arith.index_cast %123 : i32 to index
        %c0_88 = arith.constant 0 : index
        %c0_89 = arith.constant 0 : index
        %125 = vector.load %arg11[%124, %c0_88, %c0_89] : memref<112x7x128xf32, #tpu.memory_space<vmem>>, vector<8x6x128xf32>
        %126 = arith.index_cast %123 : i32 to index
        %c1_90 = arith.constant 1 : index
        %c0_91 = arith.constant 0 : index
        %127 = vector.load %arg11[%126, %c1_90, %c0_91] : memref<112x7x128xf32, #tpu.memory_space<vmem>>, vector<8x6x128xf32>
        %c28_i32_92 = arith.constant 28 : i32
        %128 = arith.addi %c28_i32_92, %123 : i32
        %129 = arith.index_cast %128 : i32 to index
        %c0_93 = arith.constant 0 : index
        %c0_94 = arith.constant 0 : index
        %130 = vector.load %arg11[%129, %c0_93, %c0_94] : memref<112x7x128xf32, #tpu.memory_space<vmem>>, vector<8x6x128xf32>
        %c28_i32_95 = arith.constant 28 : i32
        %131 = arith.addi %c28_i32_95, %123 : i32
        %132 = arith.index_cast %131 : i32 to index
        %c1_96 = arith.constant 1 : index
        %c0_97 = arith.constant 0 : index
        %133 = vector.load %arg11[%132, %c1_96, %c0_97] : memref<112x7x128xf32, #tpu.memory_space<vmem>>, vector<8x6x128xf32>
        %c56_i32_98 = arith.constant 56 : i32
        %134 = arith.addi %c56_i32_98, %123 : i32
        %135 = arith.index_cast %134 : i32 to index
        %c0_99 = arith.constant 0 : index
        %c0_100 = arith.constant 0 : index
        %136 = vector.load %arg11[%135, %c0_99, %c0_100] : memref<112x7x128xf32, #tpu.memory_space<vmem>>, vector<8x6x128xf32>
        %c56_i32_101 = arith.constant 56 : i32
        %137 = arith.addi %c56_i32_101, %123 : i32
        %138 = arith.index_cast %137 : i32 to index
        %c1_102 = arith.constant 1 : index
        %c0_103 = arith.constant 0 : index
        %139 = vector.load %arg11[%138, %c1_102, %c0_103] : memref<112x7x128xf32, #tpu.memory_space<vmem>>, vector<8x6x128xf32>
        %c84_i32_104 = arith.constant 84 : i32
        %140 = arith.addi %c84_i32_104, %123 : i32
        %141 = arith.index_cast %140 : i32 to index
        %c0_105 = arith.constant 0 : index
        %c0_106 = arith.constant 0 : index
        %142 = vector.load %arg11[%141, %c0_105, %c0_106] : memref<112x7x128xf32, #tpu.memory_space<vmem>>, vector<8x6x128xf32>
        %c25_i32_107 = arith.constant 25 : i32
        %143 = arith.muli %arg17, %c25_i32_107 : i32
        %c5_i32 = arith.constant 5 : i32
        %144 = arith.addi %143, %c5_i32 : i32
        %c0_i32_108 = arith.constant 0 : i32
        %145 = arith.addi %144, %c0_i32_108 : i32
        %146 = arith.index_cast %145 : i32 to index
        %147 = memref.load %arg2[%146] : memref<75xf32, #tpu.memory_space<smem>>
        %c25_i32_109 = arith.constant 25 : i32
        %148 = arith.muli %arg17, %c25_i32_109 : i32
        %c5_i32_110 = arith.constant 5 : i32
        %149 = arith.addi %148, %c5_i32_110 : i32
        %c1_i32_111 = arith.constant 1 : i32
        %150 = arith.addi %149, %c1_i32_111 : i32
        %151 = arith.index_cast %150 : i32 to index
        %152 = memref.load %arg2[%151] : memref<75xf32, #tpu.memory_space<smem>>
        %c25_i32_112 = arith.constant 25 : i32
        %153 = arith.muli %arg17, %c25_i32_112 : i32
        %c5_i32_113 = arith.constant 5 : i32
        %154 = arith.addi %153, %c5_i32_113 : i32
        %c2_i32_114 = arith.constant 2 : i32
        %155 = arith.addi %154, %c2_i32_114 : i32
        %156 = arith.index_cast %155 : i32 to index
        %157 = memref.load %arg2[%156] : memref<75xf32, #tpu.memory_space<smem>>
        %c25_i32_115 = arith.constant 25 : i32
        %158 = arith.muli %arg17, %c25_i32_115 : i32
        %c5_i32_116 = arith.constant 5 : i32
        %159 = arith.addi %158, %c5_i32_116 : i32
        %c3_i32_117 = arith.constant 3 : i32
        %160 = arith.addi %159, %c3_i32_117 : i32
        %161 = arith.index_cast %160 : i32 to index
        %162 = memref.load %arg2[%161] : memref<75xf32, #tpu.memory_space<smem>>
        %c25_i32_118 = arith.constant 25 : i32
        %163 = arith.muli %arg17, %c25_i32_118 : i32
        %c5_i32_119 = arith.constant 5 : i32
        %164 = arith.addi %163, %c5_i32_119 : i32
        %c4_i32_120 = arith.constant 4 : i32
        %165 = arith.addi %164, %c4_i32_120 : i32
        %166 = arith.index_cast %165 : i32 to index
        %167 = memref.load %arg2[%166] : memref<75xf32, #tpu.memory_space<smem>>
        %168 = vector.broadcast %147 : f32 to vector<8x6x128xf32>
        %169 = arith.mulf %168, %125 : vector<8x6x128xf32>
        %170 = arith.addf %107, %169 : vector<8x6x128xf32>
        %171 = vector.broadcast %152 : f32 to vector<8x6x128xf32>
        %172 = arith.mulf %171, %130 : vector<8x6x128xf32>
        %173 = arith.addf %170, %172 : vector<8x6x128xf32>
        %174 = vector.broadcast %157 : f32 to vector<8x6x128xf32>
        %175 = arith.mulf %174, %136 : vector<8x6x128xf32>
        %176 = arith.addf %173, %175 : vector<8x6x128xf32>
        %177 = vector.broadcast %162 : f32 to vector<8x6x128xf32>
        %178 = arith.mulf %177, %142 : vector<8x6x128xf32>
        %179 = arith.addf %176, %178 : vector<8x6x128xf32>
        %180 = vector.broadcast %167 : f32 to vector<8x6x128xf32>
        %181 = arith.mulf %180, %127 : vector<8x6x128xf32>
        %182 = arith.addf %179, %181 : vector<8x6x128xf32>
        %183 = vector.broadcast %147 : f32 to vector<8x6x128xf32>
        %184 = arith.mulf %183, %136 : vector<8x6x128xf32>
        %185 = arith.addf %122, %184 : vector<8x6x128xf32>
        %186 = vector.broadcast %152 : f32 to vector<8x6x128xf32>
        %187 = arith.mulf %186, %142 : vector<8x6x128xf32>
        %188 = arith.addf %185, %187 : vector<8x6x128xf32>
        %189 = vector.broadcast %157 : f32 to vector<8x6x128xf32>
        %190 = arith.mulf %189, %127 : vector<8x6x128xf32>
        %191 = arith.addf %188, %190 : vector<8x6x128xf32>
        %192 = vector.broadcast %162 : f32 to vector<8x6x128xf32>
        %193 = arith.mulf %192, %133 : vector<8x6x128xf32>
        %194 = arith.addf %191, %193 : vector<8x6x128xf32>
        %195 = vector.broadcast %167 : f32 to vector<8x6x128xf32>
        %196 = arith.mulf %195, %139 : vector<8x6x128xf32>
        %197 = arith.addf %194, %196 : vector<8x6x128xf32>
        %c2_i32_121 = arith.constant 2 : i32
        %198 = arith.addi %45, %c2_i32_121 : i32
        %199 = arith.index_cast %198 : i32 to index
        %c0_122 = arith.constant 0 : index
        %c0_123 = arith.constant 0 : index
        %200 = vector.load %arg11[%199, %c0_122, %c0_123] : memref<112x7x128xf32, #tpu.memory_space<vmem>>, vector<8x6x128xf32>
        %201 = arith.index_cast %198 : i32 to index
        %c1_124 = arith.constant 1 : index
        %c0_125 = arith.constant 0 : index
        %202 = vector.load %arg11[%201, %c1_124, %c0_125] : memref<112x7x128xf32, #tpu.memory_space<vmem>>, vector<8x6x128xf32>
        %c28_i32_126 = arith.constant 28 : i32
        %203 = arith.addi %c28_i32_126, %198 : i32
        %204 = arith.index_cast %203 : i32 to index
        %c0_127 = arith.constant 0 : index
        %c0_128 = arith.constant 0 : index
        %205 = vector.load %arg11[%204, %c0_127, %c0_128] : memref<112x7x128xf32, #tpu.memory_space<vmem>>, vector<8x6x128xf32>
        %c28_i32_129 = arith.constant 28 : i32
        %206 = arith.addi %c28_i32_129, %198 : i32
        %207 = arith.index_cast %206 : i32 to index
        %c1_130 = arith.constant 1 : index
        %c0_131 = arith.constant 0 : index
        %208 = vector.load %arg11[%207, %c1_130, %c0_131] : memref<112x7x128xf32, #tpu.memory_space<vmem>>, vector<8x6x128xf32>
        %c56_i32_132 = arith.constant 56 : i32
        %209 = arith.addi %c56_i32_132, %198 : i32
        %210 = arith.index_cast %209 : i32 to index
        %c0_133 = arith.constant 0 : index
        %c0_134 = arith.constant 0 : index
        %211 = vector.load %arg11[%210, %c0_133, %c0_134] : memref<112x7x128xf32, #tpu.memory_space<vmem>>, vector<8x6x128xf32>
        %c56_i32_135 = arith.constant 56 : i32
        %212 = arith.addi %c56_i32_135, %198 : i32
        %213 = arith.index_cast %212 : i32 to index
        %c1_136 = arith.constant 1 : index
        %c0_137 = arith.constant 0 : index
        %214 = vector.load %arg11[%213, %c1_136, %c0_137] : memref<112x7x128xf32, #tpu.memory_space<vmem>>, vector<8x6x128xf32>
        %c84_i32_138 = arith.constant 84 : i32
        %215 = arith.addi %c84_i32_138, %198 : i32
        %216 = arith.index_cast %215 : i32 to index
        %c0_139 = arith.constant 0 : index
        %c0_140 = arith.constant 0 : index
        %217 = vector.load %arg11[%216, %c0_139, %c0_140] : memref<112x7x128xf32, #tpu.memory_space<vmem>>, vector<8x6x128xf32>
        %c25_i32_141 = arith.constant 25 : i32
        %218 = arith.muli %arg17, %c25_i32_141 : i32
        %c10_i32 = arith.constant 10 : i32
        %219 = arith.addi %218, %c10_i32 : i32
        %c0_i32_142 = arith.constant 0 : i32
        %220 = arith.addi %219, %c0_i32_142 : i32
        %221 = arith.index_cast %220 : i32 to index
        %222 = memref.load %arg2[%221] : memref<75xf32, #tpu.memory_space<smem>>
        %c25_i32_143 = arith.constant 25 : i32
        %223 = arith.muli %arg17, %c25_i32_143 : i32
        %c10_i32_144 = arith.constant 10 : i32
        %224 = arith.addi %223, %c10_i32_144 : i32
        %c1_i32_145 = arith.constant 1 : i32
        %225 = arith.addi %224, %c1_i32_145 : i32
        %226 = arith.index_cast %225 : i32 to index
        %227 = memref.load %arg2[%226] : memref<75xf32, #tpu.memory_space<smem>>
        %c25_i32_146 = arith.constant 25 : i32
        %228 = arith.muli %arg17, %c25_i32_146 : i32
        %c10_i32_147 = arith.constant 10 : i32
        %229 = arith.addi %228, %c10_i32_147 : i32
        %c2_i32_148 = arith.constant 2 : i32
        %230 = arith.addi %229, %c2_i32_148 : i32
        %231 = arith.index_cast %230 : i32 to index
        %232 = memref.load %arg2[%231] : memref<75xf32, #tpu.memory_space<smem>>
        %c25_i32_149 = arith.constant 25 : i32
        %233 = arith.muli %arg17, %c25_i32_149 : i32
        %c10_i32_150 = arith.constant 10 : i32
        %234 = arith.addi %233, %c10_i32_150 : i32
        %c3_i32_151 = arith.constant 3 : i32
        %235 = arith.addi %234, %c3_i32_151 : i32
        %236 = arith.index_cast %235 : i32 to index
        %237 = memref.load %arg2[%236] : memref<75xf32, #tpu.memory_space<smem>>
        %c25_i32_152 = arith.constant 25 : i32
        %238 = arith.muli %arg17, %c25_i32_152 : i32
        %c10_i32_153 = arith.constant 10 : i32
        %239 = arith.addi %238, %c10_i32_153 : i32
        %c4_i32_154 = arith.constant 4 : i32
        %240 = arith.addi %239, %c4_i32_154 : i32
        %241 = arith.index_cast %240 : i32 to index
        %242 = memref.load %arg2[%241] : memref<75xf32, #tpu.memory_space<smem>>
        %243 = vector.broadcast %222 : f32 to vector<8x6x128xf32>
        %244 = arith.mulf %243, %200 : vector<8x6x128xf32>
        %245 = arith.addf %182, %244 : vector<8x6x128xf32>
        %246 = vector.broadcast %227 : f32 to vector<8x6x128xf32>
        %247 = arith.mulf %246, %205 : vector<8x6x128xf32>
        %248 = arith.addf %245, %247 : vector<8x6x128xf32>
        %249 = vector.broadcast %232 : f32 to vector<8x6x128xf32>
        %250 = arith.mulf %249, %211 : vector<8x6x128xf32>
        %251 = arith.addf %248, %250 : vector<8x6x128xf32>
        %252 = vector.broadcast %237 : f32 to vector<8x6x128xf32>
        %253 = arith.mulf %252, %217 : vector<8x6x128xf32>
        %254 = arith.addf %251, %253 : vector<8x6x128xf32>
        %255 = vector.broadcast %242 : f32 to vector<8x6x128xf32>
        %256 = arith.mulf %255, %202 : vector<8x6x128xf32>
        %257 = arith.addf %254, %256 : vector<8x6x128xf32>
        %258 = vector.broadcast %222 : f32 to vector<8x6x128xf32>
        %259 = arith.mulf %258, %211 : vector<8x6x128xf32>
        %260 = arith.addf %197, %259 : vector<8x6x128xf32>
        %261 = vector.broadcast %227 : f32 to vector<8x6x128xf32>
        %262 = arith.mulf %261, %217 : vector<8x6x128xf32>
        %263 = arith.addf %260, %262 : vector<8x6x128xf32>
        %264 = vector.broadcast %232 : f32 to vector<8x6x128xf32>
        %265 = arith.mulf %264, %202 : vector<8x6x128xf32>
        %266 = arith.addf %263, %265 : vector<8x6x128xf32>
        %267 = vector.broadcast %237 : f32 to vector<8x6x128xf32>
        %268 = arith.mulf %267, %208 : vector<8x6x128xf32>
        %269 = arith.addf %266, %268 : vector<8x6x128xf32>
        %270 = vector.broadcast %242 : f32 to vector<8x6x128xf32>
        %271 = arith.mulf %270, %214 : vector<8x6x128xf32>
        %272 = arith.addf %269, %271 : vector<8x6x128xf32>
        %c3_i32_155 = arith.constant 3 : i32
        %273 = arith.addi %45, %c3_i32_155 : i32
        %274 = arith.index_cast %273 : i32 to index
        %c0_156 = arith.constant 0 : index
        %c0_157 = arith.constant 0 : index
        %275 = vector.load %arg11[%274, %c0_156, %c0_157] : memref<112x7x128xf32, #tpu.memory_space<vmem>>, vector<8x6x128xf32>
        %276 = arith.index_cast %273 : i32 to index
        %c1_158 = arith.constant 1 : index
        %c0_159 = arith.constant 0 : index
        %277 = vector.load %arg11[%276, %c1_158, %c0_159] : memref<112x7x128xf32, #tpu.memory_space<vmem>>, vector<8x6x128xf32>
        %c28_i32_160 = arith.constant 28 : i32
        %278 = arith.addi %c28_i32_160, %273 : i32
        %279 = arith.index_cast %278 : i32 to index
        %c0_161 = arith.constant 0 : index
        %c0_162 = arith.constant 0 : index
        %280 = vector.load %arg11[%279, %c0_161, %c0_162] : memref<112x7x128xf32, #tpu.memory_space<vmem>>, vector<8x6x128xf32>
        %c28_i32_163 = arith.constant 28 : i32
        %281 = arith.addi %c28_i32_163, %273 : i32
        %282 = arith.index_cast %281 : i32 to index
        %c1_164 = arith.constant 1 : index
        %c0_165 = arith.constant 0 : index
        %283 = vector.load %arg11[%282, %c1_164, %c0_165] : memref<112x7x128xf32, #tpu.memory_space<vmem>>, vector<8x6x128xf32>
        %c56_i32_166 = arith.constant 56 : i32
        %284 = arith.addi %c56_i32_166, %273 : i32
        %285 = arith.index_cast %284 : i32 to index
        %c0_167 = arith.constant 0 : index
        %c0_168 = arith.constant 0 : index
        %286 = vector.load %arg11[%285, %c0_167, %c0_168] : memref<112x7x128xf32, #tpu.memory_space<vmem>>, vector<8x6x128xf32>
        %c56_i32_169 = arith.constant 56 : i32
        %287 = arith.addi %c56_i32_169, %273 : i32
        %288 = arith.index_cast %287 : i32 to index
        %c1_170 = arith.constant 1 : index
        %c0_171 = arith.constant 0 : index
        %289 = vector.load %arg11[%288, %c1_170, %c0_171] : memref<112x7x128xf32, #tpu.memory_space<vmem>>, vector<8x6x128xf32>
        %c84_i32_172 = arith.constant 84 : i32
        %290 = arith.addi %c84_i32_172, %273 : i32
        %291 = arith.index_cast %290 : i32 to index
        %c0_173 = arith.constant 0 : index
        %c0_174 = arith.constant 0 : index
        %292 = vector.load %arg11[%291, %c0_173, %c0_174] : memref<112x7x128xf32, #tpu.memory_space<vmem>>, vector<8x6x128xf32>
        %c25_i32_175 = arith.constant 25 : i32
        %293 = arith.muli %arg17, %c25_i32_175 : i32
        %c15_i32 = arith.constant 15 : i32
        %294 = arith.addi %293, %c15_i32 : i32
        %c0_i32_176 = arith.constant 0 : i32
        %295 = arith.addi %294, %c0_i32_176 : i32
        %296 = arith.index_cast %295 : i32 to index
        %297 = memref.load %arg2[%296] : memref<75xf32, #tpu.memory_space<smem>>
        %c25_i32_177 = arith.constant 25 : i32
        %298 = arith.muli %arg17, %c25_i32_177 : i32
        %c15_i32_178 = arith.constant 15 : i32
        %299 = arith.addi %298, %c15_i32_178 : i32
        %c1_i32_179 = arith.constant 1 : i32
        %300 = arith.addi %299, %c1_i32_179 : i32
        %301 = arith.index_cast %300 : i32 to index
        %302 = memref.load %arg2[%301] : memref<75xf32, #tpu.memory_space<smem>>
        %c25_i32_180 = arith.constant 25 : i32
        %303 = arith.muli %arg17, %c25_i32_180 : i32
        %c15_i32_181 = arith.constant 15 : i32
        %304 = arith.addi %303, %c15_i32_181 : i32
        %c2_i32_182 = arith.constant 2 : i32
        %305 = arith.addi %304, %c2_i32_182 : i32
        %306 = arith.index_cast %305 : i32 to index
        %307 = memref.load %arg2[%306] : memref<75xf32, #tpu.memory_space<smem>>
        %c25_i32_183 = arith.constant 25 : i32
        %308 = arith.muli %arg17, %c25_i32_183 : i32
        %c15_i32_184 = arith.constant 15 : i32
        %309 = arith.addi %308, %c15_i32_184 : i32
        %c3_i32_185 = arith.constant 3 : i32
        %310 = arith.addi %309, %c3_i32_185 : i32
        %311 = arith.index_cast %310 : i32 to index
        %312 = memref.load %arg2[%311] : memref<75xf32, #tpu.memory_space<smem>>
        %c25_i32_186 = arith.constant 25 : i32
        %313 = arith.muli %arg17, %c25_i32_186 : i32
        %c15_i32_187 = arith.constant 15 : i32
        %314 = arith.addi %313, %c15_i32_187 : i32
        %c4_i32_188 = arith.constant 4 : i32
        %315 = arith.addi %314, %c4_i32_188 : i32
        %316 = arith.index_cast %315 : i32 to index
        %317 = memref.load %arg2[%316] : memref<75xf32, #tpu.memory_space<smem>>
        %318 = vector.broadcast %297 : f32 to vector<8x6x128xf32>
        %319 = arith.mulf %318, %275 : vector<8x6x128xf32>
        %320 = arith.addf %257, %319 : vector<8x6x128xf32>
        %321 = vector.broadcast %302 : f32 to vector<8x6x128xf32>
        %322 = arith.mulf %321, %280 : vector<8x6x128xf32>
        %323 = arith.addf %320, %322 : vector<8x6x128xf32>
        %324 = vector.broadcast %307 : f32 to vector<8x6x128xf32>
        %325 = arith.mulf %324, %286 : vector<8x6x128xf32>
        %326 = arith.addf %323, %325 : vector<8x6x128xf32>
        %327 = vector.broadcast %312 : f32 to vector<8x6x128xf32>
        %328 = arith.mulf %327, %292 : vector<8x6x128xf32>
        %329 = arith.addf %326, %328 : vector<8x6x128xf32>
        %330 = vector.broadcast %317 : f32 to vector<8x6x128xf32>
        %331 = arith.mulf %330, %277 : vector<8x6x128xf32>
        %332 = arith.addf %329, %331 : vector<8x6x128xf32>
        %333 = vector.broadcast %297 : f32 to vector<8x6x128xf32>
        %334 = arith.mulf %333, %286 : vector<8x6x128xf32>
        %335 = arith.addf %272, %334 : vector<8x6x128xf32>
        %336 = vector.broadcast %302 : f32 to vector<8x6x128xf32>
        %337 = arith.mulf %336, %292 : vector<8x6x128xf32>
        %338 = arith.addf %335, %337 : vector<8x6x128xf32>
        %339 = vector.broadcast %307 : f32 to vector<8x6x128xf32>
        %340 = arith.mulf %339, %277 : vector<8x6x128xf32>
        %341 = arith.addf %338, %340 : vector<8x6x128xf32>
        %342 = vector.broadcast %312 : f32 to vector<8x6x128xf32>
        %343 = arith.mulf %342, %283 : vector<8x6x128xf32>
        %344 = arith.addf %341, %343 : vector<8x6x128xf32>
        %345 = vector.broadcast %317 : f32 to vector<8x6x128xf32>
        %346 = arith.mulf %345, %289 : vector<8x6x128xf32>
        %347 = arith.addf %344, %346 : vector<8x6x128xf32>
        %c4_i32_189 = arith.constant 4 : i32
        %348 = arith.addi %45, %c4_i32_189 : i32
        %349 = arith.index_cast %348 : i32 to index
        %c0_190 = arith.constant 0 : index
        %c0_191 = arith.constant 0 : index
        %350 = vector.load %arg11[%349, %c0_190, %c0_191] : memref<112x7x128xf32, #tpu.memory_space<vmem>>, vector<8x6x128xf32>
        %351 = arith.index_cast %348 : i32 to index
        %c1_192 = arith.constant 1 : index
        %c0_193 = arith.constant 0 : index
        %352 = vector.load %arg11[%351, %c1_192, %c0_193] : memref<112x7x128xf32, #tpu.memory_space<vmem>>, vector<8x6x128xf32>
        %c28_i32_194 = arith.constant 28 : i32
        %353 = arith.addi %c28_i32_194, %348 : i32
        %354 = arith.index_cast %353 : i32 to index
        %c0_195 = arith.constant 0 : index
        %c0_196 = arith.constant 0 : index
        %355 = vector.load %arg11[%354, %c0_195, %c0_196] : memref<112x7x128xf32, #tpu.memory_space<vmem>>, vector<8x6x128xf32>
        %c28_i32_197 = arith.constant 28 : i32
        %356 = arith.addi %c28_i32_197, %348 : i32
        %357 = arith.index_cast %356 : i32 to index
        %c1_198 = arith.constant 1 : index
        %c0_199 = arith.constant 0 : index
        %358 = vector.load %arg11[%357, %c1_198, %c0_199] : memref<112x7x128xf32, #tpu.memory_space<vmem>>, vector<8x6x128xf32>
        %c56_i32_200 = arith.constant 56 : i32
        %359 = arith.addi %c56_i32_200, %348 : i32
        %360 = arith.index_cast %359 : i32 to index
        %c0_201 = arith.constant 0 : index
        %c0_202 = arith.constant 0 : index
        %361 = vector.load %arg11[%360, %c0_201, %c0_202] : memref<112x7x128xf32, #tpu.memory_space<vmem>>, vector<8x6x128xf32>
        %c56_i32_203 = arith.constant 56 : i32
        %362 = arith.addi %c56_i32_203, %348 : i32
        %363 = arith.index_cast %362 : i32 to index
        %c1_204 = arith.constant 1 : index
        %c0_205 = arith.constant 0 : index
        %364 = vector.load %arg11[%363, %c1_204, %c0_205] : memref<112x7x128xf32, #tpu.memory_space<vmem>>, vector<8x6x128xf32>
        %c84_i32_206 = arith.constant 84 : i32
        %365 = arith.addi %c84_i32_206, %348 : i32
        %366 = arith.index_cast %365 : i32 to index
        %c0_207 = arith.constant 0 : index
        %c0_208 = arith.constant 0 : index
        %367 = vector.load %arg11[%366, %c0_207, %c0_208] : memref<112x7x128xf32, #tpu.memory_space<vmem>>, vector<8x6x128xf32>
        %c25_i32_209 = arith.constant 25 : i32
        %368 = arith.muli %arg17, %c25_i32_209 : i32
        %c20_i32 = arith.constant 20 : i32
        %369 = arith.addi %368, %c20_i32 : i32
        %c0_i32_210 = arith.constant 0 : i32
        %370 = arith.addi %369, %c0_i32_210 : i32
        %371 = arith.index_cast %370 : i32 to index
        %372 = memref.load %arg2[%371] : memref<75xf32, #tpu.memory_space<smem>>
        %c25_i32_211 = arith.constant 25 : i32
        %373 = arith.muli %arg17, %c25_i32_211 : i32
        %c20_i32_212 = arith.constant 20 : i32
        %374 = arith.addi %373, %c20_i32_212 : i32
        %c1_i32_213 = arith.constant 1 : i32
        %375 = arith.addi %374, %c1_i32_213 : i32
        %376 = arith.index_cast %375 : i32 to index
        %377 = memref.load %arg2[%376] : memref<75xf32, #tpu.memory_space<smem>>
        %c25_i32_214 = arith.constant 25 : i32
        %378 = arith.muli %arg17, %c25_i32_214 : i32
        %c20_i32_215 = arith.constant 20 : i32
        %379 = arith.addi %378, %c20_i32_215 : i32
        %c2_i32_216 = arith.constant 2 : i32
        %380 = arith.addi %379, %c2_i32_216 : i32
        %381 = arith.index_cast %380 : i32 to index
        %382 = memref.load %arg2[%381] : memref<75xf32, #tpu.memory_space<smem>>
        %c25_i32_217 = arith.constant 25 : i32
        %383 = arith.muli %arg17, %c25_i32_217 : i32
        %c20_i32_218 = arith.constant 20 : i32
        %384 = arith.addi %383, %c20_i32_218 : i32
        %c3_i32_219 = arith.constant 3 : i32
        %385 = arith.addi %384, %c3_i32_219 : i32
        %386 = arith.index_cast %385 : i32 to index
        %387 = memref.load %arg2[%386] : memref<75xf32, #tpu.memory_space<smem>>
        %c25_i32_220 = arith.constant 25 : i32
        %388 = arith.muli %arg17, %c25_i32_220 : i32
        %c20_i32_221 = arith.constant 20 : i32
        %389 = arith.addi %388, %c20_i32_221 : i32
        %c4_i32_222 = arith.constant 4 : i32
        %390 = arith.addi %389, %c4_i32_222 : i32
        %391 = arith.index_cast %390 : i32 to index
        %392 = memref.load %arg2[%391] : memref<75xf32, #tpu.memory_space<smem>>
        %393 = vector.broadcast %372 : f32 to vector<8x6x128xf32>
        %394 = arith.mulf %393, %350 : vector<8x6x128xf32>
        %395 = arith.addf %332, %394 : vector<8x6x128xf32>
        %396 = vector.broadcast %377 : f32 to vector<8x6x128xf32>
        %397 = arith.mulf %396, %355 : vector<8x6x128xf32>
        %398 = arith.addf %395, %397 : vector<8x6x128xf32>
        %399 = vector.broadcast %382 : f32 to vector<8x6x128xf32>
        %400 = arith.mulf %399, %361 : vector<8x6x128xf32>
        %401 = arith.addf %398, %400 : vector<8x6x128xf32>
        %402 = vector.broadcast %387 : f32 to vector<8x6x128xf32>
        %403 = arith.mulf %402, %367 : vector<8x6x128xf32>
        %404 = arith.addf %401, %403 : vector<8x6x128xf32>
        %405 = vector.broadcast %392 : f32 to vector<8x6x128xf32>
        %406 = arith.mulf %405, %352 : vector<8x6x128xf32>
        %407 = arith.addf %404, %406 : vector<8x6x128xf32>
        %408 = vector.broadcast %372 : f32 to vector<8x6x128xf32>
        %409 = arith.mulf %408, %361 : vector<8x6x128xf32>
        %410 = arith.addf %347, %409 : vector<8x6x128xf32>
        %411 = vector.broadcast %377 : f32 to vector<8x6x128xf32>
        %412 = arith.mulf %411, %367 : vector<8x6x128xf32>
        %413 = arith.addf %410, %412 : vector<8x6x128xf32>
        %414 = vector.broadcast %382 : f32 to vector<8x6x128xf32>
        %415 = arith.mulf %414, %352 : vector<8x6x128xf32>
        %416 = arith.addf %413, %415 : vector<8x6x128xf32>
        %417 = vector.broadcast %387 : f32 to vector<8x6x128xf32>
        %418 = arith.mulf %417, %358 : vector<8x6x128xf32>
        %419 = arith.addf %416, %418 : vector<8x6x128xf32>
        %420 = vector.broadcast %392 : f32 to vector<8x6x128xf32>
        %421 = arith.mulf %420, %364 : vector<8x6x128xf32>
        %422 = arith.addf %419, %421 : vector<8x6x128xf32>
        %423 = vector.shape_cast %407 : vector<8x6x128xf32> to vector<4x2x6x128xf32>
        %424 = vector.shape_cast %422 : vector<8x6x128xf32> to vector<4x2x6x128xf32>
        %425 = vector.extract_strided_slice %423 {offsets = [0, 0, 0, 0], sizes = [4, 1, 6, 128], strides = [1, 1, 1, 1]} : vector<4x2x6x128xf32> to vector<4x1x6x128xf32>
        %426 = vector.shape_cast %425 : vector<4x1x6x128xf32> to vector<4x6x128xf32>
        %427 = vector.extract_strided_slice %423 {offsets = [0, 1, 0, 0], sizes = [4, 1, 6, 128], strides = [1, 1, 1, 1]} : vector<4x2x6x128xf32> to vector<4x1x6x128xf32>
        %428 = vector.shape_cast %427 : vector<4x1x6x128xf32> to vector<4x6x128xf32>
        %429 = arith.addf %426, %428 : vector<4x6x128xf32>
        %430 = vector.broadcast %43 : f32 to vector<4x6x128xf32>
        %431 = arith.addf %429, %430 : vector<4x6x128xf32>
        %c12_i32 = arith.constant 12 : i32
        %432 = arith.muli %arg17, %c12_i32 : i32
        %c4_i32_223 = arith.constant 4 : i32
        %433 = arith.muli %c4_i32_223, %arg18 : i32
        %434 = arith.addi %432, %433 : i32
        %435 = arith.index_cast %434 : i32 to index
        %c0_224 = arith.constant 0 : index
        %c0_225 = arith.constant 0 : index
        %436 = vector.load %arg12[%435, %c0_224, %c0_225] : memref<36x6x128xf32, #tpu.memory_space<vmem>>, vector<4x6x128xf32>
        tpu.vector_store %arg12[%435, %c0_224, %c0_225], %431 {strides = array<i32>} : memref<36x6x128xf32, #tpu.memory_space<vmem>>, vector<4x6x128xf32>,
        %437 = vector.extract_strided_slice %424 {offsets = [0, 0, 0, 0], sizes = [4, 1, 6, 128], strides = [1, 1, 1, 1]} : vector<4x2x6x128xf32> to vector<4x1x6x128xf32>
        %438 = vector.shape_cast %437 : vector<4x1x6x128xf32> to vector<4x6x128xf32>
        %439 = vector.extract_strided_slice %424 {offsets = [0, 1, 0, 0], sizes = [4, 1, 6, 128], strides = [1, 1, 1, 1]} : vector<4x2x6x128xf32> to vector<4x1x6x128xf32>
        %440 = vector.shape_cast %439 : vector<4x1x6x128xf32> to vector<4x6x128xf32>
        %441 = arith.addf %438, %440 : vector<4x6x128xf32>
        %442 = vector.broadcast %43 : f32 to vector<4x6x128xf32>
        %443 = arith.addf %441, %442 : vector<4x6x128xf32>
        %c12_i32_226 = arith.constant 12 : i32
        %444 = arith.muli %arg17, %c12_i32_226 : i32
        %c4_i32_227 = arith.constant 4 : i32
        %445 = arith.muli %c4_i32_227, %arg18 : i32
        %446 = arith.addi %444, %445 : i32
        %447 = arith.index_cast %446 : i32 to index
        %c0_228 = arith.constant 0 : index
        %c0_229 = arith.constant 0 : index
        %448 = vector.load %arg13[%447, %c0_228, %c0_229] : memref<36x6x128xf32, #tpu.memory_space<vmem>>, vector<4x6x128xf32>
        tpu.vector_store %arg13[%447, %c0_228, %c0_229], %443 {strides = array<i32>} : memref<36x6x128xf32, #tpu.memory_space<vmem>>, vector<4x6x128xf32>,
      }
      %c3_i32_55 = arith.constant 3 : i32
    }
    %c3_i32_14 = arith.constant 3 : i32
    %c0_15 = arith.constant 0 : index
    %c0_16 = arith.constant 0 : index
    %c0_17 = arith.constant 0 : index
    %9 = vector.load %arg12[%c0_15, %c0_16, %c0_17] : memref<36x6x128xf32, #tpu.memory_space<vmem>>, vector<36x6x128xf32>
    %c0_18 = arith.constant 0 : index
    %c0_19 = arith.constant 0 : index
    %c0_20 = arith.constant 0 : index
    %10 = vector.load %arg13[%c0_18, %c0_19, %c0_20] : memref<36x6x128xf32, #tpu.memory_space<vmem>>, vector<36x6x128xf32>
    %11 = arith.addf %9, %10 : vector<36x6x128xf32>
    %c0_21 = arith.constant 0 : index
    %c0_22 = arith.constant 0 : index
    %c0_23 = arith.constant 0 : index
    %12 = vector.load %arg14[%c0_21, %c0_22, %c0_23] : memref<36x6x128xf32, #tpu.memory_space<vmem>>, vector<36x6x128xf32>
    tpu.vector_store %arg14[%c0_21, %c0_22, %c0_23], %11 {strides = array<i32>} : memref<36x6x128xf32, #tpu.memory_space<vmem>>, vector<36x6x128xf32>,
    %c0_24 = arith.constant 0 : index
    %c0_25 = arith.constant 0 : index
    %c0_26 = arith.constant 0 : index
    %13 = vector.load %arg13[%c0_24, %c0_25, %c0_26] : memref<36x6x128xf32, #tpu.memory_space<vmem>>, vector<36x5x128xf32>
    %c0_27 = arith.constant 0 : index
    %c1_28 = arith.constant 1 : index
    %c0_29 = arith.constant 0 : index
    %14 = vector.load %arg12[%c0_27, %c1_28, %c0_29] : memref<36x6x128xf32, #tpu.memory_space<vmem>>, vector<36x5x128xf32>
    %15 = arith.addf %13, %14 : vector<36x5x128xf32>
    %c0_30 = arith.constant 0 : index
    %c0_31 = arith.constant 0 : index
    %c0_32 = arith.constant 0 : index
    %16 = vector.load %arg15[%c0_30, %c0_31, %c0_32] : memref<36x5x128xf32, #tpu.memory_space<vmem>>, vector<36x5x128xf32>
    tpu.vector_store %arg15[%c0_30, %c0_31, %c0_32], %15 {strides = array<i32>} : memref<36x5x128xf32, #tpu.memory_space<vmem>>, vector<36x5x128xf32>,
    %c0_i32_33 = arith.constant 0 : i32
    %c6_i32 = arith.constant 6 : i32
    %17 = arith.addi %c0_i32_33, %c6_i32 : i32
    %c1_i32_34 = arith.constant 1 : i32
    scf.for %arg17 = %c0_i32_33 to %17 step %c1_i32_34  : i32 {
      %cst_52 = arith.constant 0.000000e+00 : f32
      %42 = vector.broadcast %cst_52 : f32 to vector<8x4x128xf32>
      %c75_i32 = arith.constant 75 : i32
      %43 = arith.muli %arg17, %c75_i32 : i32
      %c0_i32_53 = arith.constant 0 : i32
      %44 = arith.addi %43, %c0_i32_53 : i32
      %c0_i32_54 = arith.constant 0 : i32
      %45 = arith.addi %44, %c0_i32_54 : i32
      %c0_i32_55 = arith.constant 0 : i32
      %46 = arith.addi %45, %c0_i32_55 : i32
      %47 = arith.index_cast %46 : i32 to index
      %48 = memref.load %arg4[%47] : memref<450xf32, #tpu.memory_space<smem>>
      %c1_i32_56 = arith.constant 1 : i32
      %49 = arith.addi %45, %c1_i32_56 : i32
      %50 = arith.index_cast %49 : i32 to index
      %51 = memref.load %arg4[%50] : memref<450xf32, #tpu.memory_space<smem>>
      %c2_i32 = arith.constant 2 : i32
      %52 = arith.addi %45, %c2_i32 : i32
      %53 = arith.index_cast %52 : i32 to index
      %54 = memref.load %arg4[%53] : memref<450xf32, #tpu.memory_space<smem>>
      %c3_i32_57 = arith.constant 3 : i32
      %55 = arith.addi %45, %c3_i32_57 : i32
      %56 = arith.index_cast %55 : i32 to index
      %57 = memref.load %arg4[%56] : memref<450xf32, #tpu.memory_space<smem>>
      %c4_i32 = arith.constant 4 : i32
      %58 = arith.addi %45, %c4_i32 : i32
      %59 = arith.index_cast %58 : i32 to index
      %60 = memref.load %arg4[%59] : memref<450xf32, #tpu.memory_space<smem>>
      %c0_58 = arith.constant 0 : index
      %c0_59 = arith.constant 0 : index
      %c0_60 = arith.constant 0 : index
      %61 = vector.load %arg14[%c0_58, %c0_59, %c0_60] : memref<36x6x128xf32, #tpu.memory_space<vmem>>, vector<8x4x128xf32>
      %62 = vector.broadcast %48 : f32 to vector<8x4x128xf32>
      %63 = arith.mulf %62, %61 : vector<8x4x128xf32>
      %64 = arith.addf %42, %63 : vector<8x4x128xf32>
      %c0_61 = arith.constant 0 : index
      %c0_62 = arith.constant 0 : index
      %c0_63 = arith.constant 0 : index
      %65 = vector.load %arg15[%c0_61, %c0_62, %c0_63] : memref<36x5x128xf32, #tpu.memory_space<vmem>>, vector<8x4x128xf32>
      %66 = vector.broadcast %51 : f32 to vector<8x4x128xf32>
      %67 = arith.mulf %66, %65 : vector<8x4x128xf32>
      %68 = arith.addf %64, %67 : vector<8x4x128xf32>
      %c0_64 = arith.constant 0 : index
      %c1_65 = arith.constant 1 : index
      %c0_66 = arith.constant 0 : index
      %69 = vector.load %arg14[%c0_64, %c1_65, %c0_66] : memref<36x6x128xf32, #tpu.memory_space<vmem>>, vector<8x4x128xf32>
      %70 = vector.broadcast %54 : f32 to vector<8x4x128xf32>
      %71 = arith.mulf %70, %69 : vector<8x4x128xf32>
      %72 = arith.addf %68, %71 : vector<8x4x128xf32>
      %c0_67 = arith.constant 0 : index
      %c1_68 = arith.constant 1 : index
      %c0_69 = arith.constant 0 : index
      %73 = vector.load %arg15[%c0_67, %c1_68, %c0_69] : memref<36x5x128xf32, #tpu.memory_space<vmem>>, vector<8x4x128xf32>
      %74 = vector.broadcast %57 : f32 to vector<8x4x128xf32>
      %75 = arith.mulf %74, %73 : vector<8x4x128xf32>
      %76 = arith.addf %72, %75 : vector<8x4x128xf32>
      %c0_70 = arith.constant 0 : index
      %c2 = arith.constant 2 : index
      %c0_71 = arith.constant 0 : index
      %77 = vector.load %arg14[%c0_70, %c2, %c0_71] : memref<36x6x128xf32, #tpu.memory_space<vmem>>, vector<8x4x128xf32>
      %78 = vector.broadcast %60 : f32 to vector<8x4x128xf32>
      %79 = arith.mulf %78, %77 : vector<8x4x128xf32>
      %80 = arith.addf %76, %79 : vector<8x4x128xf32>
      %c75_i32_72 = arith.constant 75 : i32
      %81 = arith.muli %arg17, %c75_i32_72 : i32
      %c0_i32_73 = arith.constant 0 : i32
      %82 = arith.addi %81, %c0_i32_73 : i32
      %c5_i32 = arith.constant 5 : i32
      %83 = arith.addi %82, %c5_i32 : i32
      %c0_i32_74 = arith.constant 0 : i32
      %84 = arith.addi %83, %c0_i32_74 : i32
      %85 = arith.index_cast %84 : i32 to index
      %86 = memref.load %arg4[%85] : memref<450xf32, #tpu.memory_space<smem>>
      %c1_i32_75 = arith.constant 1 : i32
      %87 = arith.addi %83, %c1_i32_75 : i32
      %88 = arith.index_cast %87 : i32 to index
      %89 = memref.load %arg4[%88] : memref<450xf32, #tpu.memory_space<smem>>
      %c2_i32_76 = arith.constant 2 : i32
      %90 = arith.addi %83, %c2_i32_76 : i32
      %91 = arith.index_cast %90 : i32 to index
      %92 = memref.load %arg4[%91] : memref<450xf32, #tpu.memory_space<smem>>
      %c3_i32_77 = arith.constant 3 : i32
      %93 = arith.addi %83, %c3_i32_77 : i32
      %94 = arith.index_cast %93 : i32 to index
      %95 = memref.load %arg4[%94] : memref<450xf32, #tpu.memory_space<smem>>
      %c4_i32_78 = arith.constant 4 : i32
      %96 = arith.addi %83, %c4_i32_78 : i32
      %97 = arith.index_cast %96 : i32 to index
      %98 = memref.load %arg4[%97] : memref<450xf32, #tpu.memory_space<smem>>
      %c1_79 = arith.constant 1 : index
      %c0_80 = arith.constant 0 : index
      %c0_81 = arith.constant 0 : index
      %99 = vector.load %arg14[%c1_79, %c0_80, %c0_81] : memref<36x6x128xf32, #tpu.memory_space<vmem>>, vector<8x4x128xf32>
      %100 = vector.broadcast %86 : f32 to vector<8x4x128xf32>
      %101 = arith.mulf %100, %99 : vector<8x4x128xf32>
      %102 = arith.addf %80, %101 : vector<8x4x128xf32>
      %c1_82 = arith.constant 1 : index
      %c0_83 = arith.constant 0 : index
      %c0_84 = arith.constant 0 : index
      %103 = vector.load %arg15[%c1_82, %c0_83, %c0_84] : memref<36x5x128xf32, #tpu.memory_space<vmem>>, vector<8x4x128xf32>
      %104 = vector.broadcast %89 : f32 to vector<8x4x128xf32>
      %105 = arith.mulf %104, %103 : vector<8x4x128xf32>
      %106 = arith.addf %102, %105 : vector<8x4x128xf32>
      %c1_85 = arith.constant 1 : index
      %c1_86 = arith.constant 1 : index
      %c0_87 = arith.constant 0 : index
      %107 = vector.load %arg14[%c1_85, %c1_86, %c0_87] : memref<36x6x128xf32, #tpu.memory_space<vmem>>, vector<8x4x128xf32>
      %108 = vector.broadcast %92 : f32 to vector<8x4x128xf32>
      %109 = arith.mulf %108, %107 : vector<8x4x128xf32>
      %110 = arith.addf %106, %109 : vector<8x4x128xf32>
      %c1_88 = arith.constant 1 : index
      %c1_89 = arith.constant 1 : index
      %c0_90 = arith.constant 0 : index
      %111 = vector.load %arg15[%c1_88, %c1_89, %c0_90] : memref<36x5x128xf32, #tpu.memory_space<vmem>>, vector<8x4x128xf32>
      %112 = vector.broadcast %95 : f32 to vector<8x4x128xf32>
      %113 = arith.mulf %112, %111 : vector<8x4x128xf32>
      %114 = arith.addf %110, %113 : vector<8x4x128xf32>
      %c1_91 = arith.constant 1 : index
      %c2_92 = arith.constant 2 : index
      %c0_93 = arith.constant 0 : index
      %115 = vector.load %arg14[%c1_91, %c2_92, %c0_93] : memref<36x6x128xf32, #tpu.memory_space<vmem>>, vector<8x4x128xf32>
      %116 = vector.broadcast %98 : f32 to vector<8x4x128xf32>
      %117 = arith.mulf %116, %115 : vector<8x4x128xf32>
      %118 = arith.addf %114, %117 : vector<8x4x128xf32>
      %c75_i32_94 = arith.constant 75 : i32
      %119 = arith.muli %arg17, %c75_i32_94 : i32
      %c0_i32_95 = arith.constant 0 : i32
      %120 = arith.addi %119, %c0_i32_95 : i32
      %c10_i32 = arith.constant 10 : i32
      %121 = arith.addi %120, %c10_i32 : i32
      %c0_i32_96 = arith.constant 0 : i32
      %122 = arith.addi %121, %c0_i32_96 : i32
      %123 = arith.index_cast %122 : i32 to index
      %124 = memref.load %arg4[%123] : memref<450xf32, #tpu.memory_space<smem>>
      %c1_i32_97 = arith.constant 1 : i32
      %125 = arith.addi %121, %c1_i32_97 : i32
      %126 = arith.index_cast %125 : i32 to index
      %127 = memref.load %arg4[%126] : memref<450xf32, #tpu.memory_space<smem>>
      %c2_i32_98 = arith.constant 2 : i32
      %128 = arith.addi %121, %c2_i32_98 : i32
      %129 = arith.index_cast %128 : i32 to index
      %130 = memref.load %arg4[%129] : memref<450xf32, #tpu.memory_space<smem>>
      %c3_i32_99 = arith.constant 3 : i32
      %131 = arith.addi %121, %c3_i32_99 : i32
      %132 = arith.index_cast %131 : i32 to index
      %133 = memref.load %arg4[%132] : memref<450xf32, #tpu.memory_space<smem>>
      %c4_i32_100 = arith.constant 4 : i32
      %134 = arith.addi %121, %c4_i32_100 : i32
      %135 = arith.index_cast %134 : i32 to index
      %136 = memref.load %arg4[%135] : memref<450xf32, #tpu.memory_space<smem>>
      %c2_101 = arith.constant 2 : index
      %c0_102 = arith.constant 0 : index
      %c0_103 = arith.constant 0 : index
      %137 = vector.load %arg14[%c2_101, %c0_102, %c0_103] : memref<36x6x128xf32, #tpu.memory_space<vmem>>, vector<8x4x128xf32>
      %138 = vector.broadcast %124 : f32 to vector<8x4x128xf32>
      %139 = arith.mulf %138, %137 : vector<8x4x128xf32>
      %140 = arith.addf %118, %139 : vector<8x4x128xf32>
      %c2_104 = arith.constant 2 : index
      %c0_105 = arith.constant 0 : index
      %c0_106 = arith.constant 0 : index
      %141 = vector.load %arg15[%c2_104, %c0_105, %c0_106] : memref<36x5x128xf32, #tpu.memory_space<vmem>>, vector<8x4x128xf32>
      %142 = vector.broadcast %127 : f32 to vector<8x4x128xf32>
      %143 = arith.mulf %142, %141 : vector<8x4x128xf32>
      %144 = arith.addf %140, %143 : vector<8x4x128xf32>
      %c2_107 = arith.constant 2 : index
      %c1_108 = arith.constant 1 : index
      %c0_109 = arith.constant 0 : index
      %145 = vector.load %arg14[%c2_107, %c1_108, %c0_109] : memref<36x6x128xf32, #tpu.memory_space<vmem>>, vector<8x4x128xf32>
      %146 = vector.broadcast %130 : f32 to vector<8x4x128xf32>
      %147 = arith.mulf %146, %145 : vector<8x4x128xf32>
      %148 = arith.addf %144, %147 : vector<8x4x128xf32>
      %c2_110 = arith.constant 2 : index
      %c1_111 = arith.constant 1 : index
      %c0_112 = arith.constant 0 : index
      %149 = vector.load %arg15[%c2_110, %c1_111, %c0_112] : memref<36x5x128xf32, #tpu.memory_space<vmem>>, vector<8x4x128xf32>
      %150 = vector.broadcast %133 : f32 to vector<8x4x128xf32>
      %151 = arith.mulf %150, %149 : vector<8x4x128xf32>
      %152 = arith.addf %148, %151 : vector<8x4x128xf32>
      %c2_113 = arith.constant 2 : index
      %c2_114 = arith.constant 2 : index
      %c0_115 = arith.constant 0 : index
      %153 = vector.load %arg14[%c2_113, %c2_114, %c0_115] : memref<36x6x128xf32, #tpu.memory_space<vmem>>, vector<8x4x128xf32>
      %154 = vector.broadcast %136 : f32 to vector<8x4x128xf32>
      %155 = arith.mulf %154, %153 : vector<8x4x128xf32>
      %156 = arith.addf %152, %155 : vector<8x4x128xf32>
      %c75_i32_116 = arith.constant 75 : i32
      %157 = arith.muli %arg17, %c75_i32_116 : i32
      %c0_i32_117 = arith.constant 0 : i32
      %158 = arith.addi %157, %c0_i32_117 : i32
      %c15_i32 = arith.constant 15 : i32
      %159 = arith.addi %158, %c15_i32 : i32
      %c0_i32_118 = arith.constant 0 : i32
      %160 = arith.addi %159, %c0_i32_118 : i32
      %161 = arith.index_cast %160 : i32 to index
      %162 = memref.load %arg4[%161] : memref<450xf32, #tpu.memory_space<smem>>
      %c1_i32_119 = arith.constant 1 : i32
      %163 = arith.addi %159, %c1_i32_119 : i32
      %164 = arith.index_cast %163 : i32 to index
      %165 = memref.load %arg4[%164] : memref<450xf32, #tpu.memory_space<smem>>
      %c2_i32_120 = arith.constant 2 : i32
      %166 = arith.addi %159, %c2_i32_120 : i32
      %167 = arith.index_cast %166 : i32 to index
      %168 = memref.load %arg4[%167] : memref<450xf32, #tpu.memory_space<smem>>
      %c3_i32_121 = arith.constant 3 : i32
      %169 = arith.addi %159, %c3_i32_121 : i32
      %170 = arith.index_cast %169 : i32 to index
      %171 = memref.load %arg4[%170] : memref<450xf32, #tpu.memory_space<smem>>
      %c4_i32_122 = arith.constant 4 : i32
      %172 = arith.addi %159, %c4_i32_122 : i32
      %173 = arith.index_cast %172 : i32 to index
      %174 = memref.load %arg4[%173] : memref<450xf32, #tpu.memory_space<smem>>
      %c3 = arith.constant 3 : index
      %c0_123 = arith.constant 0 : index
      %c0_124 = arith.constant 0 : index
      %175 = vector.load %arg14[%c3, %c0_123, %c0_124] : memref<36x6x128xf32, #tpu.memory_space<vmem>>, vector<8x4x128xf32>
      %176 = vector.broadcast %162 : f32 to vector<8x4x128xf32>
      %177 = arith.mulf %176, %175 : vector<8x4x128xf32>
      %178 = arith.addf %156, %177 : vector<8x4x128xf32>
      %c3_125 = arith.constant 3 : index
      %c0_126 = arith.constant 0 : index
      %c0_127 = arith.constant 0 : index
      %179 = vector.load %arg15[%c3_125, %c0_126, %c0_127] : memref<36x5x128xf32, #tpu.memory_space<vmem>>, vector<8x4x128xf32>
      %180 = vector.broadcast %165 : f32 to vector<8x4x128xf32>
      %181 = arith.mulf %180, %179 : vector<8x4x128xf32>
      %182 = arith.addf %178, %181 : vector<8x4x128xf32>
      %c3_128 = arith.constant 3 : index
      %c1_129 = arith.constant 1 : index
      %c0_130 = arith.constant 0 : index
      %183 = vector.load %arg14[%c3_128, %c1_129, %c0_130] : memref<36x6x128xf32, #tpu.memory_space<vmem>>, vector<8x4x128xf32>
      %184 = vector.broadcast %168 : f32 to vector<8x4x128xf32>
      %185 = arith.mulf %184, %183 : vector<8x4x128xf32>
      %186 = arith.addf %182, %185 : vector<8x4x128xf32>
      %c3_131 = arith.constant 3 : index
      %c1_132 = arith.constant 1 : index
      %c0_133 = arith.constant 0 : index
      %187 = vector.load %arg15[%c3_131, %c1_132, %c0_133] : memref<36x5x128xf32, #tpu.memory_space<vmem>>, vector<8x4x128xf32>
      %188 = vector.broadcast %171 : f32 to vector<8x4x128xf32>
      %189 = arith.mulf %188, %187 : vector<8x4x128xf32>
      %190 = arith.addf %186, %189 : vector<8x4x128xf32>
      %c3_134 = arith.constant 3 : index
      %c2_135 = arith.constant 2 : index
      %c0_136 = arith.constant 0 : index
      %191 = vector.load %arg14[%c3_134, %c2_135, %c0_136] : memref<36x6x128xf32, #tpu.memory_space<vmem>>, vector<8x4x128xf32>
      %192 = vector.broadcast %174 : f32 to vector<8x4x128xf32>
      %193 = arith.mulf %192, %191 : vector<8x4x128xf32>
      %194 = arith.addf %190, %193 : vector<8x4x128xf32>
      %c75_i32_137 = arith.constant 75 : i32
      %195 = arith.muli %arg17, %c75_i32_137 : i32
      %c0_i32_138 = arith.constant 0 : i32
      %196 = arith.addi %195, %c0_i32_138 : i32
      %c20_i32 = arith.constant 20 : i32
      %197 = arith.addi %196, %c20_i32 : i32
      %c0_i32_139 = arith.constant 0 : i32
      %198 = arith.addi %197, %c0_i32_139 : i32
      %199 = arith.index_cast %198 : i32 to index
      %200 = memref.load %arg4[%199] : memref<450xf32, #tpu.memory_space<smem>>
      %c1_i32_140 = arith.constant 1 : i32
      %201 = arith.addi %197, %c1_i32_140 : i32
      %202 = arith.index_cast %201 : i32 to index
      %203 = memref.load %arg4[%202] : memref<450xf32, #tpu.memory_space<smem>>
      %c2_i32_141 = arith.constant 2 : i32
      %204 = arith.addi %197, %c2_i32_141 : i32
      %205 = arith.index_cast %204 : i32 to index
      %206 = memref.load %arg4[%205] : memref<450xf32, #tpu.memory_space<smem>>
      %c3_i32_142 = arith.constant 3 : i32
      %207 = arith.addi %197, %c3_i32_142 : i32
      %208 = arith.index_cast %207 : i32 to index
      %209 = memref.load %arg4[%208] : memref<450xf32, #tpu.memory_space<smem>>
      %c4_i32_143 = arith.constant 4 : i32
      %210 = arith.addi %197, %c4_i32_143 : i32
      %211 = arith.index_cast %210 : i32 to index
      %212 = memref.load %arg4[%211] : memref<450xf32, #tpu.memory_space<smem>>
      %c4 = arith.constant 4 : index
      %c0_144 = arith.constant 0 : index
      %c0_145 = arith.constant 0 : index
      %213 = vector.load %arg14[%c4, %c0_144, %c0_145] : memref<36x6x128xf32, #tpu.memory_space<vmem>>, vector<8x4x128xf32>
      %214 = vector.broadcast %200 : f32 to vector<8x4x128xf32>
      %215 = arith.mulf %214, %213 : vector<8x4x128xf32>
      %216 = arith.addf %194, %215 : vector<8x4x128xf32>
      %c4_146 = arith.constant 4 : index
      %c0_147 = arith.constant 0 : index
      %c0_148 = arith.constant 0 : index
      %217 = vector.load %arg15[%c4_146, %c0_147, %c0_148] : memref<36x5x128xf32, #tpu.memory_space<vmem>>, vector<8x4x128xf32>
      %218 = vector.broadcast %203 : f32 to vector<8x4x128xf32>
      %219 = arith.mulf %218, %217 : vector<8x4x128xf32>
      %220 = arith.addf %216, %219 : vector<8x4x128xf32>
      %c4_149 = arith.constant 4 : index
      %c1_150 = arith.constant 1 : index
      %c0_151 = arith.constant 0 : index
      %221 = vector.load %arg14[%c4_149, %c1_150, %c0_151] : memref<36x6x128xf32, #tpu.memory_space<vmem>>, vector<8x4x128xf32>
      %222 = vector.broadcast %206 : f32 to vector<8x4x128xf32>
      %223 = arith.mulf %222, %221 : vector<8x4x128xf32>
      %224 = arith.addf %220, %223 : vector<8x4x128xf32>
      %c4_152 = arith.constant 4 : index
      %c1_153 = arith.constant 1 : index
      %c0_154 = arith.constant 0 : index
      %225 = vector.load %arg15[%c4_152, %c1_153, %c0_154] : memref<36x5x128xf32, #tpu.memory_space<vmem>>, vector<8x4x128xf32>
      %226 = vector.broadcast %209 : f32 to vector<8x4x128xf32>
      %227 = arith.mulf %226, %225 : vector<8x4x128xf32>
      %228 = arith.addf %224, %227 : vector<8x4x128xf32>
      %c4_155 = arith.constant 4 : index
      %c2_156 = arith.constant 2 : index
      %c0_157 = arith.constant 0 : index
      %229 = vector.load %arg14[%c4_155, %c2_156, %c0_157] : memref<36x6x128xf32, #tpu.memory_space<vmem>>, vector<8x4x128xf32>
      %230 = vector.broadcast %212 : f32 to vector<8x4x128xf32>
      %231 = arith.mulf %230, %229 : vector<8x4x128xf32>
      %232 = arith.addf %228, %231 : vector<8x4x128xf32>
      %c75_i32_158 = arith.constant 75 : i32
      %233 = arith.muli %arg17, %c75_i32_158 : i32
      %c25_i32 = arith.constant 25 : i32
      %234 = arith.addi %233, %c25_i32 : i32
      %c0_i32_159 = arith.constant 0 : i32
      %235 = arith.addi %234, %c0_i32_159 : i32
      %c0_i32_160 = arith.constant 0 : i32
      %236 = arith.addi %235, %c0_i32_160 : i32
      %237 = arith.index_cast %236 : i32 to index
      %238 = memref.load %arg4[%237] : memref<450xf32, #tpu.memory_space<smem>>
      %c1_i32_161 = arith.constant 1 : i32
      %239 = arith.addi %235, %c1_i32_161 : i32
      %240 = arith.index_cast %239 : i32 to index
      %241 = memref.load %arg4[%240] : memref<450xf32, #tpu.memory_space<smem>>
      %c2_i32_162 = arith.constant 2 : i32
      %242 = arith.addi %235, %c2_i32_162 : i32
      %243 = arith.index_cast %242 : i32 to index
      %244 = memref.load %arg4[%243] : memref<450xf32, #tpu.memory_space<smem>>
      %c3_i32_163 = arith.constant 3 : i32
      %245 = arith.addi %235, %c3_i32_163 : i32
      %246 = arith.index_cast %245 : i32 to index
      %247 = memref.load %arg4[%246] : memref<450xf32, #tpu.memory_space<smem>>
      %c4_i32_164 = arith.constant 4 : i32
      %248 = arith.addi %235, %c4_i32_164 : i32
      %249 = arith.index_cast %248 : i32 to index
      %250 = memref.load %arg4[%249] : memref<450xf32, #tpu.memory_space<smem>>
      %c12 = arith.constant 12 : index
      %c0_165 = arith.constant 0 : index
      %c0_166 = arith.constant 0 : index
      %251 = vector.load %arg14[%c12, %c0_165, %c0_166] : memref<36x6x128xf32, #tpu.memory_space<vmem>>, vector<8x4x128xf32>
      %252 = vector.broadcast %238 : f32 to vector<8x4x128xf32>
      %253 = arith.mulf %252, %251 : vector<8x4x128xf32>
      %254 = arith.addf %232, %253 : vector<8x4x128xf32>
      %c12_167 = arith.constant 12 : index
      %c0_168 = arith.constant 0 : index
      %c0_169 = arith.constant 0 : index
      %255 = vector.load %arg15[%c12_167, %c0_168, %c0_169] : memref<36x5x128xf32, #tpu.memory_space<vmem>>, vector<8x4x128xf32>
      %256 = vector.broadcast %241 : f32 to vector<8x4x128xf32>
      %257 = arith.mulf %256, %255 : vector<8x4x128xf32>
      %258 = arith.addf %254, %257 : vector<8x4x128xf32>
      %c12_170 = arith.constant 12 : index
      %c1_171 = arith.constant 1 : index
      %c0_172 = arith.constant 0 : index
      %259 = vector.load %arg14[%c12_170, %c1_171, %c0_172] : memref<36x6x128xf32, #tpu.memory_space<vmem>>, vector<8x4x128xf32>
      %260 = vector.broadcast %244 : f32 to vector<8x4x128xf32>
      %261 = arith.mulf %260, %259 : vector<8x4x128xf32>
      %262 = arith.addf %258, %261 : vector<8x4x128xf32>
      %c12_173 = arith.constant 12 : index
      %c1_174 = arith.constant 1 : index
      %c0_175 = arith.constant 0 : index
      %263 = vector.load %arg15[%c12_173, %c1_174, %c0_175] : memref<36x5x128xf32, #tpu.memory_space<vmem>>, vector<8x4x128xf32>
      %264 = vector.broadcast %247 : f32 to vector<8x4x128xf32>
      %265 = arith.mulf %264, %263 : vector<8x4x128xf32>
      %266 = arith.addf %262, %265 : vector<8x4x128xf32>
      %c12_176 = arith.constant 12 : index
      %c2_177 = arith.constant 2 : index
      %c0_178 = arith.constant 0 : index
      %267 = vector.load %arg14[%c12_176, %c2_177, %c0_178] : memref<36x6x128xf32, #tpu.memory_space<vmem>>, vector<8x4x128xf32>
      %268 = vector.broadcast %250 : f32 to vector<8x4x128xf32>
      %269 = arith.mulf %268, %267 : vector<8x4x128xf32>
      %270 = arith.addf %266, %269 : vector<8x4x128xf32>
      %c75_i32_179 = arith.constant 75 : i32
      %271 = arith.muli %arg17, %c75_i32_179 : i32
      %c25_i32_180 = arith.constant 25 : i32
      %272 = arith.addi %271, %c25_i32_180 : i32
      %c5_i32_181 = arith.constant 5 : i32
      %273 = arith.addi %272, %c5_i32_181 : i32
      %c0_i32_182 = arith.constant 0 : i32
      %274 = arith.addi %273, %c0_i32_182 : i32
      %275 = arith.index_cast %274 : i32 to index
      %276 = memref.load %arg4[%275] : memref<450xf32, #tpu.memory_space<smem>>
      %c1_i32_183 = arith.constant 1 : i32
      %277 = arith.addi %273, %c1_i32_183 : i32
      %278 = arith.index_cast %277 : i32 to index
      %279 = memref.load %arg4[%278] : memref<450xf32, #tpu.memory_space<smem>>
      %c2_i32_184 = arith.constant 2 : i32
      %280 = arith.addi %273, %c2_i32_184 : i32
      %281 = arith.index_cast %280 : i32 to index
      %282 = memref.load %arg4[%281] : memref<450xf32, #tpu.memory_space<smem>>
      %c3_i32_185 = arith.constant 3 : i32
      %283 = arith.addi %273, %c3_i32_185 : i32
      %284 = arith.index_cast %283 : i32 to index
      %285 = memref.load %arg4[%284] : memref<450xf32, #tpu.memory_space<smem>>
      %c4_i32_186 = arith.constant 4 : i32
      %286 = arith.addi %273, %c4_i32_186 : i32
      %287 = arith.index_cast %286 : i32 to index
      %288 = memref.load %arg4[%287] : memref<450xf32, #tpu.memory_space<smem>>
      %c13 = arith.constant 13 : index
      %c0_187 = arith.constant 0 : index
      %c0_188 = arith.constant 0 : index
      %289 = vector.load %arg14[%c13, %c0_187, %c0_188] : memref<36x6x128xf32, #tpu.memory_space<vmem>>, vector<8x4x128xf32>
      %290 = vector.broadcast %276 : f32 to vector<8x4x128xf32>
      %291 = arith.mulf %290, %289 : vector<8x4x128xf32>
      %292 = arith.addf %270, %291 : vector<8x4x128xf32>
      %c13_189 = arith.constant 13 : index
      %c0_190 = arith.constant 0 : index
      %c0_191 = arith.constant 0 : index
      %293 = vector.load %arg15[%c13_189, %c0_190, %c0_191] : memref<36x5x128xf32, #tpu.memory_space<vmem>>, vector<8x4x128xf32>
      %294 = vector.broadcast %279 : f32 to vector<8x4x128xf32>
      %295 = arith.mulf %294, %293 : vector<8x4x128xf32>
      %296 = arith.addf %292, %295 : vector<8x4x128xf32>
      %c13_192 = arith.constant 13 : index
      %c1_193 = arith.constant 1 : index
      %c0_194 = arith.constant 0 : index
      %297 = vector.load %arg14[%c13_192, %c1_193, %c0_194] : memref<36x6x128xf32, #tpu.memory_space<vmem>>, vector<8x4x128xf32>
      %298 = vector.broadcast %282 : f32 to vector<8x4x128xf32>
      %299 = arith.mulf %298, %297 : vector<8x4x128xf32>
      %300 = arith.addf %296, %299 : vector<8x4x128xf32>
      %c13_195 = arith.constant 13 : index
      %c1_196 = arith.constant 1 : index
      %c0_197 = arith.constant 0 : index
      %301 = vector.load %arg15[%c13_195, %c1_196, %c0_197] : memref<36x5x128xf32, #tpu.memory_space<vmem>>, vector<8x4x128xf32>
      %302 = vector.broadcast %285 : f32 to vector<8x4x128xf32>
      %303 = arith.mulf %302, %301 : vector<8x4x128xf32>
      %304 = arith.addf %300, %303 : vector<8x4x128xf32>
      %c13_198 = arith.constant 13 : index
      %c2_199 = arith.constant 2 : index
      %c0_200 = arith.constant 0 : index
      %305 = vector.load %arg14[%c13_198, %c2_199, %c0_200] : memref<36x6x128xf32, #tpu.memory_space<vmem>>, vector<8x4x128xf32>
      %306 = vector.broadcast %288 : f32 to vector<8x4x128xf32>
      %307 = arith.mulf %306, %305 : vector<8x4x128xf32>
      %308 = arith.addf %304, %307 : vector<8x4x128xf32>
      %c75_i32_201 = arith.constant 75 : i32
      %309 = arith.muli %arg17, %c75_i32_201 : i32
      %c25_i32_202 = arith.constant 25 : i32
      %310 = arith.addi %309, %c25_i32_202 : i32
      %c10_i32_203 = arith.constant 10 : i32
      %311 = arith.addi %310, %c10_i32_203 : i32
      %c0_i32_204 = arith.constant 0 : i32
      %312 = arith.addi %311, %c0_i32_204 : i32
      %313 = arith.index_cast %312 : i32 to index
      %314 = memref.load %arg4[%313] : memref<450xf32, #tpu.memory_space<smem>>
      %c1_i32_205 = arith.constant 1 : i32
      %315 = arith.addi %311, %c1_i32_205 : i32
      %316 = arith.index_cast %315 : i32 to index
      %317 = memref.load %arg4[%316] : memref<450xf32, #tpu.memory_space<smem>>
      %c2_i32_206 = arith.constant 2 : i32
      %318 = arith.addi %311, %c2_i32_206 : i32
      %319 = arith.index_cast %318 : i32 to index
      %320 = memref.load %arg4[%319] : memref<450xf32, #tpu.memory_space<smem>>
      %c3_i32_207 = arith.constant 3 : i32
      %321 = arith.addi %311, %c3_i32_207 : i32
      %322 = arith.index_cast %321 : i32 to index
      %323 = memref.load %arg4[%322] : memref<450xf32, #tpu.memory_space<smem>>
      %c4_i32_208 = arith.constant 4 : i32
      %324 = arith.addi %311, %c4_i32_208 : i32
      %325 = arith.index_cast %324 : i32 to index
      %326 = memref.load %arg4[%325] : memref<450xf32, #tpu.memory_space<smem>>
      %c14 = arith.constant 14 : index
      %c0_209 = arith.constant 0 : index
      %c0_210 = arith.constant 0 : index
      %327 = vector.load %arg14[%c14, %c0_209, %c0_210] : memref<36x6x128xf32, #tpu.memory_space<vmem>>, vector<8x4x128xf32>
      %328 = vector.broadcast %314 : f32 to vector<8x4x128xf32>
      %329 = arith.mulf %328, %327 : vector<8x4x128xf32>
      %330 = arith.addf %308, %329 : vector<8x4x128xf32>
      %c14_211 = arith.constant 14 : index
      %c0_212 = arith.constant 0 : index
      %c0_213 = arith.constant 0 : index
      %331 = vector.load %arg15[%c14_211, %c0_212, %c0_213] : memref<36x5x128xf32, #tpu.memory_space<vmem>>, vector<8x4x128xf32>
      %332 = vector.broadcast %317 : f32 to vector<8x4x128xf32>
      %333 = arith.mulf %332, %331 : vector<8x4x128xf32>
      %334 = arith.addf %330, %333 : vector<8x4x128xf32>
      %c14_214 = arith.constant 14 : index
      %c1_215 = arith.constant 1 : index
      %c0_216 = arith.constant 0 : index
      %335 = vector.load %arg14[%c14_214, %c1_215, %c0_216] : memref<36x6x128xf32, #tpu.memory_space<vmem>>, vector<8x4x128xf32>
      %336 = vector.broadcast %320 : f32 to vector<8x4x128xf32>
      %337 = arith.mulf %336, %335 : vector<8x4x128xf32>
      %338 = arith.addf %334, %337 : vector<8x4x128xf32>
      %c14_217 = arith.constant 14 : index
      %c1_218 = arith.constant 1 : index
      %c0_219 = arith.constant 0 : index
      %339 = vector.load %arg15[%c14_217, %c1_218, %c0_219] : memref<36x5x128xf32, #tpu.memory_space<vmem>>, vector<8x4x128xf32>
      %340 = vector.broadcast %323 : f32 to vector<8x4x128xf32>
      %341 = arith.mulf %340, %339 : vector<8x4x128xf32>
      %342 = arith.addf %338, %341 : vector<8x4x128xf32>
      %c14_220 = arith.constant 14 : index
      %c2_221 = arith.constant 2 : index
      %c0_222 = arith.constant 0 : index
      %343 = vector.load %arg14[%c14_220, %c2_221, %c0_222] : memref<36x6x128xf32, #tpu.memory_space<vmem>>, vector<8x4x128xf32>
      %344 = vector.broadcast %326 : f32 to vector<8x4x128xf32>
      %345 = arith.mulf %344, %343 : vector<8x4x128xf32>
      %346 = arith.addf %342, %345 : vector<8x4x128xf32>
      %c75_i32_223 = arith.constant 75 : i32
      %347 = arith.muli %arg17, %c75_i32_223 : i32
      %c25_i32_224 = arith.constant 25 : i32
      %348 = arith.addi %347, %c25_i32_224 : i32
      %c15_i32_225 = arith.constant 15 : i32
      %349 = arith.addi %348, %c15_i32_225 : i32
      %c0_i32_226 = arith.constant 0 : i32
      %350 = arith.addi %349, %c0_i32_226 : i32
      %351 = arith.index_cast %350 : i32 to index
      %352 = memref.load %arg4[%351] : memref<450xf32, #tpu.memory_space<smem>>
      %c1_i32_227 = arith.constant 1 : i32
      %353 = arith.addi %349, %c1_i32_227 : i32
      %354 = arith.index_cast %353 : i32 to index
      %355 = memref.load %arg4[%354] : memref<450xf32, #tpu.memory_space<smem>>
      %c2_i32_228 = arith.constant 2 : i32
      %356 = arith.addi %349, %c2_i32_228 : i32
      %357 = arith.index_cast %356 : i32 to index
      %358 = memref.load %arg4[%357] : memref<450xf32, #tpu.memory_space<smem>>
      %c3_i32_229 = arith.constant 3 : i32
      %359 = arith.addi %349, %c3_i32_229 : i32
      %360 = arith.index_cast %359 : i32 to index
      %361 = memref.load %arg4[%360] : memref<450xf32, #tpu.memory_space<smem>>
      %c4_i32_230 = arith.constant 4 : i32
      %362 = arith.addi %349, %c4_i32_230 : i32
      %363 = arith.index_cast %362 : i32 to index
      %364 = memref.load %arg4[%363] : memref<450xf32, #tpu.memory_space<smem>>
      %c15 = arith.constant 15 : index
      %c0_231 = arith.constant 0 : index
      %c0_232 = arith.constant 0 : index
      %365 = vector.load %arg14[%c15, %c0_231, %c0_232] : memref<36x6x128xf32, #tpu.memory_space<vmem>>, vector<8x4x128xf32>
      %366 = vector.broadcast %352 : f32 to vector<8x4x128xf32>
      %367 = arith.mulf %366, %365 : vector<8x4x128xf32>
      %368 = arith.addf %346, %367 : vector<8x4x128xf32>
      %c15_233 = arith.constant 15 : index
      %c0_234 = arith.constant 0 : index
      %c0_235 = arith.constant 0 : index
      %369 = vector.load %arg15[%c15_233, %c0_234, %c0_235] : memref<36x5x128xf32, #tpu.memory_space<vmem>>, vector<8x4x128xf32>
      %370 = vector.broadcast %355 : f32 to vector<8x4x128xf32>
      %371 = arith.mulf %370, %369 : vector<8x4x128xf32>
      %372 = arith.addf %368, %371 : vector<8x4x128xf32>
      %c15_236 = arith.constant 15 : index
      %c1_237 = arith.constant 1 : index
      %c0_238 = arith.constant 0 : index
      %373 = vector.load %arg14[%c15_236, %c1_237, %c0_238] : memref<36x6x128xf32, #tpu.memory_space<vmem>>, vector<8x4x128xf32>
      %374 = vector.broadcast %358 : f32 to vector<8x4x128xf32>
      %375 = arith.mulf %374, %373 : vector<8x4x128xf32>
      %376 = arith.addf %372, %375 : vector<8x4x128xf32>
      %c15_239 = arith.constant 15 : index
      %c1_240 = arith.constant 1 : index
      %c0_241 = arith.constant 0 : index
      %377 = vector.load %arg15[%c15_239, %c1_240, %c0_241] : memref<36x5x128xf32, #tpu.memory_space<vmem>>, vector<8x4x128xf32>
      %378 = vector.broadcast %361 : f32 to vector<8x4x128xf32>
      %379 = arith.mulf %378, %377 : vector<8x4x128xf32>
      %380 = arith.addf %376, %379 : vector<8x4x128xf32>
      %c15_242 = arith.constant 15 : index
      %c2_243 = arith.constant 2 : index
      %c0_244 = arith.constant 0 : index
      %381 = vector.load %arg14[%c15_242, %c2_243, %c0_244] : memref<36x6x128xf32, #tpu.memory_space<vmem>>, vector<8x4x128xf32>
      %382 = vector.broadcast %364 : f32 to vector<8x4x128xf32>
      %383 = arith.mulf %382, %381 : vector<8x4x128xf32>
      %384 = arith.addf %380, %383 : vector<8x4x128xf32>
      %c75_i32_245 = arith.constant 75 : i32
      %385 = arith.muli %arg17, %c75_i32_245 : i32
      %c25_i32_246 = arith.constant 25 : i32
      %386 = arith.addi %385, %c25_i32_246 : i32
      %c20_i32_247 = arith.constant 20 : i32
      %387 = arith.addi %386, %c20_i32_247 : i32
      %c0_i32_248 = arith.constant 0 : i32
      %388 = arith.addi %387, %c0_i32_248 : i32
      %389 = arith.index_cast %388 : i32 to index
      %390 = memref.load %arg4[%389] : memref<450xf32, #tpu.memory_space<smem>>
      %c1_i32_249 = arith.constant 1 : i32
      %391 = arith.addi %387, %c1_i32_249 : i32
      %392 = arith.index_cast %391 : i32 to index
      %393 = memref.load %arg4[%392] : memref<450xf32, #tpu.memory_space<smem>>
      %c2_i32_250 = arith.constant 2 : i32
      %394 = arith.addi %387, %c2_i32_250 : i32
      %395 = arith.index_cast %394 : i32 to index
      %396 = memref.load %arg4[%395] : memref<450xf32, #tpu.memory_space<smem>>
      %c3_i32_251 = arith.constant 3 : i32
      %397 = arith.addi %387, %c3_i32_251 : i32
      %398 = arith.index_cast %397 : i32 to index
      %399 = memref.load %arg4[%398] : memref<450xf32, #tpu.memory_space<smem>>
      %c4_i32_252 = arith.constant 4 : i32
      %400 = arith.addi %387, %c4_i32_252 : i32
      %401 = arith.index_cast %400 : i32 to index
      %402 = memref.load %arg4[%401] : memref<450xf32, #tpu.memory_space<smem>>
      %c16 = arith.constant 16 : index
      %c0_253 = arith.constant 0 : index
      %c0_254 = arith.constant 0 : index
      %403 = vector.load %arg14[%c16, %c0_253, %c0_254] : memref<36x6x128xf32, #tpu.memory_space<vmem>>, vector<8x4x128xf32>
      %404 = vector.broadcast %390 : f32 to vector<8x4x128xf32>
      %405 = arith.mulf %404, %403 : vector<8x4x128xf32>
      %406 = arith.addf %384, %405 : vector<8x4x128xf32>
      %c16_255 = arith.constant 16 : index
      %c0_256 = arith.constant 0 : index
      %c0_257 = arith.constant 0 : index
      %407 = vector.load %arg15[%c16_255, %c0_256, %c0_257] : memref<36x5x128xf32, #tpu.memory_space<vmem>>, vector<8x4x128xf32>
      %408 = vector.broadcast %393 : f32 to vector<8x4x128xf32>
      %409 = arith.mulf %408, %407 : vector<8x4x128xf32>
      %410 = arith.addf %406, %409 : vector<8x4x128xf32>
      %c16_258 = arith.constant 16 : index
      %c1_259 = arith.constant 1 : index
      %c0_260 = arith.constant 0 : index
      %411 = vector.load %arg14[%c16_258, %c1_259, %c0_260] : memref<36x6x128xf32, #tpu.memory_space<vmem>>, vector<8x4x128xf32>
      %412 = vector.broadcast %396 : f32 to vector<8x4x128xf32>
      %413 = arith.mulf %412, %411 : vector<8x4x128xf32>
      %414 = arith.addf %410, %413 : vector<8x4x128xf32>
      %c16_261 = arith.constant 16 : index
      %c1_262 = arith.constant 1 : index
      %c0_263 = arith.constant 0 : index
      %415 = vector.load %arg15[%c16_261, %c1_262, %c0_263] : memref<36x5x128xf32, #tpu.memory_space<vmem>>, vector<8x4x128xf32>
      %416 = vector.broadcast %399 : f32 to vector<8x4x128xf32>
      %417 = arith.mulf %416, %415 : vector<8x4x128xf32>
      %418 = arith.addf %414, %417 : vector<8x4x128xf32>
      %c16_264 = arith.constant 16 : index
      %c2_265 = arith.constant 2 : index
      %c0_266 = arith.constant 0 : index
      %419 = vector.load %arg14[%c16_264, %c2_265, %c0_266] : memref<36x6x128xf32, #tpu.memory_space<vmem>>, vector<8x4x128xf32>
      %420 = vector.broadcast %402 : f32 to vector<8x4x128xf32>
      %421 = arith.mulf %420, %419 : vector<8x4x128xf32>
      %422 = arith.addf %418, %421 : vector<8x4x128xf32>
      %c75_i32_267 = arith.constant 75 : i32
      %423 = arith.muli %arg17, %c75_i32_267 : i32
      %c50_i32 = arith.constant 50 : i32
      %424 = arith.addi %423, %c50_i32 : i32
      %c0_i32_268 = arith.constant 0 : i32
      %425 = arith.addi %424, %c0_i32_268 : i32
      %c0_i32_269 = arith.constant 0 : i32
      %426 = arith.addi %425, %c0_i32_269 : i32
      %427 = arith.index_cast %426 : i32 to index
      %428 = memref.load %arg4[%427] : memref<450xf32, #tpu.memory_space<smem>>
      %c1_i32_270 = arith.constant 1 : i32
      %429 = arith.addi %425, %c1_i32_270 : i32
      %430 = arith.index_cast %429 : i32 to index
      %431 = memref.load %arg4[%430] : memref<450xf32, #tpu.memory_space<smem>>
      %c2_i32_271 = arith.constant 2 : i32
      %432 = arith.addi %425, %c2_i32_271 : i32
      %433 = arith.index_cast %432 : i32 to index
      %434 = memref.load %arg4[%433] : memref<450xf32, #tpu.memory_space<smem>>
      %c3_i32_272 = arith.constant 3 : i32
      %435 = arith.addi %425, %c3_i32_272 : i32
      %436 = arith.index_cast %435 : i32 to index
      %437 = memref.load %arg4[%436] : memref<450xf32, #tpu.memory_space<smem>>
      %c4_i32_273 = arith.constant 4 : i32
      %438 = arith.addi %425, %c4_i32_273 : i32
      %439 = arith.index_cast %438 : i32 to index
      %440 = memref.load %arg4[%439] : memref<450xf32, #tpu.memory_space<smem>>
      %c24 = arith.constant 24 : index
      %c0_274 = arith.constant 0 : index
      %c0_275 = arith.constant 0 : index
      %441 = vector.load %arg14[%c24, %c0_274, %c0_275] : memref<36x6x128xf32, #tpu.memory_space<vmem>>, vector<8x4x128xf32>
      %442 = vector.broadcast %428 : f32 to vector<8x4x128xf32>
      %443 = arith.mulf %442, %441 : vector<8x4x128xf32>
      %444 = arith.addf %422, %443 : vector<8x4x128xf32>
      %c24_276 = arith.constant 24 : index
      %c0_277 = arith.constant 0 : index
      %c0_278 = arith.constant 0 : index
      %445 = vector.load %arg15[%c24_276, %c0_277, %c0_278] : memref<36x5x128xf32, #tpu.memory_space<vmem>>, vector<8x4x128xf32>
      %446 = vector.broadcast %431 : f32 to vector<8x4x128xf32>
      %447 = arith.mulf %446, %445 : vector<8x4x128xf32>
      %448 = arith.addf %444, %447 : vector<8x4x128xf32>
      %c24_279 = arith.constant 24 : index
      %c1_280 = arith.constant 1 : index
      %c0_281 = arith.constant 0 : index
      %449 = vector.load %arg14[%c24_279, %c1_280, %c0_281] : memref<36x6x128xf32, #tpu.memory_space<vmem>>, vector<8x4x128xf32>
      %450 = vector.broadcast %434 : f32 to vector<8x4x128xf32>
      %451 = arith.mulf %450, %449 : vector<8x4x128xf32>
      %452 = arith.addf %448, %451 : vector<8x4x128xf32>
      %c24_282 = arith.constant 24 : index
      %c1_283 = arith.constant 1 : index
      %c0_284 = arith.constant 0 : index
      %453 = vector.load %arg15[%c24_282, %c1_283, %c0_284] : memref<36x5x128xf32, #tpu.memory_space<vmem>>, vector<8x4x128xf32>
      %454 = vector.broadcast %437 : f32 to vector<8x4x128xf32>
      %455 = arith.mulf %454, %453 : vector<8x4x128xf32>
      %456 = arith.addf %452, %455 : vector<8x4x128xf32>
      %c24_285 = arith.constant 24 : index
      %c2_286 = arith.constant 2 : index
      %c0_287 = arith.constant 0 : index
      %457 = vector.load %arg14[%c24_285, %c2_286, %c0_287] : memref<36x6x128xf32, #tpu.memory_space<vmem>>, vector<8x4x128xf32>
      %458 = vector.broadcast %440 : f32 to vector<8x4x128xf32>
      %459 = arith.mulf %458, %457 : vector<8x4x128xf32>
      %460 = arith.addf %456, %459 : vector<8x4x128xf32>
      %c75_i32_288 = arith.constant 75 : i32
      %461 = arith.muli %arg17, %c75_i32_288 : i32
      %c50_i32_289 = arith.constant 50 : i32
      %462 = arith.addi %461, %c50_i32_289 : i32
      %c5_i32_290 = arith.constant 5 : i32
      %463 = arith.addi %462, %c5_i32_290 : i32
      %c0_i32_291 = arith.constant 0 : i32
      %464 = arith.addi %463, %c0_i32_291 : i32
      %465 = arith.index_cast %464 : i32 to index
      %466 = memref.load %arg4[%465] : memref<450xf32, #tpu.memory_space<smem>>
      %c1_i32_292 = arith.constant 1 : i32
      %467 = arith.addi %463, %c1_i32_292 : i32
      %468 = arith.index_cast %467 : i32 to index
      %469 = memref.load %arg4[%468] : memref<450xf32, #tpu.memory_space<smem>>
      %c2_i32_293 = arith.constant 2 : i32
      %470 = arith.addi %463, %c2_i32_293 : i32
      %471 = arith.index_cast %470 : i32 to index
      %472 = memref.load %arg4[%471] : memref<450xf32, #tpu.memory_space<smem>>
      %c3_i32_294 = arith.constant 3 : i32
      %473 = arith.addi %463, %c3_i32_294 : i32
      %474 = arith.index_cast %473 : i32 to index
      %475 = memref.load %arg4[%474] : memref<450xf32, #tpu.memory_space<smem>>
      %c4_i32_295 = arith.constant 4 : i32
      %476 = arith.addi %463, %c4_i32_295 : i32
      %477 = arith.index_cast %476 : i32 to index
      %478 = memref.load %arg4[%477] : memref<450xf32, #tpu.memory_space<smem>>
      %c25 = arith.constant 25 : index
      %c0_296 = arith.constant 0 : index
      %c0_297 = arith.constant 0 : index
      %479 = vector.load %arg14[%c25, %c0_296, %c0_297] : memref<36x6x128xf32, #tpu.memory_space<vmem>>, vector<8x4x128xf32>
      %480 = vector.broadcast %466 : f32 to vector<8x4x128xf32>
      %481 = arith.mulf %480, %479 : vector<8x4x128xf32>
      %482 = arith.addf %460, %481 : vector<8x4x128xf32>
      %c25_298 = arith.constant 25 : index
      %c0_299 = arith.constant 0 : index
      %c0_300 = arith.constant 0 : index
      %483 = vector.load %arg15[%c25_298, %c0_299, %c0_300] : memref<36x5x128xf32, #tpu.memory_space<vmem>>, vector<8x4x128xf32>
      %484 = vector.broadcast %469 : f32 to vector<8x4x128xf32>
      %485 = arith.mulf %484, %483 : vector<8x4x128xf32>
      %486 = arith.addf %482, %485 : vector<8x4x128xf32>
      %c25_301 = arith.constant 25 : index
      %c1_302 = arith.constant 1 : index
      %c0_303 = arith.constant 0 : index
      %487 = vector.load %arg14[%c25_301, %c1_302, %c0_303] : memref<36x6x128xf32, #tpu.memory_space<vmem>>, vector<8x4x128xf32>
      %488 = vector.broadcast %472 : f32 to vector<8x4x128xf32>
      %489 = arith.mulf %488, %487 : vector<8x4x128xf32>
      %490 = arith.addf %486, %489 : vector<8x4x128xf32>
      %c25_304 = arith.constant 25 : index
      %c1_305 = arith.constant 1 : index
      %c0_306 = arith.constant 0 : index
      %491 = vector.load %arg15[%c25_304, %c1_305, %c0_306] : memref<36x5x128xf32, #tpu.memory_space<vmem>>, vector<8x4x128xf32>
      %492 = vector.broadcast %475 : f32 to vector<8x4x128xf32>
      %493 = arith.mulf %492, %491 : vector<8x4x128xf32>
      %494 = arith.addf %490, %493 : vector<8x4x128xf32>
      %c25_307 = arith.constant 25 : index
      %c2_308 = arith.constant 2 : index
      %c0_309 = arith.constant 0 : index
      %495 = vector.load %arg14[%c25_307, %c2_308, %c0_309] : memref<36x6x128xf32, #tpu.memory_space<vmem>>, vector<8x4x128xf32>
      %496 = vector.broadcast %478 : f32 to vector<8x4x128xf32>
      %497 = arith.mulf %496, %495 : vector<8x4x128xf32>
      %498 = arith.addf %494, %497 : vector<8x4x128xf32>
      %c75_i32_310 = arith.constant 75 : i32
      %499 = arith.muli %arg17, %c75_i32_310 : i32
      %c50_i32_311 = arith.constant 50 : i32
      %500 = arith.addi %499, %c50_i32_311 : i32
      %c10_i32_312 = arith.constant 10 : i32
      %501 = arith.addi %500, %c10_i32_312 : i32
      %c0_i32_313 = arith.constant 0 : i32
      %502 = arith.addi %501, %c0_i32_313 : i32
      %503 = arith.index_cast %502 : i32 to index
      %504 = memref.load %arg4[%503] : memref<450xf32, #tpu.memory_space<smem>>
      %c1_i32_314 = arith.constant 1 : i32
      %505 = arith.addi %501, %c1_i32_314 : i32
      %506 = arith.index_cast %505 : i32 to index
      %507 = memref.load %arg4[%506] : memref<450xf32, #tpu.memory_space<smem>>
      %c2_i32_315 = arith.constant 2 : i32
      %508 = arith.addi %501, %c2_i32_315 : i32
      %509 = arith.index_cast %508 : i32 to index
      %510 = memref.load %arg4[%509] : memref<450xf32, #tpu.memory_space<smem>>
      %c3_i32_316 = arith.constant 3 : i32
      %511 = arith.addi %501, %c3_i32_316 : i32
      %512 = arith.index_cast %511 : i32 to index
      %513 = memref.load %arg4[%512] : memref<450xf32, #tpu.memory_space<smem>>
      %c4_i32_317 = arith.constant 4 : i32
      %514 = arith.addi %501, %c4_i32_317 : i32
      %515 = arith.index_cast %514 : i32 to index
      %516 = memref.load %arg4[%515] : memref<450xf32, #tpu.memory_space<smem>>
      %c26 = arith.constant 26 : index
      %c0_318 = arith.constant 0 : index
      %c0_319 = arith.constant 0 : index
      %517 = vector.load %arg14[%c26, %c0_318, %c0_319] : memref<36x6x128xf32, #tpu.memory_space<vmem>>, vector<8x4x128xf32>
      %518 = vector.broadcast %504 : f32 to vector<8x4x128xf32>
      %519 = arith.mulf %518, %517 : vector<8x4x128xf32>
      %520 = arith.addf %498, %519 : vector<8x4x128xf32>
      %c26_320 = arith.constant 26 : index
      %c0_321 = arith.constant 0 : index
      %c0_322 = arith.constant 0 : index
      %521 = vector.load %arg15[%c26_320, %c0_321, %c0_322] : memref<36x5x128xf32, #tpu.memory_space<vmem>>, vector<8x4x128xf32>
      %522 = vector.broadcast %507 : f32 to vector<8x4x128xf32>
      %523 = arith.mulf %522, %521 : vector<8x4x128xf32>
      %524 = arith.addf %520, %523 : vector<8x4x128xf32>
      %c26_323 = arith.constant 26 : index
      %c1_324 = arith.constant 1 : index
      %c0_325 = arith.constant 0 : index
      %525 = vector.load %arg14[%c26_323, %c1_324, %c0_325] : memref<36x6x128xf32, #tpu.memory_space<vmem>>, vector<8x4x128xf32>
      %526 = vector.broadcast %510 : f32 to vector<8x4x128xf32>
      %527 = arith.mulf %526, %525 : vector<8x4x128xf32>
      %528 = arith.addf %524, %527 : vector<8x4x128xf32>
      %c26_326 = arith.constant 26 : index
      %c1_327 = arith.constant 1 : index
      %c0_328 = arith.constant 0 : index
      %529 = vector.load %arg15[%c26_326, %c1_327, %c0_328] : memref<36x5x128xf32, #tpu.memory_space<vmem>>, vector<8x4x128xf32>
      %530 = vector.broadcast %513 : f32 to vector<8x4x128xf32>
      %531 = arith.mulf %530, %529 : vector<8x4x128xf32>
      %532 = arith.addf %528, %531 : vector<8x4x128xf32>
      %c26_329 = arith.constant 26 : index
      %c2_330 = arith.constant 2 : index
      %c0_331 = arith.constant 0 : index
      %533 = vector.load %arg14[%c26_329, %c2_330, %c0_331] : memref<36x6x128xf32, #tpu.memory_space<vmem>>, vector<8x4x128xf32>
      %534 = vector.broadcast %516 : f32 to vector<8x4x128xf32>
      %535 = arith.mulf %534, %533 : vector<8x4x128xf32>
      %536 = arith.addf %532, %535 : vector<8x4x128xf32>
      %c75_i32_332 = arith.constant 75 : i32
      %537 = arith.muli %arg17, %c75_i32_332 : i32
      %c50_i32_333 = arith.constant 50 : i32
      %538 = arith.addi %537, %c50_i32_333 : i32
      %c15_i32_334 = arith.constant 15 : i32
      %539 = arith.addi %538, %c15_i32_334 : i32
      %c0_i32_335 = arith.constant 0 : i32
      %540 = arith.addi %539, %c0_i32_335 : i32
      %541 = arith.index_cast %540 : i32 to index
      %542 = memref.load %arg4[%541] : memref<450xf32, #tpu.memory_space<smem>>
      %c1_i32_336 = arith.constant 1 : i32
      %543 = arith.addi %539, %c1_i32_336 : i32
      %544 = arith.index_cast %543 : i32 to index
      %545 = memref.load %arg4[%544] : memref<450xf32, #tpu.memory_space<smem>>
      %c2_i32_337 = arith.constant 2 : i32
      %546 = arith.addi %539, %c2_i32_337 : i32
      %547 = arith.index_cast %546 : i32 to index
      %548 = memref.load %arg4[%547] : memref<450xf32, #tpu.memory_space<smem>>
      %c3_i32_338 = arith.constant 3 : i32
      %549 = arith.addi %539, %c3_i32_338 : i32
      %550 = arith.index_cast %549 : i32 to index
      %551 = memref.load %arg4[%550] : memref<450xf32, #tpu.memory_space<smem>>
      %c4_i32_339 = arith.constant 4 : i32
      %552 = arith.addi %539, %c4_i32_339 : i32
      %553 = arith.index_cast %552 : i32 to index
      %554 = memref.load %arg4[%553] : memref<450xf32, #tpu.memory_space<smem>>
      %c27 = arith.constant 27 : index
      %c0_340 = arith.constant 0 : index
      %c0_341 = arith.constant 0 : index
      %555 = vector.load %arg14[%c27, %c0_340, %c0_341] : memref<36x6x128xf32, #tpu.memory_space<vmem>>, vector<8x4x128xf32>
      %556 = vector.broadcast %542 : f32 to vector<8x4x128xf32>
      %557 = arith.mulf %556, %555 : vector<8x4x128xf32>
      %558 = arith.addf %536, %557 : vector<8x4x128xf32>
      %c27_342 = arith.constant 27 : index
      %c0_343 = arith.constant 0 : index
      %c0_344 = arith.constant 0 : index
      %559 = vector.load %arg15[%c27_342, %c0_343, %c0_344] : memref<36x5x128xf32, #tpu.memory_space<vmem>>, vector<8x4x128xf32>
      %560 = vector.broadcast %545 : f32 to vector<8x4x128xf32>
      %561 = arith.mulf %560, %559 : vector<8x4x128xf32>
      %562 = arith.addf %558, %561 : vector<8x4x128xf32>
      %c27_345 = arith.constant 27 : index
      %c1_346 = arith.constant 1 : index
      %c0_347 = arith.constant 0 : index
      %563 = vector.load %arg14[%c27_345, %c1_346, %c0_347] : memref<36x6x128xf32, #tpu.memory_space<vmem>>, vector<8x4x128xf32>
      %564 = vector.broadcast %548 : f32 to vector<8x4x128xf32>
      %565 = arith.mulf %564, %563 : vector<8x4x128xf32>
      %566 = arith.addf %562, %565 : vector<8x4x128xf32>
      %c27_348 = arith.constant 27 : index
      %c1_349 = arith.constant 1 : index
      %c0_350 = arith.constant 0 : index
      %567 = vector.load %arg15[%c27_348, %c1_349, %c0_350] : memref<36x5x128xf32, #tpu.memory_space<vmem>>, vector<8x4x128xf32>
      %568 = vector.broadcast %551 : f32 to vector<8x4x128xf32>
      %569 = arith.mulf %568, %567 : vector<8x4x128xf32>
      %570 = arith.addf %566, %569 : vector<8x4x128xf32>
      %c27_351 = arith.constant 27 : index
      %c2_352 = arith.constant 2 : index
      %c0_353 = arith.constant 0 : index
      %571 = vector.load %arg14[%c27_351, %c2_352, %c0_353] : memref<36x6x128xf32, #tpu.memory_space<vmem>>, vector<8x4x128xf32>
      %572 = vector.broadcast %554 : f32 to vector<8x4x128xf32>
      %573 = arith.mulf %572, %571 : vector<8x4x128xf32>
      %574 = arith.addf %570, %573 : vector<8x4x128xf32>
      %c75_i32_354 = arith.constant 75 : i32
      %575 = arith.muli %arg17, %c75_i32_354 : i32
      %c50_i32_355 = arith.constant 50 : i32
      %576 = arith.addi %575, %c50_i32_355 : i32
      %c20_i32_356 = arith.constant 20 : i32
      %577 = arith.addi %576, %c20_i32_356 : i32
      %c0_i32_357 = arith.constant 0 : i32
      %578 = arith.addi %577, %c0_i32_357 : i32
      %579 = arith.index_cast %578 : i32 to index
      %580 = memref.load %arg4[%579] : memref<450xf32, #tpu.memory_space<smem>>
      %c1_i32_358 = arith.constant 1 : i32
      %581 = arith.addi %577, %c1_i32_358 : i32
      %582 = arith.index_cast %581 : i32 to index
      %583 = memref.load %arg4[%582] : memref<450xf32, #tpu.memory_space<smem>>
      %c2_i32_359 = arith.constant 2 : i32
      %584 = arith.addi %577, %c2_i32_359 : i32
      %585 = arith.index_cast %584 : i32 to index
      %586 = memref.load %arg4[%585] : memref<450xf32, #tpu.memory_space<smem>>
      %c3_i32_360 = arith.constant 3 : i32
      %587 = arith.addi %577, %c3_i32_360 : i32
      %588 = arith.index_cast %587 : i32 to index
      %589 = memref.load %arg4[%588] : memref<450xf32, #tpu.memory_space<smem>>
      %c4_i32_361 = arith.constant 4 : i32
      %590 = arith.addi %577, %c4_i32_361 : i32
      %591 = arith.index_cast %590 : i32 to index
      %592 = memref.load %arg4[%591] : memref<450xf32, #tpu.memory_space<smem>>
      %c28_362 = arith.constant 28 : index
      %c0_363 = arith.constant 0 : index
      %c0_364 = arith.constant 0 : index
      %593 = vector.load %arg14[%c28_362, %c0_363, %c0_364] : memref<36x6x128xf32, #tpu.memory_space<vmem>>, vector<8x4x128xf32>
      %594 = vector.broadcast %580 : f32 to vector<8x4x128xf32>
      %595 = arith.mulf %594, %593 : vector<8x4x128xf32>
      %596 = arith.addf %574, %595 : vector<8x4x128xf32>
      %c28_365 = arith.constant 28 : index
      %c0_366 = arith.constant 0 : index
      %c0_367 = arith.constant 0 : index
      %597 = vector.load %arg15[%c28_365, %c0_366, %c0_367] : memref<36x5x128xf32, #tpu.memory_space<vmem>>, vector<8x4x128xf32>
      %598 = vector.broadcast %583 : f32 to vector<8x4x128xf32>
      %599 = arith.mulf %598, %597 : vector<8x4x128xf32>
      %600 = arith.addf %596, %599 : vector<8x4x128xf32>
      %c28_368 = arith.constant 28 : index
      %c1_369 = arith.constant 1 : index
      %c0_370 = arith.constant 0 : index
      %601 = vector.load %arg14[%c28_368, %c1_369, %c0_370] : memref<36x6x128xf32, #tpu.memory_space<vmem>>, vector<8x4x128xf32>
      %602 = vector.broadcast %586 : f32 to vector<8x4x128xf32>
      %603 = arith.mulf %602, %601 : vector<8x4x128xf32>
      %604 = arith.addf %600, %603 : vector<8x4x128xf32>
      %c28_371 = arith.constant 28 : index
      %c1_372 = arith.constant 1 : index
      %c0_373 = arith.constant 0 : index
      %605 = vector.load %arg15[%c28_371, %c1_372, %c0_373] : memref<36x5x128xf32, #tpu.memory_space<vmem>>, vector<8x4x128xf32>
      %606 = vector.broadcast %589 : f32 to vector<8x4x128xf32>
      %607 = arith.mulf %606, %605 : vector<8x4x128xf32>
      %608 = arith.addf %604, %607 : vector<8x4x128xf32>
      %c28_374 = arith.constant 28 : index
      %c2_375 = arith.constant 2 : index
      %c0_376 = arith.constant 0 : index
      %609 = vector.load %arg14[%c28_374, %c2_375, %c0_376] : memref<36x6x128xf32, #tpu.memory_space<vmem>>, vector<8x4x128xf32>
      %610 = vector.broadcast %592 : f32 to vector<8x4x128xf32>
      %611 = arith.mulf %610, %609 : vector<8x4x128xf32>
      %612 = arith.addf %608, %611 : vector<8x4x128xf32>
      %613 = vector.shape_cast %612 : vector<8x4x128xf32> to vector<4x2x4x128xf32>
      %614 = vector.extract_strided_slice %613 {offsets = [0, 0, 0, 0], sizes = [4, 1, 4, 128], strides = [1, 1, 1, 1]} : vector<4x2x4x128xf32> to vector<4x1x4x128xf32>
      %615 = vector.shape_cast %614 : vector<4x1x4x128xf32> to vector<4x4x128xf32>
      %616 = vector.extract_strided_slice %613 {offsets = [0, 1, 0, 0], sizes = [4, 1, 4, 128], strides = [1, 1, 1, 1]} : vector<4x2x4x128xf32> to vector<4x1x4x128xf32>
      %617 = vector.shape_cast %616 : vector<4x1x4x128xf32> to vector<4x4x128xf32>
      %618 = arith.addf %615, %617 : vector<4x4x128xf32>
      %619 = arith.index_cast %arg17 : i32 to index
      %620 = memref.load %arg5[%619] : memref<6xf32, #tpu.memory_space<smem>>
      %621 = vector.broadcast %620 : f32 to vector<4x4x128xf32>
      %622 = arith.addf %618, %621 : vector<4x4x128xf32>
      %623 = vector.extract_strided_slice %622 {offsets = [0, 0, 0], sizes = [1, 4, 128], strides = [1, 1, 1]} : vector<4x4x128xf32> to vector<1x4x128xf32>
      %624 = vector.shape_cast %623 : vector<1x4x128xf32> to vector<4x128xf32>
      %c16_i32 = arith.constant 16 : i32
      %625 = arith.muli %arg17, %c16_i32 : i32
      %c0_i32_377 = arith.constant 0 : i32
      %626 = arith.addi %625, %c0_i32_377 : i32
      %627 = arith.index_cast %626 : i32 to index
      %c0_378 = arith.constant 0 : index
      %628 = vector.load %arg16[%627, %c0_378] : memref<96x128xf32, #tpu.memory_space<vmem>>, vector<4x128xf32>
      tpu.vector_store %arg16[%627, %c0_378], %624 {strides = array<i32>} : memref<96x128xf32, #tpu.memory_space<vmem>>, vector<4x128xf32>,
      %629 = vector.extract_strided_slice %622 {offsets = [1, 0, 0], sizes = [1, 4, 128], strides = [1, 1, 1]} : vector<4x4x128xf32> to vector<1x4x128xf32>
      %630 = vector.shape_cast %629 : vector<1x4x128xf32> to vector<4x128xf32>
      %c16_i32_379 = arith.constant 16 : i32
      %631 = arith.muli %arg17, %c16_i32_379 : i32
      %c4_i32_380 = arith.constant 4 : i32
      %632 = arith.addi %631, %c4_i32_380 : i32
      %633 = arith.index_cast %632 : i32 to index
      %c0_381 = arith.constant 0 : index
      %634 = vector.load %arg16[%633, %c0_381] : memref<96x128xf32, #tpu.memory_space<vmem>>, vector<4x128xf32>
      tpu.vector_store %arg16[%633, %c0_381], %630 {strides = array<i32>} : memref<96x128xf32, #tpu.memory_space<vmem>>, vector<4x128xf32>,
      %635 = vector.extract_strided_slice %622 {offsets = [2, 0, 0], sizes = [1, 4, 128], strides = [1, 1, 1]} : vector<4x4x128xf32> to vector<1x4x128xf32>
      %636 = vector.shape_cast %635 : vector<1x4x128xf32> to vector<4x128xf32>
      %c16_i32_382 = arith.constant 16 : i32
      %637 = arith.muli %arg17, %c16_i32_382 : i32
      %c8_i32 = arith.constant 8 : i32
      %638 = arith.addi %637, %c8_i32 : i32
      %639 = arith.index_cast %638 : i32 to index
      %c0_383 = arith.constant 0 : index
      %640 = vector.load %arg16[%639, %c0_383] : memref<96x128xf32, #tpu.memory_space<vmem>>, vector<4x128xf32>
      tpu.vector_store %arg16[%639, %c0_383], %636 {strides = array<i32>} : memref<96x128xf32, #tpu.memory_space<vmem>>, vector<4x128xf32>,
      %641 = vector.extract_strided_slice %622 {offsets = [3, 0, 0], sizes = [1, 4, 128], strides = [1, 1, 1]} : vector<4x4x128xf32> to vector<1x4x128xf32>
      %642 = vector.shape_cast %641 : vector<1x4x128xf32> to vector<4x128xf32>
      %c16_i32_384 = arith.constant 16 : i32
      %643 = arith.muli %arg17, %c16_i32_384 : i32
      %c12_i32 = arith.constant 12 : i32
      %644 = arith.addi %643, %c12_i32 : i32
      %645 = arith.index_cast %644 : i32 to index
      %c0_385 = arith.constant 0 : index
      %646 = vector.load %arg16[%645, %c0_385] : memref<96x128xf32, #tpu.memory_space<vmem>>, vector<4x128xf32>
      tpu.vector_store %arg16[%645, %c0_385], %642 {strides = array<i32>} : memref<96x128xf32, #tpu.memory_space<vmem>>, vector<4x128xf32>,
    }
    %c6_i32_35 = arith.constant 6 : i32
    %c0_36 = arith.constant 0 : index
    %c0_37 = arith.constant 0 : index
    %18 = vector.load %arg6[%c0_36, %c0_37] : memref<32x96xf32, #tpu.memory_space<vmem>>, vector<32x96xf32>
    %c0_38 = arith.constant 0 : index
    %c0_39 = arith.constant 0 : index
    %19 = vector.load %arg16[%c0_38, %c0_39] : memref<96x128xf32, #tpu.memory_space<vmem>>, vector<96x128xf32>
    %cst = arith.constant dense<0.000000e+00> : vector<32x128xf32>
    %20 = tpu.matmul %18, %19, %cst {dimension_numbers = #tpu.dot_dimension_numbers<[1], [0], [0], [1], [0, 0, 1, 1], [], []>, precision = #tpu.contract_precision<fp32>} : vector<32x96xf32>, vector<96x128xf32>, vector<32x128xf32> -> vector<32x128xf32>
    %c0_40 = arith.constant 0 : index
    %c0_41 = arith.constant 0 : index
    %21 = vector.load %arg7[%c0_40, %c0_41] : memref<32x1xf32, #tpu.memory_space<vmem>>, vector<32x1xf32>
    %22 = vector.broadcast %21 : vector<32x1xf32> to vector<32x128xf32>
    %23 = arith.addf %20, %22 : vector<32x128xf32>
    %cst_42 = arith.constant 0.000000e+00 : f32
    %24 = vector.broadcast %cst_42 : f32 to vector<32x128xf32>
    %25 = arith.maximumf %23, %24 : vector<32x128xf32>
    %c0_43 = arith.constant 0 : index
    %c0_44 = arith.constant 0 : index
    %26 = vector.load %arg8[%c0_43, %c0_44] : memref<10x32xf32, #tpu.memory_space<vmem>>, vector<10x32xf32>
    %cst_45 = arith.constant dense<0.000000e+00> : vector<10x128xf32>
    %27 = tpu.matmul %26, %25, %cst_45 {dimension_numbers = #tpu.dot_dimension_numbers<[1], [0], [0], [1], [0, 0, 1, 1], [], []>, precision = #tpu.contract_precision<fp32>} : vector<10x32xf32>, vector<32x128xf32>, vector<10x128xf32> -> vector<10x128xf32>
    %c0_46 = arith.constant 0 : index
    %c0_47 = arith.constant 0 : index
    %28 = vector.load %arg9[%c0_46, %c0_47] : memref<10x1xf32, #tpu.memory_space<vmem>>, vector<10x1xf32>
    %29 = vector.broadcast %28 : vector<10x1xf32> to vector<10x128xf32>
    %30 = arith.addf %27, %29 : vector<10x128xf32>
    %cst_48 = arith.constant dense<0xFF800000> : vector<128xf32>
    %31 = vector.multi_reduction <maximumf>, %30, %cst_48 [0] : vector<10x128xf32> to vector<128xf32>
    %32 = vector.shape_cast %31 : vector<128xf32> to vector<1x128xf32>
    %33 = vector.broadcast %32 : vector<1x128xf32> to vector<10x128xf32>
    %34 = arith.subf %30, %33 : vector<10x128xf32>
    %35 = math.exp %34 : vector<10x128xf32>
    %cst_49 = arith.constant dense<0.000000e+00> : vector<128xf32>
    %36 = vector.multi_reduction <add>, %35, %cst_49 [0] : vector<10x128xf32> to vector<128xf32>
    %37 = vector.shape_cast %36 : vector<128xf32> to vector<1x128xf32>
    %38 = math.log %37 : vector<1x128xf32>
    %39 = vector.broadcast %38 : vector<1x128xf32> to vector<10x128xf32>
    %40 = arith.subf %34, %39 : vector<10x128xf32>
    %c0_50 = arith.constant 0 : index
    %c0_51 = arith.constant 0 : index
    %41 = vector.load %arg10[%c0_50, %c0_51] : memref<10x128xf32, #tpu.memory_space<vmem>>, vector<10x128xf32>
    tpu.vector_store %arg10[%c0_50, %c0_51], %40 {strides = array<i32>} : memref<10x128xf32, #tpu.memory_space<vmem>>, vector<10x128xf32>,
    return
  }
  func.func @transform_0(%arg0: i32) -> (i32, i32, i32) {
    %c0_i32 = arith.constant 0 : i32
    %c0_i32_0 = arith.constant 0 : i32
    %c0_i32_1 = arith.constant 0 : i32
    return %c0_i32, %c0_i32_0, %arg0 : i32, i32, i32
  }
  func.func @transform_1(%arg0: i32) -> i32 {
    %c0_i32 = arith.constant 0 : i32
    %c0_i32_0 = arith.constant 0 : i32
    return %c0_i32 : i32
  }
  func.func @transform_2(%arg0: i32) -> i32 {
    %c0_i32 = arith.constant 0 : i32
    %c0_i32_0 = arith.constant 0 : i32
    return %c0_i32 : i32
  }
  func.func @transform_3(%arg0: i32) -> i32 {
    %c0_i32 = arith.constant 0 : i32
    %c0_i32_0 = arith.constant 0 : i32
    return %c0_i32 : i32
  }
  func.func @transform_4(%arg0: i32) -> i32 {
    %c0_i32 = arith.constant 0 : i32
    %c0_i32_0 = arith.constant 0 : i32
    return %c0_i32 : i32
  }
  func.func @transform_5(%arg0: i32) -> (i32, i32) {
    %c0_i32 = arith.constant 0 : i32
    %c0_i32_0 = arith.constant 0 : i32
    %c0_i32_1 = arith.constant 0 : i32
    return %c0_i32, %c0_i32_0 : i32, i32
  }
  func.func @transform_6(%arg0: i32) -> (i32, i32) {
    %c0_i32 = arith.constant 0 : i32
    %c0_i32_0 = arith.constant 0 : i32
    %c0_i32_1 = arith.constant 0 : i32
    return %c0_i32, %c0_i32_0 : i32, i32
  }
  func.func @transform_7(%arg0: i32) -> (i32, i32) {
    %c0_i32 = arith.constant 0 : i32
    %c0_i32_0 = arith.constant 0 : i32
    %c0_i32_1 = arith.constant 0 : i32
    return %c0_i32, %c0_i32_0 : i32, i32
  }
  func.func @transform_8(%arg0: i32) -> (i32, i32) {
    %c0_i32 = arith.constant 0 : i32
    %c0_i32_0 = arith.constant 0 : i32
    %c0_i32_1 = arith.constant 0 : i32
    return %c0_i32, %c0_i32_0 : i32, i32
  }
  func.func @transform_9(%arg0: i32) -> (i32, i32) {
    %c0_i32 = arith.constant 0 : i32
    %c0_i32_0 = arith.constant 0 : i32
    return %c0_i32, %arg0 : i32, i32
  }
}

</mosaic_0001>

<llo_original>
// kernel: tpu_custom_call.1
$region0: #{tpu_custom_call.1}
  #allocation0 [shape = 'u32[]', space=smem, size = 0x4, offset = 0x4, fixed_abs, tag = 'smem constant byte address 0x4 - core index']
  #allocation1 [shape = 'u32[72,128]{1,0:T(1,128)}', space=vmem, size = 0x9000, scoped, tag = 'internal scratch']
  #allocation2 [shape = 'f32[112,7,128]{2,1,0:T(8,128)}', space=vmem, size = 0x70000, scoped, tag = 'scratch operand']
  #allocation3 [shape = 'f32[36,6,128]{2,1,0:T(8,128)}', space=vmem, size = 0x24000, scoped, tag = 'scratch operand']
  #allocation4 [shape = 'f32[36,6,128]{2,1,0:T(8,128)}', space=vmem, size = 0x24000, scoped, tag = 'scratch operand']
  #allocation5 [shape = 'f32[36,6,128]{2,1,0:T(8,128)}', space=vmem, size = 0x24000, scoped, tag = 'scratch operand']
  #allocation6 [shape = 'f32[36,5,128]{2,1,0:T(8,128)}', space=vmem, size = 0x24000, scoped, tag = 'scratch operand']
  #allocation7 [shape = 'f32[96,128]{1,0:T(8,128)}', space=vmem, size = 0xc000, scoped, tag = 'scratch operand']
  %s0 = inlined_call_operand.vmem [shape: f32[112,7,256], index: 0, kind: input, shape index: {}]
  %s1 = inlined_call_operand.vmem [shape: f32[75], index: 1, kind: input, shape index: {}]
  %s2 = inlined_call_operand.vmem [shape: f32[3], index: 2, kind: input, shape index: {}]
  %s3 = inlined_call_operand.vmem [shape: f32[450], index: 3, kind: input, shape index: {}]
  %s4 = inlined_call_operand.vmem [shape: f32[6], index: 4, kind: input, shape index: {}]
  %s5 = inlined_call_operand.vmem [shape: f32[32,96], index: 5, kind: input, shape index: {}]
  %s6 = inlined_call_operand.vmem [shape: f32[32,1], index: 6, kind: input, shape index: {}]
  %s7 = inlined_call_operand.vmem [shape: f32[10,32], index: 7, kind: input, shape index: {}]
  %s8 = inlined_call_operand.vmem [shape: f32[10,1], index: 8, kind: input, shape index: {}]
  %s9 = inlined_call_operand.hbm [shape: f32[10,256], index: 9, kind: output, shape index: {}]
  %s10 = sld [smem:[#allocation0]]
  $region144: #{tpu_custom_call.1} parent=0
    _
  %s12 = ssub.s32 1, %s10
  %s13 = scalar_select 0, %s12, %s10
  $region1: #{tpu_custom_call.1} parent=0
    #allocation8 [shape = 'u8[917504]{0}', space=vmem, size = 0xe0000, scoped, tag = 'input window, operand 0']
    #allocation9 [shape = 'u8[512]{0}', space=smem, size = 0x200, scoped, tag = 'input window, operand 1, single buffered']
    #allocation10 [shape = 's32[2]{0}', space=sflag, size = 0x8, scoped, tag = 'scoped memory for tpu_custom_call.1']
    #allocation11 [shape = 's32[2]{0}', space=sflag, size = 0x8, scoped, tag = 'scoped memory for tpu_custom_call.1']
    #allocation12 [shape = 'u8[512]{0}', space=smem, size = 0x200, scoped, tag = 'input window, operand 2, single buffered']
    #allocation13 [shape = 's32[1]{0}', space=sflag, size = 0x4, scoped, tag = 'scoped memory for tpu_custom_call.1']
    #allocation14 [shape = 'u8[2048]{0}', space=smem, size = 0x800, scoped, tag = 'input window, operand 3, single buffered']
    #allocation15 [shape = 'u8[512]{0}', space=smem, size = 0x200, scoped, tag = 'input window, operand 4, single buffered']
    #allocation16 [shape = 's32[1]{0}', space=sflag, size = 0x4, scoped, tag = 'scoped memory for tpu_custom_call.1']
    #allocation17 [shape = 'u8[16384]{0}', space=vmem, size = 0x4000, scoped, tag = 'output window, operand 0']
    %14 = vsyncpa [#allocation11], 0
    %15 = vsyncpa [#allocation13], 0
    %16 = vsyncpa [#allocation16], 0
    %17 = vsyncpa [#allocation10], 0
    %s18 = scalar_lea.sflag [#allocation10], 1
    %19 = vsyncpa %s18, 0
    loop: start=0, step=1, limit=4
    $region2: #{tpu_custom_call.1} parent=1 // loop_pre_header
      _
    $region3: #{tpu_custom_call.1} parent=1 // loop_header
      %s21 = sphi 0, %s25
      %p22 = scmp.ge.s32.totalorder %s21, 4
      %s31 = sphi 0, %s33
      %s34 = sphi 0, %s31
      %s35 = sphi 0, %s34
      %s51 = sphi 0, %s35
      %s55 = sphi 0, %s55
      %s57 = sphi 0, %s55
      %s58 = sphi 0, %s57
      %s72 = sphi 0, %s58
      %s76 = sphi 0, %s76
      %s78 = sphi 0, %s76
      %s79 = sphi 0, %s78
      %s93 = sphi 0, %s79
      %s97 = sphi 0, %s97
      %s99 = sphi 0, %s97
      %s100 = sphi 0, %s99
      %s114 = sphi 0, %s100
      %s118 = sphi 0, %s118
      %s120 = sphi 0, %s118
      %s121 = sphi 0, %s120
      %s135 = sphi 0, %s121
      %s139 = sphi 0, %s139
      %s141 = sphi 0, %s139
      %s142 = sphi 0, %s141
      %s156 = sphi 0, %s142
      %s160 = sphi 0, %s160
      %s162 = sphi 0, %s160
      %s163 = sphi 0, %s162
      %s177 = sphi 0, %s163
      %s181 = sphi 0, %s181
      %s183 = sphi 0, %s181
      %s184 = sphi 0, %s183
      %s198 = sphi 0, %s184
      %s202 = sphi 0, %s202
      %s204 = sphi 0, %s202
      %s205 = sphi 0, %s204
      %s219 = sphi 0, %s205
      %s225 = sphi 0, %s227
      %s228 = sphi 0, %s225
      %s229 = sphi 0, %s228
      %s245 = sphi 0, %s229
    $region4: #{tpu_custom_call.1} parent=1 // loop_header_branch
      %24 = sbr.rel (%p22) target = $region8
    $region5: #{tpu_custom_call.1} parent=1 // loop_body
      %s26 = ssub.s32 %s21, 1
      %s27 = ssub.s32 %s21, 2
      %s28 = sadd.s32 %s21, 1
      %s29 = ssub.s32 %s21, %s28
      %p30 = scmp.eq.s32.totalorder %s29, 0
      %s32 = sadd.s32 %s31, 1
      %s33 = scalar_select %p30, %s31, %s32
      %p36 = pneg %p30
      %p37 = scmp.eq.s32.totalorder %s21, 1
      %p38 = por %p36, %p37
      %p39 = scmp.ne.s32.totalorder %s31, %s34
      %p40 = scmp.eq.s32.totalorder %s21, 0
      %p41 = por %p39, %p40
      %p42 = scmp.ne.s32.totalorder %s31, %s34
      %p43 = scmp.eq.s32.totalorder %s26, 1
      %p44 = por %p42, %p43
      %p45 = scmp.ne.s32.totalorder %s34, %s35
      %p46 = scmp.eq.s32.totalorder %s26, 0
      %p47 = por %p45, %p46
      %p48 = scmp.ne.s32.totalorder %s34, %s35
      %p49 = scmp.eq.s32.totalorder %s27, 1
      %p50 = por %p48, %p49
      %p52 = scmp.ne.s32.totalorder %s35, %s51
      %p53 = scmp.eq.s32.totalorder %s27, 0
      %p54 = por %p52, %p53
      %s56 = sadd.s32 %s55, 1
      %p59 = scmp.eq.s32.totalorder %s21, 1
      %p60 = scmp.ne.s32.totalorder %s55, %s57
      %p61 = scmp.eq.s32.totalorder %s21, 0
      %p62 = por %p60, %p61
      %p63 = scmp.ne.s32.totalorder %s55, %s57
      %p64 = scmp.eq.s32.totalorder %s26, 1
      %p65 = por %p63, %p64
      %p66 = scmp.ne.s32.totalorder %s57, %s58
      %p67 = scmp.eq.s32.totalorder %s26, 0
      %p68 = por %p66, %p67
      %p69 = scmp.ne.s32.totalorder %s57, %s58
      %p70 = scmp.eq.s32.totalorder %s27, 1
      %p71 = por %p69, %p70
      %p73 = scmp.ne.s32.totalorder %s58, %s72
      %p74 = scmp.eq.s32.totalorder %s27, 0
      %p75 = por %p73, %p74
      %s77 = sadd.s32 %s76, 1
      %p80 = scmp.eq.s32.totalorder %s21, 1
      %p81 = scmp.ne.s32.totalorder %s76, %s78
      %p82 = scmp.eq.s32.totalorder %s21, 0
      %p83 = por %p81, %p82
      %p84 = scmp.ne.s32.totalorder %s76, %s78
      %p85 = scmp.eq.s32.totalorder %s26, 1
      %p86 = por %p84, %p85
      %p87 = scmp.ne.s32.totalorder %s78, %s79
      %p88 = scmp.eq.s32.totalorder %s26, 0
      %p89 = por %p87, %p88
      %p90 = scmp.ne.s32.totalorder %s78, %s79
      %p91 = scmp.eq.s32.totalorder %s27, 1
      %p92 = por %p90, %p91
      %p94 = scmp.ne.s32.totalorder %s79, %s93
      %p95 = scmp.eq.s32.totalorder %s27, 0
      %p96 = por %p94, %p95
      %s98 = sadd.s32 %s97, 1
      %p101 = scmp.eq.s32.totalorder %s21, 1
      %p102 = scmp.ne.s32.totalorder %s97, %s99
      %p103 = scmp.eq.s32.totalorder %s21, 0
      %p104 = por %p102, %p103
      %p105 = scmp.ne.s32.totalorder %s97, %s99
      %p106 = scmp.eq.s32.totalorder %s26, 1
      %p107 = por %p105, %p106
      %p108 = scmp.ne.s32.totalorder %s99, %s100
      %p109 = scmp.eq.s32.totalorder %s26, 0
      %p110 = por %p108, %p109
      %p111 = scmp.ne.s32.totalorder %s99, %s100
      %p112 = scmp.eq.s32.totalorder %s27, 1
      %p113 = por %p111, %p112
      %p115 = scmp.ne.s32.totalorder %s100, %s114
      %p116 = scmp.eq.s32.totalorder %s27, 0
      %p117 = por %p115, %p116
      %s119 = sadd.s32 %s118, 1
      %p122 = scmp.eq.s32.totalorder %s21, 1
      %p123 = scmp.ne.s32.totalorder %s118, %s120
      %p124 = scmp.eq.s32.totalorder %s21, 0
      %p125 = por %p123, %p124
      %p126 = scmp.ne.s32.totalorder %s118, %s120
      %p127 = scmp.eq.s32.totalorder %s26, 1
      %p128 = por %p126, %p127
      %p129 = scmp.ne.s32.totalorder %s120, %s121
      %p130 = scmp.eq.s32.totalorder %s26, 0
      %p131 = por %p129, %p130
      %p132 = scmp.ne.s32.totalorder %s120, %s121
      %p133 = scmp.eq.s32.totalorder %s27, 1
      %p134 = por %p132, %p133
      %p136 = scmp.ne.s32.totalorder %s121, %s135
      %p137 = scmp.eq.s32.totalorder %s27, 0
      %p138 = por %p136, %p137
      %s140 = sadd.s32 %s139, 1
      %p143 = scmp.eq.s32.totalorder %s21, 1
      %p144 = scmp.ne.s32.totalorder %s139, %s141
      %p145 = scmp.eq.s32.totalorder %s21, 0
      %p146 = por %p144, %p145
      %p147 = scmp.ne.s32.totalorder %s139, %s141
      %p148 = scmp.eq.s32.totalorder %s26, 1
      %p149 = por %p147, %p148
      %p150 = scmp.ne.s32.totalorder %s141, %s142
      %p151 = scmp.eq.s32.totalorder %s26, 0
      %p152 = por %p150, %p151
      %p153 = scmp.ne.s32.totalorder %s141, %s142
      %p154 = scmp.eq.s32.totalorder %s27, 1
      %p155 = por %p153, %p154
      %p157 = scmp.ne.s32.totalorder %s142, %s156
      %p158 = scmp.eq.s32.totalorder %s27, 0
      %p159 = por %p157, %p158
      %s161 = sadd.s32 %s160, 1
      %p164 = scmp.eq.s32.totalorder %s21, 1
      %p165 = scmp.ne.s32.totalorder %s160, %s162
      %p166 = scmp.eq.s32.totalorder %s21, 0
      %p167 = por %p165, %p166
      %p168 = scmp.ne.s32.totalorder %s160, %s162
      %p169 = scmp.eq.s32.totalorder %s26, 1
      %p170 = por %p168, %p169
      %p171 = scmp.ne.s32.totalorder %s162, %s163
      %p172 = scmp.eq.s32.totalorder %s26, 0
      %p173 = por %p171, %p172
      %p174 = scmp.ne.s32.totalorder %s162, %s163
      %p175 = scmp.eq.s32.totalorder %s27, 1
      %p176 = por %p174, %p175
      %p178 = scmp.ne.s32.totalorder %s163, %s177
      %p179 = scmp.eq.s32.totalorder %s27, 0
      %p180 = por %p178, %p179
      %s182 = sadd.s32 %s181, 1
      %p185 = scmp.eq.s32.totalorder %s21, 1
      %p186 = scmp.ne.s32.totalorder %s181, %s183
      %p187 = scmp.eq.s32.totalorder %s21, 0
      %p188 = por %p186, %p187
      %p189 = scmp.ne.s32.totalorder %s181, %s183
      %p190 = scmp.eq.s32.totalorder %s26, 1
      %p191 = por %p189, %p190
      %p192 = scmp.ne.s32.totalorder %s183, %s184
      %p193 = scmp.eq.s32.totalorder %s26, 0
      %p194 = por %p192, %p193
      %p195 = scmp.ne.s32.totalorder %s183, %s184
      %p196 = scmp.eq.s32.totalorder %s27, 1
      %p197 = por %p195, %p196
      %p199 = scmp.ne.s32.totalorder %s184, %s198
      %p200 = scmp.eq.s32.totalorder %s27, 0
      %p201 = por %p199, %p200
      %s203 = sadd.s32 %s202, 1
      %p206 = scmp.eq.s32.totalorder %s21, 1
      %p207 = scmp.ne.s32.totalorder %s202, %s204
      %p208 = scmp.eq.s32.totalorder %s21, 0
      %p209 = por %p207, %p208
      %p210 = scmp.ne.s32.totalorder %s202, %s204
      %p211 = scmp.eq.s32.totalorder %s26, 1
      %p212 = por %p210, %p211
      %p213 = scmp.ne.s32.totalorder %s204, %s205
      %p214 = scmp.eq.s32.totalorder %s26, 0
      %p215 = por %p213, %p214
      %p216 = scmp.ne.s32.totalorder %s204, %s205
      %p217 = scmp.eq.s32.totalorder %s27, 1
      %p218 = por %p216, %p217
      %p220 = scmp.ne.s32.totalorder %s205, %s219
      %p221 = scmp.eq.s32.totalorder %s27, 0
      %p222 = por %p220, %p221
      %s223 = ssub.s32 %s21, %s28
      %p224 = scmp.eq.s32.totalorder %s223, 0
      %s226 = sadd.s32 %s225, 1
      %s227 = scalar_select %p224, %s225, %s226
      %p230 = pneg %p224
      %p231 = scmp.eq.s32.totalorder %s21, 1
      %p232 = por %p230, %p231
      %p233 = scmp.ne.s32.totalorder %s225, %s228
      %p234 = scmp.eq.s32.totalorder %s21, 0
      %p235 = por %p233, %p234
      %p236 = scmp.ne.s32.totalorder %s225, %s228
      %p237 = scmp.eq.s32.totalorder %s26, 1
      %p238 = por %p236, %p237
      %p239 = scmp.ne.s32.totalorder %s228, %s229
      %p240 = scmp.eq.s32.totalorder %s26, 0
      %p241 = por %p239, %p240
      %p242 = scmp.ne.s32.totalorder %s228, %s229
      %p243 = scmp.eq.s32.totalorder %s27, 1
      %p244 = por %p242, %p243
      %p246 = scmp.ne.s32.totalorder %s229, %s245
      %p247 = scmp.eq.s32.totalorder %s27, 0
      %p248 = por %p246, %p247
      %p249 = scmp.le.s32.totalorder 1, %s21
      %p250 = scmp.lt.s32.totalorder %s21, 3
      %p251 = pnand %p249, %p250
      %p252 = pneg %p251
      // Predicated region
      $region9: #{tpu_custom_call.1} parent=5 // pred_check
        _
      $region10: #{tpu_custom_call.1} parent=5 // pred_check_branch
        %254 = sbr.rel (%p251) target = $region12
      $region11: #{tpu_custom_call.1} parent=5 // pred_region
        %s255 = ssub.s32 %s21, 1
        // Predicated region
        $region13: #{tpu_custom_call.1} parent=11 // pred_check
          %p256 = pneg %p68
        $region14: #{tpu_custom_call.1} parent=11 // pred_check_branch
          %258 = sbr.rel (%p256) target = $region16
        $region15: #{tpu_custom_call.1} parent=11 // pred_region
          %260 = vsyncadd [#allocation11], 0
          %s262 = sshll.u32 %s1, 4
          %s263 = int_to_ptr.vmem [resolvable:$true] %s262
          %265 = dma.vmem_to_smem %s263, 16, [#allocation9], [#allocation11]
        $region16: #{tpu_custom_call.1} parent=11 // pred_fallthru
          _
        // Predicated region
        $region17: #{tpu_custom_call.1} parent=11 // pred_check
          %p266 = pneg %p89
        $region18: #{tpu_custom_call.1} parent=11 // pred_check_branch
          %268 = sbr.rel (%p266) target = $region20
        $region19: #{tpu_custom_call.1} parent=11 // pred_region
          %270 = vsyncadd [#allocation13], 0
          %s272 = sshll.u32 %s2, 4
          %s273 = int_to_ptr.vmem [resolvable:$true] %s272
          %275 = dma.vmem_to_smem %s273, 16, [#allocation12], [#allocation13]
        $region20: #{tpu_custom_call.1} parent=11 // pred_fallthru
          _
        // Predicated region
        $region21: #{tpu_custom_call.1} parent=11 // pred_check
          %p276 = pneg %p110
        $region22: #{tpu_custom_call.1} parent=11 // pred_check_branch
          %278 = sbr.rel (%p276) target = $region24
        $region23: #{tpu_custom_call.1} parent=11 // pred_region
          %280 = vsyncadd [#allocation13], 0
          %s282 = sshll.u32 %s3, 4
          %s283 = int_to_ptr.vmem [resolvable:$true] %s282
          %285 = dma.vmem_to_smem %s283, 64, [#allocation14], [#allocation13]
        $region24: #{tpu_custom_call.1} parent=11 // pred_fallthru
          _
        // Predicated region
        $region25: #{tpu_custom_call.1} parent=11 // pred_check
          %p286 = pneg %p131
        $region26: #{tpu_custom_call.1} parent=11 // pred_check_branch
          %288 = sbr.rel (%p286) target = $region28
        $region27: #{tpu_custom_call.1} parent=11 // pred_region
          %290 = vsyncadd [#allocation16], 0
          %s292 = sshll.u32 %s4, 4
          %s293 = int_to_ptr.vmem [resolvable:$true] %s292
          %295 = dma.vmem_to_smem %s293, 16, [#allocation15], [#allocation16]
        $region28: #{tpu_custom_call.1} parent=11 // pred_fallthru
          _
        // Predicated region
        $region29: #{tpu_custom_call.1} parent=11 // pred_check
          %p296 = pneg %p152
        $region30: #{tpu_custom_call.1} parent=11 // pred_check_branch
          %298 = sbr.rel (%p296) target = $region32
        $region31: #{tpu_custom_call.1} parent=11 // pred_region
          _
        $region32: #{tpu_custom_call.1} parent=11 // pred_fallthru
          _
        // Predicated region
        $region33: #{tpu_custom_call.1} parent=11 // pred_check
          %p299 = pneg %p173
        $region34: #{tpu_custom_call.1} parent=11 // pred_check_branch
          %301 = sbr.rel (%p299) target = $region36
        $region35: #{tpu_custom_call.1} parent=11 // pred_region
          _
        $region36: #{tpu_custom_call.1} parent=11 // pred_fallthru
          _
        // Predicated region
        $region37: #{tpu_custom_call.1} parent=11 // pred_check
          %p302 = pneg %p194
        $region38: #{tpu_custom_call.1} parent=11 // pred_check_branch
          %304 = sbr.rel (%p302) target = $region40
        $region39: #{tpu_custom_call.1} parent=11 // pred_region
          _
        $region40: #{tpu_custom_call.1} parent=11 // pred_fallthru
          _
        // Predicated region
        $region41: #{tpu_custom_call.1} parent=11 // pred_check
          %p305 = pneg %p215
        $region42: #{tpu_custom_call.1} parent=11 // pred_check_branch
          %307 = sbr.rel (%p305) target = $region44
        $region43: #{tpu_custom_call.1} parent=11 // pred_region
          _
        $region44: #{tpu_custom_call.1} parent=11 // pred_fallthru
          _
      $region12: #{tpu_custom_call.1} parent=5 // pred_fallthru
        _
      %p308 = scmp.lt.s32.totalorder %s21, 2
      // Predicated region
      $region45: #{tpu_custom_call.1} parent=5 // pred_check
        %p309 = pneg %p308
      $region46: #{tpu_custom_call.1} parent=5 // pred_check_branch
        %311 = sbr.rel (%p309) target = $region48
      $region47: #{tpu_custom_call.1} parent=5 // pred_region
        // Predicated region
        $region49: #{tpu_custom_call.1} parent=47 // pred_check
          %p312 = pneg %p41
        $region50: #{tpu_custom_call.1} parent=47 // pred_check_branch
          %314 = sbr.rel (%p312) target = $region52
        $region51: #{tpu_custom_call.1} parent=47 // pred_region
          %s315 = sand.u32 %s31, 1
          %s316 = sand.u32 %s31, 1
          %s317 = smul.addr %s316, 896
          %s318 = scalar_lea.vmem [#allocation8], %s317
          %s319 = smul.addr %s21, 8
          %s320 = scalar_lea.vmem %s0, %s319
          // Predicated region
          $region53: #{tpu_custom_call.1} parent=51 // pred_check
            _
          $region54: #{tpu_custom_call.1} parent=51 // pred_check_branch
            %322 = sbr.rel (0) target = $region56
          $region55: #{tpu_custom_call.1} parent=51 // pred_region
            // Predicated region
            $region57: #{tpu_custom_call.1} parent=55 // pred_check
              _
            $region58: #{tpu_custom_call.1} parent=55 // pred_check_branch
              %324 = sbr.rel (0) target = $region60
            $region59: #{tpu_custom_call.1} parent=55 // pred_region
              // Predicated region
              $region72: #{tpu_custom_call.1} parent=59 // pred_check
                _
              $region73: #{tpu_custom_call.1} parent=59 // pred_check_branch
                %562 = sbr.rel (0) target = $region75
              $region74: #{tpu_custom_call.1} parent=59 // pred_region
                loop: start=0, step=1, limit=1
                $region76: #{tpu_custom_call.1} parent=74 // loop_pre_header
                  _
                $region77: #{tpu_custom_call.1} parent=74 // loop_header
                  %s564 = sphi 0, %s568
                  %p565 = scmp.ge.s32.totalorder %s564, 1
                  %s569 = sphi %s320, %s320
                  %s570 = sphi %s318, %s318
                $region78: #{tpu_custom_call.1} parent=74 // loop_header_branch
                  %567 = sbr.rel (%p565) target = $region82
                $region79: #{tpu_custom_call.1} parent=74 // loop_body
                  %v571 = vld [vmem:[%s569] sm:$0xff]
                  %572 = vst [vmem:[%s570] sm:$0xff] %v571
                  %v573 = vld [vmem:[%s569 + $0x10] sm:$0xff]
                  %574 = vst [vmem:[%s570 + $0x8] sm:$0xff] %v573
                  %v575 = vld [vmem:[%s569 + $0x20] sm:$0xff]
                  %576 = vst [vmem:[%s570 + $0x10] sm:$0xff] %v575
                  %v577 = vld [vmem:[%s569 + $0x30] sm:$0xff]
                  %578 = vst [vmem:[%s570 + $0x18] sm:$0xff] %v577
                  %v579 = vld [vmem:[%s569 + $0x40] sm:$0xff]
                  %580 = vst [vmem:[%s570 + $0x20] sm:$0xff] %v579
                  %v581 = vld [vmem:[%s569 + $0x50] sm:$0xff]
                  %582 = vst [vmem:[%s570 + $0x28] sm:$0xff] %v581
                  %v583 = vld [vmem:[%s569 + $0x60] sm:$0xff]
                  %584 = vst [vmem:[%s570 + $0x30] sm:$0xff] %v583
                  %v585 = vld [vmem:[%s569 + $0x70] sm:$0xff]
                  %586 = vst [vmem:[%s570 + $0x38] sm:$0xff] %v585
                  %v587 = vld [vmem:[%s569 + $0x80] sm:$0xff]
                  %588 = vst [vmem:[%s570 + $0x40] sm:$0xff] %v587
                  %v589 = vld [vmem:[%s569 + $0x90] sm:$0xff]
                  %590 = vst [vmem:[%s570 + $0x48] sm:$0xff] %v589
                  %v591 = vld [vmem:[%s569 + $0xa0] sm:$0xff]
                  %592 = vst [vmem:[%s570 + $0x50] sm:$0xff] %v591
                  %v593 = vld [vmem:[%s569 + $0xb0] sm:$0xff]
                  %594 = vst [vmem:[%s570 + $0x58] sm:$0xff] %v593
                  %v595 = vld [vmem:[%s569 + $0xc0] sm:$0xff]
                  %596 = vst [vmem:[%s570 + $0x60] sm:$0xff] %v595
                  %v597 = vld [vmem:[%s569 + $0xd0] sm:$0xff]
                  %598 = vst [vmem:[%s570 + $0x68] sm:$0xff] %v597
                  %v599 = vld [vmem:[%s569 + $0xe0] sm:$0xff]
                  %600 = vst [vmem:[%s570 + $0x70] sm:$0xff] %v599
                  %v601 = vld [vmem:[%s569 + $0xf0] sm:$0xff]
                  %602 = vst [vmem:[%s570 + $0x78] sm:$0xff] %v601
                  %v603 = vld [vmem:[%s569 + $0x100] sm:$0xff]
                  %604 = vst [vmem:[%s570 + $0x80] sm:$0xff] %v603
                  %v605 = vld [vmem:[%s569 + $0x110] sm:$0xff]
                  %606 = vst [vmem:[%s570 + $0x88] sm:$0xff] %v605
                  %v607 = vld [vmem:[%s569 + $0x120] sm:$0xff]
                  %608 = vst [vmem:[%s570 + $0x90] sm:$0xff] %v607
                  %v609 = vld [vmem:[%s569 + $0x130] sm:$0xff]
                  %610 = vst [vmem:[%s570 + $0x98] sm:$0xff] %v609
                  %v611 = vld [vmem:[%s569 + $0x140] sm:$0xff]
                  %612 = vst [vmem:[%s570 + $0xa0] sm:$0xff] %v611
                  %v613 = vld [vmem:[%s569 + $0x150] sm:$0xff]
                  %614 = vst [vmem:[%s570 + $0xa8] sm:$0xff] %v613
                  %v615 = vld [vmem:[%s569 + $0x160] sm:$0xff]
                  %616 = vst [vmem:[%s570 + $0xb0] sm:$0xff] %v615
                  %v617 = vld [vmem:[%s569 + $0x170] sm:$0xff]
                  %618 = vst [vmem:[%s570 + $0xb8] sm:$0xff] %v617
                  %v619 = vld [vmem:[%s569 + $0x180] sm:$0xff]
                  %620 = vst [vmem:[%s570 + $0xc0] sm:$0xff] %v619
                  %v621 = vld [vmem:[%s569 + $0x190] sm:$0xff]
                  %622 = vst [vmem:[%s570 + $0xc8] sm:$0xff] %v621
                  %v623 = vld [vmem:[%s569 + $0x1a0] sm:$0xff]
                  %624 = vst [vmem:[%s570 + $0xd0] sm:$0xff] %v623
                  %v625 = vld [vmem:[%s569 + $0x1b0] sm:$0xff]
                  %626 = vst [vmem:[%s570 + $0xd8] sm:$0xff] %v625
                  %v627 = vld [vmem:[%s569 + $0x1c0] sm:$0xff]
                  %628 = vst [vmem:[%s570 + $0xe0] sm:$0xff] %v627
                  %v629 = vld [vmem:[%s569 + $0x1d0] sm:$0xff]
                  %630 = vst [vmem:[%s570 + $0xe8] sm:$0xff] %v629
                  %v631 = vld [vmem:[%s569 + $0x1e0] sm:$0xff]
                  %632 = vst [vmem:[%s570 + $0xf0] sm:$0xff] %v631
                  %v633 = vld [vmem:[%s569 + $0x1f0] sm:$0xff]
                  %634 = vst [vmem:[%s570 + $0xf8] sm:$0xff] %v633
                  %v635 = vld [vmem:[%s569 + $0x200] sm:$0xff]
                  %636 = vst [vmem:[%s570 + $0x100] sm:$0xff] %v635
                  %v637 = vld [vmem:[%s569 + $0x210] sm:$0xff]
                  %638 = vst [vmem:[%s570 + $0x108] sm:$0xff] %v637
                  %v639 = vld [vmem:[%s569 + $0x220] sm:$0xff]
                  %640 = vst [vmem:[%s570 + $0x110] sm:$0xff] %v639
                  %v641 = vld [vmem:[%s569 + $0x230] sm:$0xff]
                  %642 = vst [vmem:[%s570 + $0x118] sm:$0xff] %v641
                  %v643 = vld [vmem:[%s569 + $0x240] sm:$0xff]
                  %644 = vst [vmem:[%s570 + $0x120] sm:$0xff] %v643
                  %v645 = vld [vmem:[%s569 + $0x250] sm:$0xff]
                  %646 = vst [vmem:[%s570 + $0x128] sm:$0xff] %v645
                  %v647 = vld [vmem:[%s569 + $0x260] sm:$0xff]
                  %648 = vst [vmem:[%s570 + $0x130] sm:$0xff] %v647
                  %v649 = vld [vmem:[%s569 + $0x270] sm:$0xff]
                  %650 = vst [vmem:[%s570 + $0x138] sm:$0xff] %v649
                  %v651 = vld [vmem:[%s569 + $0x280] sm:$0xff]
                  %652 = vst [vmem:[%s570 + $0x140] sm:$0xff] %v651
                  %v653 = vld [vmem:[%s569 + $0x290] sm:$0xff]
                  %654 = vst [vmem:[%s570 + $0x148] sm:$0xff] %v653
                  %v655 = vld [vmem:[%s569 + $0x2a0] sm:$0xff]
                  %656 = vst [vmem:[%s570 + $0x150] sm:$0xff] %v655
                  %v657 = vld [vmem:[%s569 + $0x2b0] sm:$0xff]
                  %658 = vst [vmem:[%s570 + $0x158] sm:$0xff] %v657
                  %v659 = vld [vmem:[%s569 + $0x2c0] sm:$0xff]
                  %660 = vst [vmem:[%s570 + $0x160] sm:$0xff] %v659
                  %v661 = vld [vmem:[%s569 + $0x2d0] sm:$0xff]
                  %662 = vst [vmem:[%s570 + $0x168] sm:$0xff] %v661
                  %v663 = vld [vmem:[%s569 + $0x2e0] sm:$0xff]
                  %664 = vst [vmem:[%s570 + $0x170] sm:$0xff] %v663
                  %v665 = vld [vmem:[%s569 + $0x2f0] sm:$0xff]
                  %666 = vst [vmem:[%s570 + $0x178] sm:$0xff] %v665
                  %v667 = vld [vmem:[%s569 + $0x300] sm:$0xff]
                  %668 = vst [vmem:[%s570 + $0x180] sm:$0xff] %v667
                  %v669 = vld [vmem:[%s569 + $0x310] sm:$0xff]
                  %670 = vst [vmem:[%s570 + $0x188] sm:$0xff] %v669
                  %v671 = vld [vmem:[%s569 + $0x320] sm:$0xff]
                  %672 = vst [vmem:[%s570 + $0x190] sm:$0xff] %v671
                  %v673 = vld [vmem:[%s569 + $0x330] sm:$0xff]
                  %674 = vst [vmem:[%s570 + $0x198] sm:$0xff] %v673
                  %v675 = vld [vmem:[%s569 + $0x340] sm:$0xff]
                  %676 = vst [vmem:[%s570 + $0x1a0] sm:$0xff] %v675
                  %v677 = vld [vmem:[%s569 + $0x350] sm:$0xff]
                  %678 = vst [vmem:[%s570 + $0x1a8] sm:$0xff] %v677
                  %v679 = vld [vmem:[%s569 + $0x360] sm:$0xff]
                  %680 = vst [vmem:[%s570 + $0x1b0] sm:$0xff] %v679
                  %v681 = vld [vmem:[%s569 + $0x370] sm:$0xff]
                  %682 = vst [vmem:[%s570 + $0x1b8] sm:$0xff] %v681
                  %v683 = vld [vmem:[%s569 + $0x380] sm:$0xff]
                  %684 = vst [vmem:[%s570 + $0x1c0] sm:$0xff] %v683
                  %v685 = vld [vmem:[%s569 + $0x390] sm:$0xff]
                  %686 = vst [vmem:[%s570 + $0x1c8] sm:$0xff] %v685
                  %v687 = vld [vmem:[%s569 + $0x3a0] sm:$0xff]
                  %688 = vst [vmem:[%s570 + $0x1d0] sm:$0xff] %v687
                  %v689 = vld [vmem:[%s569 + $0x3b0] sm:$0xff]
                  %690 = vst [vmem:[%s570 + $0x1d8] sm:$0xff] %v689
                  %v691 = vld [vmem:[%s569 + $0x3c0] sm:$0xff]
                  %692 = vst [vmem:[%s570 + $0x1e0] sm:$0xff] %v691
                  %v693 = vld [vmem:[%s569 + $0x3d0] sm:$0xff]
                  %694 = vst [vmem:[%s570 + $0x1e8] sm:$0xff] %v693
                  %v695 = vld [vmem:[%s569 + $0x3e0] sm:$0xff]
                  %696 = vst [vmem:[%s570 + $0x1f0] sm:$0xff] %v695
                  %v697 = vld [vmem:[%s569 + $0x3f0] sm:$0xff]
                  %698 = vst [vmem:[%s570 + $0x1f8] sm:$0xff] %v697
                  %v699 = vld [vmem:[%s569 + $0x400] sm:$0xff]
                  %700 = vst [vmem:[%s570 + $0x200] sm:$0xff] %v699
                  %v701 = vld [vmem:[%s569 + $0x410] sm:$0xff]
                  %702 = vst [vmem:[%s570 + $0x208] sm:$0xff] %v701
                  %v703 = vld [vmem:[%s569 + $0x420] sm:$0xff]
                  %704 = vst [vmem:[%s570 + $0x210] sm:$0xff] %v703
                  %v705 = vld [vmem:[%s569 + $0x430] sm:$0xff]
                  %706 = vst [vmem:[%s570 + $0x218] sm:$0xff] %v705
                  %v707 = vld [vmem:[%s569 + $0x440] sm:$0xff]
                  %708 = vst [vmem:[%s570 + $0x220] sm:$0xff] %v707
                  %v709 = vld [vmem:[%s569 + $0x450] sm:$0xff]
                  %710 = vst [vmem:[%s570 + $0x228] sm:$0xff] %v709
                  %v711 = vld [vmem:[%s569 + $0x460] sm:$0xff]
                  %712 = vst [vmem:[%s570 + $0x230] sm:$0xff] %v711
                  %v713 = vld [vmem:[%s569 + $0x470] sm:$0xff]
                  %714 = vst [vmem:[%s570 + $0x238] sm:$0xff] %v713
                  %v715 = vld [vmem:[%s569 + $0x480] sm:$0xff]
                  %716 = vst [vmem:[%s570 + $0x240] sm:$0xff] %v715
                  %v717 = vld [vmem:[%s569 + $0x490] sm:$0xff]
                  %718 = vst [vmem:[%s570 + $0x248] sm:$0xff] %v717
                  %v719 = vld [vmem:[%s569 + $0x4a0] sm:$0xff]
                  %720 = vst [vmem:[%s570 + $0x250] sm:$0xff] %v719
                  %v721 = vld [vmem:[%s569 + $0x4b0] sm:$0xff]
                  %722 = vst [vmem:[%s570 + $0x258] sm:$0xff] %v721
                  %v723 = vld [vmem:[%s569 + $0x4c0] sm:$0xff]
                  %724 = vst [vmem:[%s570 + $0x260] sm:$0xff] %v723
                  %v725 = vld [vmem:[%s569 + $0x4d0] sm:$0xff]
                  %726 = vst [vmem:[%s570 + $0x268] sm:$0xff] %v725
                  %v727 = vld [vmem:[%s569 + $0x4e0] sm:$0xff]
                  %728 = vst [vmem:[%s570 + $0x270] sm:$0xff] %v727
                  %v729 = vld [vmem:[%s569 + $0x4f0] sm:$0xff]
                  %730 = vst [vmem:[%s570 + $0x278] sm:$0xff] %v729
                  %v731 = vld [vmem:[%s569 + $0x500] sm:$0xff]
                  %732 = vst [vmem:[%s570 + $0x280] sm:$0xff] %v731
                  %v733 = vld [vmem:[%s569 + $0x510] sm:$0xff]
                  %734 = vst [vmem:[%s570 + $0x288] sm:$0xff] %v733
                  %v735 = vld [vmem:[%s569 + $0x520] sm:$0xff]
                  %736 = vst [vmem:[%s570 + $0x290] sm:$0xff] %v735
                  %v737 = vld [vmem:[%s569 + $0x530] sm:$0xff]
                  %738 = vst [vmem:[%s570 + $0x298] sm:$0xff] %v737
                  %v739 = vld [vmem:[%s569 + $0x540] sm:$0xff]
                  %740 = vst [vmem:[%s570 + $0x2a0] sm:$0xff] %v739
                  %v741 = vld [vmem:[%s569 + $0x550] sm:$0xff]
                  %742 = vst [vmem:[%s570 + $0x2a8] sm:$0xff] %v741
                  %v743 = vld [vmem:[%s569 + $0x560] sm:$0xff]
                  %744 = vst [vmem:[%s570 + $0x2b0] sm:$0xff] %v743
                  %v745 = vld [vmem:[%s569 + $0x570] sm:$0xff]
                  %746 = vst [vmem:[%s570 + $0x2b8] sm:$0xff] %v745
                  %v747 = vld [vmem:[%s569 + $0x580] sm:$0xff]
                  %748 = vst [vmem:[%s570 + $0x2c0] sm:$0xff] %v747
                  %v749 = vld [vmem:[%s569 + $0x590] sm:$0xff]
                  %750 = vst [vmem:[%s570 + $0x2c8] sm:$0xff] %v749
                  %v751 = vld [vmem:[%s569 + $0x5a0] sm:$0xff]
                  %752 = vst [vmem:[%s570 + $0x2d0] sm:$0xff] %v751
                  %v753 = vld [vmem:[%s569 + $0x5b0] sm:$0xff]
                  %754 = vst [vmem:[%s570 + $0x2d8] sm:$0xff] %v753
                  %v755 = vld [vmem:[%s569 + $0x5c0] sm:$0xff]
                  %756 = vst [vmem:[%s570 + $0x2e0] sm:$0xff] %v755
                  %v757 = vld [vmem:[%s569 + $0x5d0] sm:$0xff]
                  %758 = vst [vmem:[%s570 + $0x2e8] sm:$0xff] %v757
                  %v759 = vld [vmem:[%s569 + $0x5e0] sm:$0xff]
                  %760 = vst [vmem:[%s570 + $0x2f0] sm:$0xff] %v759
                  %v761 = vld [vmem:[%s569 + $0x5f0] sm:$0xff]
                  %762 = vst [vmem:[%s570 + $0x2f8] sm:$0xff] %v761
                  %v763 = vld [vmem:[%s569 + $0x600] sm:$0xff]
                  %764 = vst [vmem:[%s570 + $0x300] sm:$0xff] %v763
                  %v765 = vld [vmem:[%s569 + $0x610] sm:$0xff]
                  %766 = vst [vmem:[%s570 + $0x308] sm:$0xff] %v765
                  %v767 = vld [vmem:[%s569 + $0x620] sm:$0xff]
                  %768 = vst [vmem:[%s570 + $0x310] sm:$0xff] %v767
                  %v769 = vld [vmem:[%s569 + $0x630] sm:$0xff]
                  %770 = vst [vmem:[%s570 + $0x318] sm:$0xff] %v769
                  %v771 = vld [vmem:[%s569 + $0x640] sm:$0xff]
                  %772 = vst [vmem:[%s570 + $0x320] sm:$0xff] %v771
                  %v773 = vld [vmem:[%s569 + $0x650] sm:$0xff]
                  %774 = vst [vmem:[%s570 + $0x328] sm:$0xff] %v773
                  %v775 = vld [vmem:[%s569 + $0x660] sm:$0xff]
                  %776 = vst [vmem:[%s570 + $0x330] sm:$0xff] %v775
                  %v777 = vld [vmem:[%s569 + $0x670] sm:$0xff]
                  %778 = vst [vmem:[%s570 + $0x338] sm:$0xff] %v777
                  %v779 = vld [vmem:[%s569 + $0x680] sm:$0xff]
                  %780 = vst [vmem:[%s570 + $0x340] sm:$0xff] %v779
                  %v781 = vld [vmem:[%s569 + $0x690] sm:$0xff]
                  %782 = vst [vmem:[%s570 + $0x348] sm:$0xff] %v781
                  %v783 = vld [vmem:[%s569 + $0x6a0] sm:$0xff]
                  %784 = vst [vmem:[%s570 + $0x350] sm:$0xff] %v783
                  %v785 = vld [vmem:[%s569 + $0x6b0] sm:$0xff]
                  %786 = vst [vmem:[%s570 + $0x358] sm:$0xff] %v785
                  %v787 = vld [vmem:[%s569 + $0x6c0] sm:$0xff]
                  %788 = vst [vmem:[%s570 + $0x360] sm:$0xff] %v787
                  %v789 = vld [vmem:[%s569 + $0x6d0] sm:$0xff]
                  %790 = vst [vmem:[%s570 + $0x368] sm:$0xff] %v789
                  %v791 = vld [vmem:[%s569 + $0x6e0] sm:$0xff]
                  %792 = vst [vmem:[%s570 + $0x370] sm:$0xff] %v791
                  %v793 = vld [vmem:[%s569 + $0x6f0] sm:$0xff]
                  %794 = vst [vmem:[%s570 + $0x378] sm:$0xff] %v793
                $region80: #{tpu_custom_call.1} parent=74 // loop_footer
                  %s568 = sadd.s32 1, %s564
                $region81: #{tpu_custom_call.1} parent=74 // loop_footer_branch
                  %563 = sbr.rel target = $region77
                $region82: #{tpu_custom_call.1} parent=74 // loop_exit
                  _
              $region75: #{tpu_custom_call.1} parent=59 // pred_fallthru
                _
              // Predicated region
              $region83: #{tpu_custom_call.1} parent=59 // pred_check
                _
              $region84: #{tpu_custom_call.1} parent=59 // pred_check_branch
                %796 = sbr.rel target = $region86
              $region85: #{tpu_custom_call.1} parent=59 // pred_region
                _
              $region86: #{tpu_custom_call.1} parent=59 // pred_fallthru
                _
            $region60: #{tpu_custom_call.1} parent=55 // pred_fallthru
              _
            // Predicated region
            $region61: #{tpu_custom_call.1} parent=55 // pred_check
              _
            $region62: #{tpu_custom_call.1} parent=55 // pred_check_branch
              %326 = sbr.rel target = $region64
            $region63: #{tpu_custom_call.1} parent=55 // pred_region
              %s328 = ssub.s32 256, 1
              loop: start=0, step=1, limit=1
              $region65: #{tpu_custom_call.1} parent=63 // loop_pre_header
                _
              $region66: #{tpu_custom_call.1} parent=63 // loop_header
                %s330 = sphi 0, %s334
                %p331 = scmp.ge.s32.totalorder %s330, 1
                %s335 = sphi %s320, %s320
                %s336 = sphi %s318, %s318
              $region67: #{tpu_custom_call.1} parent=63 // loop_header_branch
                %333 = sbr.rel (%p331) target = $region71
              $region68: #{tpu_custom_call.1} parent=63 // loop_body
                %v337 = vld [vmem:[%s335] sm:%s328]
                %338 = vst [vmem:[%s336] sm:%s328] %v337
                %v339 = vld [vmem:[%s335 + $0x10] sm:%s328]
                %340 = vst [vmem:[%s336 + $0x8] sm:%s328] %v339
                %v341 = vld [vmem:[%s335 + $0x20] sm:%s328]
                %342 = vst [vmem:[%s336 + $0x10] sm:%s328] %v341
                %v343 = vld [vmem:[%s335 + $0x30] sm:%s328]
                %344 = vst [vmem:[%s336 + $0x18] sm:%s328] %v343
                %v345 = vld [vmem:[%s335 + $0x40] sm:%s328]
                %346 = vst [vmem:[%s336 + $0x20] sm:%s328] %v345
                %v347 = vld [vmem:[%s335 + $0x50] sm:%s328]
                %348 = vst [vmem:[%s336 + $0x28] sm:%s328] %v347
                %v349 = vld [vmem:[%s335 + $0x60] sm:%s328]
                %350 = vst [vmem:[%s336 + $0x30] sm:%s328] %v349
                %v351 = vld [vmem:[%s335 + $0x70] sm:%s328]
                %352 = vst [vmem:[%s336 + $0x38] sm:%s328] %v351
                %v353 = vld [vmem:[%s335 + $0x80] sm:%s328]
                %354 = vst [vmem:[%s336 + $0x40] sm:%s328] %v353
                %v355 = vld [vmem:[%s335 + $0x90] sm:%s328]
                %356 = vst [vmem:[%s336 + $0x48] sm:%s328] %v355
                %v357 = vld [vmem:[%s335 + $0xa0] sm:%s328]
                %358 = vst [vmem:[%s336 + $0x50] sm:%s328] %v357
                %v359 = vld [vmem:[%s335 + $0xb0] sm:%s328]
                %360 = vst [vmem:[%s336 + $0x58] sm:%s328] %v359
                %v361 = vld [vmem:[%s335 + $0xc0] sm:%s328]
                %362 = vst [vmem:[%s336 + $0x60] sm:%s328] %v361
                %v363 = vld [vmem:[%s335 + $0xd0] sm:%s328]
                %364 = vst [vmem:[%s336 + $0x68] sm:%s328] %v363
                %v365 = vld [vmem:[%s335 + $0xe0] sm:%s328]
                %366 = vst [vmem:[%s336 + $0x70] sm:%s328] %v365
                %v367 = vld [vmem:[%s335 + $0xf0] sm:%s328]
                %368 = vst [vmem:[%s336 + $0x78] sm:%s328] %v367
                %v369 = vld [vmem:[%s335 + $0x100] sm:%s328]
                %370 = vst [vmem:[%s336 + $0x80] sm:%s328] %v369
                %v371 = vld [vmem:[%s335 + $0x110] sm:%s328]
                %372 = vst [vmem:[%s336 + $0x88] sm:%s328] %v371
                %v373 = vld [vmem:[%s335 + $0x120] sm:%s328]
                %374 = vst [vmem:[%s336 + $0x90] sm:%s328] %v373
                %v375 = vld [vmem:[%s335 + $0x130] sm:%s328]
                %376 = vst [vmem:[%s336 + $0x98] sm:%s328] %v375
                %v377 = vld [vmem:[%s335 + $0x140] sm:%s328]
                %378 = vst [vmem:[%s336 + $0xa0] sm:%s328] %v377
                %v379 = vld [vmem:[%s335 + $0x150] sm:%s328]
                %380 = vst [vmem:[%s336 + $0xa8] sm:%s328] %v379
                %v381 = vld [vmem:[%s335 + $0x160] sm:%s328]
                %382 = vst [vmem:[%s336 + $0xb0] sm:%s328] %v381
                %v383 = vld [vmem:[%s335 + $0x170] sm:%s328]
                %384 = vst [vmem:[%s336 + $0xb8] sm:%s328] %v383
                %v385 = vld [vmem:[%s335 + $0x180] sm:%s328]
                %386 = vst [vmem:[%s336 + $0xc0] sm:%s328] %v385
                %v387 = vld [vmem:[%s335 + $0x190] sm:%s328]
                %388 = vst [vmem:[%s336 + $0xc8] sm:%s328] %v387
                %v389 = vld [vmem:[%s335 + $0x1a0] sm:%s328]
                %390 = vst [vmem:[%s336 + $0xd0] sm:%s328] %v389
                %v391 = vld [vmem:[%s335 + $0x1b0] sm:%s328]
                %392 = vst [vmem:[%s336 + $0xd8] sm:%s328] %v391
                %v393 = vld [vmem:[%s335 + $0x1c0] sm:%s328]
                %394 = vst [vmem:[%s336 + $0xe0] sm:%s328] %v393
                %v395 = vld [vmem:[%s335 + $0x1d0] sm:%s328]
                %396 = vst [vmem:[%s336 + $0xe8] sm:%s328] %v395
                %v397 = vld [vmem:[%s335 + $0x1e0] sm:%s328]
                %398 = vst [vmem:[%s336 + $0xf0] sm:%s328] %v397
                %v399 = vld [vmem:[%s335 + $0x1f0] sm:%s328]
                %400 = vst [vmem:[%s336 + $0xf8] sm:%s328] %v399
                %v401 = vld [vmem:[%s335 + $0x200] sm:%s328]
                %402 = vst [vmem:[%s336 + $0x100] sm:%s328] %v401
                %v403 = vld [vmem:[%s335 + $0x210] sm:%s328]
                %404 = vst [vmem:[%s336 + $0x108] sm:%s328] %v403
                %v405 = vld [vmem:[%s335 + $0x220] sm:%s328]
                %406 = vst [vmem:[%s336 + $0x110] sm:%s328] %v405
                %v407 = vld [vmem:[%s335 + $0x230] sm:%s328]
                %408 = vst [vmem:[%s336 + $0x118] sm:%s328] %v407
                %v409 = vld [vmem:[%s335 + $0x240] sm:%s328]
                %410 = vst [vmem:[%s336 + $0x120] sm:%s328] %v409
                %v411 = vld [vmem:[%s335 + $0x250] sm:%s328]
                %412 = vst [vmem:[%s336 + $0x128] sm:%s328] %v411
                %v413 = vld [vmem:[%s335 + $0x260] sm:%s328]
                %414 = vst [vmem:[%s336 + $0x130] sm:%s328] %v413
                %v415 = vld [vmem:[%s335 + $0x270] sm:%s328]
                %416 = vst [vmem:[%s336 + $0x138] sm:%s328] %v415
                %v417 = vld [vmem:[%s335 + $0x280] sm:%s328]
                %418 = vst [vmem:[%s336 + $0x140] sm:%s328] %v417
                %v419 = vld [vmem:[%s335 + $0x290] sm:%s328]
                %420 = vst [vmem:[%s336 + $0x148] sm:%s328] %v419
                %v421 = vld [vmem:[%s335 + $0x2a0] sm:%s328]
                %422 = vst [vmem:[%s336 + $0x150] sm:%s328] %v421
                %v423 = vld [vmem:[%s335 + $0x2b0] sm:%s328]
                %424 = vst [vmem:[%s336 + $0x158] sm:%s328] %v423
                %v425 = vld [vmem:[%s335 + $0x2c0] sm:%s328]
                %426 = vst [vmem:[%s336 + $0x160] sm:%s328] %v425
                %v427 = vld [vmem:[%s335 + $0x2d0] sm:%s328]
                %428 = vst [vmem:[%s336 + $0x168] sm:%s328] %v427
                %v429 = vld [vmem:[%s335 + $0x2e0] sm:%s328]
                %430 = vst [vmem:[%s336 + $0x170] sm:%s328] %v429
                %v431 = vld [vmem:[%s335 + $0x2f0] sm:%s328]
                %432 = vst [vmem:[%s336 + $0x178] sm:%s328] %v431
                %v433 = vld [vmem:[%s335 + $0x300] sm:%s328]
                %434 = vst [vmem:[%s336 + $0x180] sm:%s328] %v433
                %v435 = vld [vmem:[%s335 + $0x310] sm:%s328]
                %436 = vst [vmem:[%s336 + $0x188] sm:%s328] %v435
                %v437 = vld [vmem:[%s335 + $0x320] sm:%s328]
                %438 = vst [vmem:[%s336 + $0x190] sm:%s328] %v437
                %v439 = vld [vmem:[%s335 + $0x330] sm:%s328]
                %440 = vst [vmem:[%s336 + $0x198] sm:%s328] %v439
                %v441 = vld [vmem:[%s335 + $0x340] sm:%s328]
                %442 = vst [vmem:[%s336 + $0x1a0] sm:%s328] %v441
                %v443 = vld [vmem:[%s335 + $0x350] sm:%s328]
                %444 = vst [vmem:[%s336 + $0x1a8] sm:%s328] %v443
                %v445 = vld [vmem:[%s335 + $0x360] sm:%s328]
                %446 = vst [vmem:[%s336 + $0x1b0] sm:%s328] %v445
                %v447 = vld [vmem:[%s335 + $0x370] sm:%s328]
                %448 = vst [vmem:[%s336 + $0x1b8] sm:%s328] %v447
                %v449 = vld [vmem:[%s335 + $0x380] sm:%s328]
                %450 = vst [vmem:[%s336 + $0x1c0] sm:%s328] %v449
                %v451 = vld [vmem:[%s335 + $0x390] sm:%s328]
                %452 = vst [vmem:[%s336 + $0x1c8] sm:%s328] %v451
                %v453 = vld [vmem:[%s335 + $0x3a0] sm:%s328]
                %454 = vst [vmem:[%s336 + $0x1d0] sm:%s328] %v453
                %v455 = vld [vmem:[%s335 + $0x3b0] sm:%s328]
                %456 = vst [vmem:[%s336 + $0x1d8] sm:%s328] %v455
                %v457 = vld [vmem:[%s335 + $0x3c0] sm:%s328]
                %458 = vst [vmem:[%s336 + $0x1e0] sm:%s328] %v457
                %v459 = vld [vmem:[%s335 + $0x3d0] sm:%s328]
                %460 = vst [vmem:[%s336 + $0x1e8] sm:%s328] %v459
                %v461 = vld [vmem:[%s335 + $0x3e0] sm:%s328]
                %462 = vst [vmem:[%s336 + $0x1f0] sm:%s328] %v461
                %v463 = vld [vmem:[%s335 + $0x3f0] sm:%s328]
                %464 = vst [vmem:[%s336 + $0x1f8] sm:%s328] %v463
                %v465 = vld [vmem:[%s335 + $0x400] sm:%s328]
                %466 = vst [vmem:[%s336 + $0x200] sm:%s328] %v465
                %v467 = vld [vmem:[%s335 + $0x410] sm:%s328]
                %468 = vst [vmem:[%s336 + $0x208] sm:%s328] %v467
                %v469 = vld [vmem:[%s335 + $0x420] sm:%s328]
                %470 = vst [vmem:[%s336 + $0x210] sm:%s328] %v469
                %v471 = vld [vmem:[%s335 + $0x430] sm:%s328]
                %472 = vst [vmem:[%s336 + $0x218] sm:%s328] %v471
                %v473 = vld [vmem:[%s335 + $0x440] sm:%s328]
                %474 = vst [vmem:[%s336 + $0x220] sm:%s328] %v473
                %v475 = vld [vmem:[%s335 + $0x450] sm:%s328]
                %476 = vst [vmem:[%s336 + $0x228] sm:%s328] %v475
                %v477 = vld [vmem:[%s335 + $0x460] sm:%s328]
                %478 = vst [vmem:[%s336 + $0x230] sm:%s328] %v477
                %v479 = vld [vmem:[%s335 + $0x470] sm:%s328]
                %480 = vst [vmem:[%s336 + $0x238] sm:%s328] %v479
                %v481 = vld [vmem:[%s335 + $0x480] sm:%s328]
                %482 = vst [vmem:[%s336 + $0x240] sm:%s328] %v481
                %v483 = vld [vmem:[%s335 + $0x490] sm:%s328]
                %484 = vst [vmem:[%s336 + $0x248] sm:%s328] %v483
                %v485 = vld [vmem:[%s335 + $0x4a0] sm:%s328]
                %486 = vst [vmem:[%s336 + $0x250] sm:%s328] %v485
                %v487 = vld [vmem:[%s335 + $0x4b0] sm:%s328]
                %488 = vst [vmem:[%s336 + $0x258] sm:%s328] %v487
                %v489 = vld [vmem:[%s335 + $0x4c0] sm:%s328]
                %490 = vst [vmem:[%s336 + $0x260] sm:%s328] %v489
                %v491 = vld [vmem:[%s335 + $0x4d0] sm:%s328]
                %492 = vst [vmem:[%s336 + $0x268] sm:%s328] %v491
                %v493 = vld [vmem:[%s335 + $0x4e0] sm:%s328]
                %494 = vst [vmem:[%s336 + $0x270] sm:%s328] %v493
                %v495 = vld [vmem:[%s335 + $0x4f0] sm:%s328]
                %496 = vst [vmem:[%s336 + $0x278] sm:%s328] %v495
                %v497 = vld [vmem:[%s335 + $0x500] sm:%s328]
                %498 = vst [vmem:[%s336 + $0x280] sm:%s328] %v497
                %v499 = vld [vmem:[%s335 + $0x510] sm:%s328]
                %500 = vst [vmem:[%s336 + $0x288] sm:%s328] %v499
                %v501 = vld [vmem:[%s335 + $0x520] sm:%s328]
                %502 = vst [vmem:[%s336 + $0x290] sm:%s328] %v501
                %v503 = vld [vmem:[%s335 + $0x530] sm:%s328]
                %504 = vst [vmem:[%s336 + $0x298] sm:%s328] %v503
                %v505 = vld [vmem:[%s335 + $0x540] sm:%s328]
                %506 = vst [vmem:[%s336 + $0x2a0] sm:%s328] %v505
                %v507 = vld [vmem:[%s335 + $0x550] sm:%s328]
                %508 = vst [vmem:[%s336 + $0x2a8] sm:%s328] %v507
                %v509 = vld [vmem:[%s335 + $0x560] sm:%s328]
                %510 = vst [vmem:[%s336 + $0x2b0] sm:%s328] %v509
                %v511 = vld [vmem:[%s335 + $0x570] sm:%s328]
                %512 = vst [vmem:[%s336 + $0x2b8] sm:%s328] %v511
                %v513 = vld [vmem:[%s335 + $0x580] sm:%s328]
                %514 = vst [vmem:[%s336 + $0x2c0] sm:%s328] %v513
                %v515 = vld [vmem:[%s335 + $0x590] sm:%s328]
                %516 = vst [vmem:[%s336 + $0x2c8] sm:%s328] %v515
                %v517 = vld [vmem:[%s335 + $0x5a0] sm:%s328]
                %518 = vst [vmem:[%s336 + $0x2d0] sm:%s328] %v517
                %v519 = vld [vmem:[%s335 + $0x5b0] sm:%s328]
                %520 = vst [vmem:[%s336 + $0x2d8] sm:%s328] %v519
                %v521 = vld [vmem:[%s335 + $0x5c0] sm:%s328]
                %522 = vst [vmem:[%s336 + $0x2e0] sm:%s328] %v521
                %v523 = vld [vmem:[%s335 + $0x5d0] sm:%s328]
                %524 = vst [vmem:[%s336 + $0x2e8] sm:%s328] %v523
                %v525 = vld [vmem:[%s335 + $0x5e0] sm:%s328]
                %526 = vst [vmem:[%s336 + $0x2f0] sm:%s328] %v525
                %v527 = vld [vmem:[%s335 + $0x5f0] sm:%s328]
                %528 = vst [vmem:[%s336 + $0x2f8] sm:%s328] %v527
                %v529 = vld [vmem:[%s335 + $0x600] sm:%s328]
                %530 = vst [vmem:[%s336 + $0x300] sm:%s328] %v529
                %v531 = vld [vmem:[%s335 + $0x610] sm:%s328]
                %532 = vst [vmem:[%s336 + $0x308] sm:%s328] %v531
                %v533 = vld [vmem:[%s335 + $0x620] sm:%s328]
                %534 = vst [vmem:[%s336 + $0x310] sm:%s328] %v533
                %v535 = vld [vmem:[%s335 + $0x630] sm:%s328]
                %536 = vst [vmem:[%s336 + $0x318] sm:%s328] %v535
                %v537 = vld [vmem:[%s335 + $0x640] sm:%s328]
                %538 = vst [vmem:[%s336 + $0x320] sm:%s328] %v537
                %v539 = vld [vmem:[%s335 + $0x650] sm:%s328]
                %540 = vst [vmem:[%s336 + $0x328] sm:%s328] %v539
                %v541 = vld [vmem:[%s335 + $0x660] sm:%s328]
                %542 = vst [vmem:[%s336 + $0x330] sm:%s328] %v541
                %v543 = vld [vmem:[%s335 + $0x670] sm:%s328]
                %544 = vst [vmem:[%s336 + $0x338] sm:%s328] %v543
                %v545 = vld [vmem:[%s335 + $0x680] sm:%s328]
                %546 = vst [vmem:[%s336 + $0x340] sm:%s328] %v545
                %v547 = vld [vmem:[%s335 + $0x690] sm:%s328]
                %548 = vst [vmem:[%s336 + $0x348] sm:%s328] %v547
                %v549 = vld [vmem:[%s335 + $0x6a0] sm:%s328]
                %550 = vst [vmem:[%s336 + $0x350] sm:%s328] %v549
                %v551 = vld [vmem:[%s335 + $0x6b0] sm:%s328]
                %552 = vst [vmem:[%s336 + $0x358] sm:%s328] %v551
                %v553 = vld [vmem:[%s335 + $0x6c0] sm:%s328]
                %554 = vst [vmem:[%s336 + $0x360] sm:%s328] %v553
                %v555 = vld [vmem:[%s335 + $0x6d0] sm:%s328]
                %556 = vst [vmem:[%s336 + $0x368] sm:%s328] %v555
                %v557 = vld [vmem:[%s335 + $0x6e0] sm:%s328]
                %558 = vst [vmem:[%s336 + $0x370] sm:%s328] %v557
                %v559 = vld [vmem:[%s335 + $0x6f0] sm:%s328]
                %560 = vst [vmem:[%s336 + $0x378] sm:%s328] %v559
              $region69: #{tpu_custom_call.1} parent=63 // loop_footer
                %s334 = sadd.s32 1, %s330
              $region70: #{tpu_custom_call.1} parent=63 // loop_footer_branch
                %329 = sbr.rel target = $region66
              $region71: #{tpu_custom_call.1} parent=63 // loop_exit
                _
            $region64: #{tpu_custom_call.1} parent=55 // pred_fallthru
              _
          $region56: #{tpu_custom_call.1} parent=51 // pred_fallthru
            _
          %797 = vnop
        $region52: #{tpu_custom_call.1} parent=47 // pred_fallthru
          _
      $region48: #{tpu_custom_call.1} parent=5 // pred_fallthru
        _
      %p798 = scmp.le.s32.totalorder 1, %s21
      %p799 = scmp.lt.s32.totalorder %s21, 3
      %p800 = pnand %p798, %p799
      %p801 = pneg %p800
      // Predicated region
      $region87: #{tpu_custom_call.1} parent=5 // pred_check
        _
      $region88: #{tpu_custom_call.1} parent=5 // pred_check_branch
        %803 = sbr.rel (%p800) target = $region90
      $region89: #{tpu_custom_call.1} parent=5 // pred_region
        %s804 = ssub.s32 %s21, 1
        %s805 = sand.u32 %s34, 1
        %s806 = sand.u32 %s34, 1
        %s807 = smul.addr %s806, 896
        %s808 = scalar_lea.vmem [#allocation8], %s807
        // Predicated region
        $region91: #{tpu_custom_call.1} parent=89 // pred_check
          %p809 = pneg %p47
        $region92: #{tpu_custom_call.1} parent=89 // pred_check_branch
          %811 = sbr.rel (%p809) target = $region94
        $region93: #{tpu_custom_call.1} parent=89 // pred_region
          _
        $region94: #{tpu_custom_call.1} parent=89 // pred_fallthru
          _
        // Predicated region
        $region95: #{tpu_custom_call.1} parent=89 // pred_check
          %p812 = pneg %p68
        $region96: #{tpu_custom_call.1} parent=89 // pred_check_branch
          %814 = sbr.rel (%p812) target = $region98
        $region97: #{tpu_custom_call.1} parent=89 // pred_region
          %816 = dma.done [#allocation11], 16
        $region98: #{tpu_custom_call.1} parent=89 // pred_fallthru
          _
        // Predicated region
        $region99: #{tpu_custom_call.1} parent=89 // pred_check
          %p817 = pneg %p89
        $region100: #{tpu_custom_call.1} parent=89 // pred_check_branch
          %819 = sbr.rel (%p817) target = $region102
        $region101: #{tpu_custom_call.1} parent=89 // pred_region
          %821 = dma.done [#allocation13], 16
        $region102: #{tpu_custom_call.1} parent=89 // pred_fallthru
          _
        // Predicated region
        $region103: #{tpu_custom_call.1} parent=89 // pred_check
          %p822 = pneg %p110
        $region104: #{tpu_custom_call.1} parent=89 // pred_check_branch
          %824 = sbr.rel (%p822) target = $region106
        $region105: #{tpu_custom_call.1} parent=89 // pred_region
          %826 = dma.done [#allocation13], 64
        $region106: #{tpu_custom_call.1} parent=89 // pred_fallthru
          _
        // Predicated region
        $region107: #{tpu_custom_call.1} parent=89 // pred_check
          %p827 = pneg %p131
        $region108: #{tpu_custom_call.1} parent=89 // pred_check_branch
          %829 = sbr.rel (%p827) target = $region110
        $region109: #{tpu_custom_call.1} parent=89 // pred_region
          %831 = dma.done [#allocation16], 16
        $region110: #{tpu_custom_call.1} parent=89 // pred_fallthru
          _
        %832 = sfence
        %s833 = sand.u32 %s34, 1
        %s834 = sand.u32 %s34, 1
        %s835 = smul.addr %s834, 896
        %s836 = scalar_lea.vmem [#allocation8], %s835
        %p837 = pneg %p47
        %p838 = pneg %p44
        %p839 = pneg %p68
        %p840 = pneg %p65
        %p841 = pneg %p89
        %p842 = pneg %p86
        %p843 = pneg %p110
        %p844 = pneg %p107
        %p845 = pneg %p131
        %p846 = pneg %p128
        %p847 = pneg %p152
        %p848 = pneg %p149
        %p849 = pneg %p173
        %p850 = pneg %p170
        %p851 = pneg %p194
        %p852 = pneg %p191
        %p853 = pneg %p215
        %p854 = pneg %p212
        %p855 = pneg %p241
        %p856 = pneg %p238
        %s857 = sand.u32 %s228, 1
        %s858 = scalar_lea.sflag [#allocation10], %s857
        %s859 = sand.u32 %s228, 1
        %s860 = smul.addr %s859, 16
        %s861 = scalar_lea.vmem [#allocation17], %s860
        %v862 = vld [vmem:[%s808] sm:$0x7f]
        %v863 = vld [vmem:[%s808 + $0x8] sm:$0x7f]
        %v864 = vld [vmem:[%s808 + $0x10] sm:$0x7f]
        %v865 = vld [vmem:[%s808 + $0x18] sm:$0x7f]
        %v866 = vld [vmem:[%s808 + $0x20] sm:$0x7f]
        %v867 = vld [vmem:[%s808 + $0x28] sm:$0x7f]
        %v868 = vld [vmem:[%s808 + $0x30] sm:$0x7f]
        %v869 = vld [vmem:[%s808 + $0x38] sm:$0x7f]
        %v870 = vld [vmem:[%s808 + $0x40] sm:$0x7f]
        %v871 = vld [vmem:[%s808 + $0x48] sm:$0x7f]
        %v872 = vld [vmem:[%s808 + $0x50] sm:$0x7f]
        %v873 = vld [vmem:[%s808 + $0x58] sm:$0x7f]
        %v874 = vld [vmem:[%s808 + $0x60] sm:$0x7f]
        %v875 = vld [vmem:[%s808 + $0x68] sm:$0x7f]
        %v876 = vld [vmem:[%s808 + $0x70] sm:$0x7f]
        %v877 = vld [vmem:[%s808 + $0x78] sm:$0x7f]
        %v878 = vld [vmem:[%s808 + $0x80] sm:$0x7f]
        %v879 = vld [vmem:[%s808 + $0x88] sm:$0x7f]
        %v880 = vld [vmem:[%s808 + $0x90] sm:$0x7f]
        %v881 = vld [vmem:[%s808 + $0x98] sm:$0x7f]
        %v882 = vld [vmem:[%s808 + $0xa0] sm:$0x7f]
        %v883 = vld [vmem:[%s808 + $0xa8] sm:$0x7f]
        %v884 = vld [vmem:[%s808 + $0xb0] sm:$0x7f]
        %v885 = vld [vmem:[%s808 + $0xb8] sm:$0x7f]
        %v886 = vld [vmem:[%s808 + $0xc0] sm:$0x7f]
        %v887 = vld [vmem:[%s808 + $0xc8] sm:$0x7f]
        %v888 = vld [vmem:[%s808 + $0xd0] sm:$0x7f]
        %v889 = vld [vmem:[%s808 + $0xd8] sm:$0x7f]
        %v890 = vld [vmem:[%s808 + $0xe0] sm:$0x7f]
        %v891 = vld [vmem:[%s808 + $0xe8] sm:$0x7f]
        %v892 = vld [vmem:[%s808 + $0xf0] sm:$0x7f]
        %v893 = vld [vmem:[%s808 + $0xf8] sm:$0x7f]
        %v894 = vld [vmem:[%s808 + $0x100] sm:$0x7f]
        %v895 = vld [vmem:[%s808 + $0x108] sm:$0x7f]
        %v896 = vld [vmem:[%s808 + $0x110] sm:$0x7f]
        %v897 = vld [vmem:[%s808 + $0x118] sm:$0x7f]
        %v898 = vld [vmem:[%s808 + $0x120] sm:$0x7f]
        %v899 = vld [vmem:[%s808 + $0x128] sm:$0x7f]
        %v900 = vld [vmem:[%s808 + $0x130] sm:$0x7f]
        %v901 = vld [vmem:[%s808 + $0x138] sm:$0x7f]
        %v902 = vld [vmem:[%s808 + $0x140] sm:$0x7f]
        %v903 = vld [vmem:[%s808 + $0x148] sm:$0x7f]
        %v904 = vld [vmem:[%s808 + $0x150] sm:$0x7f]
        %v905 = vld [vmem:[%s808 + $0x158] sm:$0x7f]
        %v906 = vld [vmem:[%s808 + $0x160] sm:$0x7f]
        %v907 = vld [vmem:[%s808 + $0x168] sm:$0x7f]
        %v908 = vld [vmem:[%s808 + $0x170] sm:$0x7f]
        %v909 = vld [vmem:[%s808 + $0x178] sm:$0x7f]
        %v910 = vld [vmem:[%s808 + $0x180] sm:$0x7f]
        %v911 = vld [vmem:[%s808 + $0x188] sm:$0x7f]
        %v912 = vld [vmem:[%s808 + $0x190] sm:$0x7f]
        %v913 = vld [vmem:[%s808 + $0x198] sm:$0x7f]
        %v914 = vld [vmem:[%s808 + $0x1a0] sm:$0x7f]
        %v915 = vld [vmem:[%s808 + $0x1a8] sm:$0x7f]
        %v916 = vld [vmem:[%s808 + $0x1b0] sm:$0x7f]
        %v917 = vld [vmem:[%s808 + $0x1b8] sm:$0x7f]
        %v918 = vld [vmem:[%s808 + $0x1c0] sm:$0x7f]
        %v919 = vld [vmem:[%s808 + $0x1c8] sm:$0x7f]
        %v920 = vld [vmem:[%s808 + $0x1d0] sm:$0x7f]
        %v921 = vld [vmem:[%s808 + $0x1d8] sm:$0x7f]
        %v922 = vld [vmem:[%s808 + $0x1e0] sm:$0x7f]
        %v923 = vld [vmem:[%s808 + $0x1e8] sm:$0x7f]
        %v924 = vld [vmem:[%s808 + $0x1f0] sm:$0x7f]
        %v925 = vld [vmem:[%s808 + $0x1f8] sm:$0x7f]
        %v926 = vld [vmem:[%s808 + $0x200] sm:$0x7f]
        %v927 = vld [vmem:[%s808 + $0x208] sm:$0x7f]
        %v928 = vld [vmem:[%s808 + $0x210] sm:$0x7f]
        %v929 = vld [vmem:[%s808 + $0x218] sm:$0x7f]
        %v930 = vld [vmem:[%s808 + $0x220] sm:$0x7f]
        %v931 = vld [vmem:[%s808 + $0x228] sm:$0x7f]
        %v932 = vld [vmem:[%s808 + $0x230] sm:$0x7f]
        %v933 = vld [vmem:[%s808 + $0x238] sm:$0x7f]
        %v934 = vld [vmem:[%s808 + $0x240] sm:$0x7f]
        %v935 = vld [vmem:[%s808 + $0x248] sm:$0x7f]
        %v936 = vld [vmem:[%s808 + $0x250] sm:$0x7f]
        %v937 = vld [vmem:[%s808 + $0x258] sm:$0x7f]
        %v938 = vld [vmem:[%s808 + $0x260] sm:$0x7f]
        %v939 = vld [vmem:[%s808 + $0x268] sm:$0x7f]
        %v940 = vld [vmem:[%s808 + $0x270] sm:$0x7f]
        %v941 = vld [vmem:[%s808 + $0x278] sm:$0x7f]
        %v942 = vld [vmem:[%s808 + $0x280] sm:$0x7f]
        %v943 = vld [vmem:[%s808 + $0x288] sm:$0x7f]
        %v944 = vld [vmem:[%s808 + $0x290] sm:$0x7f]
        %v945 = vld [vmem:[%s808 + $0x298] sm:$0x7f]
        %s946 = scalar_lea.vmem %s808, 224 [#allocation8]
        %v947 = vld [vmem:[%s946] sm:$0x7f]
        %v948 = vld [vmem:[%s946 + $0x8] sm:$0x7f]
        %v949 = vld [vmem:[%s946 + $0x10] sm:$0x7f]
        %v950 = vld [vmem:[%s946 + $0x18] sm:$0x7f]
        %v951 = vld [vmem:[%s946 + $0x20] sm:$0x7f]
        %v952 = vld [vmem:[%s946 + $0x28] sm:$0x7f]
        %v953 = vld [vmem:[%s946 + $0x30] sm:$0x7f]
        %v954 = vld [vmem:[%s946 + $0x38] sm:$0x7f]
        %v955 = vld [vmem:[%s946 + $0x40] sm:$0x7f]
        %v956 = vld [vmem:[%s946 + $0x48] sm:$0x7f]
        %v957 = vld [vmem:[%s946 + $0x50] sm:$0x7f]
        %v958 = vld [vmem:[%s946 + $0x58] sm:$0x7f]
        %v959 = vld [vmem:[%s946 + $0x60] sm:$0x7f]
        %v960 = vld [vmem:[%s946 + $0x68] sm:$0x7f]
        %v961 = vld [vmem:[%s946 + $0x70] sm:$0x7f]
        %v962 = vld [vmem:[%s946 + $0x78] sm:$0x7f]
        %v963 = vld [vmem:[%s946 + $0x80] sm:$0x7f]
        %v964 = vld [vmem:[%s946 + $0x88] sm:$0x7f]
        %v965 = vld [vmem:[%s946 + $0x90] sm:$0x7f]
        %v966 = vld [vmem:[%s946 + $0x98] sm:$0x7f]
        %v967 = vld [vmem:[%s946 + $0xa0] sm:$0x7f]
        %v968 = vld [vmem:[%s946 + $0xa8] sm:$0x7f]
        %v969 = vld [vmem:[%s946 + $0xb0] sm:$0x7f]
        %v970 = vld [vmem:[%s946 + $0xb8] sm:$0x7f]
        %v971 = vld [vmem:[%s946 + $0xc0] sm:$0x7f]
        %v972 = vld [vmem:[%s946 + $0xc8] sm:$0x7f]
        %v973 = vld [vmem:[%s946 + $0xd0] sm:$0x7f]
        %v974 = vld [vmem:[%s946 + $0xd8] sm:$0x7f]
        %v975 = vld [vmem:[%s946 + $0xe0] sm:$0x7f]
        %v976 = vld [vmem:[%s946 + $0xe8] sm:$0x7f]
        %v977 = vld [vmem:[%s946 + $0xf0] sm:$0x7f]
        %v978 = vld [vmem:[%s946 + $0xf8] sm:$0x7f]
        %v979 = vld [vmem:[%s946 + $0x100] sm:$0x7f]
        %v980 = vld [vmem:[%s946 + $0x108] sm:$0x7f]
        %v981 = vld [vmem:[%s946 + $0x110] sm:$0x7f]
        %v982 = vld [vmem:[%s946 + $0x118] sm:$0x7f]
        %v983 = vld [vmem:[%s946 + $0x120] sm:$0x7f]
        %v984 = vld [vmem:[%s946 + $0x128] sm:$0x7f]
        %v985 = vld [vmem:[%s946 + $0x130] sm:$0x7f]
        %v986 = vld [vmem:[%s946 + $0x138] sm:$0x7f]
        %v987 = vld [vmem:[%s946 + $0x140] sm:$0x7f]
        %v988 = vld [vmem:[%s946 + $0x148] sm:$0x7f]
        %v989 = vld [vmem:[%s946 + $0x150] sm:$0x7f]
        %v990 = vld [vmem:[%s946 + $0x158] sm:$0x7f]
        %v991 = vld [vmem:[%s946 + $0x160] sm:$0x7f]
        %v992 = vld [vmem:[%s946 + $0x168] sm:$0x7f]
        %v993 = vld [vmem:[%s946 + $0x170] sm:$0x7f]
        %v994 = vld [vmem:[%s946 + $0x178] sm:$0x7f]
        %v995 = vld [vmem:[%s946 + $0x180] sm:$0x7f]
        %v996 = vld [vmem:[%s946 + $0x188] sm:$0x7f]
        %v997 = vld [vmem:[%s946 + $0x190] sm:$0x7f]
        %v998 = vld [vmem:[%s946 + $0x198] sm:$0x7f]
        %v999 = vld [vmem:[%s946 + $0x1a0] sm:$0x7f]
        %v1000 = vld [vmem:[%s946 + $0x1a8] sm:$0x7f]
        %v1001 = vld [vmem:[%s946 + $0x1b0] sm:$0x7f]
        %v1002 = vld [vmem:[%s946 + $0x1b8] sm:$0x7f]
        %v1003 = vld [vmem:[%s946 + $0x1c0] sm:$0x7f]
        %v1004 = vld [vmem:[%s946 + $0x1c8] sm:$0x7f]
        %v1005 = vld [vmem:[%s946 + $0x1d0] sm:$0x7f]
        %v1006 = vld [vmem:[%s946 + $0x1d8] sm:$0x7f]
        %v1007 = vld [vmem:[%s946 + $0x1e0] sm:$0x7f]
        %v1008 = vld [vmem:[%s946 + $0x1e8] sm:$0x7f]
        %v1009 = vld [vmem:[%s946 + $0x1f0] sm:$0x7f]
        %v1010 = vld [vmem:[%s946 + $0x1f8] sm:$0x7f]
        %v1011 = vld [vmem:[%s946 + $0x200] sm:$0x7f]
        %v1012 = vld [vmem:[%s946 + $0x208] sm:$0x7f]
        %v1013 = vld [vmem:[%s946 + $0x210] sm:$0x7f]
        %v1014 = vld [vmem:[%s946 + $0x218] sm:$0x7f]
        %v1015 = vld [vmem:[%s946 + $0x220] sm:$0x7f]
        %v1016 = vld [vmem:[%s946 + $0x228] sm:$0x7f]
        %v1017 = vld [vmem:[%s946 + $0x230] sm:$0x7f]
        %v1018 = vld [vmem:[%s946 + $0x238] sm:$0x7f]
        %v1019 = vld [vmem:[%s946 + $0x240] sm:$0x7f]
        %v1020 = vld [vmem:[%s946 + $0x248] sm:$0x7f]
        %v1021 = vld [vmem:[%s946 + $0x250] sm:$0x7f]
        %v1022 = vld [vmem:[%s946 + $0x258] sm:$0x7f]
        %v1023 = vld [vmem:[%s946 + $0x260] sm:$0x7f]
        %v1024 = vld [vmem:[%s946 + $0x268] sm:$0x7f]
        %v1025 = vld [vmem:[%s946 + $0x270] sm:$0x7f]
        %v1026 = vld [vmem:[%s946 + $0x278] sm:$0x7f]
        %v1027 = vld [vmem:[%s946 + $0x280] sm:$0x7f]
        %v1028 = vld [vmem:[%s946 + $0x288] sm:$0x7f]
        %v1029 = vld [vmem:[%s946 + $0x290] sm:$0x7f]
        %v1030 = vld [vmem:[%s946 + $0x298] sm:$0x7f]
        %v1031 = vadd.f32 %v862, %v947
        %v1032 = vadd.f32 %v863, %v948
        %v1033 = vadd.f32 %v864, %v949
        %v1034 = vadd.f32 %v865, %v950
        %v1035 = vadd.f32 %v866, %v951
        %v1036 = vadd.f32 %v867, %v952
        %v1037 = vadd.f32 %v868, %v953
        %v1038 = vadd.f32 %v869, %v954
        %v1039 = vadd.f32 %v870, %v955
        %v1040 = vadd.f32 %v871, %v956
        %v1041 = vadd.f32 %v872, %v957
        %v1042 = vadd.f32 %v873, %v958
        %v1043 = vadd.f32 %v874, %v959
        %v1044 = vadd.f32 %v875, %v960
        %v1045 = vadd.f32 %v876, %v961
        %v1046 = vadd.f32 %v877, %v962
        %v1047 = vadd.f32 %v878, %v963
        %v1048 = vadd.f32 %v879, %v964
        %v1049 = vadd.f32 %v880, %v965
        %v1050 = vadd.f32 %v881, %v966
        %v1051 = vadd.f32 %v882, %v967
        %v1052 = vadd.f32 %v883, %v968
        %v1053 = vadd.f32 %v884, %v969
        %v1054 = vadd.f32 %v885, %v970
        %v1055 = vadd.f32 %v886, %v971
        %v1056 = vadd.f32 %v887, %v972
        %v1057 = vadd.f32 %v888, %v973
        %v1058 = vadd.f32 %v889, %v974
        %v1059 = vadd.f32 %v890, %v975
        %v1060 = vadd.f32 %v891, %v976
        %v1061 = vadd.f32 %v892, %v977
        %v1062 = vadd.f32 %v893, %v978
        %v1063 = vadd.f32 %v894, %v979
        %v1064 = vadd.f32 %v895, %v980
        %v1065 = vadd.f32 %v896, %v981
        %v1066 = vadd.f32 %v897, %v982
        %v1067 = vadd.f32 %v898, %v983
        %v1068 = vadd.f32 %v899, %v984
        %v1069 = vadd.f32 %v900, %v985
        %v1070 = vadd.f32 %v901, %v986
        %v1071 = vadd.f32 %v902, %v987
        %v1072 = vadd.f32 %v903, %v988
        %v1073 = vadd.f32 %v904, %v989
        %v1074 = vadd.f32 %v905, %v990
        %v1075 = vadd.f32 %v906, %v991
        %v1076 = vadd.f32 %v907, %v992
        %v1077 = vadd.f32 %v908, %v993
        %v1078 = vadd.f32 %v909, %v994
        %v1079 = vadd.f32 %v910, %v995
        %v1080 = vadd.f32 %v911, %v996
        %v1081 = vadd.f32 %v912, %v997
        %v1082 = vadd.f32 %v913, %v998
        %v1083 = vadd.f32 %v914, %v999
        %v1084 = vadd.f32 %v915, %v1000
        %v1085 = vadd.f32 %v916, %v1001
        %v1086 = vadd.f32 %v917, %v1002
        %v1087 = vadd.f32 %v918, %v1003
        %v1088 = vadd.f32 %v919, %v1004
        %v1089 = vadd.f32 %v920, %v1005
        %v1090 = vadd.f32 %v921, %v1006
        %v1091 = vadd.f32 %v922, %v1007
        %v1092 = vadd.f32 %v923, %v1008
        %v1093 = vadd.f32 %v924, %v1009
        %v1094 = vadd.f32 %v925, %v1010
        %v1095 = vadd.f32 %v926, %v1011
        %v1096 = vadd.f32 %v927, %v1012
        %v1097 = vadd.f32 %v928, %v1013
        %v1098 = vadd.f32 %v929, %v1014
        %v1099 = vadd.f32 %v930, %v1015
        %v1100 = vadd.f32 %v931, %v1016
        %v1101 = vadd.f32 %v932, %v1017
        %v1102 = vadd.f32 %v933, %v1018
        %v1103 = vadd.f32 %v934, %v1019
        %v1104 = vadd.f32 %v935, %v1020
        %v1105 = vadd.f32 %v936, %v1021
        %v1106 = vadd.f32 %v937, %v1022
        %v1107 = vadd.f32 %v938, %v1023
        %v1108 = vadd.f32 %v939, %v1024
        %v1109 = vadd.f32 %v940, %v1025
        %v1110 = vadd.f32 %v941, %v1026
        %v1111 = vadd.f32 %v942, %v1027
        %v1112 = vadd.f32 %v943, %v1028
        %v1113 = vadd.f32 %v944, %v1029
        %v1114 = vadd.f32 %v945, %v1030
        %1115 = vst [vmem:[#allocation2] sm:$0x7f] %v1031
        %1116 = vst [vmem:[#allocation2 + $0x8] sm:$0x7f] %v1032
        %1117 = vst [vmem:[#allocation2 + $0x10] sm:$0x7f] %v1033
        %1118 = vst [vmem:[#allocation2 + $0x18] sm:$0x7f] %v1034
        %1119 = vst [vmem:[#allocation2 + $0x20] sm:$0x7f] %v1035
        %1120 = vst [vmem:[#allocation2 + $0x28] sm:$0x7f] %v1036
        %1121 = vst [vmem:[#allocation2 + $0x30] sm:$0x7f] %v1037
        %1122 = vst [vmem:[#allocation2 + $0x38] sm:$0x7f] %v1038
        %1123 = vst [vmem:[#allocation2 + $0x40] sm:$0x7f] %v1039
        %1124 = vst [vmem:[#allocation2 + $0x48] sm:$0x7f] %v1040
        %1125 = vst [vmem:[#allocation2 + $0x50] sm:$0x7f] %v1041
        %1126 = vst [vmem:[#allocation2 + $0x58] sm:$0x7f] %v1042
        %1127 = vst [vmem:[#allocation2 + $0x60] sm:$0x7f] %v1043
        %1128 = vst [vmem:[#allocation2 + $0x68] sm:$0x7f] %v1044
        %1129 = vst [vmem:[#allocation2 + $0x70] sm:$0x7f] %v1045
        %1130 = vst [vmem:[#allocation2 + $0x78] sm:$0x7f] %v1046
        %1131 = vst [vmem:[#allocation2 + $0x80] sm:$0x7f] %v1047
        %1132 = vst [vmem:[#allocation2 + $0x88] sm:$0x7f] %v1048
        %1133 = vst [vmem:[#allocation2 + $0x90] sm:$0x7f] %v1049
        %1134 = vst [vmem:[#allocation2 + $0x98] sm:$0x7f] %v1050
        %1135 = vst [vmem:[#allocation2 + $0xa0] sm:$0x7f] %v1051
        %1136 = vst [vmem:[#allocation2 + $0xa8] sm:$0x7f] %v1052
        %1137 = vst [vmem:[#allocation2 + $0xb0] sm:$0x7f] %v1053
        %1138 = vst [vmem:[#allocation2 + $0xb8] sm:$0x7f] %v1054
        %1139 = vst [vmem:[#allocation2 + $0xc0] sm:$0x7f] %v1055
        %1140 = vst [vmem:[#allocation2 + $0xc8] sm:$0x7f] %v1056
        %1141 = vst [vmem:[#allocation2 + $0xd0] sm:$0x7f] %v1057
        %1142 = vst [vmem:[#allocation2 + $0xd8] sm:$0x7f] %v1058
        %1143 = vst [vmem:[#allocation2 + $0xe0] sm:$0x7f] %v1059
        %1144 = vst [vmem:[#allocation2 + $0xe8] sm:$0x7f] %v1060
        %1145 = vst [vmem:[#allocation2 + $0xf0] sm:$0x7f] %v1061
        %1146 = vst [vmem:[#allocation2 + $0xf8] sm:$0x7f] %v1062
        %1147 = vst [vmem:[#allocation2 + $0x100] sm:$0x7f] %v1063
        %1148 = vst [vmem:[#allocation2 + $0x108] sm:$0x7f] %v1064
        %1149 = vst [vmem:[#allocation2 + $0x110] sm:$0x7f] %v1065
        %1150 = vst [vmem:[#allocation2 + $0x118] sm:$0x7f] %v1066
        %1151 = vst [vmem:[#allocation2 + $0x120] sm:$0x7f] %v1067
        %1152 = vst [vmem:[#allocation2 + $0x128] sm:$0x7f] %v1068
        %1153 = vst [vmem:[#allocation2 + $0x130] sm:$0x7f] %v1069
        %1154 = vst [vmem:[#allocation2 + $0x138] sm:$0x7f] %v1070
        %1155 = vst [vmem:[#allocation2 + $0x140] sm:$0x7f] %v1071
        %1156 = vst [vmem:[#allocation2 + $0x148] sm:$0x7f] %v1072
        %1157 = vst [vmem:[#allocation2 + $0x150] sm:$0x7f] %v1073
        %1158 = vst [vmem:[#allocation2 + $0x158] sm:$0x7f] %v1074
        %1159 = vst [vmem:[#allocation2 + $0x160] sm:$0x7f] %v1075
        %1160 = vst [vmem:[#allocation2 + $0x168] sm:$0x7f] %v1076
        %1161 = vst [vmem:[#allocation2 + $0x170] sm:$0x7f] %v1077
        %1162 = vst [vmem:[#allocation2 + $0x178] sm:$0x7f] %v1078
        %1163 = vst [vmem:[#allocation2 + $0x180] sm:$0x7f] %v1079
        %1164 = vst [vmem:[#allocation2 + $0x188] sm:$0x7f] %v1080
        %1165 = vst [vmem:[#allocation2 + $0x190] sm:$0x7f] %v1081
        %1166 = vst [vmem:[#allocation2 + $0x198] sm:$0x7f] %v1082
        %1167 = vst [vmem:[#allocation2 + $0x1a0] sm:$0x7f] %v1083
        %1168 = vst [vmem:[#allocation2 + $0x1a8] sm:$0x7f] %v1084
        %1169 = vst [vmem:[#allocation2 + $0x1b0] sm:$0x7f] %v1085
        %1170 = vst [vmem:[#allocation2 + $0x1b8] sm:$0x7f] %v1086
        %1171 = vst [vmem:[#allocation2 + $0x1c0] sm:$0x7f] %v1087
        %1172 = vst [vmem:[#allocation2 + $0x1c8] sm:$0x7f] %v1088
        %1173 = vst [vmem:[#allocation2 + $0x1d0] sm:$0x7f] %v1089
        %1174 = vst [vmem:[#allocation2 + $0x1d8] sm:$0x7f] %v1090
        %1175 = vst [vmem:[#allocation2 + $0x1e0] sm:$0x7f] %v1091
        %1176 = vst [vmem:[#allocation2 + $0x1e8] sm:$0x7f] %v1092
        %1177 = vst [vmem:[#allocation2 + $0x1f0] sm:$0x7f] %v1093
        %1178 = vst [vmem:[#allocation2 + $0x1f8] sm:$0x7f] %v1094
        %1179 = vst [vmem:[#allocation2 + $0x200] sm:$0x7f] %v1095
        %1180 = vst [vmem:[#allocation2 + $0x208] sm:$0x7f] %v1096
        %1181 = vst [vmem:[#allocation2 + $0x210] sm:$0x7f] %v1097
        %1182 = vst [vmem:[#allocation2 + $0x218] sm:$0x7f] %v1098
        %1183 = vst [vmem:[#allocation2 + $0x220] sm:$0x7f] %v1099
        %1184 = vst [vmem:[#allocation2 + $0x228] sm:$0x7f] %v1100
        %1185 = vst [vmem:[#allocation2 + $0x230] sm:$0x7f] %v1101
        %1186 = vst [vmem:[#allocation2 + $0x238] sm:$0x7f] %v1102
        %1187 = vst [vmem:[#allocation2 + $0x240] sm:$0x7f] %v1103
        %1188 = vst [vmem:[#allocation2 + $0x248] sm:$0x7f] %v1104
        %1189 = vst [vmem:[#allocation2 + $0x250] sm:$0x7f] %v1105
        %1190 = vst [vmem:[#allocation2 + $0x258] sm:$0x7f] %v1106
        %1191 = vst [vmem:[#allocation2 + $0x260] sm:$0x7f] %v1107
        %1192 = vst [vmem:[#allocation2 + $0x268] sm:$0x7f] %v1108
        %1193 = vst [vmem:[#allocation2 + $0x270] sm:$0x7f] %v1109
        %1194 = vst [vmem:[#allocation2 + $0x278] sm:$0x7f] %v1110
        %1195 = vst [vmem:[#allocation2 + $0x280] sm:$0x7f] %v1111
        %1196 = vst [vmem:[#allocation2 + $0x288] sm:$0x7f] %v1112
        %1197 = vst [vmem:[#allocation2 + $0x290] sm:$0x7f] %v1113
        %1198 = vst [vmem:[#allocation2 + $0x298] sm:$0x7f] %v1114
        %s1199 = scalar_lea.vmem %s808, 672 [#allocation8]
        %v1200 = vld [vmem:[%s1199] sm:$0x3f]
        %v1201 = vld [vmem:[%s1199 + $0x8] sm:$0x3f]
        %v1202 = vld [vmem:[%s1199 + $0x10] sm:$0x3f]
        %v1203 = vld [vmem:[%s1199 + $0x18] sm:$0x3f]
        %v1204 = vld [vmem:[%s1199 + $0x20] sm:$0x3f]
        %v1205 = vld [vmem:[%s1199 + $0x28] sm:$0x3f]
        %v1206 = vld [vmem:[%s1199 + $0x30] sm:$0x3f]
        %v1207 = vld [vmem:[%s1199 + $0x38] sm:$0x3f]
        %v1208 = vld [vmem:[%s1199 + $0x40] sm:$0x3f]
        %v1209 = vld [vmem:[%s1199 + $0x48] sm:$0x3f]
        %v1210 = vld [vmem:[%s1199 + $0x50] sm:$0x3f]
        %v1211 = vld [vmem:[%s1199 + $0x58] sm:$0x3f]
        %v1212 = vld [vmem:[%s1199 + $0x60] sm:$0x3f]
        %v1213 = vld [vmem:[%s1199 + $0x68] sm:$0x3f]
        %v1214 = vld [vmem:[%s1199 + $0x70] sm:$0x3f]
        %v1215 = vld [vmem:[%s1199 + $0x78] sm:$0x3f]
        %v1216 = vld [vmem:[%s1199 + $0x80] sm:$0x3f]
        %v1217 = vld [vmem:[%s1199 + $0x88] sm:$0x3f]
        %v1218 = vld [vmem:[%s1199 + $0x90] sm:$0x3f]
        %v1219 = vld [vmem:[%s1199 + $0x98] sm:$0x3f]
        %v1220 = vld [vmem:[%s1199 + $0xa0] sm:$0x3f]
        %v1221 = vld [vmem:[%s1199 + $0xa8] sm:$0x3f]
        %v1222 = vld [vmem:[%s1199 + $0xb0] sm:$0x3f]
        %v1223 = vld [vmem:[%s1199 + $0xb8] sm:$0x3f]
        %v1224 = vld [vmem:[%s1199 + $0xc0] sm:$0x3f]
        %v1225 = vld [vmem:[%s1199 + $0xc8] sm:$0x3f]
        %v1226 = vld [vmem:[%s1199 + $0xd0] sm:$0x3f]
        %v1227 = vld [vmem:[%s1199 + $0xd8] sm:$0x3f]
        %v1228 = vld [vmem:[%s808 + $0x1] sm:$0x3f]
        %v1229 = vld [vmem:[%s808 + $0x9] sm:$0x3f]
        %v1230 = vld [vmem:[%s808 + $0x11] sm:$0x3f]
        %v1231 = vld [vmem:[%s808 + $0x19] sm:$0x3f]
        %v1232 = vld [vmem:[%s808 + $0x21] sm:$0x3f]
        %v1233 = vld [vmem:[%s808 + $0x29] sm:$0x3f]
        %v1234 = vld [vmem:[%s808 + $0x31] sm:$0x3f]
        %v1235 = vld [vmem:[%s808 + $0x39] sm:$0x3f]
        %v1236 = vld [vmem:[%s808 + $0x41] sm:$0x3f]
        %v1237 = vld [vmem:[%s808 + $0x49] sm:$0x3f]
        %v1238 = vld [vmem:[%s808 + $0x51] sm:$0x3f]
        %v1239 = vld [vmem:[%s808 + $0x59] sm:$0x3f]
        %v1240 = vld [vmem:[%s808 + $0x61] sm:$0x3f]
        %v1241 = vld [vmem:[%s808 + $0x69] sm:$0x3f]
        %v1242 = vld [vmem:[%s808 + $0x71] sm:$0x3f]
        %v1243 = vld [vmem:[%s808 + $0x79] sm:$0x3f]
        %v1244 = vld [vmem:[%s808 + $0x81] sm:$0x3f]
        %v1245 = vld [vmem:[%s808 + $0x89] sm:$0x3f]
        %v1246 = vld [vmem:[%s808 + $0x91] sm:$0x3f]
        %v1247 = vld [vmem:[%s808 + $0x99] sm:$0x3f]
        %v1248 = vld [vmem:[%s808 + $0xa1] sm:$0x3f]
        %v1249 = vld [vmem:[%s808 + $0xa9] sm:$0x3f]
        %v1250 = vld [vmem:[%s808 + $0xb1] sm:$0x3f]
        %v1251 = vld [vmem:[%s808 + $0xb9] sm:$0x3f]
        %v1252 = vld [vmem:[%s808 + $0xc1] sm:$0x3f]
        %v1253 = vld [vmem:[%s808 + $0xc9] sm:$0x3f]
        %v1254 = vld [vmem:[%s808 + $0xd1] sm:$0x3f]
        %v1255 = vld [vmem:[%s808 + $0xd9] sm:$0x3f]
        %v1256 = vadd.f32 %v1200, %v1228
        %v1257 = vadd.f32 %v1201, %v1229
        %v1258 = vadd.f32 %v1202, %v1230
        %v1259 = vadd.f32 %v1203, %v1231
        %v1260 = vadd.f32 %v1204, %v1232
        %v1261 = vadd.f32 %v1205, %v1233
        %v1262 = vadd.f32 %v1206, %v1234
        %v1263 = vadd.f32 %v1207, %v1235
        %v1264 = vadd.f32 %v1208, %v1236
        %v1265 = vadd.f32 %v1209, %v1237
        %v1266 = vadd.f32 %v1210, %v1238
        %v1267 = vadd.f32 %v1211, %v1239
        %v1268 = vadd.f32 %v1212, %v1240
        %v1269 = vadd.f32 %v1213, %v1241
        %v1270 = vadd.f32 %v1214, %v1242
        %v1271 = vadd.f32 %v1215, %v1243
        %v1272 = vadd.f32 %v1216, %v1244
        %v1273 = vadd.f32 %v1217, %v1245
        %v1274 = vadd.f32 %v1218, %v1246
        %v1275 = vadd.f32 %v1219, %v1247
        %v1276 = vadd.f32 %v1220, %v1248
        %v1277 = vadd.f32 %v1221, %v1249
        %v1278 = vadd.f32 %v1222, %v1250
        %v1279 = vadd.f32 %v1223, %v1251
        %v1280 = vadd.f32 %v1224, %v1252
        %v1281 = vadd.f32 %v1225, %v1253
        %v1282 = vadd.f32 %v1226, %v1254
        %v1283 = vadd.f32 %v1227, %v1255
        %s1284 = scalar_lea.vmem [#allocation2], 672
        %1285 = vst [vmem:[%s1284] sm:$0x3f] %v1256
        %1286 = vst [vmem:[%s1284 + $0x8] sm:$0x3f] %v1257
        %1287 = vst [vmem:[%s1284 + $0x10] sm:$0x3f] %v1258
        %1288 = vst [vmem:[%s1284 + $0x18] sm:$0x3f] %v1259
        %1289 = vst [vmem:[%s1284 + $0x20] sm:$0x3f] %v1260
        %1290 = vst [vmem:[%s1284 + $0x28] sm:$0x3f] %v1261
        %1291 = vst [vmem:[%s1284 + $0x30] sm:$0x3f] %v1262
        %1292 = vst [vmem:[%s1284 + $0x38] sm:$0x3f] %v1263
        %1293 = vst [vmem:[%s1284 + $0x40] sm:$0x3f] %v1264
        %1294 = vst [vmem:[%s1284 + $0x48] sm:$0x3f] %v1265
        %1295 = vst [vmem:[%s1284 + $0x50] sm:$0x3f] %v1266
        %1296 = vst [vmem:[%s1284 + $0x58] sm:$0x3f] %v1267
        %1297 = vst [vmem:[%s1284 + $0x60] sm:$0x3f] %v1268
        %1298 = vst [vmem:[%s1284 + $0x68] sm:$0x3f] %v1269
        %1299 = vst [vmem:[%s1284 + $0x70] sm:$0x3f] %v1270
        %1300 = vst [vmem:[%s1284 + $0x78] sm:$0x3f] %v1271
        %1301 = vst [vmem:[%s1284 + $0x80] sm:$0x3f] %v1272
        %1302 = vst [vmem:[%s1284 + $0x88] sm:$0x3f] %v1273
        %1303 = vst [vmem:[%s1284 + $0x90] sm:$0x3f] %v1274
        %1304 = vst [vmem:[%s1284 + $0x98] sm:$0x3f] %v1275
        %1305 = vst [vmem:[%s1284 + $0xa0] sm:$0x3f] %v1276
        %1306 = vst [vmem:[%s1284 + $0xa8] sm:$0x3f] %v1277
        %1307 = vst [vmem:[%s1284 + $0xb0] sm:$0x3f] %v1278
        %1308 = vst [vmem:[%s1284 + $0xb8] sm:$0x3f] %v1279
        %1309 = vst [vmem:[%s1284 + $0xc0] sm:$0x3f] %v1280
        %1310 = vst [vmem:[%s1284 + $0xc8] sm:$0x3f] %v1281
        %1311 = vst [vmem:[%s1284 + $0xd0] sm:$0x3f] %v1282
        %1312 = vst [vmem:[%s1284 + $0xd8] sm:$0x3f] %v1283
        loop: start=0, step=1, limit=3
        $region111: #{tpu_custom_call.1} parent=89 // loop_pre_header
          _
        $region112: #{tpu_custom_call.1} parent=89 // loop_header
          %s1314 = sphi 0, %s1318
          %p1315 = scmp.ge.s32.totalorder %s1314, 3
        $region113: #{tpu_custom_call.1} parent=89 // loop_header_branch
          %1317 = sbr.rel (%p1315) target = $region117
        $region114: #{tpu_custom_call.1} parent=89 // loop_body
          %s1319 = sld [smem:[#allocation12 + %s1314]]
          loop: start=0, step=1, limit=3
          $region118: #{tpu_custom_call.1} parent=114 // loop_pre_header
            _
          $region119: #{tpu_custom_call.1} parent=114 // loop_header
            %s1321 = sphi 0, %s1325
            %p1322 = scmp.ge.s32.totalorder %s1321, 3
          $region120: #{tpu_custom_call.1} parent=114 // loop_header_branch
            %1324 = sbr.rel (%p1322) target = $region124
          $region121: #{tpu_custom_call.1} parent=114 // loop_body
            %s1326 = smul.u32 %s1321, 8
            %s1327 = smul.u32 %s1326, 8
            %s1328 = scalar_lea.vmem [#allocation2], %s1327
            %v1329 = vld [vmem:[%s1328] sm:$0x3f]
            %v1330 = vld [vmem:[%s1328 + $0x8] sm:$0x3f]
            %v1331 = vld [vmem:[%s1328 + $0x10] sm:$0x3f]
            %v1332 = vld [vmem:[%s1328 + $0x18] sm:$0x3f]
            %v1333 = vld [vmem:[%s1328 + $0x20] sm:$0x3f]
            %v1334 = vld [vmem:[%s1328 + $0x28] sm:$0x3f]
            %v1335 = vld [vmem:[%s1328 + $0x30] sm:$0x3f]
            %v1336 = vld [vmem:[%s1328 + $0x38] sm:$0x3f]
            %v1337 = vld [vmem:[%s1328 + $0x1] sm:$0x3f]
            %v1338 = vld [vmem:[%s1328 + $0x9] sm:$0x3f]
            %v1339 = vld [vmem:[%s1328 + $0x11] sm:$0x3f]
            %v1340 = vld [vmem:[%s1328 + $0x19] sm:$0x3f]
            %v1341 = vld [vmem:[%s1328 + $0x21] sm:$0x3f]
            %v1342 = vld [vmem:[%s1328 + $0x29] sm:$0x3f]
            %v1343 = vld [vmem:[%s1328 + $0x31] sm:$0x3f]
            %v1344 = vld [vmem:[%s1328 + $0x39] sm:$0x3f]
            %s1345 = sadd.s32 %s1326, 28
            %s1346 = smul.u32 %s1345, 8
            %s1347 = scalar_lea.vmem [#allocation2], %s1346
            %v1348 = vld [vmem:[%s1347] sm:$0x3f]
            %v1349 = vld [vmem:[%s1347 + $0x8] sm:$0x3f]
            %v1350 = vld [vmem:[%s1347 + $0x10] sm:$0x3f]
            %v1351 = vld [vmem:[%s1347 + $0x18] sm:$0x3f]
            %v1352 = vld [vmem:[%s1347 + $0x20] sm:$0x3f]
            %v1353 = vld [vmem:[%s1347 + $0x28] sm:$0x3f]
            %v1354 = vld [vmem:[%s1347 + $0x30] sm:$0x3f]
            %v1355 = vld [vmem:[%s1347 + $0x38] sm:$0x3f]
            %v1356 = vld [vmem:[%s1347 + $0x1] sm:$0x3f]
            %v1357 = vld [vmem:[%s1347 + $0x9] sm:$0x3f]
            %v1358 = vld [vmem:[%s1347 + $0x11] sm:$0x3f]
            %v1359 = vld [vmem:[%s1347 + $0x19] sm:$0x3f]
            %v1360 = vld [vmem:[%s1347 + $0x21] sm:$0x3f]
            %v1361 = vld [vmem:[%s1347 + $0x29] sm:$0x3f]
            %v1362 = vld [vmem:[%s1347 + $0x31] sm:$0x3f]
            %v1363 = vld [vmem:[%s1347 + $0x39] sm:$0x3f]
            %s1364 = sadd.s32 %s1326, 56
            %s1365 = smul.u32 %s1364, 8
            %s1366 = scalar_lea.vmem [#allocation2], %s1365
            %v1367 = vld [vmem:[%s1366] sm:$0x3f]
            %v1368 = vld [vmem:[%s1366 + $0x8] sm:$0x3f]
            %v1369 = vld [vmem:[%s1366 + $0x10] sm:$0x3f]
            %v1370 = vld [vmem:[%s1366 + $0x18] sm:$0x3f]
            %v1371 = vld [vmem:[%s1366 + $0x20] sm:$0x3f]
            %v1372 = vld [vmem:[%s1366 + $0x28] sm:$0x3f]
            %v1373 = vld [vmem:[%s1366 + $0x30] sm:$0x3f]
            %v1374 = vld [vmem:[%s1366 + $0x38] sm:$0x3f]
            %v1375 = vld [vmem:[%s1366 + $0x1] sm:$0x3f]
            %v1376 = vld [vmem:[%s1366 + $0x9] sm:$0x3f]
            %v1377 = vld [vmem:[%s1366 + $0x11] sm:$0x3f]
            %v1378 = vld [vmem:[%s1366 + $0x19] sm:$0x3f]
            %v1379 = vld [vmem:[%s1366 + $0x21] sm:$0x3f]
            %v1380 = vld [vmem:[%s1366 + $0x29] sm:$0x3f]
            %v1381 = vld [vmem:[%s1366 + $0x31] sm:$0x3f]
            %v1382 = vld [vmem:[%s1366 + $0x39] sm:$0x3f]
            %s1383 = sadd.s32 %s1326, 84
            %s1384 = smul.u32 %s1383, 8
            %s1385 = scalar_lea.vmem [#allocation2], %s1384
            %v1386 = vld [vmem:[%s1385] sm:$0x3f]
            %v1387 = vld [vmem:[%s1385 + $0x8] sm:$0x3f]
            %v1388 = vld [vmem:[%s1385 + $0x10] sm:$0x3f]
            %v1389 = vld [vmem:[%s1385 + $0x18] sm:$0x3f]
            %v1390 = vld [vmem:[%s1385 + $0x20] sm:$0x3f]
            %v1391 = vld [vmem:[%s1385 + $0x28] sm:$0x3f]
            %v1392 = vld [vmem:[%s1385 + $0x30] sm:$0x3f]
            %v1393 = vld [vmem:[%s1385 + $0x38] sm:$0x3f]
            %s1394 = smul.u32 %s1314, 25
            %s1395 = sld [smem:[#allocation9 + %s1394]]
            %s1396 = sadd.s32 %s1394, 1
            %s1397 = sld [smem:[#allocation9 + %s1396]]
            %s1398 = sadd.s32 %s1394, 2
            %s1399 = sld [smem:[#allocation9 + %s1398]]
            %s1400 = sadd.s32 %s1394, 3
            %s1401 = sld [smem:[#allocation9 + %s1400]]
            %s1402 = sadd.s32 %s1394, 4
            %s1403 = sld [smem:[#allocation9 + %s1402]]
            %v1404 = vstv %s1395
            %v1405 = vmul.f32 %v1404, %v1329
            %v1406 = vmul.f32 %v1404, %v1330
            %v1407 = vmul.f32 %v1404, %v1331
            %v1408 = vmul.f32 %v1404, %v1332
            %v1409 = vmul.f32 %v1404, %v1333
            %v1410 = vmul.f32 %v1404, %v1334
            %v1411 = vmul.f32 %v1404, %v1335
            %v1412 = vmul.f32 %v1404, %v1336
            %v1413 = vadd.f32 %v1405, 0.0
            %v1414 = vadd.f32 %v1406, 0.0
            %v1415 = vadd.f32 %v1407, 0.0
            %v1416 = vadd.f32 %v1408, 0.0
            %v1417 = vadd.f32 %v1409, 0.0
            %v1418 = vadd.f32 %v1410, 0.0
            %v1419 = vadd.f32 %v1411, 0.0
            %v1420 = vadd.f32 %v1412, 0.0
            %v1421 = vstv %s1397
            %v1422 = vmul.f32 %v1421, %v1348
            %v1423 = vmul.f32 %v1421, %v1349
            %v1424 = vmul.f32 %v1421, %v1350
            %v1425 = vmul.f32 %v1421, %v1351
            %v1426 = vmul.f32 %v1421, %v1352
            %v1427 = vmul.f32 %v1421, %v1353
            %v1428 = vmul.f32 %v1421, %v1354
            %v1429 = vmul.f32 %v1421, %v1355
            %v1430 = vadd.f32 %v1413, %v1422
            %v1431 = vadd.f32 %v1414, %v1423
            %v1432 = vadd.f32 %v1415, %v1424
            %v1433 = vadd.f32 %v1416, %v1425
            %v1434 = vadd.f32 %v1417, %v1426
            %v1435 = vadd.f32 %v1418, %v1427
            %v1436 = vadd.f32 %v1419, %v1428
            %v1437 = vadd.f32 %v1420, %v1429
            %v1438 = vstv %s1399
            %v1439 = vmul.f32 %v1438, %v1367
            %v1440 = vmul.f32 %v1438, %v1368
            %v1441 = vmul.f32 %v1438, %v1369
            %v1442 = vmul.f32 %v1438, %v1370
            %v1443 = vmul.f32 %v1438, %v1371
            %v1444 = vmul.f32 %v1438, %v1372
            %v1445 = vmul.f32 %v1438, %v1373
            %v1446 = vmul.f32 %v1438, %v1374
            %v1447 = vadd.f32 %v1430, %v1439
            %v1448 = vadd.f32 %v1431, %v1440
            %v1449 = vadd.f32 %v1432, %v1441
            %v1450 = vadd.f32 %v1433, %v1442
            %v1451 = vadd.f32 %v1434, %v1443
            %v1452 = vadd.f32 %v1435, %v1444
            %v1453 = vadd.f32 %v1436, %v1445
            %v1454 = vadd.f32 %v1437, %v1446
            %v1455 = vstv %s1401
            %v1456 = vmul.f32 %v1455, %v1386
            %v1457 = vmul.f32 %v1455, %v1387
            %v1458 = vmul.f32 %v1455, %v1388
            %v1459 = vmul.f32 %v1455, %v1389
            %v1460 = vmul.f32 %v1455, %v1390
            %v1461 = vmul.f32 %v1455, %v1391
            %v1462 = vmul.f32 %v1455, %v1392
            %v1463 = vmul.f32 %v1455, %v1393
            %v1464 = vadd.f32 %v1447, %v1456
            %v1465 = vadd.f32 %v1448, %v1457
            %v1466 = vadd.f32 %v1449, %v1458
            %v1467 = vadd.f32 %v1450, %v1459
            %v1468 = vadd.f32 %v1451, %v1460
            %v1469 = vadd.f32 %v1452, %v1461
            %v1470 = vadd.f32 %v1453, %v1462
            %v1471 = vadd.f32 %v1454, %v1463
            %v1472 = vstv %s1403
            %v1473 = vmul.f32 %v1472, %v1337
            %v1474 = vmul.f32 %v1472, %v1338
            %v1475 = vmul.f32 %v1472, %v1339
            %v1476 = vmul.f32 %v1472, %v1340
            %v1477 = vmul.f32 %v1472, %v1341
            %v1478 = vmul.f32 %v1472, %v1342
            %v1479 = vmul.f32 %v1472, %v1343
            %v1480 = vmul.f32 %v1472, %v1344
            %v1481 = vadd.f32 %v1464, %v1473
            %v1482 = vadd.f32 %v1465, %v1474
            %v1483 = vadd.f32 %v1466, %v1475
            %v1484 = vadd.f32 %v1467, %v1476
            %v1485 = vadd.f32 %v1468, %v1477
            %v1486 = vadd.f32 %v1469, %v1478
            %v1487 = vadd.f32 %v1470, %v1479
            %v1488 = vadd.f32 %v1471, %v1480
            %v1489 = vmul.f32 %v1404, %v1367
            %v1490 = vmul.f32 %v1404, %v1368
            %v1491 = vmul.f32 %v1404, %v1369
            %v1492 = vmul.f32 %v1404, %v1370
            %v1493 = vmul.f32 %v1404, %v1371
            %v1494 = vmul.f32 %v1404, %v1372
            %v1495 = vmul.f32 %v1404, %v1373
            %v1496 = vmul.f32 %v1404, %v1374
            %v1497 = vadd.f32 %v1489, 0.0
            %v1498 = vadd.f32 %v1490, 0.0
            %v1499 = vadd.f32 %v1491, 0.0
            %v1500 = vadd.f32 %v1492, 0.0
            %v1501 = vadd.f32 %v1493, 0.0
            %v1502 = vadd.f32 %v1494, 0.0
            %v1503 = vadd.f32 %v1495, 0.0
            %v1504 = vadd.f32 %v1496, 0.0
            %v1505 = vmul.f32 %v1421, %v1386
            %v1506 = vmul.f32 %v1421, %v1387
            %v1507 = vmul.f32 %v1421, %v1388
            %v1508 = vmul.f32 %v1421, %v1389
            %v1509 = vmul.f32 %v1421, %v1390
            %v1510 = vmul.f32 %v1421, %v1391
            %v1511 = vmul.f32 %v1421, %v1392
            %v1512 = vmul.f32 %v1421, %v1393
            %v1513 = vadd.f32 %v1497, %v1505
            %v1514 = vadd.f32 %v1498, %v1506
            %v1515 = vadd.f32 %v1499, %v1507
            %v1516 = vadd.f32 %v1500, %v1508
            %v1517 = vadd.f32 %v1501, %v1509
            %v1518 = vadd.f32 %v1502, %v1510
            %v1519 = vadd.f32 %v1503, %v1511
            %v1520 = vadd.f32 %v1504, %v1512
            %v1521 = vmul.f32 %v1438, %v1337
            %v1522 = vmul.f32 %v1438, %v1338
            %v1523 = vmul.f32 %v1438, %v1339
            %v1524 = vmul.f32 %v1438, %v1340
            %v1525 = vmul.f32 %v1438, %v1341
            %v1526 = vmul.f32 %v1438, %v1342
            %v1527 = vmul.f32 %v1438, %v1343
            %v1528 = vmul.f32 %v1438, %v1344
            %v1529 = vadd.f32 %v1513, %v1521
            %v1530 = vadd.f32 %v1514, %v1522
            %v1531 = vadd.f32 %v1515, %v1523
            %v1532 = vadd.f32 %v1516, %v1524
            %v1533 = vadd.f32 %v1517, %v1525
            %v1534 = vadd.f32 %v1518, %v1526
            %v1535 = vadd.f32 %v1519, %v1527
            %v1536 = vadd.f32 %v1520, %v1528
            %v1537 = vmul.f32 %v1455, %v1356
            %v1538 = vmul.f32 %v1455, %v1357
            %v1539 = vmul.f32 %v1455, %v1358
            %v1540 = vmul.f32 %v1455, %v1359
            %v1541 = vmul.f32 %v1455, %v1360
            %v1542 = vmul.f32 %v1455, %v1361
            %v1543 = vmul.f32 %v1455, %v1362
            %v1544 = vmul.f32 %v1455, %v1363
            %v1545 = vadd.f32 %v1529, %v1537
            %v1546 = vadd.f32 %v1530, %v1538
            %v1547 = vadd.f32 %v1531, %v1539
            %v1548 = vadd.f32 %v1532, %v1540
            %v1549 = vadd.f32 %v1533, %v1541
            %v1550 = vadd.f32 %v1534, %v1542
            %v1551 = vadd.f32 %v1535, %v1543
            %v1552 = vadd.f32 %v1536, %v1544
            %v1553 = vmul.f32 %v1472, %v1375
            %v1554 = vmul.f32 %v1472, %v1376
            %v1555 = vmul.f32 %v1472, %v1377
            %v1556 = vmul.f32 %v1472, %v1378
            %v1557 = vmul.f32 %v1472, %v1379
            %v1558 = vmul.f32 %v1472, %v1380
            %v1559 = vmul.f32 %v1472, %v1381
            %v1560 = vmul.f32 %v1472, %v1382
            %v1561 = vadd.f32 %v1545, %v1553
            %v1562 = vadd.f32 %v1546, %v1554
            %v1563 = vadd.f32 %v1547, %v1555
            %v1564 = vadd.f32 %v1548, %v1556
            %v1565 = vadd.f32 %v1549, %v1557
            %v1566 = vadd.f32 %v1550, %v1558
            %v1567 = vadd.f32 %v1551, %v1559
            %v1568 = vadd.f32 %v1552, %v1560
            %s1569 = sadd.s32 %s1326, 1
            %s1570 = smul.u32 %s1569, 8
            %s1571 = scalar_lea.vmem [#allocation2], %s1570
            %v1572 = vld [vmem:[%s1571] sm:$0x3f]
            %v1573 = vld [vmem:[%s1571 + $0x8] sm:$0x3f]
            %v1574 = vld [vmem:[%s1571 + $0x10] sm:$0x3f]
            %v1575 = vld [vmem:[%s1571 + $0x18] sm:$0x3f]
            %v1576 = vld [vmem:[%s1571 + $0x20] sm:$0x3f]
            %v1577 = vld [vmem:[%s1571 + $0x28] sm:$0x3f]
            %v1578 = vld [vmem:[%s1571 + $0x30] sm:$0x3f]
            %v1579 = vld [vmem:[%s1571 + $0x38] sm:$0x3f]
            %v1580 = vld [vmem:[%s1571 + $0x1] sm:$0x3f]
            %v1581 = vld [vmem:[%s1571 + $0x9] sm:$0x3f]
            %v1582 = vld [vmem:[%s1571 + $0x11] sm:$0x3f]
            %v1583 = vld [vmem:[%s1571 + $0x19] sm:$0x3f]
            %v1584 = vld [vmem:[%s1571 + $0x21] sm:$0x3f]
            %v1585 = vld [vmem:[%s1571 + $0x29] sm:$0x3f]
            %v1586 = vld [vmem:[%s1571 + $0x31] sm:$0x3f]
            %v1587 = vld [vmem:[%s1571 + $0x39] sm:$0x3f]
            %s1588 = sadd.s32 %s1326, 29
            %s1589 = smul.u32 %s1588, 8
            %s1590 = scalar_lea.vmem [#allocation2], %s1589
            %v1591 = vld [vmem:[%s1590] sm:$0x3f]
            %v1592 = vld [vmem:[%s1590 + $0x8] sm:$0x3f]
            %v1593 = vld [vmem:[%s1590 + $0x10] sm:$0x3f]
            %v1594 = vld [vmem:[%s1590 + $0x18] sm:$0x3f]
            %v1595 = vld [vmem:[%s1590 + $0x20] sm:$0x3f]
            %v1596 = vld [vmem:[%s1590 + $0x28] sm:$0x3f]
            %v1597 = vld [vmem:[%s1590 + $0x30] sm:$0x3f]
            %v1598 = vld [vmem:[%s1590 + $0x38] sm:$0x3f]
            %v1599 = vld [vmem:[%s1590 + $0x1] sm:$0x3f]
            %v1600 = vld [vmem:[%s1590 + $0x9] sm:$0x3f]
            %v1601 = vld [vmem:[%s1590 + $0x11] sm:$0x3f]
            %v1602 = vld [vmem:[%s1590 + $0x19] sm:$0x3f]
            %v1603 = vld [vmem:[%s1590 + $0x21] sm:$0x3f]
            %v1604 = vld [vmem:[%s1590 + $0x29] sm:$0x3f]
            %v1605 = vld [vmem:[%s1590 + $0x31] sm:$0x3f]
            %v1606 = vld [vmem:[%s1590 + $0x39] sm:$0x3f]
            %s1607 = sadd.s32 %s1326, 57
            %s1608 = smul.u32 %s1607, 8
            %s1609 = scalar_lea.vmem [#allocation2], %s1608
            %v1610 = vld [vmem:[%s1609] sm:$0x3f]
            %v1611 = vld [vmem:[%s1609 + $0x8] sm:$0x3f]
            %v1612 = vld [vmem:[%s1609 + $0x10] sm:$0x3f]
            %v1613 = vld [vmem:[%s1609 + $0x18] sm:$0x3f]
            %v1614 = vld [vmem:[%s1609 + $0x20] sm:$0x3f]
            %v1615 = vld [vmem:[%s1609 + $0x28] sm:$0x3f]
            %v1616 = vld [vmem:[%s1609 + $0x30] sm:$0x3f]
            %v1617 = vld [vmem:[%s1609 + $0x38] sm:$0x3f]
            %v1618 = vld [vmem:[%s1609 + $0x1] sm:$0x3f]
            %v1619 = vld [vmem:[%s1609 + $0x9] sm:$0x3f]
            %v1620 = vld [vmem:[%s1609 + $0x11] sm:$0x3f]
            %v1621 = vld [vmem:[%s1609 + $0x19] sm:$0x3f]
            %v1622 = vld [vmem:[%s1609 + $0x21] sm:$0x3f]
            %v1623 = vld [vmem:[%s1609 + $0x29] sm:$0x3f]
            %v1624 = vld [vmem:[%s1609 + $0x31] sm:$0x3f]
            %v1625 = vld [vmem:[%s1609 + $0x39] sm:$0x3f]
            %s1626 = sadd.s32 %s1326, 85
            %s1627 = smul.u32 %s1626, 8
            %s1628 = scalar_lea.vmem [#allocation2], %s1627
            %v1629 = vld [vmem:[%s1628] sm:$0x3f]
            %v1630 = vld [vmem:[%s1628 + $0x8] sm:$0x3f]
            %v1631 = vld [vmem:[%s1628 + $0x10] sm:$0x3f]
            %v1632 = vld [vmem:[%s1628 + $0x18] sm:$0x3f]
            %v1633 = vld [vmem:[%s1628 + $0x20] sm:$0x3f]
            %v1634 = vld [vmem:[%s1628 + $0x28] sm:$0x3f]
            %v1635 = vld [vmem:[%s1628 + $0x30] sm:$0x3f]
            %v1636 = vld [vmem:[%s1628 + $0x38] sm:$0x3f]
            %s1637 = sadd.s32 %s1394, 5
            %s1638 = sld [smem:[#allocation9 + %s1637]]
            %s1639 = sadd.s32 %s1394, 6
            %s1640 = sld [smem:[#allocation9 + %s1639]]
            %s1641 = sadd.s32 %s1394, 7
            %s1642 = sld [smem:[#allocation9 + %s1641]]
            %s1643 = sadd.s32 %s1394, 8
            %s1644 = sld [smem:[#allocation9 + %s1643]]
            %s1645 = sadd.s32 %s1394, 9
            %s1646 = sld [smem:[#allocation9 + %s1645]]
            %v1647 = vstv %s1638
            %v1648 = vmul.f32 %v1647, %v1572
            %v1649 = vmul.f32 %v1647, %v1573
            %v1650 = vmul.f32 %v1647, %v1574
            %v1651 = vmul.f32 %v1647, %v1575
            %v1652 = vmul.f32 %v1647, %v1576
            %v1653 = vmul.f32 %v1647, %v1577
            %v1654 = vmul.f32 %v1647, %v1578
            %v1655 = vmul.f32 %v1647, %v1579
            %v1656 = vadd.f32 %v1481, %v1648
            %v1657 = vadd.f32 %v1482, %v1649
            %v1658 = vadd.f32 %v1483, %v1650
            %v1659 = vadd.f32 %v1484, %v1651
            %v1660 = vadd.f32 %v1485, %v1652
            %v1661 = vadd.f32 %v1486, %v1653
            %v1662 = vadd.f32 %v1487, %v1654
            %v1663 = vadd.f32 %v1488, %v1655
            %v1664 = vstv %s1640
            %v1665 = vmul.f32 %v1664, %v1591
            %v1666 = vmul.f32 %v1664, %v1592
            %v1667 = vmul.f32 %v1664, %v1593
            %v1668 = vmul.f32 %v1664, %v1594
            %v1669 = vmul.f32 %v1664, %v1595
            %v1670 = vmul.f32 %v1664, %v1596
            %v1671 = vmul.f32 %v1664, %v1597
            %v1672 = vmul.f32 %v1664, %v1598
            %v1673 = vadd.f32 %v1656, %v1665
            %v1674 = vadd.f32 %v1657, %v1666
            %v1675 = vadd.f32 %v1658, %v1667
            %v1676 = vadd.f32 %v1659, %v1668
            %v1677 = vadd.f32 %v1660, %v1669
            %v1678 = vadd.f32 %v1661, %v1670
            %v1679 = vadd.f32 %v1662, %v1671
            %v1680 = vadd.f32 %v1663, %v1672
            %v1681 = vstv %s1642
            %v1682 = vmul.f32 %v1681, %v1610
            %v1683 = vmul.f32 %v1681, %v1611
            %v1684 = vmul.f32 %v1681, %v1612
            %v1685 = vmul.f32 %v1681, %v1613
            %v1686 = vmul.f32 %v1681, %v1614
            %v1687 = vmul.f32 %v1681, %v1615
            %v1688 = vmul.f32 %v1681, %v1616
            %v1689 = vmul.f32 %v1681, %v1617
            %v1690 = vadd.f32 %v1673, %v1682
            %v1691 = vadd.f32 %v1674, %v1683
            %v1692 = vadd.f32 %v1675, %v1684
            %v1693 = vadd.f32 %v1676, %v1685
            %v1694 = vadd.f32 %v1677, %v1686
            %v1695 = vadd.f32 %v1678, %v1687
            %v1696 = vadd.f32 %v1679, %v1688
            %v1697 = vadd.f32 %v1680, %v1689
            %v1698 = vstv %s1644
            %v1699 = vmul.f32 %v1698, %v1629
            %v1700 = vmul.f32 %v1698, %v1630
            %v1701 = vmul.f32 %v1698, %v1631
            %v1702 = vmul.f32 %v1698, %v1632
            %v1703 = vmul.f32 %v1698, %v1633
            %v1704 = vmul.f32 %v1698, %v1634
            %v1705 = vmul.f32 %v1698, %v1635
            %v1706 = vmul.f32 %v1698, %v1636
            %v1707 = vadd.f32 %v1690, %v1699
            %v1708 = vadd.f32 %v1691, %v1700
            %v1709 = vadd.f32 %v1692, %v1701
            %v1710 = vadd.f32 %v1693, %v1702
            %v1711 = vadd.f32 %v1694, %v1703
            %v1712 = vadd.f32 %v1695, %v1704
            %v1713 = vadd.f32 %v1696, %v1705
            %v1714 = vadd.f32 %v1697, %v1706
            %v1715 = vstv %s1646
            %v1716 = vmul.f32 %v1715, %v1580
            %v1717 = vmul.f32 %v1715, %v1581
            %v1718 = vmul.f32 %v1715, %v1582
            %v1719 = vmul.f32 %v1715, %v1583
            %v1720 = vmul.f32 %v1715, %v1584
            %v1721 = vmul.f32 %v1715, %v1585
            %v1722 = vmul.f32 %v1715, %v1586
            %v1723 = vmul.f32 %v1715, %v1587
            %v1724 = vadd.f32 %v1707, %v1716
            %v1725 = vadd.f32 %v1708, %v1717
            %v1726 = vadd.f32 %v1709, %v1718
            %v1727 = vadd.f32 %v1710, %v1719
            %v1728 = vadd.f32 %v1711, %v1720
            %v1729 = vadd.f32 %v1712, %v1721
            %v1730 = vadd.f32 %v1713, %v1722
            %v1731 = vadd.f32 %v1714, %v1723
            %v1732 = vmul.f32 %v1647, %v1610
            %v1733 = vmul.f32 %v1647, %v1611
            %v1734 = vmul.f32 %v1647, %v1612
            %v1735 = vmul.f32 %v1647, %v1613
            %v1736 = vmul.f32 %v1647, %v1614
            %v1737 = vmul.f32 %v1647, %v1615
            %v1738 = vmul.f32 %v1647, %v1616
            %v1739 = vmul.f32 %v1647, %v1617
            %v1740 = vadd.f32 %v1561, %v1732
            %v1741 = vadd.f32 %v1562, %v1733
            %v1742 = vadd.f32 %v1563, %v1734
            %v1743 = vadd.f32 %v1564, %v1735
            %v1744 = vadd.f32 %v1565, %v1736
            %v1745 = vadd.f32 %v1566, %v1737
            %v1746 = vadd.f32 %v1567, %v1738
            %v1747 = vadd.f32 %v1568, %v1739
            %v1748 = vmul.f32 %v1664, %v1629
            %v1749 = vmul.f32 %v1664, %v1630
            %v1750 = vmul.f32 %v1664, %v1631
            %v1751 = vmul.f32 %v1664, %v1632
            %v1752 = vmul.f32 %v1664, %v1633
            %v1753 = vmul.f32 %v1664, %v1634
            %v1754 = vmul.f32 %v1664, %v1635
            %v1755 = vmul.f32 %v1664, %v1636
            %v1756 = vadd.f32 %v1740, %v1748
            %v1757 = vadd.f32 %v1741, %v1749
            %v1758 = vadd.f32 %v1742, %v1750
            %v1759 = vadd.f32 %v1743, %v1751
            %v1760 = vadd.f32 %v1744, %v1752
            %v1761 = vadd.f32 %v1745, %v1753
            %v1762 = vadd.f32 %v1746, %v1754
            %v1763 = vadd.f32 %v1747, %v1755
            %v1764 = vmul.f32 %v1681, %v1580
            %v1765 = vmul.f32 %v1681, %v1581
            %v1766 = vmul.f32 %v1681, %v1582
            %v1767 = vmul.f32 %v1681, %v1583
            %v1768 = vmul.f32 %v1681, %v1584
            %v1769 = vmul.f32 %v1681, %v1585
            %v1770 = vmul.f32 %v1681, %v1586
            %v1771 = vmul.f32 %v1681, %v1587
            %v1772 = vadd.f32 %v1756, %v1764
            %v1773 = vadd.f32 %v1757, %v1765
            %v1774 = vadd.f32 %v1758, %v1766
            %v1775 = vadd.f32 %v1759, %v1767
            %v1776 = vadd.f32 %v1760, %v1768
            %v1777 = vadd.f32 %v1761, %v1769
            %v1778 = vadd.f32 %v1762, %v1770
            %v1779 = vadd.f32 %v1763, %v1771
            %v1780 = vmul.f32 %v1698, %v1599
            %v1781 = vmul.f32 %v1698, %v1600
            %v1782 = vmul.f32 %v1698, %v1601
            %v1783 = vmul.f32 %v1698, %v1602
            %v1784 = vmul.f32 %v1698, %v1603
            %v1785 = vmul.f32 %v1698, %v1604
            %v1786 = vmul.f32 %v1698, %v1605
            %v1787 = vmul.f32 %v1698, %v1606
            %v1788 = vadd.f32 %v1772, %v1780
            %v1789 = vadd.f32 %v1773, %v1781
            %v1790 = vadd.f32 %v1774, %v1782
            %v1791 = vadd.f32 %v1775, %v1783
            %v1792 = vadd.f32 %v1776, %v1784
            %v1793 = vadd.f32 %v1777, %v1785
            %v1794 = vadd.f32 %v1778, %v1786
            %v1795 = vadd.f32 %v1779, %v1787
            %v1796 = vmul.f32 %v1715, %v1618
            %v1797 = vmul.f32 %v1715, %v1619
            %v1798 = vmul.f32 %v1715, %v1620
            %v1799 = vmul.f32 %v1715, %v1621
            %v1800 = vmul.f32 %v1715, %v1622
            %v1801 = vmul.f32 %v1715, %v1623
            %v1802 = vmul.f32 %v1715, %v1624
            %v1803 = vmul.f32 %v1715, %v1625
            %v1804 = vadd.f32 %v1788, %v1796
            %v1805 = vadd.f32 %v1789, %v1797
            %v1806 = vadd.f32 %v1790, %v1798
            %v1807 = vadd.f32 %v1791, %v1799
            %v1808 = vadd.f32 %v1792, %v1800
            %v1809 = vadd.f32 %v1793, %v1801
            %v1810 = vadd.f32 %v1794, %v1802
            %v1811 = vadd.f32 %v1795, %v1803
            %s1812 = sadd.s32 %s1326, 2
            %s1813 = smul.u32 %s1812, 8
            %s1814 = scalar_lea.vmem [#allocation2], %s1813
            %v1815 = vld [vmem:[%s1814] sm:$0x3f]
            %v1816 = vld [vmem:[%s1814 + $0x8] sm:$0x3f]
            %v1817 = vld [vmem:[%s1814 + $0x10] sm:$0x3f]
            %v1818 = vld [vmem:[%s1814 + $0x18] sm:$0x3f]
            %v1819 = vld [vmem:[%s1814 + $0x20] sm:$0x3f]
            %v1820 = vld [vmem:[%s1814 + $0x28] sm:$0x3f]
            %v1821 = vld [vmem:[%s1814 + $0x30] sm:$0x3f]
            %v1822 = vld [vmem:[%s1814 + $0x38] sm:$0x3f]
            %v1823 = vld [vmem:[%s1814 + $0x1] sm:$0x3f]
            %v1824 = vld [vmem:[%s1814 + $0x9] sm:$0x3f]
            %v1825 = vld [vmem:[%s1814 + $0x11] sm:$0x3f]
            %v1826 = vld [vmem:[%s1814 + $0x19] sm:$0x3f]
            %v1827 = vld [vmem:[%s1814 + $0x21] sm:$0x3f]
            %v1828 = vld [vmem:[%s1814 + $0x29] sm:$0x3f]
            %v1829 = vld [vmem:[%s1814 + $0x31] sm:$0x3f]
            %v1830 = vld [vmem:[%s1814 + $0x39] sm:$0x3f]
            %s1831 = sadd.s32 %s1326, 30
            %s1832 = smul.u32 %s1831, 8
            %s1833 = scalar_lea.vmem [#allocation2], %s1832
            %v1834 = vld [vmem:[%s1833] sm:$0x3f]
            %v1835 = vld [vmem:[%s1833 + $0x8] sm:$0x3f]
            %v1836 = vld [vmem:[%s1833 + $0x10] sm:$0x3f]
            %v1837 = vld [vmem:[%s1833 + $0x18] sm:$0x3f]
            %v1838 = vld [vmem:[%s1833 + $0x20] sm:$0x3f]
            %v1839 = vld [vmem:[%s1833 + $0x28] sm:$0x3f]
            %v1840 = vld [vmem:[%s1833 + $0x30] sm:$0x3f]
            %v1841 = vld [vmem:[%s1833 + $0x38] sm:$0x3f]
            %v1842 = vld [vmem:[%s1833 + $0x1] sm:$0x3f]
            %v1843 = vld [vmem:[%s1833 + $0x9] sm:$0x3f]
            %v1844 = vld [vmem:[%s1833 + $0x11] sm:$0x3f]
            %v1845 = vld [vmem:[%s1833 + $0x19] sm:$0x3f]
            %v1846 = vld [vmem:[%s1833 + $0x21] sm:$0x3f]
            %v1847 = vld [vmem:[%s1833 + $0x29] sm:$0x3f]
            %v1848 = vld [vmem:[%s1833 + $0x31] sm:$0x3f]
            %v1849 = vld [vmem:[%s1833 + $0x39] sm:$0x3f]
            %s1850 = sadd.s32 %s1326, 58
            %s1851 = smul.u32 %s1850, 8
            %s1852 = scalar_lea.vmem [#allocation2], %s1851
            %v1853 = vld [vmem:[%s1852] sm:$0x3f]
            %v1854 = vld [vmem:[%s1852 + $0x8] sm:$0x3f]
            %v1855 = vld [vmem:[%s1852 + $0x10] sm:$0x3f]
            %v1856 = vld [vmem:[%s1852 + $0x18] sm:$0x3f]
            %v1857 = vld [vmem:[%s1852 + $0x20] sm:$0x3f]
            %v1858 = vld [vmem:[%s1852 + $0x28] sm:$0x3f]
            %v1859 = vld [vmem:[%s1852 + $0x30] sm:$0x3f]
            %v1860 = vld [vmem:[%s1852 + $0x38] sm:$0x3f]
            %v1861 = vld [vmem:[%s1852 + $0x1] sm:$0x3f]
            %v1862 = vld [vmem:[%s1852 + $0x9] sm:$0x3f]
            %v1863 = vld [vmem:[%s1852 + $0x11] sm:$0x3f]
            %v1864 = vld [vmem:[%s1852 + $0x19] sm:$0x3f]
            %v1865 = vld [vmem:[%s1852 + $0x21] sm:$0x3f]
            %v1866 = vld [vmem:[%s1852 + $0x29] sm:$0x3f]
            %v1867 = vld [vmem:[%s1852 + $0x31] sm:$0x3f]
            %v1868 = vld [vmem:[%s1852 + $0x39] sm:$0x3f]
            %s1869 = sadd.s32 %s1326, 86
            %s1870 = smul.u32 %s1869, 8
            %s1871 = scalar_lea.vmem [#allocation2], %s1870
            %v1872 = vld [vmem:[%s1871] sm:$0x3f]
            %v1873 = vld [vmem:[%s1871 + $0x8] sm:$0x3f]
            %v1874 = vld [vmem:[%s1871 + $0x10] sm:$0x3f]
            %v1875 = vld [vmem:[%s1871 + $0x18] sm:$0x3f]
            %v1876 = vld [vmem:[%s1871 + $0x20] sm:$0x3f]
            %v1877 = vld [vmem:[%s1871 + $0x28] sm:$0x3f]
            %v1878 = vld [vmem:[%s1871 + $0x30] sm:$0x3f]
            %v1879 = vld [vmem:[%s1871 + $0x38] sm:$0x3f]
            %s1880 = sadd.s32 %s1394, 10
            %s1881 = sld [smem:[#allocation9 + %s1880]]
            %s1882 = sadd.s32 %s1394, 11
            %s1883 = sld [smem:[#allocation9 + %s1882]]
            %s1884 = sadd.s32 %s1394, 12
            %s1885 = sld [smem:[#allocation9 + %s1884]]
            %s1886 = sadd.s32 %s1394, 13
            %s1887 = sld [smem:[#allocation9 + %s1886]]
            %s1888 = sadd.s32 %s1394, 14
            %s1889 = sld [smem:[#allocation9 + %s1888]]
            %v1890 = vstv %s1881
            %v1891 = vmul.f32 %v1890, %v1815
            %v1892 = vmul.f32 %v1890, %v1816
            %v1893 = vmul.f32 %v1890, %v1817
            %v1894 = vmul.f32 %v1890, %v1818
            %v1895 = vmul.f32 %v1890, %v1819
            %v1896 = vmul.f32 %v1890, %v1820
            %v1897 = vmul.f32 %v1890, %v1821
            %v1898 = vmul.f32 %v1890, %v1822
            %v1899 = vadd.f32 %v1724, %v1891
            %v1900 = vadd.f32 %v1725, %v1892
            %v1901 = vadd.f32 %v1726, %v1893
            %v1902 = vadd.f32 %v1727, %v1894
            %v1903 = vadd.f32 %v1728, %v1895
            %v1904 = vadd.f32 %v1729, %v1896
            %v1905 = vadd.f32 %v1730, %v1897
            %v1906 = vadd.f32 %v1731, %v1898
            %v1907 = vstv %s1883
            %v1908 = vmul.f32 %v1907, %v1834
            %v1909 = vmul.f32 %v1907, %v1835
            %v1910 = vmul.f32 %v1907, %v1836
            %v1911 = vmul.f32 %v1907, %v1837
            %v1912 = vmul.f32 %v1907, %v1838
            %v1913 = vmul.f32 %v1907, %v1839
            %v1914 = vmul.f32 %v1907, %v1840
            %v1915 = vmul.f32 %v1907, %v1841
            %v1916 = vadd.f32 %v1899, %v1908
            %v1917 = vadd.f32 %v1900, %v1909
            %v1918 = vadd.f32 %v1901, %v1910
            %v1919 = vadd.f32 %v1902, %v1911
            %v1920 = vadd.f32 %v1903, %v1912
            %v1921 = vadd.f32 %v1904, %v1913
            %v1922 = vadd.f32 %v1905, %v1914
            %v1923 = vadd.f32 %v1906, %v1915
            %v1924 = vstv %s1885
            %v1925 = vmul.f32 %v1924, %v1853
            %v1926 = vmul.f32 %v1924, %v1854
            %v1927 = vmul.f32 %v1924, %v1855
            %v1928 = vmul.f32 %v1924, %v1856
            %v1929 = vmul.f32 %v1924, %v1857
            %v1930 = vmul.f32 %v1924, %v1858
            %v1931 = vmul.f32 %v1924, %v1859
            %v1932 = vmul.f32 %v1924, %v1860
            %v1933 = vadd.f32 %v1916, %v1925
            %v1934 = vadd.f32 %v1917, %v1926
            %v1935 = vadd.f32 %v1918, %v1927
            %v1936 = vadd.f32 %v1919, %v1928
            %v1937 = vadd.f32 %v1920, %v1929
            %v1938 = vadd.f32 %v1921, %v1930
            %v1939 = vadd.f32 %v1922, %v1931
            %v1940 = vadd.f32 %v1923, %v1932
            %v1941 = vstv %s1887
            %v1942 = vmul.f32 %v1941, %v1872
            %v1943 = vmul.f32 %v1941, %v1873
            %v1944 = vmul.f32 %v1941, %v1874
            %v1945 = vmul.f32 %v1941, %v1875
            %v1946 = vmul.f32 %v1941, %v1876
            %v1947 = vmul.f32 %v1941, %v1877
            %v1948 = vmul.f32 %v1941, %v1878
            %v1949 = vmul.f32 %v1941, %v1879
            %v1950 = vadd.f32 %v1933, %v1942
            %v1951 = vadd.f32 %v1934, %v1943
            %v1952 = vadd.f32 %v1935, %v1944
            %v1953 = vadd.f32 %v1936, %v1945
            %v1954 = vadd.f32 %v1937, %v1946
            %v1955 = vadd.f32 %v1938, %v1947
            %v1956 = vadd.f32 %v1939, %v1948
            %v1957 = vadd.f32 %v1940, %v1949
            %v1958 = vstv %s1889
            %v1959 = vmul.f32 %v1958, %v1823
            %v1960 = vmul.f32 %v1958, %v1824
            %v1961 = vmul.f32 %v1958, %v1825
            %v1962 = vmul.f32 %v1958, %v1826
            %v1963 = vmul.f32 %v1958, %v1827
            %v1964 = vmul.f32 %v1958, %v1828
            %v1965 = vmul.f32 %v1958, %v1829
            %v1966 = vmul.f32 %v1958, %v1830
            %v1967 = vadd.f32 %v1950, %v1959
            %v1968 = vadd.f32 %v1951, %v1960
            %v1969 = vadd.f32 %v1952, %v1961
            %v1970 = vadd.f32 %v1953, %v1962
            %v1971 = vadd.f32 %v1954, %v1963
            %v1972 = vadd.f32 %v1955, %v1964
            %v1973 = vadd.f32 %v1956, %v1965
            %v1974 = vadd.f32 %v1957, %v1966
            %v1975 = vmul.f32 %v1890, %v1853
            %v1976 = vmul.f32 %v1890, %v1854
            %v1977 = vmul.f32 %v1890, %v1855
            %v1978 = vmul.f32 %v1890, %v1856
            %v1979 = vmul.f32 %v1890, %v1857
            %v1980 = vmul.f32 %v1890, %v1858
            %v1981 = vmul.f32 %v1890, %v1859
            %v1982 = vmul.f32 %v1890, %v1860
            %v1983 = vadd.f32 %v1804, %v1975
            %v1984 = vadd.f32 %v1805, %v1976
            %v1985 = vadd.f32 %v1806, %v1977
            %v1986 = vadd.f32 %v1807, %v1978
            %v1987 = vadd.f32 %v1808, %v1979
            %v1988 = vadd.f32 %v1809, %v1980
            %v1989 = vadd.f32 %v1810, %v1981
            %v1990 = vadd.f32 %v1811, %v1982
            %v1991 = vmul.f32 %v1907, %v1872
            %v1992 = vmul.f32 %v1907, %v1873
            %v1993 = vmul.f32 %v1907, %v1874
            %v1994 = vmul.f32 %v1907, %v1875
            %v1995 = vmul.f32 %v1907, %v1876
            %v1996 = vmul.f32 %v1907, %v1877
            %v1997 = vmul.f32 %v1907, %v1878
            %v1998 = vmul.f32 %v1907, %v1879
            %v1999 = vadd.f32 %v1983, %v1991
            %v2000 = vadd.f32 %v1984, %v1992
            %v2001 = vadd.f32 %v1985, %v1993
            %v2002 = vadd.f32 %v1986, %v1994
            %v2003 = vadd.f32 %v1987, %v1995
            %v2004 = vadd.f32 %v1988, %v1996
            %v2005 = vadd.f32 %v1989, %v1997
            %v2006 = vadd.f32 %v1990, %v1998
            %v2007 = vmul.f32 %v1924, %v1823
            %v2008 = vmul.f32 %v1924, %v1824
            %v2009 = vmul.f32 %v1924, %v1825
            %v2010 = vmul.f32 %v1924, %v1826
            %v2011 = vmul.f32 %v1924, %v1827
            %v2012 = vmul.f32 %v1924, %v1828
            %v2013 = vmul.f32 %v1924, %v1829
            %v2014 = vmul.f32 %v1924, %v1830
            %v2015 = vadd.f32 %v1999, %v2007
            %v2016 = vadd.f32 %v2000, %v2008
            %v2017 = vadd.f32 %v2001, %v2009
            %v2018 = vadd.f32 %v2002, %v2010
            %v2019 = vadd.f32 %v2003, %v2011
            %v2020 = vadd.f32 %v2004, %v2012
            %v2021 = vadd.f32 %v2005, %v2013
            %v2022 = vadd.f32 %v2006, %v2014
            %v2023 = vmul.f32 %v1941, %v1842
            %v2024 = vmul.f32 %v1941, %v1843
            %v2025 = vmul.f32 %v1941, %v1844
            %v2026 = vmul.f32 %v1941, %v1845
            %v2027 = vmul.f32 %v1941, %v1846
            %v2028 = vmul.f32 %v1941, %v1847
            %v2029 = vmul.f32 %v1941, %v1848
            %v2030 = vmul.f32 %v1941, %v1849
            %v2031 = vadd.f32 %v2015, %v2023
            %v2032 = vadd.f32 %v2016, %v2024
            %v2033 = vadd.f32 %v2017, %v2025
            %v2034 = vadd.f32 %v2018, %v2026
            %v2035 = vadd.f32 %v2019, %v2027
            %v2036 = vadd.f32 %v2020, %v2028
            %v2037 = vadd.f32 %v2021, %v2029
            %v2038 = vadd.f32 %v2022, %v2030
            %v2039 = vmul.f32 %v1958, %v1861
            %v2040 = vmul.f32 %v1958, %v1862
            %v2041 = vmul.f32 %v1958, %v1863
            %v2042 = vmul.f32 %v1958, %v1864
            %v2043 = vmul.f32 %v1958, %v1865
            %v2044 = vmul.f32 %v1958, %v1866
            %v2045 = vmul.f32 %v1958, %v1867
            %v2046 = vmul.f32 %v1958, %v1868
            %v2047 = vadd.f32 %v2031, %v2039
            %v2048 = vadd.f32 %v2032, %v2040
            %v2049 = vadd.f32 %v2033, %v2041
            %v2050 = vadd.f32 %v2034, %v2042
            %v2051 = vadd.f32 %v2035, %v2043
            %v2052 = vadd.f32 %v2036, %v2044
            %v2053 = vadd.f32 %v2037, %v2045
            %v2054 = vadd.f32 %v2038, %v2046
            %s2055 = sadd.s32 %s1326, 3
            %s2056 = smul.u32 %s2055, 8
            %s2057 = scalar_lea.vmem [#allocation2], %s2056
            %v2058 = vld [vmem:[%s2057] sm:$0x3f]
            %v2059 = vld [vmem:[%s2057 + $0x8] sm:$0x3f]
            %v2060 = vld [vmem:[%s2057 + $0x10] sm:$0x3f]
            %v2061 = vld [vmem:[%s2057 + $0x18] sm:$0x3f]
            %v2062 = vld [vmem:[%s2057 + $0x20] sm:$0x3f]
            %v2063 = vld [vmem:[%s2057 + $0x28] sm:$0x3f]
            %v2064 = vld [vmem:[%s2057 + $0x30] sm:$0x3f]
            %v2065 = vld [vmem:[%s2057 + $0x38] sm:$0x3f]
            %v2066 = vld [vmem:[%s2057 + $0x1] sm:$0x3f]
            %v2067 = vld [vmem:[%s2057 + $0x9] sm:$0x3f]
            %v2068 = vld [vmem:[%s2057 + $0x11] sm:$0x3f]
            %v2069 = vld [vmem:[%s2057 + $0x19] sm:$0x3f]
            %v2070 = vld [vmem:[%s2057 + $0x21] sm:$0x3f]
            %v2071 = vld [vmem:[%s2057 + $0x29] sm:$0x3f]
            %v2072 = vld [vmem:[%s2057 + $0x31] sm:$0x3f]
            %v2073 = vld [vmem:[%s2057 + $0x39] sm:$0x3f]
            %s2074 = sadd.s32 %s1326, 31
            %s2075 = smul.u32 %s2074, 8
            %s2076 = scalar_lea.vmem [#allocation2], %s2075
            %v2077 = vld [vmem:[%s2076] sm:$0x3f]
            %v2078 = vld [vmem:[%s2076 + $0x8] sm:$0x3f]
            %v2079 = vld [vmem:[%s2076 + $0x10] sm:$0x3f]
            %v2080 = vld [vmem:[%s2076 + $0x18] sm:$0x3f]
            %v2081 = vld [vmem:[%s2076 + $0x20] sm:$0x3f]
            %v2082 = vld [vmem:[%s2076 + $0x28] sm:$0x3f]
            %v2083 = vld [vmem:[%s2076 + $0x30] sm:$0x3f]
            %v2084 = vld [vmem:[%s2076 + $0x38] sm:$0x3f]
            %v2085 = vld [vmem:[%s2076 + $0x1] sm:$0x3f]
            %v2086 = vld [vmem:[%s2076 + $0x9] sm:$0x3f]
            %v2087 = vld [vmem:[%s2076 + $0x11] sm:$0x3f]
            %v2088 = vld [vmem:[%s2076 + $0x19] sm:$0x3f]
            %v2089 = vld [vmem:[%s2076 + $0x21] sm:$0x3f]
            %v2090 = vld [vmem:[%s2076 + $0x29] sm:$0x3f]
            %v2091 = vld [vmem:[%s2076 + $0x31] sm:$0x3f]
            %v2092 = vld [vmem:[%s2076 + $0x39] sm:$0x3f]
            %s2093 = sadd.s32 %s1326, 59
            %s2094 = smul.u32 %s2093, 8
            %s2095 = scalar_lea.vmem [#allocation2], %s2094
            %v2096 = vld [vmem:[%s2095] sm:$0x3f]
            %v2097 = vld [vmem:[%s2095 + $0x8] sm:$0x3f]
            %v2098 = vld [vmem:[%s2095 + $0x10] sm:$0x3f]
            %v2099 = vld [vmem:[%s2095 + $0x18] sm:$0x3f]
            %v2100 = vld [vmem:[%s2095 + $0x20] sm:$0x3f]
            %v2101 = vld [vmem:[%s2095 + $0x28] sm:$0x3f]
            %v2102 = vld [vmem:[%s2095 + $0x30] sm:$0x3f]
            %v2103 = vld [vmem:[%s2095 + $0x38] sm:$0x3f]
            %v2104 = vld [vmem:[%s2095 + $0x1] sm:$0x3f]
            %v2105 = vld [vmem:[%s2095 + $0x9] sm:$0x3f]
            %v2106 = vld [vmem:[%s2095 + $0x11] sm:$0x3f]
            %v2107 = vld [vmem:[%s2095 + $0x19] sm:$0x3f]
            %v2108 = vld [vmem:[%s2095 + $0x21] sm:$0x3f]
            %v2109 = vld [vmem:[%s2095 + $0x29] sm:$0x3f]
            %v2110 = vld [vmem:[%s2095 + $0x31] sm:$0x3f]
            %v2111 = vld [vmem:[%s2095 + $0x39] sm:$0x3f]
            %s2112 = sadd.s32 %s1326, 87
            %s2113 = smul.u32 %s2112, 8
            %s2114 = scalar_lea.vmem [#allocation2], %s2113
            %v2115 = vld [vmem:[%s2114] sm:$0x3f]
            %v2116 = vld [vmem:[%s2114 + $0x8] sm:$0x3f]
            %v2117 = vld [vmem:[%s2114 + $0x10] sm:$0x3f]
            %v2118 = vld [vmem:[%s2114 + $0x18] sm:$0x3f]
            %v2119 = vld [vmem:[%s2114 + $0x20] sm:$0x3f]
            %v2120 = vld [vmem:[%s2114 + $0x28] sm:$0x3f]
            %v2121 = vld [vmem:[%s2114 + $0x30] sm:$0x3f]
            %v2122 = vld [vmem:[%s2114 + $0x38] sm:$0x3f]
            %s2123 = sadd.s32 %s1394, 15
            %s2124 = sld [smem:[#allocation9 + %s2123]]
            %s2125 = sadd.s32 %s1394, 16
            %s2126 = sld [smem:[#allocation9 + %s2125]]
            %s2127 = sadd.s32 %s1394, 17
            %s2128 = sld [smem:[#allocation9 + %s2127]]
            %s2129 = sadd.s32 %s1394, 18
            %s2130 = sld [smem:[#allocation9 + %s2129]]
            %s2131 = sadd.s32 %s1394, 19
            %s2132 = sld [smem:[#allocation9 + %s2131]]
            %v2133 = vstv %s2124
            %v2134 = vmul.f32 %v2133, %v2058
            %v2135 = vmul.f32 %v2133, %v2059
            %v2136 = vmul.f32 %v2133, %v2060
            %v2137 = vmul.f32 %v2133, %v2061
            %v2138 = vmul.f32 %v2133, %v2062
            %v2139 = vmul.f32 %v2133, %v2063
            %v2140 = vmul.f32 %v2133, %v2064
            %v2141 = vmul.f32 %v2133, %v2065
            %v2142 = vadd.f32 %v1967, %v2134
            %v2143 = vadd.f32 %v1968, %v2135
            %v2144 = vadd.f32 %v1969, %v2136
            %v2145 = vadd.f32 %v1970, %v2137
            %v2146 = vadd.f32 %v1971, %v2138
            %v2147 = vadd.f32 %v1972, %v2139
            %v2148 = vadd.f32 %v1973, %v2140
            %v2149 = vadd.f32 %v1974, %v2141
            %v2150 = vstv %s2126
            %v2151 = vmul.f32 %v2150, %v2077
            %v2152 = vmul.f32 %v2150, %v2078
            %v2153 = vmul.f32 %v2150, %v2079
            %v2154 = vmul.f32 %v2150, %v2080
            %v2155 = vmul.f32 %v2150, %v2081
            %v2156 = vmul.f32 %v2150, %v2082
            %v2157 = vmul.f32 %v2150, %v2083
            %v2158 = vmul.f32 %v2150, %v2084
            %v2159 = vadd.f32 %v2142, %v2151
            %v2160 = vadd.f32 %v2143, %v2152
            %v2161 = vadd.f32 %v2144, %v2153
            %v2162 = vadd.f32 %v2145, %v2154
            %v2163 = vadd.f32 %v2146, %v2155
            %v2164 = vadd.f32 %v2147, %v2156
            %v2165 = vadd.f32 %v2148, %v2157
            %v2166 = vadd.f32 %v2149, %v2158
            %v2167 = vstv %s2128
            %v2168 = vmul.f32 %v2167, %v2096
            %v2169 = vmul.f32 %v2167, %v2097
            %v2170 = vmul.f32 %v2167, %v2098
            %v2171 = vmul.f32 %v2167, %v2099
            %v2172 = vmul.f32 %v2167, %v2100
            %v2173 = vmul.f32 %v2167, %v2101
            %v2174 = vmul.f32 %v2167, %v2102
            %v2175 = vmul.f32 %v2167, %v2103
            %v2176 = vadd.f32 %v2159, %v2168
            %v2177 = vadd.f32 %v2160, %v2169
            %v2178 = vadd.f32 %v2161, %v2170
            %v2179 = vadd.f32 %v2162, %v2171
            %v2180 = vadd.f32 %v2163, %v2172
            %v2181 = vadd.f32 %v2164, %v2173
            %v2182 = vadd.f32 %v2165, %v2174
            %v2183 = vadd.f32 %v2166, %v2175
            %v2184 = vstv %s2130
            %v2185 = vmul.f32 %v2184, %v2115
            %v2186 = vmul.f32 %v2184, %v2116
            %v2187 = vmul.f32 %v2184, %v2117
            %v2188 = vmul.f32 %v2184, %v2118
            %v2189 = vmul.f32 %v2184, %v2119
            %v2190 = vmul.f32 %v2184, %v2120
            %v2191 = vmul.f32 %v2184, %v2121
            %v2192 = vmul.f32 %v2184, %v2122
            %v2193 = vadd.f32 %v2176, %v2185
            %v2194 = vadd.f32 %v2177, %v2186
            %v2195 = vadd.f32 %v2178, %v2187
            %v2196 = vadd.f32 %v2179, %v2188
            %v2197 = vadd.f32 %v2180, %v2189
            %v2198 = vadd.f32 %v2181, %v2190
            %v2199 = vadd.f32 %v2182, %v2191
            %v2200 = vadd.f32 %v2183, %v2192
            %v2201 = vstv %s2132
            %v2202 = vmul.f32 %v2201, %v2066
            %v2203 = vmul.f32 %v2201, %v2067
            %v2204 = vmul.f32 %v2201, %v2068
            %v2205 = vmul.f32 %v2201, %v2069
            %v2206 = vmul.f32 %v2201, %v2070
            %v2207 = vmul.f32 %v2201, %v2071
            %v2208 = vmul.f32 %v2201, %v2072
            %v2209 = vmul.f32 %v2201, %v2073
            %v2210 = vadd.f32 %v2193, %v2202
            %v2211 = vadd.f32 %v2194, %v2203
            %v2212 = vadd.f32 %v2195, %v2204
            %v2213 = vadd.f32 %v2196, %v2205
            %v2214 = vadd.f32 %v2197, %v2206
            %v2215 = vadd.f32 %v2198, %v2207
            %v2216 = vadd.f32 %v2199, %v2208
            %v2217 = vadd.f32 %v2200, %v2209
            %v2218 = vmul.f32 %v2133, %v2096
            %v2219 = vmul.f32 %v2133, %v2097
            %v2220 = vmul.f32 %v2133, %v2098
            %v2221 = vmul.f32 %v2133, %v2099
            %v2222 = vmul.f32 %v2133, %v2100
            %v2223 = vmul.f32 %v2133, %v2101
            %v2224 = vmul.f32 %v2133, %v2102
            %v2225 = vmul.f32 %v2133, %v2103
            %v2226 = vadd.f32 %v2047, %v2218
            %v2227 = vadd.f32 %v2048, %v2219
            %v2228 = vadd.f32 %v2049, %v2220
            %v2229 = vadd.f32 %v2050, %v2221
            %v2230 = vadd.f32 %v2051, %v2222
            %v2231 = vadd.f32 %v2052, %v2223
            %v2232 = vadd.f32 %v2053, %v2224
            %v2233 = vadd.f32 %v2054, %v2225
            %v2234 = vmul.f32 %v2150, %v2115
            %v2235 = vmul.f32 %v2150, %v2116
            %v2236 = vmul.f32 %v2150, %v2117
            %v2237 = vmul.f32 %v2150, %v2118
            %v2238 = vmul.f32 %v2150, %v2119
            %v2239 = vmul.f32 %v2150, %v2120
            %v2240 = vmul.f32 %v2150, %v2121
            %v2241 = vmul.f32 %v2150, %v2122
            %v2242 = vadd.f32 %v2226, %v2234
            %v2243 = vadd.f32 %v2227, %v2235
            %v2244 = vadd.f32 %v2228, %v2236
            %v2245 = vadd.f32 %v2229, %v2237
            %v2246 = vadd.f32 %v2230, %v2238
            %v2247 = vadd.f32 %v2231, %v2239
            %v2248 = vadd.f32 %v2232, %v2240
            %v2249 = vadd.f32 %v2233, %v2241
            %v2250 = vmul.f32 %v2167, %v2066
            %v2251 = vmul.f32 %v2167, %v2067
            %v2252 = vmul.f32 %v2167, %v2068
            %v2253 = vmul.f32 %v2167, %v2069
            %v2254 = vmul.f32 %v2167, %v2070
            %v2255 = vmul.f32 %v2167, %v2071
            %v2256 = vmul.f32 %v2167, %v2072
            %v2257 = vmul.f32 %v2167, %v2073
            %v2258 = vadd.f32 %v2242, %v2250
            %v2259 = vadd.f32 %v2243, %v2251
            %v2260 = vadd.f32 %v2244, %v2252
            %v2261 = vadd.f32 %v2245, %v2253
            %v2262 = vadd.f32 %v2246, %v2254
            %v2263 = vadd.f32 %v2247, %v2255
            %v2264 = vadd.f32 %v2248, %v2256
            %v2265 = vadd.f32 %v2249, %v2257
            %v2266 = vmul.f32 %v2184, %v2085
            %v2267 = vmul.f32 %v2184, %v2086
            %v2268 = vmul.f32 %v2184, %v2087
            %v2269 = vmul.f32 %v2184, %v2088
            %v2270 = vmul.f32 %v2184, %v2089
            %v2271 = vmul.f32 %v2184, %v2090
            %v2272 = vmul.f32 %v2184, %v2091
            %v2273 = vmul.f32 %v2184, %v2092
            %v2274 = vadd.f32 %v2258, %v2266
            %v2275 = vadd.f32 %v2259, %v2267
            %v2276 = vadd.f32 %v2260, %v2268
            %v2277 = vadd.f32 %v2261, %v2269
            %v2278 = vadd.f32 %v2262, %v2270
            %v2279 = vadd.f32 %v2263, %v2271
            %v2280 = vadd.f32 %v2264, %v2272
            %v2281 = vadd.f32 %v2265, %v2273
            %v2282 = vmul.f32 %v2201, %v2104
            %v2283 = vmul.f32 %v2201, %v2105
            %v2284 = vmul.f32 %v2201, %v2106
            %v2285 = vmul.f32 %v2201, %v2107
            %v2286 = vmul.f32 %v2201, %v2108
            %v2287 = vmul.f32 %v2201, %v2109
            %v2288 = vmul.f32 %v2201, %v2110
            %v2289 = vmul.f32 %v2201, %v2111
            %v2290 = vadd.f32 %v2274, %v2282
            %v2291 = vadd.f32 %v2275, %v2283
            %v2292 = vadd.f32 %v2276, %v2284
            %v2293 = vadd.f32 %v2277, %v2285
            %v2294 = vadd.f32 %v2278, %v2286
            %v2295 = vadd.f32 %v2279, %v2287
            %v2296 = vadd.f32 %v2280, %v2288
            %v2297 = vadd.f32 %v2281, %v2289
            %s2298 = sadd.s32 %s1326, 4
            %s2299 = smul.u32 %s2298, 8
            %s2300 = scalar_lea.vmem [#allocation2], %s2299
            %v2301 = vld [vmem:[%s2300] sm:$0x3f]
            %v2302 = vld [vmem:[%s2300 + $0x8] sm:$0x3f]
            %v2303 = vld [vmem:[%s2300 + $0x10] sm:$0x3f]
            %v2304 = vld [vmem:[%s2300 + $0x18] sm:$0x3f]
            %v2305 = vld [vmem:[%s2300 + $0x20] sm:$0x3f]
            %v2306 = vld [vmem:[%s2300 + $0x28] sm:$0x3f]
            %v2307 = vld [vmem:[%s2300 + $0x30] sm:$0x3f]
            %v2308 = vld [vmem:[%s2300 + $0x38] sm:$0x3f]
            %v2309 = vld [vmem:[%s2300 + $0x1] sm:$0x3f]
            %v2310 = vld [vmem:[%s2300 + $0x9] sm:$0x3f]
            %v2311 = vld [vmem:[%s2300 + $0x11] sm:$0x3f]
            %v2312 = vld [vmem:[%s2300 + $0x19] sm:$0x3f]
            %v2313 = vld [vmem:[%s2300 + $0x21] sm:$0x3f]
            %v2314 = vld [vmem:[%s2300 + $0x29] sm:$0x3f]
            %v2315 = vld [vmem:[%s2300 + $0x31] sm:$0x3f]
            %v2316 = vld [vmem:[%s2300 + $0x39] sm:$0x3f]
            %s2317 = sadd.s32 %s1326, 32
            %s2318 = smul.u32 %s2317, 8
            %s2319 = scalar_lea.vmem [#allocation2], %s2318
            %v2320 = vld [vmem:[%s2319] sm:$0x3f]
            %v2321 = vld [vmem:[%s2319 + $0x8] sm:$0x3f]
            %v2322 = vld [vmem:[%s2319 + $0x10] sm:$0x3f]
            %v2323 = vld [vmem:[%s2319 + $0x18] sm:$0x3f]
            %v2324 = vld [vmem:[%s2319 + $0x20] sm:$0x3f]
            %v2325 = vld [vmem:[%s2319 + $0x28] sm:$0x3f]
            %v2326 = vld [vmem:[%s2319 + $0x30] sm:$0x3f]
            %v2327 = vld [vmem:[%s2319 + $0x38] sm:$0x3f]
            %v2328 = vld [vmem:[%s2319 + $0x1] sm:$0x3f]
            %v2329 = vld [vmem:[%s2319 + $0x9] sm:$0x3f]
            %v2330 = vld [vmem:[%s2319 + $0x11] sm:$0x3f]
            %v2331 = vld [vmem:[%s2319 + $0x19] sm:$0x3f]
            %v2332 = vld [vmem:[%s2319 + $0x21] sm:$0x3f]
            %v2333 = vld [vmem:[%s2319 + $0x29] sm:$0x3f]
            %v2334 = vld [vmem:[%s2319 + $0x31] sm:$0x3f]
            %v2335 = vld [vmem:[%s2319 + $0x39] sm:$0x3f]
            %s2336 = sadd.s32 %s1326, 60
            %s2337 = smul.u32 %s2336, 8
            %s2338 = scalar_lea.vmem [#allocation2], %s2337
            %v2339 = vld [vmem:[%s2338] sm:$0x3f]
            %v2340 = vld [vmem:[%s2338 + $0x8] sm:$0x3f]
            %v2341 = vld [vmem:[%s2338 + $0x10] sm:$0x3f]
            %v2342 = vld [vmem:[%s2338 + $0x18] sm:$0x3f]
            %v2343 = vld [vmem:[%s2338 + $0x20] sm:$0x3f]
            %v2344 = vld [vmem:[%s2338 + $0x28] sm:$0x3f]
            %v2345 = vld [vmem:[%s2338 + $0x30] sm:$0x3f]
            %v2346 = vld [vmem:[%s2338 + $0x38] sm:$0x3f]
            %v2347 = vld [vmem:[%s2338 + $0x1] sm:$0x3f]
            %v2348 = vld [vmem:[%s2338 + $0x9] sm:$0x3f]
            %v2349 = vld [vmem:[%s2338 + $0x11] sm:$0x3f]
            %v2350 = vld [vmem:[%s2338 + $0x19] sm:$0x3f]
            %v2351 = vld [vmem:[%s2338 + $0x21] sm:$0x3f]
            %v2352 = vld [vmem:[%s2338 + $0x29] sm:$0x3f]
            %v2353 = vld [vmem:[%s2338 + $0x31] sm:$0x3f]
            %v2354 = vld [vmem:[%s2338 + $0x39] sm:$0x3f]
            %s2355 = sadd.s32 %s1326, 88
            %s2356 = smul.u32 %s2355, 8
            %s2357 = scalar_lea.vmem [#allocation2], %s2356
            %v2358 = vld [vmem:[%s2357] sm:$0x3f]
            %v2359 = vld [vmem:[%s2357 + $0x8] sm:$0x3f]
            %v2360 = vld [vmem:[%s2357 + $0x10] sm:$0x3f]
            %v2361 = vld [vmem:[%s2357 + $0x18] sm:$0x3f]
            %v2362 = vld [vmem:[%s2357 + $0x20] sm:$0x3f]
            %v2363 = vld [vmem:[%s2357 + $0x28] sm:$0x3f]
            %v2364 = vld [vmem:[%s2357 + $0x30] sm:$0x3f]
            %v2365 = vld [vmem:[%s2357 + $0x38] sm:$0x3f]
            %s2366 = sadd.s32 %s1394, 20
            %s2367 = sld [smem:[#allocation9 + %s2366]]
            %s2368 = sadd.s32 %s1394, 21
            %s2369 = sld [smem:[#allocation9 + %s2368]]
            %s2370 = sadd.s32 %s1394, 22
            %s2371 = sld [smem:[#allocation9 + %s2370]]
            %s2372 = sadd.s32 %s1394, 23
            %s2373 = sld [smem:[#allocation9 + %s2372]]
            %s2374 = sadd.s32 %s1394, 24
            %s2375 = sld [smem:[#allocation9 + %s2374]]
            %v2376 = vstv %s2367
            %v2377 = vmul.f32 %v2376, %v2301
            %v2378 = vmul.f32 %v2376, %v2302
            %v2379 = vmul.f32 %v2376, %v2303
            %v2380 = vmul.f32 %v2376, %v2304
            %v2381 = vmul.f32 %v2376, %v2305
            %v2382 = vmul.f32 %v2376, %v2306
            %v2383 = vmul.f32 %v2376, %v2307
            %v2384 = vmul.f32 %v2376, %v2308
            %v2385 = vadd.f32 %v2210, %v2377
            %v2386 = vadd.f32 %v2211, %v2378
            %v2387 = vadd.f32 %v2212, %v2379
            %v2388 = vadd.f32 %v2213, %v2380
            %v2389 = vadd.f32 %v2214, %v2381
            %v2390 = vadd.f32 %v2215, %v2382
            %v2391 = vadd.f32 %v2216, %v2383
            %v2392 = vadd.f32 %v2217, %v2384
            %v2393 = vstv %s2369
            %v2394 = vmul.f32 %v2393, %v2320
            %v2395 = vmul.f32 %v2393, %v2321
            %v2396 = vmul.f32 %v2393, %v2322
            %v2397 = vmul.f32 %v2393, %v2323
            %v2398 = vmul.f32 %v2393, %v2324
            %v2399 = vmul.f32 %v2393, %v2325
            %v2400 = vmul.f32 %v2393, %v2326
            %v2401 = vmul.f32 %v2393, %v2327
            %v2402 = vadd.f32 %v2385, %v2394
            %v2403 = vadd.f32 %v2386, %v2395
            %v2404 = vadd.f32 %v2387, %v2396
            %v2405 = vadd.f32 %v2388, %v2397
            %v2406 = vadd.f32 %v2389, %v2398
            %v2407 = vadd.f32 %v2390, %v2399
            %v2408 = vadd.f32 %v2391, %v2400
            %v2409 = vadd.f32 %v2392, %v2401
            %v2410 = vstv %s2371
            %v2411 = vmul.f32 %v2410, %v2339
            %v2412 = vmul.f32 %v2410, %v2340
            %v2413 = vmul.f32 %v2410, %v2341
            %v2414 = vmul.f32 %v2410, %v2342
            %v2415 = vmul.f32 %v2410, %v2343
            %v2416 = vmul.f32 %v2410, %v2344
            %v2417 = vmul.f32 %v2410, %v2345
            %v2418 = vmul.f32 %v2410, %v2346
            %v2419 = vadd.f32 %v2402, %v2411
            %v2420 = vadd.f32 %v2403, %v2412
            %v2421 = vadd.f32 %v2404, %v2413
            %v2422 = vadd.f32 %v2405, %v2414
            %v2423 = vadd.f32 %v2406, %v2415
            %v2424 = vadd.f32 %v2407, %v2416
            %v2425 = vadd.f32 %v2408, %v2417
            %v2426 = vadd.f32 %v2409, %v2418
            %v2427 = vstv %s2373
            %v2428 = vmul.f32 %v2427, %v2358
            %v2429 = vmul.f32 %v2427, %v2359
            %v2430 = vmul.f32 %v2427, %v2360
            %v2431 = vmul.f32 %v2427, %v2361
            %v2432 = vmul.f32 %v2427, %v2362
            %v2433 = vmul.f32 %v2427, %v2363
            %v2434 = vmul.f32 %v2427, %v2364
            %v2435 = vmul.f32 %v2427, %v2365
            %v2436 = vadd.f32 %v2419, %v2428
            %v2437 = vadd.f32 %v2420, %v2429
            %v2438 = vadd.f32 %v2421, %v2430
            %v2439 = vadd.f32 %v2422, %v2431
            %v2440 = vadd.f32 %v2423, %v2432
            %v2441 = vadd.f32 %v2424, %v2433
            %v2442 = vadd.f32 %v2425, %v2434
            %v2443 = vadd.f32 %v2426, %v2435
            %v2444 = vstv %s2375
            %v2445 = vmul.f32 %v2444, %v2309
            %v2446 = vmul.f32 %v2444, %v2310
            %v2447 = vmul.f32 %v2444, %v2311
            %v2448 = vmul.f32 %v2444, %v2312
            %v2449 = vmul.f32 %v2444, %v2313
            %v2450 = vmul.f32 %v2444, %v2314
            %v2451 = vmul.f32 %v2444, %v2315
            %v2452 = vmul.f32 %v2444, %v2316
            %v2453 = vadd.f32 %v2436, %v2445
            %v2454 = vadd.f32 %v2437, %v2446
            %v2455 = vadd.f32 %v2438, %v2447
            %v2456 = vadd.f32 %v2439, %v2448
            %v2457 = vadd.f32 %v2440, %v2449
            %v2458 = vadd.f32 %v2441, %v2450
            %v2459 = vadd.f32 %v2442, %v2451
            %v2460 = vadd.f32 %v2443, %v2452
            %v2461 = vmul.f32 %v2376, %v2339
            %v2462 = vmul.f32 %v2376, %v2340
            %v2463 = vmul.f32 %v2376, %v2341
            %v2464 = vmul.f32 %v2376, %v2342
            %v2465 = vmul.f32 %v2376, %v2343
            %v2466 = vmul.f32 %v2376, %v2344
            %v2467 = vmul.f32 %v2376, %v2345
            %v2468 = vmul.f32 %v2376, %v2346
            %v2469 = vadd.f32 %v2290, %v2461
            %v2470 = vadd.f32 %v2291, %v2462
            %v2471 = vadd.f32 %v2292, %v2463
            %v2472 = vadd.f32 %v2293, %v2464
            %v2473 = vadd.f32 %v2294, %v2465
            %v2474 = vadd.f32 %v2295, %v2466
            %v2475 = vadd.f32 %v2296, %v2467
            %v2476 = vadd.f32 %v2297, %v2468
            %v2477 = vmul.f32 %v2393, %v2358
            %v2478 = vmul.f32 %v2393, %v2359
            %v2479 = vmul.f32 %v2393, %v2360
            %v2480 = vmul.f32 %v2393, %v2361
            %v2481 = vmul.f32 %v2393, %v2362
            %v2482 = vmul.f32 %v2393, %v2363
            %v2483 = vmul.f32 %v2393, %v2364
            %v2484 = vmul.f32 %v2393, %v2365
            %v2485 = vadd.f32 %v2469, %v2477
            %v2486 = vadd.f32 %v2470, %v2478
            %v2487 = vadd.f32 %v2471, %v2479
            %v2488 = vadd.f32 %v2472, %v2480
            %v2489 = vadd.f32 %v2473, %v2481
            %v2490 = vadd.f32 %v2474, %v2482
            %v2491 = vadd.f32 %v2475, %v2483
            %v2492 = vadd.f32 %v2476, %v2484
            %v2493 = vmul.f32 %v2410, %v2309
            %v2494 = vmul.f32 %v2410, %v2310
            %v2495 = vmul.f32 %v2410, %v2311
            %v2496 = vmul.f32 %v2410, %v2312
            %v2497 = vmul.f32 %v2410, %v2313
            %v2498 = vmul.f32 %v2410, %v2314
            %v2499 = vmul.f32 %v2410, %v2315
            %v2500 = vmul.f32 %v2410, %v2316
            %v2501 = vadd.f32 %v2485, %v2493
            %v2502 = vadd.f32 %v2486, %v2494
            %v2503 = vadd.f32 %v2487, %v2495
            %v2504 = vadd.f32 %v2488, %v2496
            %v2505 = vadd.f32 %v2489, %v2497
            %v2506 = vadd.f32 %v2490, %v2498
            %v2507 = vadd.f32 %v2491, %v2499
            %v2508 = vadd.f32 %v2492, %v2500
            %v2509 = vmul.f32 %v2427, %v2328
            %v2510 = vmul.f32 %v2427, %v2329
            %v2511 = vmul.f32 %v2427, %v2330
            %v2512 = vmul.f32 %v2427, %v2331
            %v2513 = vmul.f32 %v2427, %v2332
            %v2514 = vmul.f32 %v2427, %v2333
            %v2515 = vmul.f32 %v2427, %v2334
            %v2516 = vmul.f32 %v2427, %v2335
            %v2517 = vadd.f32 %v2501, %v2509
            %v2518 = vadd.f32 %v2502, %v2510
            %v2519 = vadd.f32 %v2503, %v2511
            %v2520 = vadd.f32 %v2504, %v2512
            %v2521 = vadd.f32 %v2505, %v2513
            %v2522 = vadd.f32 %v2506, %v2514
            %v2523 = vadd.f32 %v2507, %v2515
            %v2524 = vadd.f32 %v2508, %v2516
            %v2525 = vmul.f32 %v2444, %v2347
            %v2526 = vmul.f32 %v2444, %v2348
            %v2527 = vmul.f32 %v2444, %v2349
            %v2528 = vmul.f32 %v2444, %v2350
            %v2529 = vmul.f32 %v2444, %v2351
            %v2530 = vmul.f32 %v2444, %v2352
            %v2531 = vmul.f32 %v2444, %v2353
            %v2532 = vmul.f32 %v2444, %v2354
            %v2533 = vadd.f32 %v2517, %v2525
            %v2534 = vadd.f32 %v2518, %v2526
            %v2535 = vadd.f32 %v2519, %v2527
            %v2536 = vadd.f32 %v2520, %v2528
            %v2537 = vadd.f32 %v2521, %v2529
            %v2538 = vadd.f32 %v2522, %v2530
            %v2539 = vadd.f32 %v2523, %v2531
            %v2540 = vadd.f32 %v2524, %v2532
            %v2541 = vadd.f32 %v2453, %v2454
            %v2542 = vadd.f32 %v2455, %v2456
            %v2543 = vadd.f32 %v2457, %v2458
            %v2544 = vadd.f32 %v2459, %v2460
            %v2545 = vstv %s1319
            %v2546 = vadd.f32 %v2541, %v2545
            %v2547 = vadd.f32 %v2542, %v2545
            %v2548 = vadd.f32 %v2543, %v2545
            %v2549 = vadd.f32 %v2544, %v2545
            %s2550 = smul.u32 %s1314, 12
            %s2551 = smul.u32 %s1321, 4
            %s2552 = sadd.s32 %s2550, %s2551
            %s2553 = smul.u32 %s2552, 8
            %s2554 = scalar_lea.vmem [#allocation3], %s2553
            %2555 = vst [vmem:[%s2554] sm:$0x3f] %v2546
            %2556 = vst [vmem:[%s2554 + $0x8] sm:$0x3f] %v2547
            %2557 = vst [vmem:[%s2554 + $0x10] sm:$0x3f] %v2548
            %2558 = vst [vmem:[%s2554 + $0x18] sm:$0x3f] %v2549
            %v2559 = vadd.f32 %v2533, %v2534
            %v2560 = vadd.f32 %v2535, %v2536
            %v2561 = vadd.f32 %v2537, %v2538
            %v2562 = vadd.f32 %v2539, %v2540
            %v2563 = vadd.f32 %v2559, %v2545
            %v2564 = vadd.f32 %v2560, %v2545
            %v2565 = vadd.f32 %v2561, %v2545
            %v2566 = vadd.f32 %v2562, %v2545
            %s2567 = scalar_lea.vmem [#allocation4], %s2553
            %2568 = vst [vmem:[%s2567] sm:$0x3f] %v2563
            %2569 = vst [vmem:[%s2567 + $0x8] sm:$0x3f] %v2564
            %2570 = vst [vmem:[%s2567 + $0x10] sm:$0x3f] %v2565
            %2571 = vst [vmem:[%s2567 + $0x18] sm:$0x3f] %v2566
          $region122: #{tpu_custom_call.1} parent=114 // loop_footer
            %s1325 = sadd.s32 1, %s1321
          $region123: #{tpu_custom_call.1} parent=114 // loop_footer_branch
            %1320 = sbr.rel target = $region119
          $region124: #{tpu_custom_call.1} parent=114 // loop_exit
            _
        $region115: #{tpu_custom_call.1} parent=89 // loop_footer
          %s1318 = sadd.s32 1, %s1314
        $region116: #{tpu_custom_call.1} parent=89 // loop_footer_branch
          %1313 = sbr.rel target = $region112
        $region117: #{tpu_custom_call.1} parent=89 // loop_exit
          _
        %v2572 = vld [vmem:[#allocation3] sm:$0x3f]
        %v2573 = vld [vmem:[#allocation3 + $0x8] sm:$0x3f]
        %v2574 = vld [vmem:[#allocation3 + $0x10] sm:$0x3f]
        %v2575 = vld [vmem:[#allocation3 + $0x18] sm:$0x3f]
        %v2576 = vld [vmem:[#allocation3 + $0x20] sm:$0x3f]
        %v2577 = vld [vmem:[#allocation3 + $0x28] sm:$0x3f]
        %v2578 = vld [vmem:[#allocation3 + $0x30] sm:$0x3f]
        %v2579 = vld [vmem:[#allocation3 + $0x38] sm:$0x3f]
        %v2580 = vld [vmem:[#allocation3 + $0x40] sm:$0x3f]
        %v2581 = vld [vmem:[#allocation3 + $0x48] sm:$0x3f]
        %v2582 = vld [vmem:[#allocation3 + $0x50] sm:$0x3f]
        %v2583 = vld [vmem:[#allocation3 + $0x58] sm:$0x3f]
        %v2584 = vld [vmem:[#allocation3 + $0x60] sm:$0x3f]
        %v2585 = vld [vmem:[#allocation3 + $0x68] sm:$0x3f]
        %v2586 = vld [vmem:[#allocation3 + $0x70] sm:$0x3f]
        %v2587 = vld [vmem:[#allocation3 + $0x78] sm:$0x3f]
        %v2588 = vld [vmem:[#allocation3 + $0x80] sm:$0x3f]
        %v2589 = vld [vmem:[#allocation3 + $0x88] sm:$0x3f]
        %v2590 = vld [vmem:[#allocation3 + $0x90] sm:$0x3f]
        %v2591 = vld [vmem:[#allocation3 + $0x98] sm:$0x3f]
        %v2592 = vld [vmem:[#allocation3 + $0xa0] sm:$0x3f]
        %v2593 = vld [vmem:[#allocation3 + $0xa8] sm:$0x3f]
        %v2594 = vld [vmem:[#allocation3 + $0xb0] sm:$0x3f]
        %v2595 = vld [vmem:[#allocation3 + $0xb8] sm:$0x3f]
        %v2596 = vld [vmem:[#allocation3 + $0xc0] sm:$0x3f]
        %v2597 = vld [vmem:[#allocation3 + $0xc8] sm:$0x3f]
        %v2598 = vld [vmem:[#allocation3 + $0xd0] sm:$0x3f]
        %v2599 = vld [vmem:[#allocation3 + $0xd8] sm:$0x3f]
        %v2600 = vld [vmem:[#allocation3 + $0xe0] sm:$0x3f]
        %v2601 = vld [vmem:[#allocation3 + $0xe8] sm:$0x3f]
        %v2602 = vld [vmem:[#allocation3 + $0xf0] sm:$0x3f]
        %v2603 = vld [vmem:[#allocation3 + $0xf8] sm:$0x3f]
        %v2604 = vld [vmem:[#allocation3 + $0x100] sm:$0x3f]
        %v2605 = vld [vmem:[#allocation3 + $0x108] sm:$0x3f]
        %v2606 = vld [vmem:[#allocation3 + $0x110] sm:$0x3f]
        %v2607 = vld [vmem:[#allocation3 + $0x118] sm:$0x3f]
        %v2608 = vld [vmem:[#allocation4] sm:$0x3f]
        %v2609 = vld [vmem:[#allocation4 + $0x8] sm:$0x3f]
        %v2610 = vld [vmem:[#allocation4 + $0x10] sm:$0x3f]
        %v2611 = vld [vmem:[#allocation4 + $0x18] sm:$0x3f]
        %v2612 = vld [vmem:[#allocation4 + $0x20] sm:$0x3f]
        %v2613 = vld [vmem:[#allocation4 + $0x28] sm:$0x3f]
        %v2614 = vld [vmem:[#allocation4 + $0x30] sm:$0x3f]
        %v2615 = vld [vmem:[#allocation4 + $0x38] sm:$0x3f]
        %v2616 = vld [vmem:[#allocation4 + $0x40] sm:$0x3f]
        %v2617 = vld [vmem:[#allocation4 + $0x48] sm:$0x3f]
        %v2618 = vld [vmem:[#allocation4 + $0x50] sm:$0x3f]
        %v2619 = vld [vmem:[#allocation4 + $0x58] sm:$0x3f]
        %v2620 = vld [vmem:[#allocation4 + $0x60] sm:$0x3f]
        %v2621 = vld [vmem:[#allocation4 + $0x68] sm:$0x3f]
        %v2622 = vld [vmem:[#allocation4 + $0x70] sm:$0x3f]
        %v2623 = vld [vmem:[#allocation4 + $0x78] sm:$0x3f]
        %v2624 = vld [vmem:[#allocation4 + $0x80] sm:$0x3f]
        %v2625 = vld [vmem:[#allocation4 + $0x88] sm:$0x3f]
        %v2626 = vld [vmem:[#allocation4 + $0x90] sm:$0x3f]
        %v2627 = vld [vmem:[#allocation4 + $0x98] sm:$0x3f]
        %v2628 = vld [vmem:[#allocation4 + $0xa0] sm:$0x3f]
        %v2629 = vld [vmem:[#allocation4 + $0xa8] sm:$0x3f]
        %v2630 = vld [vmem:[#allocation4 + $0xb0] sm:$0x3f]
        %v2631 = vld [vmem:[#allocation4 + $0xb8] sm:$0x3f]
        %v2632 = vld [vmem:[#allocation4 + $0xc0] sm:$0x3f]
        %v2633 = vld [vmem:[#allocation4 + $0xc8] sm:$0x3f]
        %v2634 = vld [vmem:[#allocation4 + $0xd0] sm:$0x3f]
        %v2635 = vld [vmem:[#allocation4 + $0xd8] sm:$0x3f]
        %v2636 = vld [vmem:[#allocation4 + $0xe0] sm:$0x3f]
        %v2637 = vld [vmem:[#allocation4 + $0xe8] sm:$0x3f]
        %v2638 = vld [vmem:[#allocation4 + $0xf0] sm:$0x3f]
        %v2639 = vld [vmem:[#allocation4 + $0xf8] sm:$0x3f]
        %v2640 = vld [vmem:[#allocation4 + $0x100] sm:$0x3f]
        %v2641 = vld [vmem:[#allocation4 + $0x108] sm:$0x3f]
        %v2642 = vld [vmem:[#allocation4 + $0x110] sm:$0x3f]
        %v2643 = vld [vmem:[#allocation4 + $0x118] sm:$0x3f]
        %v2644 = vadd.f32 %v2572, %v2608
        %v2645 = vadd.f32 %v2573, %v2609
        %v2646 = vadd.f32 %v2574, %v2610
        %v2647 = vadd.f32 %v2575, %v2611
        %v2648 = vadd.f32 %v2576, %v2612
        %v2649 = vadd.f32 %v2577, %v2613
        %v2650 = vadd.f32 %v2578, %v2614
        %v2651 = vadd.f32 %v2579, %v2615
        %v2652 = vadd.f32 %v2580, %v2616
        %v2653 = vadd.f32 %v2581, %v2617
        %v2654 = vadd.f32 %v2582, %v2618
        %v2655 = vadd.f32 %v2583, %v2619
        %v2656 = vadd.f32 %v2584, %v2620
        %v2657 = vadd.f32 %v2585, %v2621
        %v2658 = vadd.f32 %v2586, %v2622
        %v2659 = vadd.f32 %v2587, %v2623
        %v2660 = vadd.f32 %v2588, %v2624
        %v2661 = vadd.f32 %v2589, %v2625
        %v2662 = vadd.f32 %v2590, %v2626
        %v2663 = vadd.f32 %v2591, %v2627
        %v2664 = vadd.f32 %v2592, %v2628
        %v2665 = vadd.f32 %v2593, %v2629
        %v2666 = vadd.f32 %v2594, %v2630
        %v2667 = vadd.f32 %v2595, %v2631
        %v2668 = vadd.f32 %v2596, %v2632
        %v2669 = vadd.f32 %v2597, %v2633
        %v2670 = vadd.f32 %v2598, %v2634
        %v2671 = vadd.f32 %v2599, %v2635
        %v2672 = vadd.f32 %v2600, %v2636
        %v2673 = vadd.f32 %v2601, %v2637
        %v2674 = vadd.f32 %v2602, %v2638
        %v2675 = vadd.f32 %v2603, %v2639
        %v2676 = vadd.f32 %v2604, %v2640
        %v2677 = vadd.f32 %v2605, %v2641
        %v2678 = vadd.f32 %v2606, %v2642
        %v2679 = vadd.f32 %v2607, %v2643
        %2680 = vst [vmem:[#allocation5] sm:$0x3f] %v2644
        %2681 = vst [vmem:[#allocation5 + $0x8] sm:$0x3f] %v2645
        %2682 = vst [vmem:[#allocation5 + $0x10] sm:$0x3f] %v2646
        %2683 = vst [vmem:[#allocation5 + $0x18] sm:$0x3f] %v2647
        %2684 = vst [vmem:[#allocation5 + $0x20] sm:$0x3f] %v2648
        %2685 = vst [vmem:[#allocation5 + $0x28] sm:$0x3f] %v2649
        %2686 = vst [vmem:[#allocation5 + $0x30] sm:$0x3f] %v2650
        %2687 = vst [vmem:[#allocation5 + $0x38] sm:$0x3f] %v2651
        %2688 = vst [vmem:[#allocation5 + $0x40] sm:$0x3f] %v2652
        %2689 = vst [vmem:[#allocation5 + $0x48] sm:$0x3f] %v2653
        %2690 = vst [vmem:[#allocation5 + $0x50] sm:$0x3f] %v2654
        %2691 = vst [vmem:[#allocation5 + $0x58] sm:$0x3f] %v2655
        %2692 = vst [vmem:[#allocation5 + $0x60] sm:$0x3f] %v2656
        %2693 = vst [vmem:[#allocation5 + $0x68] sm:$0x3f] %v2657
        %2694 = vst [vmem:[#allocation5 + $0x70] sm:$0x3f] %v2658
        %2695 = vst [vmem:[#allocation5 + $0x78] sm:$0x3f] %v2659
        %2696 = vst [vmem:[#allocation5 + $0x80] sm:$0x3f] %v2660
        %2697 = vst [vmem:[#allocation5 + $0x88] sm:$0x3f] %v2661
        %2698 = vst [vmem:[#allocation5 + $0x90] sm:$0x3f] %v2662
        %2699 = vst [vmem:[#allocation5 + $0x98] sm:$0x3f] %v2663
        %2700 = vst [vmem:[#allocation5 + $0xa0] sm:$0x3f] %v2664
        %2701 = vst [vmem:[#allocation5 + $0xa8] sm:$0x3f] %v2665
        %2702 = vst [vmem:[#allocation5 + $0xb0] sm:$0x3f] %v2666
        %2703 = vst [vmem:[#allocation5 + $0xb8] sm:$0x3f] %v2667
        %2704 = vst [vmem:[#allocation5 + $0xc0] sm:$0x3f] %v2668
        %2705 = vst [vmem:[#allocation5 + $0xc8] sm:$0x3f] %v2669
        %2706 = vst [vmem:[#allocation5 + $0xd0] sm:$0x3f] %v2670
        %2707 = vst [vmem:[#allocation5 + $0xd8] sm:$0x3f] %v2671
        %2708 = vst [vmem:[#allocation5 + $0xe0] sm:$0x3f] %v2672
        %2709 = vst [vmem:[#allocation5 + $0xe8] sm:$0x3f] %v2673
        %2710 = vst [vmem:[#allocation5 + $0xf0] sm:$0x3f] %v2674
        %2711 = vst [vmem:[#allocation5 + $0xf8] sm:$0x3f] %v2675
        %2712 = vst [vmem:[#allocation5 + $0x100] sm:$0x3f] %v2676
        %2713 = vst [vmem:[#allocation5 + $0x108] sm:$0x3f] %v2677
        %2714 = vst [vmem:[#allocation5 + $0x110] sm:$0x3f] %v2678
        %2715 = vst [vmem:[#allocation5 + $0x118] sm:$0x3f] %v2679
        %v2716 = vld [vmem:[#allocation4] sm:$0x1f]
        %v2717 = vld [vmem:[#allocation4 + $0x8] sm:$0x1f]
        %v2718 = vld [vmem:[#allocation4 + $0x10] sm:$0x1f]
        %v2719 = vld [vmem:[#allocation4 + $0x18] sm:$0x1f]
        %v2720 = vld [vmem:[#allocation4 + $0x20] sm:$0x1f]
        %v2721 = vld [vmem:[#allocation4 + $0x28] sm:$0x1f]
        %v2722 = vld [vmem:[#allocation4 + $0x30] sm:$0x1f]
        %v2723 = vld [vmem:[#allocation4 + $0x38] sm:$0x1f]
        %v2724 = vld [vmem:[#allocation4 + $0x40] sm:$0x1f]
        %v2725 = vld [vmem:[#allocation4 + $0x48] sm:$0x1f]
        %v2726 = vld [vmem:[#allocation4 + $0x50] sm:$0x1f]
        %v2727 = vld [vmem:[#allocation4 + $0x58] sm:$0x1f]
        %v2728 = vld [vmem:[#allocation4 + $0x60] sm:$0x1f]
        %v2729 = vld [vmem:[#allocation4 + $0x68] sm:$0x1f]
        %v2730 = vld [vmem:[#allocation4 + $0x70] sm:$0x1f]
        %v2731 = vld [vmem:[#allocation4 + $0x78] sm:$0x1f]
        %v2732 = vld [vmem:[#allocation4 + $0x80] sm:$0x1f]
        %v2733 = vld [vmem:[#allocation4 + $0x88] sm:$0x1f]
        %v2734 = vld [vmem:[#allocation4 + $0x90] sm:$0x1f]
        %v2735 = vld [vmem:[#allocation4 + $0x98] sm:$0x1f]
        %v2736 = vld [vmem:[#allocation4 + $0xa0] sm:$0x1f]
        %v2737 = vld [vmem:[#allocation4 + $0xa8] sm:$0x1f]
        %v2738 = vld [vmem:[#allocation4 + $0xb0] sm:$0x1f]
        %v2739 = vld [vmem:[#allocation4 + $0xb8] sm:$0x1f]
        %v2740 = vld [vmem:[#allocation4 + $0xc0] sm:$0x1f]
        %v2741 = vld [vmem:[#allocation4 + $0xc8] sm:$0x1f]
        %v2742 = vld [vmem:[#allocation4 + $0xd0] sm:$0x1f]
        %v2743 = vld [vmem:[#allocation4 + $0xd8] sm:$0x1f]
        %v2744 = vld [vmem:[#allocation4 + $0xe0] sm:$0x1f]
        %v2745 = vld [vmem:[#allocation4 + $0xe8] sm:$0x1f]
        %v2746 = vld [vmem:[#allocation4 + $0xf0] sm:$0x1f]
        %v2747 = vld [vmem:[#allocation4 + $0xf8] sm:$0x1f]
        %v2748 = vld [vmem:[#allocation4 + $0x100] sm:$0x1f]
        %v2749 = vld [vmem:[#allocation4 + $0x108] sm:$0x1f]
        %v2750 = vld [vmem:[#allocation4 + $0x110] sm:$0x1f]
        %v2751 = vld [vmem:[#allocation4 + $0x118] sm:$0x1f]
        %v2752 = vld [vmem:[#allocation3 + $0x1] sm:$0x1f]
        %v2753 = vld [vmem:[#allocation3 + $0x9] sm:$0x1f]
        %v2754 = vld [vmem:[#allocation3 + $0x11] sm:$0x1f]
        %v2755 = vld [vmem:[#allocation3 + $0x19] sm:$0x1f]
        %v2756 = vld [vmem:[#allocation3 + $0x21] sm:$0x1f]
        %v2757 = vld [vmem:[#allocation3 + $0x29] sm:$0x1f]
        %v2758 = vld [vmem:[#allocation3 + $0x31] sm:$0x1f]
        %v2759 = vld [vmem:[#allocation3 + $0x39] sm:$0x1f]
        %v2760 = vld [vmem:[#allocation3 + $0x41] sm:$0x1f]
        %v2761 = vld [vmem:[#allocation3 + $0x49] sm:$0x1f]
        %v2762 = vld [vmem:[#allocation3 + $0x51] sm:$0x1f]
        %v2763 = vld [vmem:[#allocation3 + $0x59] sm:$0x1f]
        %v2764 = vld [vmem:[#allocation3 + $0x61] sm:$0x1f]
        %v2765 = vld [vmem:[#allocation3 + $0x69] sm:$0x1f]
        %v2766 = vld [vmem:[#allocation3 + $0x71] sm:$0x1f]
        %v2767 = vld [vmem:[#allocation3 + $0x79] sm:$0x1f]
        %v2768 = vld [vmem:[#allocation3 + $0x81] sm:$0x1f]
        %v2769 = vld [vmem:[#allocation3 + $0x89] sm:$0x1f]
        %v2770 = vld [vmem:[#allocation3 + $0x91] sm:$0x1f]
        %v2771 = vld [vmem:[#allocation3 + $0x99] sm:$0x1f]
        %v2772 = vld [vmem:[#allocation3 + $0xa1] sm:$0x1f]
        %v2773 = vld [vmem:[#allocation3 + $0xa9] sm:$0x1f]
        %v2774 = vld [vmem:[#allocation3 + $0xb1] sm:$0x1f]
        %v2775 = vld [vmem:[#allocation3 + $0xb9] sm:$0x1f]
        %v2776 = vld [vmem:[#allocation3 + $0xc1] sm:$0x1f]
        %v2777 = vld [vmem:[#allocation3 + $0xc9] sm:$0x1f]
        %v2778 = vld [vmem:[#allocation3 + $0xd1] sm:$0x1f]
        %v2779 = vld [vmem:[#allocation3 + $0xd9] sm:$0x1f]
        %v2780 = vld [vmem:[#allocation3 + $0xe1] sm:$0x1f]
        %v2781 = vld [vmem:[#allocation3 + $0xe9] sm:$0x1f]
        %v2782 = vld [vmem:[#allocation3 + $0xf1] sm:$0x1f]
        %v2783 = vld [vmem:[#allocation3 + $0xf9] sm:$0x1f]
        %v2784 = vld [vmem:[#allocation3 + $0x101] sm:$0x1f]
        %v2785 = vld [vmem:[#allocation3 + $0x109] sm:$0x1f]
        %v2786 = vld [vmem:[#allocation3 + $0x111] sm:$0x1f]
        %v2787 = vld [vmem:[#allocation3 + $0x119] sm:$0x1f]
        %v2788 = vadd.f32 %v2716, %v2752
        %v2789 = vadd.f32 %v2717, %v2753
        %v2790 = vadd.f32 %v2718, %v2754
        %v2791 = vadd.f32 %v2719, %v2755
        %v2792 = vadd.f32 %v2720, %v2756
        %v2793 = vadd.f32 %v2721, %v2757
        %v2794 = vadd.f32 %v2722, %v2758
        %v2795 = vadd.f32 %v2723, %v2759
        %v2796 = vadd.f32 %v2724, %v2760
        %v2797 = vadd.f32 %v2725, %v2761
        %v2798 = vadd.f32 %v2726, %v2762
        %v2799 = vadd.f32 %v2727, %v2763
        %v2800 = vadd.f32 %v2728, %v2764
        %v2801 = vadd.f32 %v2729, %v2765
        %v2802 = vadd.f32 %v2730, %v2766
        %v2803 = vadd.f32 %v2731, %v2767
        %v2804 = vadd.f32 %v2732, %v2768
        %v2805 = vadd.f32 %v2733, %v2769
        %v2806 = vadd.f32 %v2734, %v2770
        %v2807 = vadd.f32 %v2735, %v2771
        %v2808 = vadd.f32 %v2736, %v2772
        %v2809 = vadd.f32 %v2737, %v2773
        %v2810 = vadd.f32 %v2738, %v2774
        %v2811 = vadd.f32 %v2739, %v2775
        %v2812 = vadd.f32 %v2740, %v2776
        %v2813 = vadd.f32 %v2741, %v2777
        %v2814 = vadd.f32 %v2742, %v2778
        %v2815 = vadd.f32 %v2743, %v2779
        %v2816 = vadd.f32 %v2744, %v2780
        %v2817 = vadd.f32 %v2745, %v2781
        %v2818 = vadd.f32 %v2746, %v2782
        %v2819 = vadd.f32 %v2747, %v2783
        %v2820 = vadd.f32 %v2748, %v2784
        %v2821 = vadd.f32 %v2749, %v2785
        %v2822 = vadd.f32 %v2750, %v2786
        %v2823 = vadd.f32 %v2751, %v2787
        %2824 = vst [vmem:[#allocation6] sm:$0x1f] %v2788
        %2825 = vst [vmem:[#allocation6 + $0x8] sm:$0x1f] %v2789
        %2826 = vst [vmem:[#allocation6 + $0x10] sm:$0x1f] %v2790
        %2827 = vst [vmem:[#allocation6 + $0x18] sm:$0x1f] %v2791
        %2828 = vst [vmem:[#allocation6 + $0x20] sm:$0x1f] %v2792
        %2829 = vst [vmem:[#allocation6 + $0x28] sm:$0x1f] %v2793
        %2830 = vst [vmem:[#allocation6 + $0x30] sm:$0x1f] %v2794
        %2831 = vst [vmem:[#allocation6 + $0x38] sm:$0x1f] %v2795
        %2832 = vst [vmem:[#allocation6 + $0x40] sm:$0x1f] %v2796
        %2833 = vst [vmem:[#allocation6 + $0x48] sm:$0x1f] %v2797
        %2834 = vst [vmem:[#allocation6 + $0x50] sm:$0x1f] %v2798
        %2835 = vst [vmem:[#allocation6 + $0x58] sm:$0x1f] %v2799
        %2836 = vst [vmem:[#allocation6 + $0x60] sm:$0x1f] %v2800
        %2837 = vst [vmem:[#allocation6 + $0x68] sm:$0x1f] %v2801
        %2838 = vst [vmem:[#allocation6 + $0x70] sm:$0x1f] %v2802
        %2839 = vst [vmem:[#allocation6 + $0x78] sm:$0x1f] %v2803
        %2840 = vst [vmem:[#allocation6 + $0x80] sm:$0x1f] %v2804
        %2841 = vst [vmem:[#allocation6 + $0x88] sm:$0x1f] %v2805
        %2842 = vst [vmem:[#allocation6 + $0x90] sm:$0x1f] %v2806
        %2843 = vst [vmem:[#allocation6 + $0x98] sm:$0x1f] %v2807
        %2844 = vst [vmem:[#allocation6 + $0xa0] sm:$0x1f] %v2808
        %2845 = vst [vmem:[#allocation6 + $0xa8] sm:$0x1f] %v2809
        %2846 = vst [vmem:[#allocation6 + $0xb0] sm:$0x1f] %v2810
        %2847 = vst [vmem:[#allocation6 + $0xb8] sm:$0x1f] %v2811
        %2848 = vst [vmem:[#allocation6 + $0xc0] sm:$0x1f] %v2812
        %2849 = vst [vmem:[#allocation6 + $0xc8] sm:$0x1f] %v2813
        %2850 = vst [vmem:[#allocation6 + $0xd0] sm:$0x1f] %v2814
        %2851 = vst [vmem:[#allocation6 + $0xd8] sm:$0x1f] %v2815
        %2852 = vst [vmem:[#allocation6 + $0xe0] sm:$0x1f] %v2816
        %2853 = vst [vmem:[#allocation6 + $0xe8] sm:$0x1f] %v2817
        %2854 = vst [vmem:[#allocation6 + $0xf0] sm:$0x1f] %v2818
        %2855 = vst [vmem:[#allocation6 + $0xf8] sm:$0x1f] %v2819
        %2856 = vst [vmem:[#allocation6 + $0x100] sm:$0x1f] %v2820
        %2857 = vst [vmem:[#allocation6 + $0x108] sm:$0x1f] %v2821
        %2858 = vst [vmem:[#allocation6 + $0x110] sm:$0x1f] %v2822
        %2859 = vst [vmem:[#allocation6 + $0x118] sm:$0x1f] %v2823
        loop: start=0, step=1, limit=6
        $region125: #{tpu_custom_call.1} parent=89 // loop_pre_header
          _
        $region126: #{tpu_custom_call.1} parent=89 // loop_header
          %s2861 = sphi 0, %s2865
          %p2862 = scmp.ge.s32.totalorder %s2861, 6
        $region127: #{tpu_custom_call.1} parent=89 // loop_header_branch
          %2864 = sbr.rel (%p2862) target = $region131
        $region128: #{tpu_custom_call.1} parent=89 // loop_body
          %s2866 = smul.u32 %s2861, 75
          %s2867 = sld [smem:[#allocation14 + %s2866]]
          %s2868 = sadd.s32 %s2866, 1
          %s2869 = sld [smem:[#allocation14 + %s2868]]
          %s2870 = sadd.s32 %s2866, 2
          %s2871 = sld [smem:[#allocation14 + %s2870]]
          %s2872 = sadd.s32 %s2866, 3
          %s2873 = sld [smem:[#allocation14 + %s2872]]
          %s2874 = sadd.s32 %s2866, 4
          %s2875 = sld [smem:[#allocation14 + %s2874]]
          %v2876 = vld [vmem:[#allocation5] sm:$0xf]
          %v2877 = vld [vmem:[#allocation5 + $0x8] sm:$0xf]
          %v2878 = vld [vmem:[#allocation5 + $0x10] sm:$0xf]
          %v2879 = vld [vmem:[#allocation5 + $0x18] sm:$0xf]
          %v2880 = vld [vmem:[#allocation5 + $0x20] sm:$0xf]
          %v2881 = vld [vmem:[#allocation5 + $0x28] sm:$0xf]
          %v2882 = vld [vmem:[#allocation5 + $0x30] sm:$0xf]
          %v2883 = vld [vmem:[#allocation5 + $0x38] sm:$0xf]
          %v2884 = vstv %s2867
          %v2885 = vmul.f32 %v2884, %v2876
          %v2886 = vmul.f32 %v2884, %v2877
          %v2887 = vmul.f32 %v2884, %v2878
          %v2888 = vmul.f32 %v2884, %v2879
          %v2889 = vmul.f32 %v2884, %v2880
          %v2890 = vmul.f32 %v2884, %v2881
          %v2891 = vmul.f32 %v2884, %v2882
          %v2892 = vmul.f32 %v2884, %v2883
          %v2893 = vadd.f32 %v2885, 0.0
          %v2894 = vadd.f32 %v2886, 0.0
          %v2895 = vadd.f32 %v2887, 0.0
          %v2896 = vadd.f32 %v2888, 0.0
          %v2897 = vadd.f32 %v2889, 0.0
          %v2898 = vadd.f32 %v2890, 0.0
          %v2899 = vadd.f32 %v2891, 0.0
          %v2900 = vadd.f32 %v2892, 0.0
          %v2901 = vld [vmem:[#allocation6] sm:$0xf]
          %v2902 = vld [vmem:[#allocation6 + $0x8] sm:$0xf]
          %v2903 = vld [vmem:[#allocation6 + $0x10] sm:$0xf]
          %v2904 = vld [vmem:[#allocation6 + $0x18] sm:$0xf]
          %v2905 = vld [vmem:[#allocation6 + $0x20] sm:$0xf]
          %v2906 = vld [vmem:[#allocation6 + $0x28] sm:$0xf]
          %v2907 = vld [vmem:[#allocation6 + $0x30] sm:$0xf]
          %v2908 = vld [vmem:[#allocation6 + $0x38] sm:$0xf]
          %v2909 = vstv %s2869
          %v2910 = vmul.f32 %v2909, %v2901
          %v2911 = vmul.f32 %v2909, %v2902
          %v2912 = vmul.f32 %v2909, %v2903
          %v2913 = vmul.f32 %v2909, %v2904
          %v2914 = vmul.f32 %v2909, %v2905
          %v2915 = vmul.f32 %v2909, %v2906
          %v2916 = vmul.f32 %v2909, %v2907
          %v2917 = vmul.f32 %v2909, %v2908
          %v2918 = vadd.f32 %v2893, %v2910
          %v2919 = vadd.f32 %v2894, %v2911
          %v2920 = vadd.f32 %v2895, %v2912
          %v2921 = vadd.f32 %v2896, %v2913
          %v2922 = vadd.f32 %v2897, %v2914
          %v2923 = vadd.f32 %v2898, %v2915
          %v2924 = vadd.f32 %v2899, %v2916
          %v2925 = vadd.f32 %v2900, %v2917
          %v2926 = vld [vmem:[#allocation5 + $0x1] sm:$0xf]
          %v2927 = vld [vmem:[#allocation5 + $0x9] sm:$0xf]
          %v2928 = vld [vmem:[#allocation5 + $0x11] sm:$0xf]
          %v2929 = vld [vmem:[#allocation5 + $0x19] sm:$0xf]
          %v2930 = vld [vmem:[#allocation5 + $0x21] sm:$0xf]
          %v2931 = vld [vmem:[#allocation5 + $0x29] sm:$0xf]
          %v2932 = vld [vmem:[#allocation5 + $0x31] sm:$0xf]
          %v2933 = vld [vmem:[#allocation5 + $0x39] sm:$0xf]
          %v2934 = vstv %s2871
          %v2935 = vmul.f32 %v2934, %v2926
          %v2936 = vmul.f32 %v2934, %v2927
          %v2937 = vmul.f32 %v2934, %v2928
          %v2938 = vmul.f32 %v2934, %v2929
          %v2939 = vmul.f32 %v2934, %v2930
          %v2940 = vmul.f32 %v2934, %v2931
          %v2941 = vmul.f32 %v2934, %v2932
          %v2942 = vmul.f32 %v2934, %v2933
          %v2943 = vadd.f32 %v2918, %v2935
          %v2944 = vadd.f32 %v2919, %v2936
          %v2945 = vadd.f32 %v2920, %v2937
          %v2946 = vadd.f32 %v2921, %v2938
          %v2947 = vadd.f32 %v2922, %v2939
          %v2948 = vadd.f32 %v2923, %v2940
          %v2949 = vadd.f32 %v2924, %v2941
          %v2950 = vadd.f32 %v2925, %v2942
          %v2951 = vld [vmem:[#allocation6 + $0x1] sm:$0xf]
          %v2952 = vld [vmem:[#allocation6 + $0x9] sm:$0xf]
          %v2953 = vld [vmem:[#allocation6 + $0x11] sm:$0xf]
          %v2954 = vld [vmem:[#allocation6 + $0x19] sm:$0xf]
          %v2955 = vld [vmem:[#allocation6 + $0x21] sm:$0xf]
          %v2956 = vld [vmem:[#allocation6 + $0x29] sm:$0xf]
          %v2957 = vld [vmem:[#allocation6 + $0x31] sm:$0xf]
          %v2958 = vld [vmem:[#allocation6 + $0x39] sm:$0xf]
          %v2959 = vstv %s2873
          %v2960 = vmul.f32 %v2959, %v2951
          %v2961 = vmul.f32 %v2959, %v2952
          %v2962 = vmul.f32 %v2959, %v2953
          %v2963 = vmul.f32 %v2959, %v2954
          %v2964 = vmul.f32 %v2959, %v2955
          %v2965 = vmul.f32 %v2959, %v2956
          %v2966 = vmul.f32 %v2959, %v2957
          %v2967 = vmul.f32 %v2959, %v2958
          %v2968 = vadd.f32 %v2943, %v2960
          %v2969 = vadd.f32 %v2944, %v2961
          %v2970 = vadd.f32 %v2945, %v2962
          %v2971 = vadd.f32 %v2946, %v2963
          %v2972 = vadd.f32 %v2947, %v2964
          %v2973 = vadd.f32 %v2948, %v2965
          %v2974 = vadd.f32 %v2949, %v2966
          %v2975 = vadd.f32 %v2950, %v2967
          %v2976 = vld [vmem:[#allocation5 + $0x2] sm:$0xf]
          %v2977 = vld [vmem:[#allocation5 + $0xa] sm:$0xf]
          %v2978 = vld [vmem:[#allocation5 + $0x12] sm:$0xf]
          %v2979 = vld [vmem:[#allocation5 + $0x1a] sm:$0xf]
          %v2980 = vld [vmem:[#allocation5 + $0x22] sm:$0xf]
          %v2981 = vld [vmem:[#allocation5 + $0x2a] sm:$0xf]
          %v2982 = vld [vmem:[#allocation5 + $0x32] sm:$0xf]
          %v2983 = vld [vmem:[#allocation5 + $0x3a] sm:$0xf]
          %v2984 = vstv %s2875
          %v2985 = vmul.f32 %v2984, %v2976
          %v2986 = vmul.f32 %v2984, %v2977
          %v2987 = vmul.f32 %v2984, %v2978
          %v2988 = vmul.f32 %v2984, %v2979
          %v2989 = vmul.f32 %v2984, %v2980
          %v2990 = vmul.f32 %v2984, %v2981
          %v2991 = vmul.f32 %v2984, %v2982
          %v2992 = vmul.f32 %v2984, %v2983
          %v2993 = vadd.f32 %v2968, %v2985
          %v2994 = vadd.f32 %v2969, %v2986
          %v2995 = vadd.f32 %v2970, %v2987
          %v2996 = vadd.f32 %v2971, %v2988
          %v2997 = vadd.f32 %v2972, %v2989
          %v2998 = vadd.f32 %v2973, %v2990
          %v2999 = vadd.f32 %v2974, %v2991
          %v3000 = vadd.f32 %v2975, %v2992
          %s3001 = sadd.s32 %s2866, 5
          %s3002 = sld [smem:[#allocation14 + %s3001]]
          %s3003 = sadd.s32 %s2866, 6
          %s3004 = sld [smem:[#allocation14 + %s3003]]
          %s3005 = sadd.s32 %s2866, 7
          %s3006 = sld [smem:[#allocation14 + %s3005]]
          %s3007 = sadd.s32 %s2866, 8
          %s3008 = sld [smem:[#allocation14 + %s3007]]
          %s3009 = sadd.s32 %s2866, 9
          %s3010 = sld [smem:[#allocation14 + %s3009]]
          %s3011 = scalar_lea.vmem [#allocation5], 8
          %v3012 = vld [vmem:[%s3011] sm:$0xf]
          %v3013 = vld [vmem:[%s3011 + $0x8] sm:$0xf]
          %v3014 = vld [vmem:[%s3011 + $0x10] sm:$0xf]
          %v3015 = vld [vmem:[%s3011 + $0x18] sm:$0xf]
          %v3016 = vld [vmem:[%s3011 + $0x20] sm:$0xf]
          %v3017 = vld [vmem:[%s3011 + $0x28] sm:$0xf]
          %v3018 = vld [vmem:[%s3011 + $0x30] sm:$0xf]
          %v3019 = vld [vmem:[%s3011 + $0x38] sm:$0xf]
          %v3020 = vstv %s3002
          %v3021 = vmul.f32 %v3020, %v3012
          %v3022 = vmul.f32 %v3020, %v3013
          %v3023 = vmul.f32 %v3020, %v3014
          %v3024 = vmul.f32 %v3020, %v3015
          %v3025 = vmul.f32 %v3020, %v3016
          %v3026 = vmul.f32 %v3020, %v3017
          %v3027 = vmul.f32 %v3020, %v3018
          %v3028 = vmul.f32 %v3020, %v3019
          %v3029 = vadd.f32 %v2993, %v3021
          %v3030 = vadd.f32 %v2994, %v3022
          %v3031 = vadd.f32 %v2995, %v3023
          %v3032 = vadd.f32 %v2996, %v3024
          %v3033 = vadd.f32 %v2997, %v3025
          %v3034 = vadd.f32 %v2998, %v3026
          %v3035 = vadd.f32 %v2999, %v3027
          %v3036 = vadd.f32 %v3000, %v3028
          %s3037 = scalar_lea.vmem [#allocation6], 8
          %v3038 = vld [vmem:[%s3037] sm:$0xf]
          %v3039 = vld [vmem:[%s3037 + $0x8] sm:$0xf]
          %v3040 = vld [vmem:[%s3037 + $0x10] sm:$0xf]
          %v3041 = vld [vmem:[%s3037 + $0x18] sm:$0xf]
          %v3042 = vld [vmem:[%s3037 + $0x20] sm:$0xf]
          %v3043 = vld [vmem:[%s3037 + $0x28] sm:$0xf]
          %v3044 = vld [vmem:[%s3037 + $0x30] sm:$0xf]
          %v3045 = vld [vmem:[%s3037 + $0x38] sm:$0xf]
          %v3046 = vstv %s3004
          %v3047 = vmul.f32 %v3046, %v3038
          %v3048 = vmul.f32 %v3046, %v3039
          %v3049 = vmul.f32 %v3046, %v3040
          %v3050 = vmul.f32 %v3046, %v3041
          %v3051 = vmul.f32 %v3046, %v3042
          %v3052 = vmul.f32 %v3046, %v3043
          %v3053 = vmul.f32 %v3046, %v3044
          %v3054 = vmul.f32 %v3046, %v3045
          %v3055 = vadd.f32 %v3029, %v3047
          %v3056 = vadd.f32 %v3030, %v3048
          %v3057 = vadd.f32 %v3031, %v3049
          %v3058 = vadd.f32 %v3032, %v3050
          %v3059 = vadd.f32 %v3033, %v3051
          %v3060 = vadd.f32 %v3034, %v3052
          %v3061 = vadd.f32 %v3035, %v3053
          %v3062 = vadd.f32 %v3036, %v3054
          %v3063 = vld [vmem:[%s3011 + $0x1] sm:$0xf]
          %v3064 = vld [vmem:[%s3011 + $0x9] sm:$0xf]
          %v3065 = vld [vmem:[%s3011 + $0x11] sm:$0xf]
          %v3066 = vld [vmem:[%s3011 + $0x19] sm:$0xf]
          %v3067 = vld [vmem:[%s3011 + $0x21] sm:$0xf]
          %v3068 = vld [vmem:[%s3011 + $0x29] sm:$0xf]
          %v3069 = vld [vmem:[%s3011 + $0x31] sm:$0xf]
          %v3070 = vld [vmem:[%s3011 + $0x39] sm:$0xf]
          %v3071 = vstv %s3006
          %v3072 = vmul.f32 %v3071, %v3063
          %v3073 = vmul.f32 %v3071, %v3064
          %v3074 = vmul.f32 %v3071, %v3065
          %v3075 = vmul.f32 %v3071, %v3066
          %v3076 = vmul.f32 %v3071, %v3067
          %v3077 = vmul.f32 %v3071, %v3068
          %v3078 = vmul.f32 %v3071, %v3069
          %v3079 = vmul.f32 %v3071, %v3070
          %v3080 = vadd.f32 %v3055, %v3072
          %v3081 = vadd.f32 %v3056, %v3073
          %v3082 = vadd.f32 %v3057, %v3074
          %v3083 = vadd.f32 %v3058, %v3075
          %v3084 = vadd.f32 %v3059, %v3076
          %v3085 = vadd.f32 %v3060, %v3077
          %v3086 = vadd.f32 %v3061, %v3078
          %v3087 = vadd.f32 %v3062, %v3079
          %v3088 = vld [vmem:[%s3037 + $0x1] sm:$0xf]
          %v3089 = vld [vmem:[%s3037 + $0x9] sm:$0xf]
          %v3090 = vld [vmem:[%s3037 + $0x11] sm:$0xf]
          %v3091 = vld [vmem:[%s3037 + $0x19] sm:$0xf]
          %v3092 = vld [vmem:[%s3037 + $0x21] sm:$0xf]
          %v3093 = vld [vmem:[%s3037 + $0x29] sm:$0xf]
          %v3094 = vld [vmem:[%s3037 + $0x31] sm:$0xf]
          %v3095 = vld [vmem:[%s3037 + $0x39] sm:$0xf]
          %v3096 = vstv %s3008
          %v3097 = vmul.f32 %v3096, %v3088
          %v3098 = vmul.f32 %v3096, %v3089
          %v3099 = vmul.f32 %v3096, %v3090
          %v3100 = vmul.f32 %v3096, %v3091
          %v3101 = vmul.f32 %v3096, %v3092
          %v3102 = vmul.f32 %v3096, %v3093
          %v3103 = vmul.f32 %v3096, %v3094
          %v3104 = vmul.f32 %v3096, %v3095
          %v3105 = vadd.f32 %v3080, %v3097
          %v3106 = vadd.f32 %v3081, %v3098
          %v3107 = vadd.f32 %v3082, %v3099
          %v3108 = vadd.f32 %v3083, %v3100
          %v3109 = vadd.f32 %v3084, %v3101
          %v3110 = vadd.f32 %v3085, %v3102
          %v3111 = vadd.f32 %v3086, %v3103
          %v3112 = vadd.f32 %v3087, %v3104
          %v3113 = vld [vmem:[%s3011 + $0x2] sm:$0xf]
          %v3114 = vld [vmem:[%s3011 + $0xa] sm:$0xf]
          %v3115 = vld [vmem:[%s3011 + $0x12] sm:$0xf]
          %v3116 = vld [vmem:[%s3011 + $0x1a] sm:$0xf]
          %v3117 = vld [vmem:[%s3011 + $0x22] sm:$0xf]
          %v3118 = vld [vmem:[%s3011 + $0x2a] sm:$0xf]
          %v3119 = vld [vmem:[%s3011 + $0x32] sm:$0xf]
          %v3120 = vld [vmem:[%s3011 + $0x3a] sm:$0xf]
          %v3121 = vstv %s3010
          %v3122 = vmul.f32 %v3121, %v3113
          %v3123 = vmul.f32 %v3121, %v3114
          %v3124 = vmul.f32 %v3121, %v3115
          %v3125 = vmul.f32 %v3121, %v3116
          %v3126 = vmul.f32 %v3121, %v3117
          %v3127 = vmul.f32 %v3121, %v3118
          %v3128 = vmul.f32 %v3121, %v3119
          %v3129 = vmul.f32 %v3121, %v3120
          %v3130 = vadd.f32 %v3105, %v3122
          %v3131 = vadd.f32 %v3106, %v3123
          %v3132 = vadd.f32 %v3107, %v3124
          %v3133 = vadd.f32 %v3108, %v3125
          %v3134 = vadd.f32 %v3109, %v3126
          %v3135 = vadd.f32 %v3110, %v3127
          %v3136 = vadd.f32 %v3111, %v3128
          %v3137 = vadd.f32 %v3112, %v3129
          %s3138 = sadd.s32 %s2866, 10
          %s3139 = sld [smem:[#allocation14 + %s3138]]
          %s3140 = sadd.s32 %s2866, 11
          %s3141 = sld [smem:[#allocation14 + %s3140]]
          %s3142 = sadd.s32 %s2866, 12
          %s3143 = sld [smem:[#allocation14 + %s3142]]
          %s3144 = sadd.s32 %s2866, 13
          %s3145 = sld [smem:[#allocation14 + %s3144]]
          %s3146 = sadd.s32 %s2866, 14
          %s3147 = sld [smem:[#allocation14 + %s3146]]
          %s3148 = scalar_lea.vmem [#allocation5], 16
          %v3149 = vld [vmem:[%s3148] sm:$0xf]
          %v3150 = vld [vmem:[%s3148 + $0x8] sm:$0xf]
          %v3151 = vld [vmem:[%s3148 + $0x10] sm:$0xf]
          %v3152 = vld [vmem:[%s3148 + $0x18] sm:$0xf]
          %v3153 = vld [vmem:[%s3148 + $0x20] sm:$0xf]
          %v3154 = vld [vmem:[%s3148 + $0x28] sm:$0xf]
          %v3155 = vld [vmem:[%s3148 + $0x30] sm:$0xf]
          %v3156 = vld [vmem:[%s3148 + $0x38] sm:$0xf]
          %v3157 = vstv %s3139
          %v3158 = vmul.f32 %v3157, %v3149
          %v3159 = vmul.f32 %v3157, %v3150
          %v3160 = vmul.f32 %v3157, %v3151
          %v3161 = vmul.f32 %v3157, %v3152
          %v3162 = vmul.f32 %v3157, %v3153
          %v3163 = vmul.f32 %v3157, %v3154
          %v3164 = vmul.f32 %v3157, %v3155
          %v3165 = vmul.f32 %v3157, %v3156
          %v3166 = vadd.f32 %v3130, %v3158
          %v3167 = vadd.f32 %v3131, %v3159
          %v3168 = vadd.f32 %v3132, %v3160
          %v3169 = vadd.f32 %v3133, %v3161
          %v3170 = vadd.f32 %v3134, %v3162
          %v3171 = vadd.f32 %v3135, %v3163
          %v3172 = vadd.f32 %v3136, %v3164
          %v3173 = vadd.f32 %v3137, %v3165
          %s3174 = scalar_lea.vmem [#allocation6], 16
          %v3175 = vld [vmem:[%s3174] sm:$0xf]
          %v3176 = vld [vmem:[%s3174 + $0x8] sm:$0xf]
          %v3177 = vld [vmem:[%s3174 + $0x10] sm:$0xf]
          %v3178 = vld [vmem:[%s3174 + $0x18] sm:$0xf]
          %v3179 = vld [vmem:[%s3174 + $0x20] sm:$0xf]
          %v3180 = vld [vmem:[%s3174 + $0x28] sm:$0xf]
          %v3181 = vld [vmem:[%s3174 + $0x30] sm:$0xf]
          %v3182 = vld [vmem:[%s3174 + $0x38] sm:$0xf]
          %v3183 = vstv %s3141
          %v3184 = vmul.f32 %v3183, %v3175
          %v3185 = vmul.f32 %v3183, %v3176
          %v3186 = vmul.f32 %v3183, %v3177
          %v3187 = vmul.f32 %v3183, %v3178
          %v3188 = vmul.f32 %v3183, %v3179
          %v3189 = vmul.f32 %v3183, %v3180
          %v3190 = vmul.f32 %v3183, %v3181
          %v3191 = vmul.f32 %v3183, %v3182
          %v3192 = vadd.f32 %v3166, %v3184
          %v3193 = vadd.f32 %v3167, %v3185
          %v3194 = vadd.f32 %v3168, %v3186
          %v3195 = vadd.f32 %v3169, %v3187
          %v3196 = vadd.f32 %v3170, %v3188
          %v3197 = vadd.f32 %v3171, %v3189
          %v3198 = vadd.f32 %v3172, %v3190
          %v3199 = vadd.f32 %v3173, %v3191
          %v3200 = vld [vmem:[%s3148 + $0x1] sm:$0xf]
          %v3201 = vld [vmem:[%s3148 + $0x9] sm:$0xf]
          %v3202 = vld [vmem:[%s3148 + $0x11] sm:$0xf]
          %v3203 = vld [vmem:[%s3148 + $0x19] sm:$0xf]
          %v3204 = vld [vmem:[%s3148 + $0x21] sm:$0xf]
          %v3205 = vld [vmem:[%s3148 + $0x29] sm:$0xf]
          %v3206 = vld [vmem:[%s3148 + $0x31] sm:$0xf]
          %v3207 = vld [vmem:[%s3148 + $0x39] sm:$0xf]
          %v3208 = vstv %s3143
          %v3209 = vmul.f32 %v3208, %v3200
          %v3210 = vmul.f32 %v3208, %v3201
          %v3211 = vmul.f32 %v3208, %v3202
          %v3212 = vmul.f32 %v3208, %v3203
          %v3213 = vmul.f32 %v3208, %v3204
          %v3214 = vmul.f32 %v3208, %v3205
          %v3215 = vmul.f32 %v3208, %v3206
          %v3216 = vmul.f32 %v3208, %v3207
          %v3217 = vadd.f32 %v3192, %v3209
          %v3218 = vadd.f32 %v3193, %v3210
          %v3219 = vadd.f32 %v3194, %v3211
          %v3220 = vadd.f32 %v3195, %v3212
          %v3221 = vadd.f32 %v3196, %v3213
          %v3222 = vadd.f32 %v3197, %v3214
          %v3223 = vadd.f32 %v3198, %v3215
          %v3224 = vadd.f32 %v3199, %v3216
          %v3225 = vld [vmem:[%s3174 + $0x1] sm:$0xf]
          %v3226 = vld [vmem:[%s3174 + $0x9] sm:$0xf]
          %v3227 = vld [vmem:[%s3174 + $0x11] sm:$0xf]
          %v3228 = vld [vmem:[%s3174 + $0x19] sm:$0xf]
          %v3229 = vld [vmem:[%s3174 + $0x21] sm:$0xf]
          %v3230 = vld [vmem:[%s3174 + $0x29] sm:$0xf]
          %v3231 = vld [vmem:[%s3174 + $0x31] sm:$0xf]
          %v3232 = vld [vmem:[%s3174 + $0x39] sm:$0xf]
          %v3233 = vstv %s3145
          %v3234 = vmul.f32 %v3233, %v3225
          %v3235 = vmul.f32 %v3233, %v3226
          %v3236 = vmul.f32 %v3233, %v3227
          %v3237 = vmul.f32 %v3233, %v3228
          %v3238 = vmul.f32 %v3233, %v3229
          %v3239 = vmul.f32 %v3233, %v3230
          %v3240 = vmul.f32 %v3233, %v3231
          %v3241 = vmul.f32 %v3233, %v3232
          %v3242 = vadd.f32 %v3217, %v3234
          %v3243 = vadd.f32 %v3218, %v3235
          %v3244 = vadd.f32 %v3219, %v3236
          %v3245 = vadd.f32 %v3220, %v3237
          %v3246 = vadd.f32 %v3221, %v3238
          %v3247 = vadd.f32 %v3222, %v3239
          %v3248 = vadd.f32 %v3223, %v3240
          %v3249 = vadd.f32 %v3224, %v3241
          %v3250 = vld [vmem:[%s3148 + $0x2] sm:$0xf]
          %v3251 = vld [vmem:[%s3148 + $0xa] sm:$0xf]
          %v3252 = vld [vmem:[%s3148 + $0x12] sm:$0xf]
          %v3253 = vld [vmem:[%s3148 + $0x1a] sm:$0xf]
          %v3254 = vld [vmem:[%s3148 + $0x22] sm:$0xf]
          %v3255 = vld [vmem:[%s3148 + $0x2a] sm:$0xf]
          %v3256 = vld [vmem:[%s3148 + $0x32] sm:$0xf]
          %v3257 = vld [vmem:[%s3148 + $0x3a] sm:$0xf]
          %v3258 = vstv %s3147
          %v3259 = vmul.f32 %v3258, %v3250
          %v3260 = vmul.f32 %v3258, %v3251
          %v3261 = vmul.f32 %v3258, %v3252
          %v3262 = vmul.f32 %v3258, %v3253
          %v3263 = vmul.f32 %v3258, %v3254
          %v3264 = vmul.f32 %v3258, %v3255
          %v3265 = vmul.f32 %v3258, %v3256
          %v3266 = vmul.f32 %v3258, %v3257
          %v3267 = vadd.f32 %v3242, %v3259
          %v3268 = vadd.f32 %v3243, %v3260
          %v3269 = vadd.f32 %v3244, %v3261
          %v3270 = vadd.f32 %v3245, %v3262
          %v3271 = vadd.f32 %v3246, %v3263
          %v3272 = vadd.f32 %v3247, %v3264
          %v3273 = vadd.f32 %v3248, %v3265
          %v3274 = vadd.f32 %v3249, %v3266
          %s3275 = sadd.s32 %s2866, 15
          %s3276 = sld [smem:[#allocation14 + %s3275]]
          %s3277 = sadd.s32 %s2866, 16
          %s3278 = sld [smem:[#allocation14 + %s3277]]
          %s3279 = sadd.s32 %s2866, 17
          %s3280 = sld [smem:[#allocation14 + %s3279]]
          %s3281 = sadd.s32 %s2866, 18
          %s3282 = sld [smem:[#allocation14 + %s3281]]
          %s3283 = sadd.s32 %s2866, 19
          %s3284 = sld [smem:[#allocation14 + %s3283]]
          %s3285 = scalar_lea.vmem [#allocation5], 24
          %v3286 = vld [vmem:[%s3285] sm:$0xf]
          %v3287 = vld [vmem:[%s3285 + $0x8] sm:$0xf]
          %v3288 = vld [vmem:[%s3285 + $0x10] sm:$0xf]
          %v3289 = vld [vmem:[%s3285 + $0x18] sm:$0xf]
          %v3290 = vld [vmem:[%s3285 + $0x20] sm:$0xf]
          %v3291 = vld [vmem:[%s3285 + $0x28] sm:$0xf]
          %v3292 = vld [vmem:[%s3285 + $0x30] sm:$0xf]
          %v3293 = vld [vmem:[%s3285 + $0x38] sm:$0xf]
          %v3294 = vstv %s3276
          %v3295 = vmul.f32 %v3294, %v3286
          %v3296 = vmul.f32 %v3294, %v3287
          %v3297 = vmul.f32 %v3294, %v3288
          %v3298 = vmul.f32 %v3294, %v3289
          %v3299 = vmul.f32 %v3294, %v3290
          %v3300 = vmul.f32 %v3294, %v3291
          %v3301 = vmul.f32 %v3294, %v3292
          %v3302 = vmul.f32 %v3294, %v3293
          %v3303 = vadd.f32 %v3267, %v3295
          %v3304 = vadd.f32 %v3268, %v3296
          %v3305 = vadd.f32 %v3269, %v3297
          %v3306 = vadd.f32 %v3270, %v3298
          %v3307 = vadd.f32 %v3271, %v3299
          %v3308 = vadd.f32 %v3272, %v3300
          %v3309 = vadd.f32 %v3273, %v3301
          %v3310 = vadd.f32 %v3274, %v3302
          %s3311 = scalar_lea.vmem [#allocation6], 24
          %v3312 = vld [vmem:[%s3311] sm:$0xf]
          %v3313 = vld [vmem:[%s3311 + $0x8] sm:$0xf]
          %v3314 = vld [vmem:[%s3311 + $0x10] sm:$0xf]
          %v3315 = vld [vmem:[%s3311 + $0x18] sm:$0xf]
          %v3316 = vld [vmem:[%s3311 + $0x20] sm:$0xf]
          %v3317 = vld [vmem:[%s3311 + $0x28] sm:$0xf]
          %v3318 = vld [vmem:[%s3311 + $0x30] sm:$0xf]
          %v3319 = vld [vmem:[%s3311 + $0x38] sm:$0xf]
          %v3320 = vstv %s3278
          %v3321 = vmul.f32 %v3320, %v3312
          %v3322 = vmul.f32 %v3320, %v3313
          %v3323 = vmul.f32 %v3320, %v3314
          %v3324 = vmul.f32 %v3320, %v3315
          %v3325 = vmul.f32 %v3320, %v3316
          %v3326 = vmul.f32 %v3320, %v3317
          %v3327 = vmul.f32 %v3320, %v3318
          %v3328 = vmul.f32 %v3320, %v3319
          %v3329 = vadd.f32 %v3303, %v3321
          %v3330 = vadd.f32 %v3304, %v3322
          %v3331 = vadd.f32 %v3305, %v3323
          %v3332 = vadd.f32 %v3306, %v3324
          %v3333 = vadd.f32 %v3307, %v3325
          %v3334 = vadd.f32 %v3308, %v3326
          %v3335 = vadd.f32 %v3309, %v3327
          %v3336 = vadd.f32 %v3310, %v3328
          %v3337 = vld [vmem:[%s3285 + $0x1] sm:$0xf]
          %v3338 = vld [vmem:[%s3285 + $0x9] sm:$0xf]
          %v3339 = vld [vmem:[%s3285 + $0x11] sm:$0xf]
          %v3340 = vld [vmem:[%s3285 + $0x19] sm:$0xf]
          %v3341 = vld [vmem:[%s3285 + $0x21] sm:$0xf]
          %v3342 = vld [vmem:[%s3285 + $0x29] sm:$0xf]
          %v3343 = vld [vmem:[%s3285 + $0x31] sm:$0xf]
          %v3344 = vld [vmem:[%s3285 + $0x39] sm:$0xf]
          %v3345 = vstv %s3280
          %v3346 = vmul.f32 %v3345, %v3337
          %v3347 = vmul.f32 %v3345, %v3338
          %v3348 = vmul.f32 %v3345, %v3339
          %v3349 = vmul.f32 %v3345, %v3340
          %v3350 = vmul.f32 %v3345, %v3341
          %v3351 = vmul.f32 %v3345, %v3342
          %v3352 = vmul.f32 %v3345, %v3343
          %v3353 = vmul.f32 %v3345, %v3344
          %v3354 = vadd.f32 %v3329, %v3346
          %v3355 = vadd.f32 %v3330, %v3347
          %v3356 = vadd.f32 %v3331, %v3348
          %v3357 = vadd.f32 %v3332, %v3349
          %v3358 = vadd.f32 %v3333, %v3350
          %v3359 = vadd.f32 %v3334, %v3351
          %v3360 = vadd.f32 %v3335, %v3352
          %v3361 = vadd.f32 %v3336, %v3353
          %v3362 = vld [vmem:[%s3311 + $0x1] sm:$0xf]
          %v3363 = vld [vmem:[%s3311 + $0x9] sm:$0xf]
          %v3364 = vld [vmem:[%s3311 + $0x11] sm:$0xf]
          %v3365 = vld [vmem:[%s3311 + $0x19] sm:$0xf]
          %v3366 = vld [vmem:[%s3311 + $0x21] sm:$0xf]
          %v3367 = vld [vmem:[%s3311 + $0x29] sm:$0xf]
          %v3368 = vld [vmem:[%s3311 + $0x31] sm:$0xf]
          %v3369 = vld [vmem:[%s3311 + $0x39] sm:$0xf]
          %v3370 = vstv %s3282
          %v3371 = vmul.f32 %v3370, %v3362
          %v3372 = vmul.f32 %v3370, %v3363
          %v3373 = vmul.f32 %v3370, %v3364
          %v3374 = vmul.f32 %v3370, %v3365
          %v3375 = vmul.f32 %v3370, %v3366
          %v3376 = vmul.f32 %v3370, %v3367
          %v3377 = vmul.f32 %v3370, %v3368
          %v3378 = vmul.f32 %v3370, %v3369
          %v3379 = vadd.f32 %v3354, %v3371
          %v3380 = vadd.f32 %v3355, %v3372
          %v3381 = vadd.f32 %v3356, %v3373
          %v3382 = vadd.f32 %v3357, %v3374
          %v3383 = vadd.f32 %v3358, %v3375
          %v3384 = vadd.f32 %v3359, %v3376
          %v3385 = vadd.f32 %v3360, %v3377
          %v3386 = vadd.f32 %v3361, %v3378
          %v3387 = vld [vmem:[%s3285 + $0x2] sm:$0xf]
          %v3388 = vld [vmem:[%s3285 + $0xa] sm:$0xf]
          %v3389 = vld [vmem:[%s3285 + $0x12] sm:$0xf]
          %v3390 = vld [vmem:[%s3285 + $0x1a] sm:$0xf]
          %v3391 = vld [vmem:[%s3285 + $0x22] sm:$0xf]
          %v3392 = vld [vmem:[%s3285 + $0x2a] sm:$0xf]
          %v3393 = vld [vmem:[%s3285 + $0x32] sm:$0xf]
          %v3394 = vld [vmem:[%s3285 + $0x3a] sm:$0xf]
          %v3395 = vstv %s3284
          %v3396 = vmul.f32 %v3395, %v3387
          %v3397 = vmul.f32 %v3395, %v3388
          %v3398 = vmul.f32 %v3395, %v3389
          %v3399 = vmul.f32 %v3395, %v3390
          %v3400 = vmul.f32 %v3395, %v3391
          %v3401 = vmul.f32 %v3395, %v3392
          %v3402 = vmul.f32 %v3395, %v3393
          %v3403 = vmul.f32 %v3395, %v3394
          %v3404 = vadd.f32 %v3379, %v3396
          %v3405 = vadd.f32 %v3380, %v3397
          %v3406 = vadd.f32 %v3381, %v3398
          %v3407 = vadd.f32 %v3382, %v3399
          %v3408 = vadd.f32 %v3383, %v3400
          %v3409 = vadd.f32 %v3384, %v3401
          %v3410 = vadd.f32 %v3385, %v3402
          %v3411 = vadd.f32 %v3386, %v3403
          %s3412 = sadd.s32 %s2866, 20
          %s3413 = sld [smem:[#allocation14 + %s3412]]
          %s3414 = sadd.s32 %s2866, 21
          %s3415 = sld [smem:[#allocation14 + %s3414]]
          %s3416 = sadd.s32 %s2866, 22
          %s3417 = sld [smem:[#allocation14 + %s3416]]
          %s3418 = sadd.s32 %s2866, 23
          %s3419 = sld [smem:[#allocation14 + %s3418]]
          %s3420 = sadd.s32 %s2866, 24
          %s3421 = sld [smem:[#allocation14 + %s3420]]
          %s3422 = scalar_lea.vmem [#allocation5], 32
          %v3423 = vld [vmem:[%s3422] sm:$0xf]
          %v3424 = vld [vmem:[%s3422 + $0x8] sm:$0xf]
          %v3425 = vld [vmem:[%s3422 + $0x10] sm:$0xf]
          %v3426 = vld [vmem:[%s3422 + $0x18] sm:$0xf]
          %v3427 = vld [vmem:[%s3422 + $0x20] sm:$0xf]
          %v3428 = vld [vmem:[%s3422 + $0x28] sm:$0xf]
          %v3429 = vld [vmem:[%s3422 + $0x30] sm:$0xf]
          %v3430 = vld [vmem:[%s3422 + $0x38] sm:$0xf]
          %v3431 = vstv %s3413
          %v3432 = vmul.f32 %v3431, %v3423
          %v3433 = vmul.f32 %v3431, %v3424
          %v3434 = vmul.f32 %v3431, %v3425
          %v3435 = vmul.f32 %v3431, %v3426
          %v3436 = vmul.f32 %v3431, %v3427
          %v3437 = vmul.f32 %v3431, %v3428
          %v3438 = vmul.f32 %v3431, %v3429
          %v3439 = vmul.f32 %v3431, %v3430
          %v3440 = vadd.f32 %v3404, %v3432
          %v3441 = vadd.f32 %v3405, %v3433
          %v3442 = vadd.f32 %v3406, %v3434
          %v3443 = vadd.f32 %v3407, %v3435
          %v3444 = vadd.f32 %v3408, %v3436
          %v3445 = vadd.f32 %v3409, %v3437
          %v3446 = vadd.f32 %v3410, %v3438
          %v3447 = vadd.f32 %v3411, %v3439
          %s3448 = scalar_lea.vmem [#allocation6], 32
          %v3449 = vld [vmem:[%s3448] sm:$0xf]
          %v3450 = vld [vmem:[%s3448 + $0x8] sm:$0xf]
          %v3451 = vld [vmem:[%s3448 + $0x10] sm:$0xf]
          %v3452 = vld [vmem:[%s3448 + $0x18] sm:$0xf]
          %v3453 = vld [vmem:[%s3448 + $0x20] sm:$0xf]
          %v3454 = vld [vmem:[%s3448 + $0x28] sm:$0xf]
          %v3455 = vld [vmem:[%s3448 + $0x30] sm:$0xf]
          %v3456 = vld [vmem:[%s3448 + $0x38] sm:$0xf]
          %v3457 = vstv %s3415
          %v3458 = vmul.f32 %v3457, %v3449
          %v3459 = vmul.f32 %v3457, %v3450
          %v3460 = vmul.f32 %v3457, %v3451
          %v3461 = vmul.f32 %v3457, %v3452
          %v3462 = vmul.f32 %v3457, %v3453
          %v3463 = vmul.f32 %v3457, %v3454
          %v3464 = vmul.f32 %v3457, %v3455
          %v3465 = vmul.f32 %v3457, %v3456
          %v3466 = vadd.f32 %v3440, %v3458
          %v3467 = vadd.f32 %v3441, %v3459
          %v3468 = vadd.f32 %v3442, %v3460
          %v3469 = vadd.f32 %v3443, %v3461
          %v3470 = vadd.f32 %v3444, %v3462
          %v3471 = vadd.f32 %v3445, %v3463
          %v3472 = vadd.f32 %v3446, %v3464
          %v3473 = vadd.f32 %v3447, %v3465
          %v3474 = vld [vmem:[%s3422 + $0x1] sm:$0xf]
          %v3475 = vld [vmem:[%s3422 + $0x9] sm:$0xf]
          %v3476 = vld [vmem:[%s3422 + $0x11] sm:$0xf]
          %v3477 = vld [vmem:[%s3422 + $0x19] sm:$0xf]
          %v3478 = vld [vmem:[%s3422 + $0x21] sm:$0xf]
          %v3479 = vld [vmem:[%s3422 + $0x29] sm:$0xf]
          %v3480 = vld [vmem:[%s3422 + $0x31] sm:$0xf]
          %v3481 = vld [vmem:[%s3422 + $0x39] sm:$0xf]
          %v3482 = vstv %s3417
          %v3483 = vmul.f32 %v3482, %v3474
          %v3484 = vmul.f32 %v3482, %v3475
          %v3485 = vmul.f32 %v3482, %v3476
          %v3486 = vmul.f32 %v3482, %v3477
          %v3487 = vmul.f32 %v3482, %v3478
          %v3488 = vmul.f32 %v3482, %v3479
          %v3489 = vmul.f32 %v3482, %v3480
          %v3490 = vmul.f32 %v3482, %v3481
          %v3491 = vadd.f32 %v3466, %v3483
          %v3492 = vadd.f32 %v3467, %v3484
          %v3493 = vadd.f32 %v3468, %v3485
          %v3494 = vadd.f32 %v3469, %v3486
          %v3495 = vadd.f32 %v3470, %v3487
          %v3496 = vadd.f32 %v3471, %v3488
          %v3497 = vadd.f32 %v3472, %v3489
          %v3498 = vadd.f32 %v3473, %v3490
          %v3499 = vld [vmem:[%s3448 + $0x1] sm:$0xf]
          %v3500 = vld [vmem:[%s3448 + $0x9] sm:$0xf]
          %v3501 = vld [vmem:[%s3448 + $0x11] sm:$0xf]
          %v3502 = vld [vmem:[%s3448 + $0x19] sm:$0xf]
          %v3503 = vld [vmem:[%s3448 + $0x21] sm:$0xf]
          %v3504 = vld [vmem:[%s3448 + $0x29] sm:$0xf]
          %v3505 = vld [vmem:[%s3448 + $0x31] sm:$0xf]
          %v3506 = vld [vmem:[%s3448 + $0x39] sm:$0xf]
          %v3507 = vstv %s3419
          %v3508 = vmul.f32 %v3507, %v3499
          %v3509 = vmul.f32 %v3507, %v3500
          %v3510 = vmul.f32 %v3507, %v3501
          %v3511 = vmul.f32 %v3507, %v3502
          %v3512 = vmul.f32 %v3507, %v3503
          %v3513 = vmul.f32 %v3507, %v3504
          %v3514 = vmul.f32 %v3507, %v3505
          %v3515 = vmul.f32 %v3507, %v3506
          %v3516 = vadd.f32 %v3491, %v3508
          %v3517 = vadd.f32 %v3492, %v3509
          %v3518 = vadd.f32 %v3493, %v3510
          %v3519 = vadd.f32 %v3494, %v3511
          %v3520 = vadd.f32 %v3495, %v3512
          %v3521 = vadd.f32 %v3496, %v3513
          %v3522 = vadd.f32 %v3497, %v3514
          %v3523 = vadd.f32 %v3498, %v3515
          %v3524 = vld [vmem:[%s3422 + $0x2] sm:$0xf]
          %v3525 = vld [vmem:[%s3422 + $0xa] sm:$0xf]
          %v3526 = vld [vmem:[%s3422 + $0x12] sm:$0xf]
          %v3527 = vld [vmem:[%s3422 + $0x1a] sm:$0xf]
          %v3528 = vld [vmem:[%s3422 + $0x22] sm:$0xf]
          %v3529 = vld [vmem:[%s3422 + $0x2a] sm:$0xf]
          %v3530 = vld [vmem:[%s3422 + $0x32] sm:$0xf]
          %v3531 = vld [vmem:[%s3422 + $0x3a] sm:$0xf]
          %v3532 = vstv %s3421
          %v3533 = vmul.f32 %v3532, %v3524
          %v3534 = vmul.f32 %v3532, %v3525
          %v3535 = vmul.f32 %v3532, %v3526
          %v3536 = vmul.f32 %v3532, %v3527
          %v3537 = vmul.f32 %v3532, %v3528
          %v3538 = vmul.f32 %v3532, %v3529
          %v3539 = vmul.f32 %v3532, %v3530
          %v3540 = vmul.f32 %v3532, %v3531
          %v3541 = vadd.f32 %v3516, %v3533
          %v3542 = vadd.f32 %v3517, %v3534
          %v3543 = vadd.f32 %v3518, %v3535
          %v3544 = vadd.f32 %v3519, %v3536
          %v3545 = vadd.f32 %v3520, %v3537
          %v3546 = vadd.f32 %v3521, %v3538
          %v3547 = vadd.f32 %v3522, %v3539
          %v3548 = vadd.f32 %v3523, %v3540
          %s3549 = sadd.s32 %s2866, 25
          %s3550 = sld [smem:[#allocation14 + %s3549]]
          %s3551 = sadd.s32 %s2866, 26
          %s3552 = sld [smem:[#allocation14 + %s3551]]
          %s3553 = sadd.s32 %s2866, 27
          %s3554 = sld [smem:[#allocation14 + %s3553]]
          %s3555 = sadd.s32 %s2866, 28
          %s3556 = sld [smem:[#allocation14 + %s3555]]
          %s3557 = sadd.s32 %s2866, 29
          %s3558 = sld [smem:[#allocation14 + %s3557]]
          %s3559 = scalar_lea.vmem [#allocation5], 96
          %v3560 = vld [vmem:[%s3559] sm:$0xf]
          %v3561 = vld [vmem:[%s3559 + $0x8] sm:$0xf]
          %v3562 = vld [vmem:[%s3559 + $0x10] sm:$0xf]
          %v3563 = vld [vmem:[%s3559 + $0x18] sm:$0xf]
          %v3564 = vld [vmem:[%s3559 + $0x20] sm:$0xf]
          %v3565 = vld [vmem:[%s3559 + $0x28] sm:$0xf]
          %v3566 = vld [vmem:[%s3559 + $0x30] sm:$0xf]
          %v3567 = vld [vmem:[%s3559 + $0x38] sm:$0xf]
          %v3568 = vstv %s3550
          %v3569 = vmul.f32 %v3568, %v3560
          %v3570 = vmul.f32 %v3568, %v3561
          %v3571 = vmul.f32 %v3568, %v3562
          %v3572 = vmul.f32 %v3568, %v3563
          %v3573 = vmul.f32 %v3568, %v3564
          %v3574 = vmul.f32 %v3568, %v3565
          %v3575 = vmul.f32 %v3568, %v3566
          %v3576 = vmul.f32 %v3568, %v3567
          %v3577 = vadd.f32 %v3541, %v3569
          %v3578 = vadd.f32 %v3542, %v3570
          %v3579 = vadd.f32 %v3543, %v3571
          %v3580 = vadd.f32 %v3544, %v3572
          %v3581 = vadd.f32 %v3545, %v3573
          %v3582 = vadd.f32 %v3546, %v3574
          %v3583 = vadd.f32 %v3547, %v3575
          %v3584 = vadd.f32 %v3548, %v3576
          %s3585 = scalar_lea.vmem [#allocation6], 96
          %v3586 = vld [vmem:[%s3585] sm:$0xf]
          %v3587 = vld [vmem:[%s3585 + $0x8] sm:$0xf]
          %v3588 = vld [vmem:[%s3585 + $0x10] sm:$0xf]
          %v3589 = vld [vmem:[%s3585 + $0x18] sm:$0xf]
          %v3590 = vld [vmem:[%s3585 + $0x20] sm:$0xf]
          %v3591 = vld [vmem:[%s3585 + $0x28] sm:$0xf]
          %v3592 = vld [vmem:[%s3585 + $0x30] sm:$0xf]
          %v3593 = vld [vmem:[%s3585 + $0x38] sm:$0xf]
          %v3594 = vstv %s3552
          %v3595 = vmul.f32 %v3594, %v3586
          %v3596 = vmul.f32 %v3594, %v3587
          %v3597 = vmul.f32 %v3594, %v3588
          %v3598 = vmul.f32 %v3594, %v3589
          %v3599 = vmul.f32 %v3594, %v3590
          %v3600 = vmul.f32 %v3594, %v3591
          %v3601 = vmul.f32 %v3594, %v3592
          %v3602 = vmul.f32 %v3594, %v3593
          %v3603 = vadd.f32 %v3577, %v3595
          %v3604 = vadd.f32 %v3578, %v3596
          %v3605 = vadd.f32 %v3579, %v3597
          %v3606 = vadd.f32 %v3580, %v3598
          %v3607 = vadd.f32 %v3581, %v3599
          %v3608 = vadd.f32 %v3582, %v3600
          %v3609 = vadd.f32 %v3583, %v3601
          %v3610 = vadd.f32 %v3584, %v3602
          %v3611 = vld [vmem:[%s3559 + $0x1] sm:$0xf]
          %v3612 = vld [vmem:[%s3559 + $0x9] sm:$0xf]
          %v3613 = vld [vmem:[%s3559 + $0x11] sm:$0xf]
          %v3614 = vld [vmem:[%s3559 + $0x19] sm:$0xf]
          %v3615 = vld [vmem:[%s3559 + $0x21] sm:$0xf]
          %v3616 = vld [vmem:[%s3559 + $0x29] sm:$0xf]
          %v3617 = vld [vmem:[%s3559 + $0x31] sm:$0xf]
          %v3618 = vld [vmem:[%s3559 + $0x39] sm:$0xf]
          %v3619 = vstv %s3554
          %v3620 = vmul.f32 %v3619, %v3611
          %v3621 = vmul.f32 %v3619, %v3612
          %v3622 = vmul.f32 %v3619, %v3613
          %v3623 = vmul.f32 %v3619, %v3614
          %v3624 = vmul.f32 %v3619, %v3615
          %v3625 = vmul.f32 %v3619, %v3616
          %v3626 = vmul.f32 %v3619, %v3617
          %v3627 = vmul.f32 %v3619, %v3618
          %v3628 = vadd.f32 %v3603, %v3620
          %v3629 = vadd.f32 %v3604, %v3621
          %v3630 = vadd.f32 %v3605, %v3622
          %v3631 = vadd.f32 %v3606, %v3623
          %v3632 = vadd.f32 %v3607, %v3624
          %v3633 = vadd.f32 %v3608, %v3625
          %v3634 = vadd.f32 %v3609, %v3626
          %v3635 = vadd.f32 %v3610, %v3627
          %v3636 = vld [vmem:[%s3585 + $0x1] sm:$0xf]
          %v3637 = vld [vmem:[%s3585 + $0x9] sm:$0xf]
          %v3638 = vld [vmem:[%s3585 + $0x11] sm:$0xf]
          %v3639 = vld [vmem:[%s3585 + $0x19] sm:$0xf]
          %v3640 = vld [vmem:[%s3585 + $0x21] sm:$0xf]
          %v3641 = vld [vmem:[%s3585 + $0x29] sm:$0xf]
          %v3642 = vld [vmem:[%s3585 + $0x31] sm:$0xf]
          %v3643 = vld [vmem:[%s3585 + $0x39] sm:$0xf]
          %v3644 = vstv %s3556
          %v3645 = vmul.f32 %v3644, %v3636
          %v3646 = vmul.f32 %v3644, %v3637
          %v3647 = vmul.f32 %v3644, %v3638
          %v3648 = vmul.f32 %v3644, %v3639
          %v3649 = vmul.f32 %v3644, %v3640
          %v3650 = vmul.f32 %v3644, %v3641
          %v3651 = vmul.f32 %v3644, %v3642
          %v3652 = vmul.f32 %v3644, %v3643
          %v3653 = vadd.f32 %v3628, %v3645
          %v3654 = vadd.f32 %v3629, %v3646
          %v3655 = vadd.f32 %v3630, %v3647
          %v3656 = vadd.f32 %v3631, %v3648
          %v3657 = vadd.f32 %v3632, %v3649
          %v3658 = vadd.f32 %v3633, %v3650
          %v3659 = vadd.f32 %v3634, %v3651
          %v3660 = vadd.f32 %v3635, %v3652
          %v3661 = vld [vmem:[%s3559 + $0x2] sm:$0xf]
          %v3662 = vld [vmem:[%s3559 + $0xa] sm:$0xf]
          %v3663 = vld [vmem:[%s3559 + $0x12] sm:$0xf]
          %v3664 = vld [vmem:[%s3559 + $0x1a] sm:$0xf]
          %v3665 = vld [vmem:[%s3559 + $0x22] sm:$0xf]
          %v3666 = vld [vmem:[%s3559 + $0x2a] sm:$0xf]
          %v3667 = vld [vmem:[%s3559 + $0x32] sm:$0xf]
          %v3668 = vld [vmem:[%s3559 + $0x3a] sm:$0xf]
          %v3669 = vstv %s3558
          %v3670 = vmul.f32 %v3669, %v3661
          %v3671 = vmul.f32 %v3669, %v3662
          %v3672 = vmul.f32 %v3669, %v3663
          %v3673 = vmul.f32 %v3669, %v3664
          %v3674 = vmul.f32 %v3669, %v3665
          %v3675 = vmul.f32 %v3669, %v3666
          %v3676 = vmul.f32 %v3669, %v3667
          %v3677 = vmul.f32 %v3669, %v3668
          %v3678 = vadd.f32 %v3653, %v3670
          %v3679 = vadd.f32 %v3654, %v3671
          %v3680 = vadd.f32 %v3655, %v3672
          %v3681 = vadd.f32 %v3656, %v3673
          %v3682 = vadd.f32 %v3657, %v3674
          %v3683 = vadd.f32 %v3658, %v3675
          %v3684 = vadd.f32 %v3659, %v3676
          %v3685 = vadd.f32 %v3660, %v3677
          %s3686 = sadd.s32 %s2866, 30
          %s3687 = sld [smem:[#allocation14 + %s3686]]
          %s3688 = sadd.s32 %s2866, 31
          %s3689 = sld [smem:[#allocation14 + %s3688]]
          %s3690 = sadd.s32 %s2866, 32
          %s3691 = sld [smem:[#allocation14 + %s3690]]
          %s3692 = sadd.s32 %s2866, 33
          %s3693 = sld [smem:[#allocation14 + %s3692]]
          %s3694 = sadd.s32 %s2866, 34
          %s3695 = sld [smem:[#allocation14 + %s3694]]
          %s3696 = scalar_lea.vmem [#allocation5], 104
          %v3697 = vld [vmem:[%s3696] sm:$0xf]
          %v3698 = vld [vmem:[%s3696 + $0x8] sm:$0xf]
          %v3699 = vld [vmem:[%s3696 + $0x10] sm:$0xf]
          %v3700 = vld [vmem:[%s3696 + $0x18] sm:$0xf]
          %v3701 = vld [vmem:[%s3696 + $0x20] sm:$0xf]
          %v3702 = vld [vmem:[%s3696 + $0x28] sm:$0xf]
          %v3703 = vld [vmem:[%s3696 + $0x30] sm:$0xf]
          %v3704 = vld [vmem:[%s3696 + $0x38] sm:$0xf]
          %v3705 = vstv %s3687
          %v3706 = vmul.f32 %v3705, %v3697
          %v3707 = vmul.f32 %v3705, %v3698
          %v3708 = vmul.f32 %v3705, %v3699
          %v3709 = vmul.f32 %v3705, %v3700
          %v3710 = vmul.f32 %v3705, %v3701
          %v3711 = vmul.f32 %v3705, %v3702
          %v3712 = vmul.f32 %v3705, %v3703
          %v3713 = vmul.f32 %v3705, %v3704
          %v3714 = vadd.f32 %v3678, %v3706
          %v3715 = vadd.f32 %v3679, %v3707
          %v3716 = vadd.f32 %v3680, %v3708
          %v3717 = vadd.f32 %v3681, %v3709
          %v3718 = vadd.f32 %v3682, %v3710
          %v3719 = vadd.f32 %v3683, %v3711
          %v3720 = vadd.f32 %v3684, %v3712
          %v3721 = vadd.f32 %v3685, %v3713
          %s3722 = scalar_lea.vmem [#allocation6], 104
          %v3723 = vld [vmem:[%s3722] sm:$0xf]
          %v3724 = vld [vmem:[%s3722 + $0x8] sm:$0xf]
          %v3725 = vld [vmem:[%s3722 + $0x10] sm:$0xf]
          %v3726 = vld [vmem:[%s3722 + $0x18] sm:$0xf]
          %v3727 = vld [vmem:[%s3722 + $0x20] sm:$0xf]
          %v3728 = vld [vmem:[%s3722 + $0x28] sm:$0xf]
          %v3729 = vld [vmem:[%s3722 + $0x30] sm:$0xf]
          %v3730 = vld [vmem:[%s3722 + $0x38] sm:$0xf]
          %v3731 = vstv %s3689
          %v3732 = vmul.f32 %v3731, %v3723
          %v3733 = vmul.f32 %v3731, %v3724
          %v3734 = vmul.f32 %v3731, %v3725
          %v3735 = vmul.f32 %v3731, %v3726
          %v3736 = vmul.f32 %v3731, %v3727
          %v3737 = vmul.f32 %v3731, %v3728
          %v3738 = vmul.f32 %v3731, %v3729
          %v3739 = vmul.f32 %v3731, %v3730
          %v3740 = vadd.f32 %v3714, %v3732
          %v3741 = vadd.f32 %v3715, %v3733
          %v3742 = vadd.f32 %v3716, %v3734
          %v3743 = vadd.f32 %v3717, %v3735
          %v3744 = vadd.f32 %v3718, %v3736
          %v3745 = vadd.f32 %v3719, %v3737
          %v3746 = vadd.f32 %v3720, %v3738
          %v3747 = vadd.f32 %v3721, %v3739
          %v3748 = vld [vmem:[%s3696 + $0x1] sm:$0xf]
          %v3749 = vld [vmem:[%s3696 + $0x9] sm:$0xf]
          %v3750 = vld [vmem:[%s3696 + $0x11] sm:$0xf]
          %v3751 = vld [vmem:[%s3696 + $0x19] sm:$0xf]
          %v3752 = vld [vmem:[%s3696 + $0x21] sm:$0xf]
          %v3753 = vld [vmem:[%s3696 + $0x29] sm:$0xf]
          %v3754 = vld [vmem:[%s3696 + $0x31] sm:$0xf]
          %v3755 = vld [vmem:[%s3696 + $0x39] sm:$0xf]
          %v3756 = vstv %s3691
          %v3757 = vmul.f32 %v3756, %v3748
          %v3758 = vmul.f32 %v3756, %v3749
          %v3759 = vmul.f32 %v3756, %v3750
          %v3760 = vmul.f32 %v3756, %v3751
          %v3761 = vmul.f32 %v3756, %v3752
          %v3762 = vmul.f32 %v3756, %v3753
          %v3763 = vmul.f32 %v3756, %v3754
          %v3764 = vmul.f32 %v3756, %v3755
          %v3765 = vadd.f32 %v3740, %v3757
          %v3766 = vadd.f32 %v3741, %v3758
          %v3767 = vadd.f32 %v3742, %v3759
          %v3768 = vadd.f32 %v3743, %v3760
          %v3769 = vadd.f32 %v3744, %v3761
          %v3770 = vadd.f32 %v3745, %v3762
          %v3771 = vadd.f32 %v3746, %v3763
          %v3772 = vadd.f32 %v3747, %v3764
          %v3773 = vld [vmem:[%s3722 + $0x1] sm:$0xf]
          %v3774 = vld [vmem:[%s3722 + $0x9] sm:$0xf]
          %v3775 = vld [vmem:[%s3722 + $0x11] sm:$0xf]
          %v3776 = vld [vmem:[%s3722 + $0x19] sm:$0xf]
          %v3777 = vld [vmem:[%s3722 + $0x21] sm:$0xf]
          %v3778 = vld [vmem:[%s3722 + $0x29] sm:$0xf]
          %v3779 = vld [vmem:[%s3722 + $0x31] sm:$0xf]
          %v3780 = vld [vmem:[%s3722 + $0x39] sm:$0xf]
          %v3781 = vstv %s3693
          %v3782 = vmul.f32 %v3781, %v3773
          %v3783 = vmul.f32 %v3781, %v3774
          %v3784 = vmul.f32 %v3781, %v3775
          %v3785 = vmul.f32 %v3781, %v3776
          %v3786 = vmul.f32 %v3781, %v3777
          %v3787 = vmul.f32 %v3781, %v3778
          %v3788 = vmul.f32 %v3781, %v3779
          %v3789 = vmul.f32 %v3781, %v3780
          %v3790 = vadd.f32 %v3765, %v3782
          %v3791 = vadd.f32 %v3766, %v3783
          %v3792 = vadd.f32 %v3767, %v3784
          %v3793 = vadd.f32 %v3768, %v3785
          %v3794 = vadd.f32 %v3769, %v3786
          %v3795 = vadd.f32 %v3770, %v3787
          %v3796 = vadd.f32 %v3771, %v3788
          %v3797 = vadd.f32 %v3772, %v3789
          %v3798 = vld [vmem:[%s3696 + $0x2] sm:$0xf]
          %v3799 = vld [vmem:[%s3696 + $0xa] sm:$0xf]
          %v3800 = vld [vmem:[%s3696 + $0x12] sm:$0xf]
          %v3801 = vld [vmem:[%s3696 + $0x1a] sm:$0xf]
          %v3802 = vld [vmem:[%s3696 + $0x22] sm:$0xf]
          %v3803 = vld [vmem:[%s3696 + $0x2a] sm:$0xf]
          %v3804 = vld [vmem:[%s3696 + $0x32] sm:$0xf]
          %v3805 = vld [vmem:[%s3696 + $0x3a] sm:$0xf]
          %v3806 = vstv %s3695
          %v3807 = vmul.f32 %v3806, %v3798
          %v3808 = vmul.f32 %v3806, %v3799
          %v3809 = vmul.f32 %v3806, %v3800
          %v3810 = vmul.f32 %v3806, %v3801
          %v3811 = vmul.f32 %v3806, %v3802
          %v3812 = vmul.f32 %v3806, %v3803
          %v3813 = vmul.f32 %v3806, %v3804
          %v3814 = vmul.f32 %v3806, %v3805
          %v3815 = vadd.f32 %v3790, %v3807
          %v3816 = vadd.f32 %v3791, %v3808
          %v3817 = vadd.f32 %v3792, %v3809
          %v3818 = vadd.f32 %v3793, %v3810
          %v3819 = vadd.f32 %v3794, %v3811
          %v3820 = vadd.f32 %v3795, %v3812
          %v3821 = vadd.f32 %v3796, %v3813
          %v3822 = vadd.f32 %v3797, %v3814
          %s3823 = sadd.s32 %s2866, 35
          %s3824 = sld [smem:[#allocation14 + %s3823]]
          %s3825 = sadd.s32 %s2866, 36
          %s3826 = sld [smem:[#allocation14 + %s3825]]
          %s3827 = sadd.s32 %s2866, 37
          %s3828 = sld [smem:[#allocation14 + %s3827]]
          %s3829 = sadd.s32 %s2866, 38
          %s3830 = sld [smem:[#allocation14 + %s3829]]
          %s3831 = sadd.s32 %s2866, 39
          %s3832 = sld [smem:[#allocation14 + %s3831]]
          %s3833 = scalar_lea.vmem [#allocation5], 112
          %v3834 = vld [vmem:[%s3833] sm:$0xf]
          %v3835 = vld [vmem:[%s3833 + $0x8] sm:$0xf]
          %v3836 = vld [vmem:[%s3833 + $0x10] sm:$0xf]
          %v3837 = vld [vmem:[%s3833 + $0x18] sm:$0xf]
          %v3838 = vld [vmem:[%s3833 + $0x20] sm:$0xf]
          %v3839 = vld [vmem:[%s3833 + $0x28] sm:$0xf]
          %v3840 = vld [vmem:[%s3833 + $0x30] sm:$0xf]
          %v3841 = vld [vmem:[%s3833 + $0x38] sm:$0xf]
          %v3842 = vstv %s3824
          %v3843 = vmul.f32 %v3842, %v3834
          %v3844 = vmul.f32 %v3842, %v3835
          %v3845 = vmul.f32 %v3842, %v3836
          %v3846 = vmul.f32 %v3842, %v3837
          %v3847 = vmul.f32 %v3842, %v3838
          %v3848 = vmul.f32 %v3842, %v3839
          %v3849 = vmul.f32 %v3842, %v3840
          %v3850 = vmul.f32 %v3842, %v3841
          %v3851 = vadd.f32 %v3815, %v3843
          %v3852 = vadd.f32 %v3816, %v3844
          %v3853 = vadd.f32 %v3817, %v3845
          %v3854 = vadd.f32 %v3818, %v3846
          %v3855 = vadd.f32 %v3819, %v3847
          %v3856 = vadd.f32 %v3820, %v3848
          %v3857 = vadd.f32 %v3821, %v3849
          %v3858 = vadd.f32 %v3822, %v3850
          %s3859 = scalar_lea.vmem [#allocation6], 112
          %v3860 = vld [vmem:[%s3859] sm:$0xf]
          %v3861 = vld [vmem:[%s3859 + $0x8] sm:$0xf]
          %v3862 = vld [vmem:[%s3859 + $0x10] sm:$0xf]
          %v3863 = vld [vmem:[%s3859 + $0x18] sm:$0xf]
          %v3864 = vld [vmem:[%s3859 + $0x20] sm:$0xf]
          %v3865 = vld [vmem:[%s3859 + $0x28] sm:$0xf]
          %v3866 = vld [vmem:[%s3859 + $0x30] sm:$0xf]
          %v3867 = vld [vmem:[%s3859 + $0x38] sm:$0xf]
          %v3868 = vstv %s3826
          %v3869 = vmul.f32 %v3868, %v3860
          %v3870 = vmul.f32 %v3868, %v3861
          %v3871 = vmul.f32 %v3868, %v3862
          %v3872 = vmul.f32 %v3868, %v3863
          %v3873 = vmul.f32 %v3868, %v3864
          %v3874 = vmul.f32 %v3868, %v3865
          %v3875 = vmul.f32 %v3868, %v3866
          %v3876 = vmul.f32 %v3868, %v3867
          %v3877 = vadd.f32 %v3851, %v3869
          %v3878 = vadd.f32 %v3852, %v3870
          %v3879 = vadd.f32 %v3853, %v3871
          %v3880 = vadd.f32 %v3854, %v3872
          %v3881 = vadd.f32 %v3855, %v3873
          %v3882 = vadd.f32 %v3856, %v3874
          %v3883 = vadd.f32 %v3857, %v3875
          %v3884 = vadd.f32 %v3858, %v3876
          %v3885 = vld [vmem:[%s3833 + $0x1] sm:$0xf]
          %v3886 = vld [vmem:[%s3833 + $0x9] sm:$0xf]
          %v3887 = vld [vmem:[%s3833 + $0x11] sm:$0xf]
          %v3888 = vld [vmem:[%s3833 + $0x19] sm:$0xf]
          %v3889 = vld [vmem:[%s3833 + $0x21] sm:$0xf]
          %v3890 = vld [vmem:[%s3833 + $0x29] sm:$0xf]
          %v3891 = vld [vmem:[%s3833 + $0x31] sm:$0xf]
          %v3892 = vld [vmem:[%s3833 + $0x39] sm:$0xf]
          %v3893 = vstv %s3828
          %v3894 = vmul.f32 %v3893, %v3885
          %v3895 = vmul.f32 %v3893, %v3886
          %v3896 = vmul.f32 %v3893, %v3887
          %v3897 = vmul.f32 %v3893, %v3888
          %v3898 = vmul.f32 %v3893, %v3889
          %v3899 = vmul.f32 %v3893, %v3890
          %v3900 = vmul.f32 %v3893, %v3891
          %v3901 = vmul.f32 %v3893, %v3892
          %v3902 = vadd.f32 %v3877, %v3894
          %v3903 = vadd.f32 %v3878, %v3895
          %v3904 = vadd.f32 %v3879, %v3896
          %v3905 = vadd.f32 %v3880, %v3897
          %v3906 = vadd.f32 %v3881, %v3898
          %v3907 = vadd.f32 %v3882, %v3899
          %v3908 = vadd.f32 %v3883, %v3900
          %v3909 = vadd.f32 %v3884, %v3901
          %v3910 = vld [vmem:[%s3859 + $0x1] sm:$0xf]
          %v3911 = vld [vmem:[%s3859 + $0x9] sm:$0xf]
          %v3912 = vld [vmem:[%s3859 + $0x11] sm:$0xf]
          %v3913 = vld [vmem:[%s3859 + $0x19] sm:$0xf]
          %v3914 = vld [vmem:[%s3859 + $0x21] sm:$0xf]
          %v3915 = vld [vmem:[%s3859 + $0x29] sm:$0xf]
          %v3916 = vld [vmem:[%s3859 + $0x31] sm:$0xf]
          %v3917 = vld [vmem:[%s3859 + $0x39] sm:$0xf]
          %v3918 = vstv %s3830
          %v3919 = vmul.f32 %v3918, %v3910
          %v3920 = vmul.f32 %v3918, %v3911
          %v3921 = vmul.f32 %v3918, %v3912
          %v3922 = vmul.f32 %v3918, %v3913
          %v3923 = vmul.f32 %v3918, %v3914
          %v3924 = vmul.f32 %v3918, %v3915
          %v3925 = vmul.f32 %v3918, %v3916
          %v3926 = vmul.f32 %v3918, %v3917
          %v3927 = vadd.f32 %v3902, %v3919
          %v3928 = vadd.f32 %v3903, %v3920
          %v3929 = vadd.f32 %v3904, %v3921
          %v3930 = vadd.f32 %v3905, %v3922
          %v3931 = vadd.f32 %v3906, %v3923
          %v3932 = vadd.f32 %v3907, %v3924
          %v3933 = vadd.f32 %v3908, %v3925
          %v3934 = vadd.f32 %v3909, %v3926
          %v3935 = vld [vmem:[%s3833 + $0x2] sm:$0xf]
          %v3936 = vld [vmem:[%s3833 + $0xa] sm:$0xf]
          %v3937 = vld [vmem:[%s3833 + $0x12] sm:$0xf]
          %v3938 = vld [vmem:[%s3833 + $0x1a] sm:$0xf]
          %v3939 = vld [vmem:[%s3833 + $0x22] sm:$0xf]
          %v3940 = vld [vmem:[%s3833 + $0x2a] sm:$0xf]
          %v3941 = vld [vmem:[%s3833 + $0x32] sm:$0xf]
          %v3942 = vld [vmem:[%s3833 + $0x3a] sm:$0xf]
          %v3943 = vstv %s3832
          %v3944 = vmul.f32 %v3943, %v3935
          %v3945 = vmul.f32 %v3943, %v3936
          %v3946 = vmul.f32 %v3943, %v3937
          %v3947 = vmul.f32 %v3943, %v3938
          %v3948 = vmul.f32 %v3943, %v3939
          %v3949 = vmul.f32 %v3943, %v3940
          %v3950 = vmul.f32 %v3943, %v3941
          %v3951 = vmul.f32 %v3943, %v3942
          %v3952 = vadd.f32 %v3927, %v3944
          %v3953 = vadd.f32 %v3928, %v3945
          %v3954 = vadd.f32 %v3929, %v3946
          %v3955 = vadd.f32 %v3930, %v3947
          %v3956 = vadd.f32 %v3931, %v3948
          %v3957 = vadd.f32 %v3932, %v3949
          %v3958 = vadd.f32 %v3933, %v3950
          %v3959 = vadd.f32 %v3934, %v3951
          %s3960 = sadd.s32 %s2866, 40
          %s3961 = sld [smem:[#allocation14 + %s3960]]
          %s3962 = sadd.s32 %s2866, 41
          %s3963 = sld [smem:[#allocation14 + %s3962]]
          %s3964 = sadd.s32 %s2866, 42
          %s3965 = sld [smem:[#allocation14 + %s3964]]
          %s3966 = sadd.s32 %s2866, 43
          %s3967 = sld [smem:[#allocation14 + %s3966]]
          %s3968 = sadd.s32 %s2866, 44
          %s3969 = sld [smem:[#allocation14 + %s3968]]
          %s3970 = scalar_lea.vmem [#allocation5], 120
          %v3971 = vld [vmem:[%s3970] sm:$0xf]
          %v3972 = vld [vmem:[%s3970 + $0x8] sm:$0xf]
          %v3973 = vld [vmem:[%s3970 + $0x10] sm:$0xf]
          %v3974 = vld [vmem:[%s3970 + $0x18] sm:$0xf]
          %v3975 = vld [vmem:[%s3970 + $0x20] sm:$0xf]
          %v3976 = vld [vmem:[%s3970 + $0x28] sm:$0xf]
          %v3977 = vld [vmem:[%s3970 + $0x30] sm:$0xf]
          %v3978 = vld [vmem:[%s3970 + $0x38] sm:$0xf]
          %v3979 = vstv %s3961
          %v3980 = vmul.f32 %v3979, %v3971
          %v3981 = vmul.f32 %v3979, %v3972
          %v3982 = vmul.f32 %v3979, %v3973
          %v3983 = vmul.f32 %v3979, %v3974
          %v3984 = vmul.f32 %v3979, %v3975
          %v3985 = vmul.f32 %v3979, %v3976
          %v3986 = vmul.f32 %v3979, %v3977
          %v3987 = vmul.f32 %v3979, %v3978
          %v3988 = vadd.f32 %v3952, %v3980
          %v3989 = vadd.f32 %v3953, %v3981
          %v3990 = vadd.f32 %v3954, %v3982
          %v3991 = vadd.f32 %v3955, %v3983
          %v3992 = vadd.f32 %v3956, %v3984
          %v3993 = vadd.f32 %v3957, %v3985
          %v3994 = vadd.f32 %v3958, %v3986
          %v3995 = vadd.f32 %v3959, %v3987
          %s3996 = scalar_lea.vmem [#allocation6], 120
          %v3997 = vld [vmem:[%s3996] sm:$0xf]
          %v3998 = vld [vmem:[%s3996 + $0x8] sm:$0xf]
          %v3999 = vld [vmem:[%s3996 + $0x10] sm:$0xf]
          %v4000 = vld [vmem:[%s3996 + $0x18] sm:$0xf]
          %v4001 = vld [vmem:[%s3996 + $0x20] sm:$0xf]
          %v4002 = vld [vmem:[%s3996 + $0x28] sm:$0xf]
          %v4003 = vld [vmem:[%s3996 + $0x30] sm:$0xf]
          %v4004 = vld [vmem:[%s3996 + $0x38] sm:$0xf]
          %v4005 = vstv %s3963
          %v4006 = vmul.f32 %v4005, %v3997
          %v4007 = vmul.f32 %v4005, %v3998
          %v4008 = vmul.f32 %v4005, %v3999
          %v4009 = vmul.f32 %v4005, %v4000
          %v4010 = vmul.f32 %v4005, %v4001
          %v4011 = vmul.f32 %v4005, %v4002
          %v4012 = vmul.f32 %v4005, %v4003
          %v4013 = vmul.f32 %v4005, %v4004
          %v4014 = vadd.f32 %v3988, %v4006
          %v4015 = vadd.f32 %v3989, %v4007
          %v4016 = vadd.f32 %v3990, %v4008
          %v4017 = vadd.f32 %v3991, %v4009
          %v4018 = vadd.f32 %v3992, %v4010
          %v4019 = vadd.f32 %v3993, %v4011
          %v4020 = vadd.f32 %v3994, %v4012
          %v4021 = vadd.f32 %v3995, %v4013
          %v4022 = vld [vmem:[%s3970 + $0x1] sm:$0xf]
          %v4023 = vld [vmem:[%s3970 + $0x9] sm:$0xf]
          %v4024 = vld [vmem:[%s3970 + $0x11] sm:$0xf]
          %v4025 = vld [vmem:[%s3970 + $0x19] sm:$0xf]
          %v4026 = vld [vmem:[%s3970 + $0x21] sm:$0xf]
          %v4027 = vld [vmem:[%s3970 + $0x29] sm:$0xf]
          %v4028 = vld [vmem:[%s3970 + $0x31] sm:$0xf]
          %v4029 = vld [vmem:[%s3970 + $0x39] sm:$0xf]
          %v4030 = vstv %s3965
          %v4031 = vmul.f32 %v4030, %v4022
          %v4032 = vmul.f32 %v4030, %v4023
          %v4033 = vmul.f32 %v4030, %v4024
          %v4034 = vmul.f32 %v4030, %v4025
          %v4035 = vmul.f32 %v4030, %v4026
          %v4036 = vmul.f32 %v4030, %v4027
          %v4037 = vmul.f32 %v4030, %v4028
          %v4038 = vmul.f32 %v4030, %v4029
          %v4039 = vadd.f32 %v4014, %v4031
          %v4040 = vadd.f32 %v4015, %v4032
          %v4041 = vadd.f32 %v4016, %v4033
          %v4042 = vadd.f32 %v4017, %v4034
          %v4043 = vadd.f32 %v4018, %v4035
          %v4044 = vadd.f32 %v4019, %v4036
          %v4045 = vadd.f32 %v4020, %v4037
          %v4046 = vadd.f32 %v4021, %v4038
          %v4047 = vld [vmem:[%s3996 + $0x1] sm:$0xf]
          %v4048 = vld [vmem:[%s3996 + $0x9] sm:$0xf]
          %v4049 = vld [vmem:[%s3996 + $0x11] sm:$0xf]
          %v4050 = vld [vmem:[%s3996 + $0x19] sm:$0xf]
          %v4051 = vld [vmem:[%s3996 + $0x21] sm:$0xf]
          %v4052 = vld [vmem:[%s3996 + $0x29] sm:$0xf]
          %v4053 = vld [vmem:[%s3996 + $0x31] sm:$0xf]
          %v4054 = vld [vmem:[%s3996 + $0x39] sm:$0xf]
          %v4055 = vstv %s3967
          %v4056 = vmul.f32 %v4055, %v4047
          %v4057 = vmul.f32 %v4055, %v4048
          %v4058 = vmul.f32 %v4055, %v4049
          %v4059 = vmul.f32 %v4055, %v4050
          %v4060 = vmul.f32 %v4055, %v4051
          %v4061 = vmul.f32 %v4055, %v4052
          %v4062 = vmul.f32 %v4055, %v4053
          %v4063 = vmul.f32 %v4055, %v4054
          %v4064 = vadd.f32 %v4039, %v4056
          %v4065 = vadd.f32 %v4040, %v4057
          %v4066 = vadd.f32 %v4041, %v4058
          %v4067 = vadd.f32 %v4042, %v4059
          %v4068 = vadd.f32 %v4043, %v4060
          %v4069 = vadd.f32 %v4044, %v4061
          %v4070 = vadd.f32 %v4045, %v4062
          %v4071 = vadd.f32 %v4046, %v4063
          %v4072 = vld [vmem:[%s3970 + $0x2] sm:$0xf]
          %v4073 = vld [vmem:[%s3970 + $0xa] sm:$0xf]
          %v4074 = vld [vmem:[%s3970 + $0x12] sm:$0xf]
          %v4075 = vld [vmem:[%s3970 + $0x1a] sm:$0xf]
          %v4076 = vld [vmem:[%s3970 + $0x22] sm:$0xf]
          %v4077 = vld [vmem:[%s3970 + $0x2a] sm:$0xf]
          %v4078 = vld [vmem:[%s3970 + $0x32] sm:$0xf]
          %v4079 = vld [vmem:[%s3970 + $0x3a] sm:$0xf]
          %v4080 = vstv %s3969
          %v4081 = vmul.f32 %v4080, %v4072
          %v4082 = vmul.f32 %v4080, %v4073
          %v4083 = vmul.f32 %v4080, %v4074
          %v4084 = vmul.f32 %v4080, %v4075
          %v4085 = vmul.f32 %v4080, %v4076
          %v4086 = vmul.f32 %v4080, %v4077
          %v4087 = vmul.f32 %v4080, %v4078
          %v4088 = vmul.f32 %v4080, %v4079
          %v4089 = vadd.f32 %v4064, %v4081
          %v4090 = vadd.f32 %v4065, %v4082
          %v4091 = vadd.f32 %v4066, %v4083
          %v4092 = vadd.f32 %v4067, %v4084
          %v4093 = vadd.f32 %v4068, %v4085
          %v4094 = vadd.f32 %v4069, %v4086
          %v4095 = vadd.f32 %v4070, %v4087
          %v4096 = vadd.f32 %v4071, %v4088
          %s4097 = sadd.s32 %s2866, 45
          %s4098 = sld [smem:[#allocation14 + %s4097]]
          %s4099 = sadd.s32 %s2866, 46
          %s4100 = sld [smem:[#allocation14 + %s4099]]
          %s4101 = sadd.s32 %s2866, 47
          %s4102 = sld [smem:[#allocation14 + %s4101]]
          %s4103 = sadd.s32 %s2866, 48
          %s4104 = sld [smem:[#allocation14 + %s4103]]
          %s4105 = sadd.s32 %s2866, 49
          %s4106 = sld [smem:[#allocation14 + %s4105]]
          %s4107 = scalar_lea.vmem [#allocation5], 128
          %v4108 = vld [vmem:[%s4107] sm:$0xf]
          %v4109 = vld [vmem:[%s4107 + $0x8] sm:$0xf]
          %v4110 = vld [vmem:[%s4107 + $0x10] sm:$0xf]
          %v4111 = vld [vmem:[%s4107 + $0x18] sm:$0xf]
          %v4112 = vld [vmem:[%s4107 + $0x20] sm:$0xf]
          %v4113 = vld [vmem:[%s4107 + $0x28] sm:$0xf]
          %v4114 = vld [vmem:[%s4107 + $0x30] sm:$0xf]
          %v4115 = vld [vmem:[%s4107 + $0x38] sm:$0xf]
          %v4116 = vstv %s4098
          %v4117 = vmul.f32 %v4116, %v4108
          %v4118 = vmul.f32 %v4116, %v4109
          %v4119 = vmul.f32 %v4116, %v4110
          %v4120 = vmul.f32 %v4116, %v4111
          %v4121 = vmul.f32 %v4116, %v4112
          %v4122 = vmul.f32 %v4116, %v4113
          %v4123 = vmul.f32 %v4116, %v4114
          %v4124 = vmul.f32 %v4116, %v4115
          %v4125 = vadd.f32 %v4089, %v4117
          %v4126 = vadd.f32 %v4090, %v4118
          %v4127 = vadd.f32 %v4091, %v4119
          %v4128 = vadd.f32 %v4092, %v4120
          %v4129 = vadd.f32 %v4093, %v4121
          %v4130 = vadd.f32 %v4094, %v4122
          %v4131 = vadd.f32 %v4095, %v4123
          %v4132 = vadd.f32 %v4096, %v4124
          %s4133 = scalar_lea.vmem [#allocation6], 128
          %v4134 = vld [vmem:[%s4133] sm:$0xf]
          %v4135 = vld [vmem:[%s4133 + $0x8] sm:$0xf]
          %v4136 = vld [vmem:[%s4133 + $0x10] sm:$0xf]
          %v4137 = vld [vmem:[%s4133 + $0x18] sm:$0xf]
          %v4138 = vld [vmem:[%s4133 + $0x20] sm:$0xf]
          %v4139 = vld [vmem:[%s4133 + $0x28] sm:$0xf]
          %v4140 = vld [vmem:[%s4133 + $0x30] sm:$0xf]
          %v4141 = vld [vmem:[%s4133 + $0x38] sm:$0xf]
          %v4142 = vstv %s4100
          %v4143 = vmul.f32 %v4142, %v4134
          %v4144 = vmul.f32 %v4142, %v4135
          %v4145 = vmul.f32 %v4142, %v4136
          %v4146 = vmul.f32 %v4142, %v4137
          %v4147 = vmul.f32 %v4142, %v4138
          %v4148 = vmul.f32 %v4142, %v4139
          %v4149 = vmul.f32 %v4142, %v4140
          %v4150 = vmul.f32 %v4142, %v4141
          %v4151 = vadd.f32 %v4125, %v4143
          %v4152 = vadd.f32 %v4126, %v4144
          %v4153 = vadd.f32 %v4127, %v4145
          %v4154 = vadd.f32 %v4128, %v4146
          %v4155 = vadd.f32 %v4129, %v4147
          %v4156 = vadd.f32 %v4130, %v4148
          %v4157 = vadd.f32 %v4131, %v4149
          %v4158 = vadd.f32 %v4132, %v4150
          %v4159 = vld [vmem:[%s4107 + $0x1] sm:$0xf]
          %v4160 = vld [vmem:[%s4107 + $0x9] sm:$0xf]
          %v4161 = vld [vmem:[%s4107 + $0x11] sm:$0xf]
          %v4162 = vld [vmem:[%s4107 + $0x19] sm:$0xf]
          %v4163 = vld [vmem:[%s4107 + $0x21] sm:$0xf]
          %v4164 = vld [vmem:[%s4107 + $0x29] sm:$0xf]
          %v4165 = vld [vmem:[%s4107 + $0x31] sm:$0xf]
          %v4166 = vld [vmem:[%s4107 + $0x39] sm:$0xf]
          %v4167 = vstv %s4102
          %v4168 = vmul.f32 %v4167, %v4159
          %v4169 = vmul.f32 %v4167, %v4160
          %v4170 = vmul.f32 %v4167, %v4161
          %v4171 = vmul.f32 %v4167, %v4162
          %v4172 = vmul.f32 %v4167, %v4163
          %v4173 = vmul.f32 %v4167, %v4164
          %v4174 = vmul.f32 %v4167, %v4165
          %v4175 = vmul.f32 %v4167, %v4166
          %v4176 = vadd.f32 %v4151, %v4168
          %v4177 = vadd.f32 %v4152, %v4169
          %v4178 = vadd.f32 %v4153, %v4170
          %v4179 = vadd.f32 %v4154, %v4171
          %v4180 = vadd.f32 %v4155, %v4172
          %v4181 = vadd.f32 %v4156, %v4173
          %v4182 = vadd.f32 %v4157, %v4174
          %v4183 = vadd.f32 %v4158, %v4175
          %v4184 = vld [vmem:[%s4133 + $0x1] sm:$0xf]
          %v4185 = vld [vmem:[%s4133 + $0x9] sm:$0xf]
          %v4186 = vld [vmem:[%s4133 + $0x11] sm:$0xf]
          %v4187 = vld [vmem:[%s4133 + $0x19] sm:$0xf]
          %v4188 = vld [vmem:[%s4133 + $0x21] sm:$0xf]
          %v4189 = vld [vmem:[%s4133 + $0x29] sm:$0xf]
          %v4190 = vld [vmem:[%s4133 + $0x31] sm:$0xf]
          %v4191 = vld [vmem:[%s4133 + $0x39] sm:$0xf]
          %v4192 = vstv %s4104
          %v4193 = vmul.f32 %v4192, %v4184
          %v4194 = vmul.f32 %v4192, %v4185
          %v4195 = vmul.f32 %v4192, %v4186
          %v4196 = vmul.f32 %v4192, %v4187
          %v4197 = vmul.f32 %v4192, %v4188
          %v4198 = vmul.f32 %v4192, %v4189
          %v4199 = vmul.f32 %v4192, %v4190
          %v4200 = vmul.f32 %v4192, %v4191
          %v4201 = vadd.f32 %v4176, %v4193
          %v4202 = vadd.f32 %v4177, %v4194
          %v4203 = vadd.f32 %v4178, %v4195
          %v4204 = vadd.f32 %v4179, %v4196
          %v4205 = vadd.f32 %v4180, %v4197
          %v4206 = vadd.f32 %v4181, %v4198
          %v4207 = vadd.f32 %v4182, %v4199
          %v4208 = vadd.f32 %v4183, %v4200
          %v4209 = vld [vmem:[%s4107 + $0x2] sm:$0xf]
          %v4210 = vld [vmem:[%s4107 + $0xa] sm:$0xf]
          %v4211 = vld [vmem:[%s4107 + $0x12] sm:$0xf]
          %v4212 = vld [vmem:[%s4107 + $0x1a] sm:$0xf]
          %v4213 = vld [vmem:[%s4107 + $0x22] sm:$0xf]
          %v4214 = vld [vmem:[%s4107 + $0x2a] sm:$0xf]
          %v4215 = vld [vmem:[%s4107 + $0x32] sm:$0xf]
          %v4216 = vld [vmem:[%s4107 + $0x3a] sm:$0xf]
          %v4217 = vstv %s4106
          %v4218 = vmul.f32 %v4217, %v4209
          %v4219 = vmul.f32 %v4217, %v4210
          %v4220 = vmul.f32 %v4217, %v4211
          %v4221 = vmul.f32 %v4217, %v4212
          %v4222 = vmul.f32 %v4217, %v4213
          %v4223 = vmul.f32 %v4217, %v4214
          %v4224 = vmul.f32 %v4217, %v4215
          %v4225 = vmul.f32 %v4217, %v4216
          %v4226 = vadd.f32 %v4201, %v4218
          %v4227 = vadd.f32 %v4202, %v4219
          %v4228 = vadd.f32 %v4203, %v4220
          %v4229 = vadd.f32 %v4204, %v4221
          %v4230 = vadd.f32 %v4205, %v4222
          %v4231 = vadd.f32 %v4206, %v4223
          %v4232 = vadd.f32 %v4207, %v4224
          %v4233 = vadd.f32 %v4208, %v4225
          %s4234 = sadd.s32 %s2866, 50
          %s4235 = sld [smem:[#allocation14 + %s4234]]
          %s4236 = sadd.s32 %s2866, 51
          %s4237 = sld [smem:[#allocation14 + %s4236]]
          %s4238 = sadd.s32 %s2866, 52
          %s4239 = sld [smem:[#allocation14 + %s4238]]
          %s4240 = sadd.s32 %s2866, 53
          %s4241 = sld [smem:[#allocation14 + %s4240]]
          %s4242 = sadd.s32 %s2866, 54
          %s4243 = sld [smem:[#allocation14 + %s4242]]
          %s4244 = scalar_lea.vmem [#allocation5], 192
          %v4245 = vld [vmem:[%s4244] sm:$0xf]
          %v4246 = vld [vmem:[%s4244 + $0x8] sm:$0xf]
          %v4247 = vld [vmem:[%s4244 + $0x10] sm:$0xf]
          %v4248 = vld [vmem:[%s4244 + $0x18] sm:$0xf]
          %v4249 = vld [vmem:[%s4244 + $0x20] sm:$0xf]
          %v4250 = vld [vmem:[%s4244 + $0x28] sm:$0xf]
          %v4251 = vld [vmem:[%s4244 + $0x30] sm:$0xf]
          %v4252 = vld [vmem:[%s4244 + $0x38] sm:$0xf]
          %v4253 = vstv %s4235
          %v4254 = vmul.f32 %v4253, %v4245
          %v4255 = vmul.f32 %v4253, %v4246
          %v4256 = vmul.f32 %v4253, %v4247
          %v4257 = vmul.f32 %v4253, %v4248
          %v4258 = vmul.f32 %v4253, %v4249
          %v4259 = vmul.f32 %v4253, %v4250
          %v4260 = vmul.f32 %v4253, %v4251
          %v4261 = vmul.f32 %v4253, %v4252
          %v4262 = vadd.f32 %v4226, %v4254
          %v4263 = vadd.f32 %v4227, %v4255
          %v4264 = vadd.f32 %v4228, %v4256
          %v4265 = vadd.f32 %v4229, %v4257
          %v4266 = vadd.f32 %v4230, %v4258
          %v4267 = vadd.f32 %v4231, %v4259
          %v4268 = vadd.f32 %v4232, %v4260
          %v4269 = vadd.f32 %v4233, %v4261
          %s4270 = scalar_lea.vmem [#allocation6], 192
          %v4271 = vld [vmem:[%s4270] sm:$0xf]
          %v4272 = vld [vmem:[%s4270 + $0x8] sm:$0xf]
          %v4273 = vld [vmem:[%s4270 + $0x10] sm:$0xf]
          %v4274 = vld [vmem:[%s4270 + $0x18] sm:$0xf]
          %v4275 = vld [vmem:[%s4270 + $0x20] sm:$0xf]
          %v4276 = vld [vmem:[%s4270 + $0x28] sm:$0xf]
          %v4277 = vld [vmem:[%s4270 + $0x30] sm:$0xf]
          %v4278 = vld [vmem:[%s4270 + $0x38] sm:$0xf]
          %v4279 = vstv %s4237
          %v4280 = vmul.f32 %v4279, %v4271
          %v4281 = vmul.f32 %v4279, %v4272
          %v4282 = vmul.f32 %v4279, %v4273
          %v4283 = vmul.f32 %v4279, %v4274
          %v4284 = vmul.f32 %v4279, %v4275
          %v4285 = vmul.f32 %v4279, %v4276
          %v4286 = vmul.f32 %v4279, %v4277
          %v4287 = vmul.f32 %v4279, %v4278
          %v4288 = vadd.f32 %v4262, %v4280
          %v4289 = vadd.f32 %v4263, %v4281
          %v4290 = vadd.f32 %v4264, %v4282
          %v4291 = vadd.f32 %v4265, %v4283
          %v4292 = vadd.f32 %v4266, %v4284
          %v4293 = vadd.f32 %v4267, %v4285
          %v4294 = vadd.f32 %v4268, %v4286
          %v4295 = vadd.f32 %v4269, %v4287
          %v4296 = vld [vmem:[%s4244 + $0x1] sm:$0xf]
          %v4297 = vld [vmem:[%s4244 + $0x9] sm:$0xf]
          %v4298 = vld [vmem:[%s4244 + $0x11] sm:$0xf]
          %v4299 = vld [vmem:[%s4244 + $0x19] sm:$0xf]
          %v4300 = vld [vmem:[%s4244 + $0x21] sm:$0xf]
          %v4301 = vld [vmem:[%s4244 + $0x29] sm:$0xf]
          %v4302 = vld [vmem:[%s4244 + $0x31] sm:$0xf]
          %v4303 = vld [vmem:[%s4244 + $0x39] sm:$0xf]
          %v4304 = vstv %s4239
          %v4305 = vmul.f32 %v4304, %v4296
          %v4306 = vmul.f32 %v4304, %v4297
          %v4307 = vmul.f32 %v4304, %v4298
          %v4308 = vmul.f32 %v4304, %v4299
          %v4309 = vmul.f32 %v4304, %v4300
          %v4310 = vmul.f32 %v4304, %v4301
          %v4311 = vmul.f32 %v4304, %v4302
          %v4312 = vmul.f32 %v4304, %v4303
          %v4313 = vadd.f32 %v4288, %v4305
          %v4314 = vadd.f32 %v4289, %v4306
          %v4315 = vadd.f32 %v4290, %v4307
          %v4316 = vadd.f32 %v4291, %v4308
          %v4317 = vadd.f32 %v4292, %v4309
          %v4318 = vadd.f32 %v4293, %v4310
          %v4319 = vadd.f32 %v4294, %v4311
          %v4320 = vadd.f32 %v4295, %v4312
          %v4321 = vld [vmem:[%s4270 + $0x1] sm:$0xf]
          %v4322 = vld [vmem:[%s4270 + $0x9] sm:$0xf]
          %v4323 = vld [vmem:[%s4270 + $0x11] sm:$0xf]
          %v4324 = vld [vmem:[%s4270 + $0x19] sm:$0xf]
          %v4325 = vld [vmem:[%s4270 + $0x21] sm:$0xf]
          %v4326 = vld [vmem:[%s4270 + $0x29] sm:$0xf]
          %v4327 = vld [vmem:[%s4270 + $0x31] sm:$0xf]
          %v4328 = vld [vmem:[%s4270 + $0x39] sm:$0xf]
          %v4329 = vstv %s4241
          %v4330 = vmul.f32 %v4329, %v4321
          %v4331 = vmul.f32 %v4329, %v4322
          %v4332 = vmul.f32 %v4329, %v4323
          %v4333 = vmul.f32 %v4329, %v4324
          %v4334 = vmul.f32 %v4329, %v4325
          %v4335 = vmul.f32 %v4329, %v4326
          %v4336 = vmul.f32 %v4329, %v4327
          %v4337 = vmul.f32 %v4329, %v4328
          %v4338 = vadd.f32 %v4313, %v4330
          %v4339 = vadd.f32 %v4314, %v4331
          %v4340 = vadd.f32 %v4315, %v4332
          %v4341 = vadd.f32 %v4316, %v4333
          %v4342 = vadd.f32 %v4317, %v4334
          %v4343 = vadd.f32 %v4318, %v4335
          %v4344 = vadd.f32 %v4319, %v4336
          %v4345 = vadd.f32 %v4320, %v4337
          %v4346 = vld [vmem:[%s4244 + $0x2] sm:$0xf]
          %v4347 = vld [vmem:[%s4244 + $0xa] sm:$0xf]
          %v4348 = vld [vmem:[%s4244 + $0x12] sm:$0xf]
          %v4349 = vld [vmem:[%s4244 + $0x1a] sm:$0xf]
          %v4350 = vld [vmem:[%s4244 + $0x22] sm:$0xf]
          %v4351 = vld [vmem:[%s4244 + $0x2a] sm:$0xf]
          %v4352 = vld [vmem:[%s4244 + $0x32] sm:$0xf]
          %v4353 = vld [vmem:[%s4244 + $0x3a] sm:$0xf]
          %v4354 = vstv %s4243
          %v4355 = vmul.f32 %v4354, %v4346
          %v4356 = vmul.f32 %v4354, %v4347
          %v4357 = vmul.f32 %v4354, %v4348
          %v4358 = vmul.f32 %v4354, %v4349
          %v4359 = vmul.f32 %v4354, %v4350
          %v4360 = vmul.f32 %v4354, %v4351
          %v4361 = vmul.f32 %v4354, %v4352
          %v4362 = vmul.f32 %v4354, %v4353
          %v4363 = vadd.f32 %v4338, %v4355
          %v4364 = vadd.f32 %v4339, %v4356
          %v4365 = vadd.f32 %v4340, %v4357
          %v4366 = vadd.f32 %v4341, %v4358
          %v4367 = vadd.f32 %v4342, %v4359
          %v4368 = vadd.f32 %v4343, %v4360
          %v4369 = vadd.f32 %v4344, %v4361
          %v4370 = vadd.f32 %v4345, %v4362
          %s4371 = sadd.s32 %s2866, 55
          %s4372 = sld [smem:[#allocation14 + %s4371]]
          %s4373 = sadd.s32 %s2866, 56
          %s4374 = sld [smem:[#allocation14 + %s4373]]
          %s4375 = sadd.s32 %s2866, 57
          %s4376 = sld [smem:[#allocation14 + %s4375]]
          %s4377 = sadd.s32 %s2866, 58
          %s4378 = sld [smem:[#allocation14 + %s4377]]
          %s4379 = sadd.s32 %s2866, 59
          %s4380 = sld [smem:[#allocation14 + %s4379]]
          %s4381 = scalar_lea.vmem [#allocation5], 200
          %v4382 = vld [vmem:[%s4381] sm:$0xf]
          %v4383 = vld [vmem:[%s4381 + $0x8] sm:$0xf]
          %v4384 = vld [vmem:[%s4381 + $0x10] sm:$0xf]
          %v4385 = vld [vmem:[%s4381 + $0x18] sm:$0xf]
          %v4386 = vld [vmem:[%s4381 + $0x20] sm:$0xf]
          %v4387 = vld [vmem:[%s4381 + $0x28] sm:$0xf]
          %v4388 = vld [vmem:[%s4381 + $0x30] sm:$0xf]
          %v4389 = vld [vmem:[%s4381 + $0x38] sm:$0xf]
          %v4390 = vstv %s4372
          %v4391 = vmul.f32 %v4390, %v4382
          %v4392 = vmul.f32 %v4390, %v4383
          %v4393 = vmul.f32 %v4390, %v4384
          %v4394 = vmul.f32 %v4390, %v4385
          %v4395 = vmul.f32 %v4390, %v4386
          %v4396 = vmul.f32 %v4390, %v4387
          %v4397 = vmul.f32 %v4390, %v4388
          %v4398 = vmul.f32 %v4390, %v4389
          %v4399 = vadd.f32 %v4363, %v4391
          %v4400 = vadd.f32 %v4364, %v4392
          %v4401 = vadd.f32 %v4365, %v4393
          %v4402 = vadd.f32 %v4366, %v4394
          %v4403 = vadd.f32 %v4367, %v4395
          %v4404 = vadd.f32 %v4368, %v4396
          %v4405 = vadd.f32 %v4369, %v4397
          %v4406 = vadd.f32 %v4370, %v4398
          %s4407 = scalar_lea.vmem [#allocation6], 200
          %v4408 = vld [vmem:[%s4407] sm:$0xf]
          %v4409 = vld [vmem:[%s4407 + $0x8] sm:$0xf]
          %v4410 = vld [vmem:[%s4407 + $0x10] sm:$0xf]
          %v4411 = vld [vmem:[%s4407 + $0x18] sm:$0xf]
          %v4412 = vld [vmem:[%s4407 + $0x20] sm:$0xf]
          %v4413 = vld [vmem:[%s4407 + $0x28] sm:$0xf]
          %v4414 = vld [vmem:[%s4407 + $0x30] sm:$0xf]
          %v4415 = vld [vmem:[%s4407 + $0x38] sm:$0xf]
          %v4416 = vstv %s4374
          %v4417 = vmul.f32 %v4416, %v4408
          %v4418 = vmul.f32 %v4416, %v4409
          %v4419 = vmul.f32 %v4416, %v4410
          %v4420 = vmul.f32 %v4416, %v4411
          %v4421 = vmul.f32 %v4416, %v4412
          %v4422 = vmul.f32 %v4416, %v4413
          %v4423 = vmul.f32 %v4416, %v4414
          %v4424 = vmul.f32 %v4416, %v4415
          %v4425 = vadd.f32 %v4399, %v4417
          %v4426 = vadd.f32 %v4400, %v4418
          %v4427 = vadd.f32 %v4401, %v4419
          %v4428 = vadd.f32 %v4402, %v4420
          %v4429 = vadd.f32 %v4403, %v4421
          %v4430 = vadd.f32 %v4404, %v4422
          %v4431 = vadd.f32 %v4405, %v4423
          %v4432 = vadd.f32 %v4406, %v4424
          %v4433 = vld [vmem:[%s4381 + $0x1] sm:$0xf]
          %v4434 = vld [vmem:[%s4381 + $0x9] sm:$0xf]
          %v4435 = vld [vmem:[%s4381 + $0x11] sm:$0xf]
          %v4436 = vld [vmem:[%s4381 + $0x19] sm:$0xf]
          %v4437 = vld [vmem:[%s4381 + $0x21] sm:$0xf]
          %v4438 = vld [vmem:[%s4381 + $0x29] sm:$0xf]
          %v4439 = vld [vmem:[%s4381 + $0x31] sm:$0xf]
          %v4440 = vld [vmem:[%s4381 + $0x39] sm:$0xf]
          %v4441 = vstv %s4376
          %v4442 = vmul.f32 %v4441, %v4433
          %v4443 = vmul.f32 %v4441, %v4434
          %v4444 = vmul.f32 %v4441, %v4435
          %v4445 = vmul.f32 %v4441, %v4436
          %v4446 = vmul.f32 %v4441, %v4437
          %v4447 = vmul.f32 %v4441, %v4438
          %v4448 = vmul.f32 %v4441, %v4439
          %v4449 = vmul.f32 %v4441, %v4440
          %v4450 = vadd.f32 %v4425, %v4442
          %v4451 = vadd.f32 %v4426, %v4443
          %v4452 = vadd.f32 %v4427, %v4444
          %v4453 = vadd.f32 %v4428, %v4445
          %v4454 = vadd.f32 %v4429, %v4446
          %v4455 = vadd.f32 %v4430, %v4447
          %v4456 = vadd.f32 %v4431, %v4448
          %v4457 = vadd.f32 %v4432, %v4449
          %v4458 = vld [vmem:[%s4407 + $0x1] sm:$0xf]
          %v4459 = vld [vmem:[%s4407 + $0x9] sm:$0xf]
          %v4460 = vld [vmem:[%s4407 + $0x11] sm:$0xf]
          %v4461 = vld [vmem:[%s4407 + $0x19] sm:$0xf]
          %v4462 = vld [vmem:[%s4407 + $0x21] sm:$0xf]
          %v4463 = vld [vmem:[%s4407 + $0x29] sm:$0xf]
          %v4464 = vld [vmem:[%s4407 + $0x31] sm:$0xf]
          %v4465 = vld [vmem:[%s4407 + $0x39] sm:$0xf]
          %v4466 = vstv %s4378
          %v4467 = vmul.f32 %v4466, %v4458
          %v4468 = vmul.f32 %v4466, %v4459
          %v4469 = vmul.f32 %v4466, %v4460
          %v4470 = vmul.f32 %v4466, %v4461
          %v4471 = vmul.f32 %v4466, %v4462
          %v4472 = vmul.f32 %v4466, %v4463
          %v4473 = vmul.f32 %v4466, %v4464
          %v4474 = vmul.f32 %v4466, %v4465
          %v4475 = vadd.f32 %v4450, %v4467
          %v4476 = vadd.f32 %v4451, %v4468
          %v4477 = vadd.f32 %v4452, %v4469
          %v4478 = vadd.f32 %v4453, %v4470
          %v4479 = vadd.f32 %v4454, %v4471
          %v4480 = vadd.f32 %v4455, %v4472
          %v4481 = vadd.f32 %v4456, %v4473
          %v4482 = vadd.f32 %v4457, %v4474
          %v4483 = vld [vmem:[%s4381 + $0x2] sm:$0xf]
          %v4484 = vld [vmem:[%s4381 + $0xa] sm:$0xf]
          %v4485 = vld [vmem:[%s4381 + $0x12] sm:$0xf]
          %v4486 = vld [vmem:[%s4381 + $0x1a] sm:$0xf]
          %v4487 = vld [vmem:[%s4381 + $0x22] sm:$0xf]
          %v4488 = vld [vmem:[%s4381 + $0x2a] sm:$0xf]
          %v4489 = vld [vmem:[%s4381 + $0x32] sm:$0xf]
          %v4490 = vld [vmem:[%s4381 + $0x3a] sm:$0xf]
          %v4491 = vstv %s4380
          %v4492 = vmul.f32 %v4491, %v4483
          %v4493 = vmul.f32 %v4491, %v4484
          %v4494 = vmul.f32 %v4491, %v4485
          %v4495 = vmul.f32 %v4491, %v4486
          %v4496 = vmul.f32 %v4491, %v4487
          %v4497 = vmul.f32 %v4491, %v4488
          %v4498 = vmul.f32 %v4491, %v4489
          %v4499 = vmul.f32 %v4491, %v4490
          %v4500 = vadd.f32 %v4475, %v4492
          %v4501 = vadd.f32 %v4476, %v4493
          %v4502 = vadd.f32 %v4477, %v4494
          %v4503 = vadd.f32 %v4478, %v4495
          %v4504 = vadd.f32 %v4479, %v4496
          %v4505 = vadd.f32 %v4480, %v4497
          %v4506 = vadd.f32 %v4481, %v4498
          %v4507 = vadd.f32 %v4482, %v4499
          %s4508 = sadd.s32 %s2866, 60
          %s4509 = sld [smem:[#allocation14 + %s4508]]
          %s4510 = sadd.s32 %s2866, 61
          %s4511 = sld [smem:[#allocation14 + %s4510]]
          %s4512 = sadd.s32 %s2866, 62
          %s4513 = sld [smem:[#allocation14 + %s4512]]
          %s4514 = sadd.s32 %s2866, 63
          %s4515 = sld [smem:[#allocation14 + %s4514]]
          %s4516 = sadd.s32 %s2866, 64
          %s4517 = sld [smem:[#allocation14 + %s4516]]
          %s4518 = scalar_lea.vmem [#allocation5], 208
          %v4519 = vld [vmem:[%s4518] sm:$0xf]
          %v4520 = vld [vmem:[%s4518 + $0x8] sm:$0xf]
          %v4521 = vld [vmem:[%s4518 + $0x10] sm:$0xf]
          %v4522 = vld [vmem:[%s4518 + $0x18] sm:$0xf]
          %v4523 = vld [vmem:[%s4518 + $0x20] sm:$0xf]
          %v4524 = vld [vmem:[%s4518 + $0x28] sm:$0xf]
          %v4525 = vld [vmem:[%s4518 + $0x30] sm:$0xf]
          %v4526 = vld [vmem:[%s4518 + $0x38] sm:$0xf]
          %v4527 = vstv %s4509
          %v4528 = vmul.f32 %v4527, %v4519
          %v4529 = vmul.f32 %v4527, %v4520
          %v4530 = vmul.f32 %v4527, %v4521
          %v4531 = vmul.f32 %v4527, %v4522
          %v4532 = vmul.f32 %v4527, %v4523
          %v4533 = vmul.f32 %v4527, %v4524
          %v4534 = vmul.f32 %v4527, %v4525
          %v4535 = vmul.f32 %v4527, %v4526
          %v4536 = vadd.f32 %v4500, %v4528
          %v4537 = vadd.f32 %v4501, %v4529
          %v4538 = vadd.f32 %v4502, %v4530
          %v4539 = vadd.f32 %v4503, %v4531
          %v4540 = vadd.f32 %v4504, %v4532
          %v4541 = vadd.f32 %v4505, %v4533
          %v4542 = vadd.f32 %v4506, %v4534
          %v4543 = vadd.f32 %v4507, %v4535
          %s4544 = scalar_lea.vmem [#allocation6], 208
          %v4545 = vld [vmem:[%s4544] sm:$0xf]
          %v4546 = vld [vmem:[%s4544 + $0x8] sm:$0xf]
          %v4547 = vld [vmem:[%s4544 + $0x10] sm:$0xf]
          %v4548 = vld [vmem:[%s4544 + $0x18] sm:$0xf]
          %v4549 = vld [vmem:[%s4544 + $0x20] sm:$0xf]
          %v4550 = vld [vmem:[%s4544 + $0x28] sm:$0xf]
          %v4551 = vld [vmem:[%s4544 + $0x30] sm:$0xf]
          %v4552 = vld [vmem:[%s4544 + $0x38] sm:$0xf]
          %v4553 = vstv %s4511
          %v4554 = vmul.f32 %v4553, %v4545
          %v4555 = vmul.f32 %v4553, %v4546
          %v4556 = vmul.f32 %v4553, %v4547
          %v4557 = vmul.f32 %v4553, %v4548
          %v4558 = vmul.f32 %v4553, %v4549
          %v4559 = vmul.f32 %v4553, %v4550
          %v4560 = vmul.f32 %v4553, %v4551
          %v4561 = vmul.f32 %v4553, %v4552
          %v4562 = vadd.f32 %v4536, %v4554
          %v4563 = vadd.f32 %v4537, %v4555
          %v4564 = vadd.f32 %v4538, %v4556
          %v4565 = vadd.f32 %v4539, %v4557
          %v4566 = vadd.f32 %v4540, %v4558
          %v4567 = vadd.f32 %v4541, %v4559
          %v4568 = vadd.f32 %v4542, %v4560
          %v4569 = vadd.f32 %v4543, %v4561
          %v4570 = vld [vmem:[%s4518 + $0x1] sm:$0xf]
          %v4571 = vld [vmem:[%s4518 + $0x9] sm:$0xf]
          %v4572 = vld [vmem:[%s4518 + $0x11] sm:$0xf]
          %v4573 = vld [vmem:[%s4518 + $0x19] sm:$0xf]
          %v4574 = vld [vmem:[%s4518 + $0x21] sm:$0xf]
          %v4575 = vld [vmem:[%s4518 + $0x29] sm:$0xf]
          %v4576 = vld [vmem:[%s4518 + $0x31] sm:$0xf]
          %v4577 = vld [vmem:[%s4518 + $0x39] sm:$0xf]
          %v4578 = vstv %s4513
          %v4579 = vmul.f32 %v4578, %v4570
          %v4580 = vmul.f32 %v4578, %v4571
          %v4581 = vmul.f32 %v4578, %v4572
          %v4582 = vmul.f32 %v4578, %v4573
          %v4583 = vmul.f32 %v4578, %v4574
          %v4584 = vmul.f32 %v4578, %v4575
          %v4585 = vmul.f32 %v4578, %v4576
          %v4586 = vmul.f32 %v4578, %v4577
          %v4587 = vadd.f32 %v4562, %v4579
          %v4588 = vadd.f32 %v4563, %v4580
          %v4589 = vadd.f32 %v4564, %v4581
          %v4590 = vadd.f32 %v4565, %v4582
          %v4591 = vadd.f32 %v4566, %v4583
          %v4592 = vadd.f32 %v4567, %v4584
          %v4593 = vadd.f32 %v4568, %v4585
          %v4594 = vadd.f32 %v4569, %v4586
          %v4595 = vld [vmem:[%s4544 + $0x1] sm:$0xf]
          %v4596 = vld [vmem:[%s4544 + $0x9] sm:$0xf]
          %v4597 = vld [vmem:[%s4544 + $0x11] sm:$0xf]
          %v4598 = vld [vmem:[%s4544 + $0x19] sm:$0xf]
          %v4599 = vld [vmem:[%s4544 + $0x21] sm:$0xf]
          %v4600 = vld [vmem:[%s4544 + $0x29] sm:$0xf]
          %v4601 = vld [vmem:[%s4544 + $0x31] sm:$0xf]
          %v4602 = vld [vmem:[%s4544 + $0x39] sm:$0xf]
          %v4603 = vstv %s4515
          %v4604 = vmul.f32 %v4603, %v4595
          %v4605 = vmul.f32 %v4603, %v4596
          %v4606 = vmul.f32 %v4603, %v4597
          %v4607 = vmul.f32 %v4603, %v4598
          %v4608 = vmul.f32 %v4603, %v4599
          %v4609 = vmul.f32 %v4603, %v4600
          %v4610 = vmul.f32 %v4603, %v4601
          %v4611 = vmul.f32 %v4603, %v4602
          %v4612 = vadd.f32 %v4587, %v4604
          %v4613 = vadd.f32 %v4588, %v4605
          %v4614 = vadd.f32 %v4589, %v4606
          %v4615 = vadd.f32 %v4590, %v4607
          %v4616 = vadd.f32 %v4591, %v4608
          %v4617 = vadd.f32 %v4592, %v4609
          %v4618 = vadd.f32 %v4593, %v4610
          %v4619 = vadd.f32 %v4594, %v4611
          %v4620 = vld [vmem:[%s4518 + $0x2] sm:$0xf]
          %v4621 = vld [vmem:[%s4518 + $0xa] sm:$0xf]
          %v4622 = vld [vmem:[%s4518 + $0x12] sm:$0xf]
          %v4623 = vld [vmem:[%s4518 + $0x1a] sm:$0xf]
          %v4624 = vld [vmem:[%s4518 + $0x22] sm:$0xf]
          %v4625 = vld [vmem:[%s4518 + $0x2a] sm:$0xf]
          %v4626 = vld [vmem:[%s4518 + $0x32] sm:$0xf]
          %v4627 = vld [vmem:[%s4518 + $0x3a] sm:$0xf]
          %v4628 = vstv %s4517
          %v4629 = vmul.f32 %v4628, %v4620
          %v4630 = vmul.f32 %v4628, %v4621
          %v4631 = vmul.f32 %v4628, %v4622
          %v4632 = vmul.f32 %v4628, %v4623
          %v4633 = vmul.f32 %v4628, %v4624
          %v4634 = vmul.f32 %v4628, %v4625
          %v4635 = vmul.f32 %v4628, %v4626
          %v4636 = vmul.f32 %v4628, %v4627
          %v4637 = vadd.f32 %v4612, %v4629
          %v4638 = vadd.f32 %v4613, %v4630
          %v4639 = vadd.f32 %v4614, %v4631
          %v4640 = vadd.f32 %v4615, %v4632
          %v4641 = vadd.f32 %v4616, %v4633
          %v4642 = vadd.f32 %v4617, %v4634
          %v4643 = vadd.f32 %v4618, %v4635
          %v4644 = vadd.f32 %v4619, %v4636
          %s4645 = sadd.s32 %s2866, 65
          %s4646 = sld [smem:[#allocation14 + %s4645]]
          %s4647 = sadd.s32 %s2866, 66
          %s4648 = sld [smem:[#allocation14 + %s4647]]
          %s4649 = sadd.s32 %s2866, 67
          %s4650 = sld [smem:[#allocation14 + %s4649]]
          %s4651 = sadd.s32 %s2866, 68
          %s4652 = sld [smem:[#allocation14 + %s4651]]
          %s4653 = sadd.s32 %s2866, 69
          %s4654 = sld [smem:[#allocation14 + %s4653]]
          %s4655 = scalar_lea.vmem [#allocation5], 216
          %v4656 = vld [vmem:[%s4655] sm:$0xf]
          %v4657 = vld [vmem:[%s4655 + $0x8] sm:$0xf]
          %v4658 = vld [vmem:[%s4655 + $0x10] sm:$0xf]
          %v4659 = vld [vmem:[%s4655 + $0x18] sm:$0xf]
          %v4660 = vld [vmem:[%s4655 + $0x20] sm:$0xf]
          %v4661 = vld [vmem:[%s4655 + $0x28] sm:$0xf]
          %v4662 = vld [vmem:[%s4655 + $0x30] sm:$0xf]
          %v4663 = vld [vmem:[%s4655 + $0x38] sm:$0xf]
          %v4664 = vstv %s4646
          %v4665 = vmul.f32 %v4664, %v4656
          %v4666 = vmul.f32 %v4664, %v4657
          %v4667 = vmul.f32 %v4664, %v4658
          %v4668 = vmul.f32 %v4664, %v4659
          %v4669 = vmul.f32 %v4664, %v4660
          %v4670 = vmul.f32 %v4664, %v4661
          %v4671 = vmul.f32 %v4664, %v4662
          %v4672 = vmul.f32 %v4664, %v4663
          %v4673 = vadd.f32 %v4637, %v4665
          %v4674 = vadd.f32 %v4638, %v4666
          %v4675 = vadd.f32 %v4639, %v4667
          %v4676 = vadd.f32 %v4640, %v4668
          %v4677 = vadd.f32 %v4641, %v4669
          %v4678 = vadd.f32 %v4642, %v4670
          %v4679 = vadd.f32 %v4643, %v4671
          %v4680 = vadd.f32 %v4644, %v4672
          %s4681 = scalar_lea.vmem [#allocation6], 216
          %v4682 = vld [vmem:[%s4681] sm:$0xf]
          %v4683 = vld [vmem:[%s4681 + $0x8] sm:$0xf]
          %v4684 = vld [vmem:[%s4681 + $0x10] sm:$0xf]
          %v4685 = vld [vmem:[%s4681 + $0x18] sm:$0xf]
          %v4686 = vld [vmem:[%s4681 + $0x20] sm:$0xf]
          %v4687 = vld [vmem:[%s4681 + $0x28] sm:$0xf]
          %v4688 = vld [vmem:[%s4681 + $0x30] sm:$0xf]
          %v4689 = vld [vmem:[%s4681 + $0x38] sm:$0xf]
          %v4690 = vstv %s4648
          %v4691 = vmul.f32 %v4690, %v4682
          %v4692 = vmul.f32 %v4690, %v4683
          %v4693 = vmul.f32 %v4690, %v4684
          %v4694 = vmul.f32 %v4690, %v4685
          %v4695 = vmul.f32 %v4690, %v4686
          %v4696 = vmul.f32 %v4690, %v4687
          %v4697 = vmul.f32 %v4690, %v4688
          %v4698 = vmul.f32 %v4690, %v4689
          %v4699 = vadd.f32 %v4673, %v4691
          %v4700 = vadd.f32 %v4674, %v4692
          %v4701 = vadd.f32 %v4675, %v4693
          %v4702 = vadd.f32 %v4676, %v4694
          %v4703 = vadd.f32 %v4677, %v4695
          %v4704 = vadd.f32 %v4678, %v4696
          %v4705 = vadd.f32 %v4679, %v4697
          %v4706 = vadd.f32 %v4680, %v4698
          %v4707 = vld [vmem:[%s4655 + $0x1] sm:$0xf]
          %v4708 = vld [vmem:[%s4655 + $0x9] sm:$0xf]
          %v4709 = vld [vmem:[%s4655 + $0x11] sm:$0xf]
          %v4710 = vld [vmem:[%s4655 + $0x19] sm:$0xf]
          %v4711 = vld [vmem:[%s4655 + $0x21] sm:$0xf]
          %v4712 = vld [vmem:[%s4655 + $0x29] sm:$0xf]
          %v4713 = vld [vmem:[%s4655 + $0x31] sm:$0xf]
          %v4714 = vld [vmem:[%s4655 + $0x39] sm:$0xf]
          %v4715 = vstv %s4650
          %v4716 = vmul.f32 %v4715, %v4707
          %v4717 = vmul.f32 %v4715, %v4708
          %v4718 = vmul.f32 %v4715, %v4709
          %v4719 = vmul.f32 %v4715, %v4710
          %v4720 = vmul.f32 %v4715, %v4711
          %v4721 = vmul.f32 %v4715, %v4712
          %v4722 = vmul.f32 %v4715, %v4713
          %v4723 = vmul.f32 %v4715, %v4714
          %v4724 = vadd.f32 %v4699, %v4716
          %v4725 = vadd.f32 %v4700, %v4717
          %v4726 = vadd.f32 %v4701, %v4718
          %v4727 = vadd.f32 %v4702, %v4719
          %v4728 = vadd.f32 %v4703, %v4720
          %v4729 = vadd.f32 %v4704, %v4721
          %v4730 = vadd.f32 %v4705, %v4722
          %v4731 = vadd.f32 %v4706, %v4723
          %v4732 = vld [vmem:[%s4681 + $0x1] sm:$0xf]
          %v4733 = vld [vmem:[%s4681 + $0x9] sm:$0xf]
          %v4734 = vld [vmem:[%s4681 + $0x11] sm:$0xf]
          %v4735 = vld [vmem:[%s4681 + $0x19] sm:$0xf]
          %v4736 = vld [vmem:[%s4681 + $0x21] sm:$0xf]
          %v4737 = vld [vmem:[%s4681 + $0x29] sm:$0xf]
          %v4738 = vld [vmem:[%s4681 + $0x31] sm:$0xf]
          %v4739 = vld [vmem:[%s4681 + $0x39] sm:$0xf]
          %v4740 = vstv %s4652
          %v4741 = vmul.f32 %v4740, %v4732
          %v4742 = vmul.f32 %v4740, %v4733
          %v4743 = vmul.f32 %v4740, %v4734
          %v4744 = vmul.f32 %v4740, %v4735
          %v4745 = vmul.f32 %v4740, %v4736
          %v4746 = vmul.f32 %v4740, %v4737
          %v4747 = vmul.f32 %v4740, %v4738
          %v4748 = vmul.f32 %v4740, %v4739
          %v4749 = vadd.f32 %v4724, %v4741
          %v4750 = vadd.f32 %v4725, %v4742
          %v4751 = vadd.f32 %v4726, %v4743
          %v4752 = vadd.f32 %v4727, %v4744
          %v4753 = vadd.f32 %v4728, %v4745
          %v4754 = vadd.f32 %v4729, %v4746
          %v4755 = vadd.f32 %v4730, %v4747
          %v4756 = vadd.f32 %v4731, %v4748
          %v4757 = vld [vmem:[%s4655 + $0x2] sm:$0xf]
          %v4758 = vld [vmem:[%s4655 + $0xa] sm:$0xf]
          %v4759 = vld [vmem:[%s4655 + $0x12] sm:$0xf]
          %v4760 = vld [vmem:[%s4655 + $0x1a] sm:$0xf]
          %v4761 = vld [vmem:[%s4655 + $0x22] sm:$0xf]
          %v4762 = vld [vmem:[%s4655 + $0x2a] sm:$0xf]
          %v4763 = vld [vmem:[%s4655 + $0x32] sm:$0xf]
          %v4764 = vld [vmem:[%s4655 + $0x3a] sm:$0xf]
          %v4765 = vstv %s4654
          %v4766 = vmul.f32 %v4765, %v4757
          %v4767 = vmul.f32 %v4765, %v4758
          %v4768 = vmul.f32 %v4765, %v4759
          %v4769 = vmul.f32 %v4765, %v4760
          %v4770 = vmul.f32 %v4765, %v4761
          %v4771 = vmul.f32 %v4765, %v4762
          %v4772 = vmul.f32 %v4765, %v4763
          %v4773 = vmul.f32 %v4765, %v4764
          %v4774 = vadd.f32 %v4749, %v4766
          %v4775 = vadd.f32 %v4750, %v4767
          %v4776 = vadd.f32 %v4751, %v4768
          %v4777 = vadd.f32 %v4752, %v4769
          %v4778 = vadd.f32 %v4753, %v4770
          %v4779 = vadd.f32 %v4754, %v4771
          %v4780 = vadd.f32 %v4755, %v4772
          %v4781 = vadd.f32 %v4756, %v4773
          %s4782 = sadd.s32 %s2866, 70
          %s4783 = sld [smem:[#allocation14 + %s4782]]
          %s4784 = sadd.s32 %s2866, 71
          %s4785 = sld [smem:[#allocation14 + %s4784]]
          %s4786 = sadd.s32 %s2866, 72
          %s4787 = sld [smem:[#allocation14 + %s4786]]
          %s4788 = sadd.s32 %s2866, 73
          %s4789 = sld [smem:[#allocation14 + %s4788]]
          %s4790 = sadd.s32 %s2866, 74
          %s4791 = sld [smem:[#allocation14 + %s4790]]
          %s4792 = scalar_lea.vmem [#allocation5], 224
          %v4793 = vld [vmem:[%s4792] sm:$0xf]
          %v4794 = vld [vmem:[%s4792 + $0x8] sm:$0xf]
          %v4795 = vld [vmem:[%s4792 + $0x10] sm:$0xf]
          %v4796 = vld [vmem:[%s4792 + $0x18] sm:$0xf]
          %v4797 = vld [vmem:[%s4792 + $0x20] sm:$0xf]
          %v4798 = vld [vmem:[%s4792 + $0x28] sm:$0xf]
          %v4799 = vld [vmem:[%s4792 + $0x30] sm:$0xf]
          %v4800 = vld [vmem:[%s4792 + $0x38] sm:$0xf]
          %v4801 = vstv %s4783
          %v4802 = vmul.f32 %v4801, %v4793
          %v4803 = vmul.f32 %v4801, %v4794
          %v4804 = vmul.f32 %v4801, %v4795
          %v4805 = vmul.f32 %v4801, %v4796
          %v4806 = vmul.f32 %v4801, %v4797
          %v4807 = vmul.f32 %v4801, %v4798
          %v4808 = vmul.f32 %v4801, %v4799
          %v4809 = vmul.f32 %v4801, %v4800
          %v4810 = vadd.f32 %v4774, %v4802
          %v4811 = vadd.f32 %v4775, %v4803
          %v4812 = vadd.f32 %v4776, %v4804
          %v4813 = vadd.f32 %v4777, %v4805
          %v4814 = vadd.f32 %v4778, %v4806
          %v4815 = vadd.f32 %v4779, %v4807
          %v4816 = vadd.f32 %v4780, %v4808
          %v4817 = vadd.f32 %v4781, %v4809
          %s4818 = scalar_lea.vmem [#allocation6], 224
          %v4819 = vld [vmem:[%s4818] sm:$0xf]
          %v4820 = vld [vmem:[%s4818 + $0x8] sm:$0xf]
          %v4821 = vld [vmem:[%s4818 + $0x10] sm:$0xf]
          %v4822 = vld [vmem:[%s4818 + $0x18] sm:$0xf]
          %v4823 = vld [vmem:[%s4818 + $0x20] sm:$0xf]
          %v4824 = vld [vmem:[%s4818 + $0x28] sm:$0xf]
          %v4825 = vld [vmem:[%s4818 + $0x30] sm:$0xf]
          %v4826 = vld [vmem:[%s4818 + $0x38] sm:$0xf]
          %v4827 = vstv %s4785
          %v4828 = vmul.f32 %v4827, %v4819
          %v4829 = vmul.f32 %v4827, %v4820
          %v4830 = vmul.f32 %v4827, %v4821
          %v4831 = vmul.f32 %v4827, %v4822
          %v4832 = vmul.f32 %v4827, %v4823
          %v4833 = vmul.f32 %v4827, %v4824
          %v4834 = vmul.f32 %v4827, %v4825
          %v4835 = vmul.f32 %v4827, %v4826
          %v4836 = vadd.f32 %v4810, %v4828
          %v4837 = vadd.f32 %v4811, %v4829
          %v4838 = vadd.f32 %v4812, %v4830
          %v4839 = vadd.f32 %v4813, %v4831
          %v4840 = vadd.f32 %v4814, %v4832
          %v4841 = vadd.f32 %v4815, %v4833
          %v4842 = vadd.f32 %v4816, %v4834
          %v4843 = vadd.f32 %v4817, %v4835
          %v4844 = vld [vmem:[%s4792 + $0x1] sm:$0xf]
          %v4845 = vld [vmem:[%s4792 + $0x9] sm:$0xf]
          %v4846 = vld [vmem:[%s4792 + $0x11] sm:$0xf]
          %v4847 = vld [vmem:[%s4792 + $0x19] sm:$0xf]
          %v4848 = vld [vmem:[%s4792 + $0x21] sm:$0xf]
          %v4849 = vld [vmem:[%s4792 + $0x29] sm:$0xf]
          %v4850 = vld [vmem:[%s4792 + $0x31] sm:$0xf]
          %v4851 = vld [vmem:[%s4792 + $0x39] sm:$0xf]
          %v4852 = vstv %s4787
          %v4853 = vmul.f32 %v4852, %v4844
          %v4854 = vmul.f32 %v4852, %v4845
          %v4855 = vmul.f32 %v4852, %v4846
          %v4856 = vmul.f32 %v4852, %v4847
          %v4857 = vmul.f32 %v4852, %v4848
          %v4858 = vmul.f32 %v4852, %v4849
          %v4859 = vmul.f32 %v4852, %v4850
          %v4860 = vmul.f32 %v4852, %v4851
          %v4861 = vadd.f32 %v4836, %v4853
          %v4862 = vadd.f32 %v4837, %v4854
          %v4863 = vadd.f32 %v4838, %v4855
          %v4864 = vadd.f32 %v4839, %v4856
          %v4865 = vadd.f32 %v4840, %v4857
          %v4866 = vadd.f32 %v4841, %v4858
          %v4867 = vadd.f32 %v4842, %v4859
          %v4868 = vadd.f32 %v4843, %v4860
          %v4869 = vld [vmem:[%s4818 + $0x1] sm:$0xf]
          %v4870 = vld [vmem:[%s4818 + $0x9] sm:$0xf]
          %v4871 = vld [vmem:[%s4818 + $0x11] sm:$0xf]
          %v4872 = vld [vmem:[%s4818 + $0x19] sm:$0xf]
          %v4873 = vld [vmem:[%s4818 + $0x21] sm:$0xf]
          %v4874 = vld [vmem:[%s4818 + $0x29] sm:$0xf]
          %v4875 = vld [vmem:[%s4818 + $0x31] sm:$0xf]
          %v4876 = vld [vmem:[%s4818 + $0x39] sm:$0xf]
          %v4877 = vstv %s4789
          %v4878 = vmul.f32 %v4877, %v4869
          %v4879 = vmul.f32 %v4877, %v4870
          %v4880 = vmul.f32 %v4877, %v4871
          %v4881 = vmul.f32 %v4877, %v4872
          %v4882 = vmul.f32 %v4877, %v4873
          %v4883 = vmul.f32 %v4877, %v4874
          %v4884 = vmul.f32 %v4877, %v4875
          %v4885 = vmul.f32 %v4877, %v4876
          %v4886 = vadd.f32 %v4861, %v4878
          %v4887 = vadd.f32 %v4862, %v4879
          %v4888 = vadd.f32 %v4863, %v4880
          %v4889 = vadd.f32 %v4864, %v4881
          %v4890 = vadd.f32 %v4865, %v4882
          %v4891 = vadd.f32 %v4866, %v4883
          %v4892 = vadd.f32 %v4867, %v4884
          %v4893 = vadd.f32 %v4868, %v4885
          %v4894 = vld [vmem:[%s4792 + $0x2] sm:$0xf]
          %v4895 = vld [vmem:[%s4792 + $0xa] sm:$0xf]
          %v4896 = vld [vmem:[%s4792 + $0x12] sm:$0xf]
          %v4897 = vld [vmem:[%s4792 + $0x1a] sm:$0xf]
          %v4898 = vld [vmem:[%s4792 + $0x22] sm:$0xf]
          %v4899 = vld [vmem:[%s4792 + $0x2a] sm:$0xf]
          %v4900 = vld [vmem:[%s4792 + $0x32] sm:$0xf]
          %v4901 = vld [vmem:[%s4792 + $0x3a] sm:$0xf]
          %v4902 = vstv %s4791
          %v4903 = vmul.f32 %v4902, %v4894
          %v4904 = vmul.f32 %v4902, %v4895
          %v4905 = vmul.f32 %v4902, %v4896
          %v4906 = vmul.f32 %v4902, %v4897
          %v4907 = vmul.f32 %v4902, %v4898
          %v4908 = vmul.f32 %v4902, %v4899
          %v4909 = vmul.f32 %v4902, %v4900
          %v4910 = vmul.f32 %v4902, %v4901
          %v4911 = vadd.f32 %v4886, %v4903
          %v4912 = vadd.f32 %v4887, %v4904
          %v4913 = vadd.f32 %v4888, %v4905
          %v4914 = vadd.f32 %v4889, %v4906
          %v4915 = vadd.f32 %v4890, %v4907
          %v4916 = vadd.f32 %v4891, %v4908
          %v4917 = vadd.f32 %v4892, %v4909
          %v4918 = vadd.f32 %v4893, %v4910
          %v4919 = vadd.f32 %v4911, %v4912
          %v4920 = vadd.f32 %v4913, %v4914
          %v4921 = vadd.f32 %v4915, %v4916
          %v4922 = vadd.f32 %v4917, %v4918
          %s4923 = sld [smem:[#allocation15 + %s2861]]
          %v4924 = vstv %s4923
          %v4925 = vadd.f32 %v4919, %v4924
          %v4926 = vadd.f32 %v4920, %v4924
          %v4927 = vadd.f32 %v4921, %v4924
          %v4928 = vadd.f32 %v4922, %v4924
          %s4929 = smul.u32 %s2861, 16
          %s4930 = scalar_lea.vmem [#allocation7], %s4929
          %4931 = vst [vmem:[%s4930] sm:$0xf] %v4925
          %s4932 = sadd.s32 %s4929, 4
          %s4933 = scalar_lea.vmem [#allocation7], %s4932
          %4934 = vst [vmem:[%s4933] sm:$0xf] %v4926
          %s4935 = sadd.s32 %s4929, 8
          %s4936 = scalar_lea.vmem [#allocation7], %s4935
          %4937 = vst [vmem:[%s4936] sm:$0xf] %v4927
          %s4938 = sadd.s32 %s4929, 12
          %s4939 = scalar_lea.vmem [#allocation7], %s4938
          %4940 = vst [vmem:[%s4939] sm:$0xf] %v4928
        $region129: #{tpu_custom_call.1} parent=89 // loop_footer
          %s2865 = sadd.s32 1, %s2861
        $region130: #{tpu_custom_call.1} parent=89 // loop_footer_branch
          %2860 = sbr.rel target = $region126
        $region131: #{tpu_custom_call.1} parent=89 // loop_exit
          _
        %v4941 = vld [vmem:[%s5] sm:$0xff]
        %v4942 = vld [vmem:[%s5 + $0x8] sm:$0xff]
        %v4943 = vld [vmem:[%s5 + $0x10] sm:$0xff]
        %v4944 = vld [vmem:[%s5 + $0x18] sm:$0xff]
        %v4945 = vld [vmem:[#allocation7] sm:$0xff]
        %v4946 = vld [vmem:[#allocation7 + $0x8] sm:$0xff]
        %v4947 = vld [vmem:[#allocation7 + $0x10] sm:$0xff]
        %v4948 = vld [vmem:[#allocation7 + $0x18] sm:$0xff]
        %v4949 = vld [vmem:[#allocation7 + $0x20] sm:$0xff]
        %v4950 = vld [vmem:[#allocation7 + $0x28] sm:$0xff]
        %v4951 = vld [vmem:[#allocation7 + $0x30] sm:$0xff]
        %v4952 = vld [vmem:[#allocation7 + $0x38] sm:$0xff]
        %v4953 = vld [vmem:[#allocation7 + $0x40] sm:$0xff]
        %v4954 = vld [vmem:[#allocation7 + $0x48] sm:$0xff]
        %v4955 = vld [vmem:[#allocation7 + $0x50] sm:$0xff]
        %v4956 = vld [vmem:[#allocation7 + $0x58] sm:$0xff]
        %v4957 = vld [vmem:[%s6] sm:$0xff]
        %v4958 = vld [vmem:[%s6 + $0x8] sm:$0xff]
        %v4959 = vld [vmem:[%s6 + $0x10] sm:$0xff]
        %v4960 = vld [vmem:[%s6 + $0x18] sm:$0xff]
        %4962 = vset.pattern.permute.xlu0 0
        %4963 = vperm.xlu0 %4962, %v4957
        %v4964 = vpop.permute.xlu0 %4963
        %4967 = vset.pattern.permute.xlu0 0
        %4968 = vperm.xlu0 %4967, %v4958
        %v4969 = vpop.permute.xlu0 %4968
        %4972 = vset.pattern.permute.xlu0 0
        %4973 = vperm.xlu0 %4972, %v4959
        %v4974 = vpop.permute.xlu0 %4973
        %4977 = vset.pattern.permute.xlu0 0
        %4978 = vperm.xlu0 %4977, %v4960
        %v4979 = vpop.permute.xlu0 %4978
        %vm4981 = vcmask 785408
        %v4983 = vsel %vm4981, %v4941, 0
        %v4986 = vsel %vm4981, %v4942, 0
        %v4989 = vsel %vm4981, %v4943, 0
        %v4992 = vsel %vm4981, %v4944, 0
        %4994 = vmatpush.msra.mxu0 0.0
        %4995 = vmatpush.msra.mxu0 0.0
        %4996 = vmatpush.msra.mxu0 0.0
        %4997 = vmatpush.msra.mxu0 0.0
        %v4998 = vand.u32 %v4956, 4294901760
        %4999 = vmatpush.msra.mxu0 %v4998
        %v5000 = vand.u32 %v4955, 4294901760
        %5001 = vmatpush.msra.mxu0 %v5000
        %v5002 = vand.u32 %v4954, 4294901760
        %5003 = vmatpush.msra.mxu0 %v5002
        %v5004 = vand.u32 %v4953, 4294901760
        %5005 = vmatpush.msra.mxu0 %v5004
        %v5006 = vand.u32 %v4952, 4294901760
        %5007 = vmatpush.msra.mxu0 %v5006
        %v5008 = vand.u32 %v4951, 4294901760
        %5009 = vmatpush.msra.mxu0 %v5008
        %v5010 = vand.u32 %v4950, 4294901760
        %5011 = vmatpush.msra.mxu0 %v5010
        %v5012 = vand.u32 %v4949, 4294901760
        %5013 = vmatpush.msra.mxu0 %v5012
        %v5014 = vand.u32 %v4948, 4294901760
        %5015 = vmatpush.msra.mxu0 %v5014
        %v5016 = vand.u32 %v4947, 4294901760
        %5017 = vmatpush.msra.mxu0 %v5016
        %v5018 = vand.u32 %v4946, 4294901760
        %5019 = vmatpush.msra.mxu0 %v5018
        %v5020 = vand.u32 %v4945, 4294901760
        %5021 = vmatpush.msra.mxu0 %v5020
        %v5022 = vand.u32 %v4983, 4294901760
        %v5023 = vsub.f32 %v4983, %v5022
        %v5024 = vand.u32 %v5023, 4294901760
        %v5025 = vsub.f32 %v5023, %v5024
        %v5026 = vand.u32 %v5025, 4294901760
        %5027 = vmatmul.f32.gmra.mxu0 %v5026
        %v5028 = vpop.f32.mrf.mxu0
        %v5029 = vadd.f32 %v4964, %v5028
        %v5030 = vand.u32 %v4986, 4294901760
        %v5031 = vsub.f32 %v4986, %v5030
        %v5032 = vand.u32 %v5031, 4294901760
        %v5033 = vsub.f32 %v5031, %v5032
        %v5034 = vand.u32 %v5033, 4294901760
        %5035 = vmatmul.f32.gmra.mxu0 %v5034
        %v5036 = vpop.f32.mrf.mxu0
        %v5037 = vadd.f32 %v4969, %v5036
        %v5038 = vand.u32 %v4989, 4294901760
        %v5039 = vsub.f32 %v4989, %v5038
        %v5040 = vand.u32 %v5039, 4294901760
        %v5041 = vsub.f32 %v5039, %v5040
        %v5042 = vand.u32 %v5041, 4294901760
        %5043 = vmatmul.f32.gmra.mxu0 %v5042
        %v5044 = vpop.f32.mrf.mxu0
        %v5045 = vadd.f32 %v4974, %v5044
        %v5046 = vand.u32 %v4992, 4294901760
        %v5047 = vsub.f32 %v4992, %v5046
        %v5048 = vand.u32 %v5047, 4294901760
        %v5049 = vsub.f32 %v5047, %v5048
        %v5050 = vand.u32 %v5049, 4294901760
        %5051 = vmatmul.f32.gmra.mxu0 %v5050
        %v5052 = vpop.f32.mrf.mxu0
        %v5053 = vadd.f32 %v4979, %v5052
        %5054 = vdwg.mxu0
        %5055 = vmatpush.msra.mxu0 0.0
        %5056 = vmatpush.msra.mxu0 0.0
        %5057 = vmatpush.msra.mxu0 0.0
        %5058 = vmatpush.msra.mxu0 0.0
        %v5059 = vand.u32 %v4956, 4294901760
        %v5060 = vsub.f32 %v4956, %v5059
        %v5061 = vand.u32 %v5060, 4294901760
        %v5062 = vsub.f32 %v5060, %v5061
        %v5063 = vand.u32 %v5062, 4294901760
        %5064 = vmatpush.msra.mxu0 %v5063
        %v5065 = vand.u32 %v4955, 4294901760
        %v5066 = vsub.f32 %v4955, %v5065
        %v5067 = vand.u32 %v5066, 4294901760
        %v5068 = vsub.f32 %v5066, %v5067
        %v5069 = vand.u32 %v5068, 4294901760
        %5070 = vmatpush.msra.mxu0 %v5069
        %v5071 = vand.u32 %v4954, 4294901760
        %v5072 = vsub.f32 %v4954, %v5071
        %v5073 = vand.u32 %v5072, 4294901760
        %v5074 = vsub.f32 %v5072, %v5073
        %v5075 = vand.u32 %v5074, 4294901760
        %5076 = vmatpush.msra.mxu0 %v5075
        %v5077 = vand.u32 %v4953, 4294901760
        %v5078 = vsub.f32 %v4953, %v5077
        %v5079 = vand.u32 %v5078, 4294901760
        %v5080 = vsub.f32 %v5078, %v5079
        %v5081 = vand.u32 %v5080, 4294901760
        %5082 = vmatpush.msra.mxu0 %v5081
        %v5083 = vand.u32 %v4952, 4294901760
        %v5084 = vsub.f32 %v4952, %v5083
        %v5085 = vand.u32 %v5084, 4294901760
        %v5086 = vsub.f32 %v5084, %v5085
        %v5087 = vand.u32 %v5086, 4294901760
        %5088 = vmatpush.msra.mxu0 %v5087
        %v5089 = vand.u32 %v4951, 4294901760
        %v5090 = vsub.f32 %v4951, %v5089
        %v5091 = vand.u32 %v5090, 4294901760
        %v5092 = vsub.f32 %v5090, %v5091
        %v5093 = vand.u32 %v5092, 4294901760
        %5094 = vmatpush.msra.mxu0 %v5093
        %v5095 = vand.u32 %v4950, 4294901760
        %v5096 = vsub.f32 %v4950, %v5095
        %v5097 = vand.u32 %v5096, 4294901760
        %v5098 = vsub.f32 %v5096, %v5097
        %v5099 = vand.u32 %v5098, 4294901760
        %5100 = vmatpush.msra.mxu0 %v5099
        %v5101 = vand.u32 %v4949, 4294901760
        %v5102 = vsub.f32 %v4949, %v5101
        %v5103 = vand.u32 %v5102, 4294901760
        %v5104 = vsub.f32 %v5102, %v5103
        %v5105 = vand.u32 %v5104, 4294901760
        %5106 = vmatpush.msra.mxu0 %v5105
        %v5107 = vand.u32 %v4948, 4294901760
        %v5108 = vsub.f32 %v4948, %v5107
        %v5109 = vand.u32 %v5108, 4294901760
        %v5110 = vsub.f32 %v5108, %v5109
        %v5111 = vand.u32 %v5110, 4294901760
        %5112 = vmatpush.msra.mxu0 %v5111
        %v5113 = vand.u32 %v4947, 4294901760
        %v5114 = vsub.f32 %v4947, %v5113
        %v5115 = vand.u32 %v5114, 4294901760
        %v5116 = vsub.f32 %v5114, %v5115
        %v5117 = vand.u32 %v5116, 4294901760
        %5118 = vmatpush.msra.mxu0 %v5117
        %v5119 = vand.u32 %v4946, 4294901760
        %v5120 = vsub.f32 %v4946, %v5119
        %v5121 = vand.u32 %v5120, 4294901760
        %v5122 = vsub.f32 %v5120, %v5121
        %v5123 = vand.u32 %v5122, 4294901760
        %5124 = vmatpush.msra.mxu0 %v5123
        %v5125 = vand.u32 %v4945, 4294901760
        %v5126 = vsub.f32 %v4945, %v5125
        %v5127 = vand.u32 %v5126, 4294901760
        %v5128 = vsub.f32 %v5126, %v5127
        %v5129 = vand.u32 %v5128, 4294901760
        %5130 = vmatpush.msra.mxu0 %v5129
        %v5131 = vand.u32 %v4983, 4294901760
        %5132 = vmatmul.f32.gmra.mxu0 %v5131
        %v5133 = vpop.f32.mrf.mxu0
        %v5134 = vadd.f32 %v5029, %v5133
        %v5135 = vand.u32 %v4986, 4294901760
        %5136 = vmatmul.f32.gmra.mxu0 %v5135
        %v5137 = vpop.f32.mrf.mxu0
        %v5138 = vadd.f32 %v5037, %v5137
        %v5139 = vand.u32 %v4989, 4294901760
        %5140 = vmatmul.f32.gmra.mxu0 %v5139
        %v5141 = vpop.f32.mrf.mxu0
        %v5142 = vadd.f32 %v5045, %v5141
        %v5143 = vand.u32 %v4992, 4294901760
        %5144 = vmatmul.f32.gmra.mxu0 %v5143
        %v5145 = vpop.f32.mrf.mxu0
        %v5146 = vadd.f32 %v5053, %v5145
        %5147 = vdwg.mxu0
        %5148 = vmatpush.msra.mxu0 0.0
        %5149 = vmatpush.msra.mxu0 0.0
        %5150 = vmatpush.msra.mxu0 0.0
        %5151 = vmatpush.msra.mxu0 0.0
        %v5152 = vand.u32 %v4956, 4294901760
        %v5153 = vsub.f32 %v4956, %v5152
        %5154 = vmatpush.msra.mxu0 %v5153
        %v5155 = vand.u32 %v4955, 4294901760
        %v5156 = vsub.f32 %v4955, %v5155
        %5157 = vmatpush.msra.mxu0 %v5156
        %v5158 = vand.u32 %v4954, 4294901760
        %v5159 = vsub.f32 %v4954, %v5158
        %5160 = vmatpush.msra.mxu0 %v5159
        %v5161 = vand.u32 %v4953, 4294901760
        %v5162 = vsub.f32 %v4953, %v5161
        %5163 = vmatpush.msra.mxu0 %v5162
        %v5164 = vand.u32 %v4952, 4294901760
        %v5165 = vsub.f32 %v4952, %v5164
        %5166 = vmatpush.msra.mxu0 %v5165
        %v5167 = vand.u32 %v4951, 4294901760
        %v5168 = vsub.f32 %v4951, %v5167
        %5169 = vmatpush.msra.mxu0 %v5168
        %v5170 = vand.u32 %v4950, 4294901760
        %v5171 = vsub.f32 %v4950, %v5170
        %5172 = vmatpush.msra.mxu0 %v5171
        %v5173 = vand.u32 %v4949, 4294901760
        %v5174 = vsub.f32 %v4949, %v5173
        %5175 = vmatpush.msra.mxu0 %v5174
        %v5176 = vand.u32 %v4948, 4294901760
        %v5177 = vsub.f32 %v4948, %v5176
        %5178 = vmatpush.msra.mxu0 %v5177
        %v5179 = vand.u32 %v4947, 4294901760
        %v5180 = vsub.f32 %v4947, %v5179
        %5181 = vmatpush.msra.mxu0 %v5180
        %v5182 = vand.u32 %v4946, 4294901760
        %v5183 = vsub.f32 %v4946, %v5182
        %5184 = vmatpush.msra.mxu0 %v5183
        %v5185 = vand.u32 %v4945, 4294901760
        %v5186 = vsub.f32 %v4945, %v5185
        %5187 = vmatpush.msra.mxu0 %v5186
        %v5188 = vand.u32 %v4983, 4294901760
        %v5189 = vsub.f32 %v4983, %v5188
        %5190 = vmatmul.f32.gmra.mxu0 %v5189
        %v5191 = vpop.f32.mrf.mxu0
        %v5192 = vadd.f32 %v5134, %v5191
        %v5193 = vand.u32 %v4986, 4294901760
        %v5194 = vsub.f32 %v4986, %v5193
        %5195 = vmatmul.f32.gmra.mxu0 %v5194
        %v5196 = vpop.f32.mrf.mxu0
        %v5197 = vadd.f32 %v5138, %v5196
        %v5198 = vand.u32 %v4989, 4294901760
        %v5199 = vsub.f32 %v4989, %v5198
        %5200 = vmatmul.f32.gmra.mxu0 %v5199
        %v5201 = vpop.f32.mrf.mxu0
        %v5202 = vadd.f32 %v5142, %v5201
        %v5203 = vand.u32 %v4992, 4294901760
        %v5204 = vsub.f32 %v4992, %v5203
        %5205 = vmatmul.f32.gmra.mxu0 %v5204
        %v5206 = vpop.f32.mrf.mxu0
        %v5207 = vadd.f32 %v5146, %v5206
        %5208 = vdwg.mxu0
        %5209 = vmatpush.msra.mxu0 0.0
        %5210 = vmatpush.msra.mxu0 0.0
        %5211 = vmatpush.msra.mxu0 0.0
        %5212 = vmatpush.msra.mxu0 0.0
        %v5213 = vand.u32 %v4956, 4294901760
        %5214 = vmatpush.msra.mxu0 %v5213
        %v5215 = vand.u32 %v4955, 4294901760
        %5216 = vmatpush.msra.mxu0 %v5215
        %v5217 = vand.u32 %v4954, 4294901760
        %5218 = vmatpush.msra.mxu0 %v5217
        %v5219 = vand.u32 %v4953, 4294901760
        %5220 = vmatpush.msra.mxu0 %v5219
        %v5221 = vand.u32 %v4952, 4294901760
        %5222 = vmatpush.msra.mxu0 %v5221
        %v5223 = vand.u32 %v4951, 4294901760
        %5224 = vmatpush.msra.mxu0 %v5223
        %v5225 = vand.u32 %v4950, 4294901760
        %5226 = vmatpush.msra.mxu0 %v5225
        %v5227 = vand.u32 %v4949, 4294901760
        %5228 = vmatpush.msra.mxu0 %v5227
        %v5229 = vand.u32 %v4948, 4294901760
        %5230 = vmatpush.msra.mxu0 %v5229
        %v5231 = vand.u32 %v4947, 4294901760
        %5232 = vmatpush.msra.mxu0 %v5231
        %v5233 = vand.u32 %v4946, 4294901760
        %5234 = vmatpush.msra.mxu0 %v5233
        %v5235 = vand.u32 %v4945, 4294901760
        %5236 = vmatpush.msra.mxu0 %v5235
        %v5237 = vand.u32 %v4983, 4294901760
        %v5238 = vsub.f32 %v4983, %v5237
        %v5239 = vand.u32 %v5238, 4294901760
        %5240 = vmatmul.f32.gmra.mxu0 %v5239
        %v5241 = vpop.f32.mrf.mxu0
        %v5242 = vadd.f32 %v5192, %v5241
        %v5243 = vand.u32 %v4986, 4294901760
        %v5244 = vsub.f32 %v4986, %v5243
        %v5245 = vand.u32 %v5244, 4294901760
        %5246 = vmatmul.f32.gmra.mxu0 %v5245
        %v5247 = vpop.f32.mrf.mxu0
        %v5248 = vadd.f32 %v5197, %v5247
        %v5249 = vand.u32 %v4989, 4294901760
        %v5250 = vsub.f32 %v4989, %v5249
        %v5251 = vand.u32 %v5250, 4294901760
        %5252 = vmatmul.f32.gmra.mxu0 %v5251
        %v5253 = vpop.f32.mrf.mxu0
        %v5254 = vadd.f32 %v5202, %v5253
        %v5255 = vand.u32 %v4992, 4294901760
        %v5256 = vsub.f32 %v4992, %v5255
        %v5257 = vand.u32 %v5256, 4294901760
        %5258 = vmatmul.f32.gmra.mxu0 %v5257
        %v5259 = vpop.f32.mrf.mxu0
        %v5260 = vadd.f32 %v5207, %v5259
        %5261 = vdwg.mxu0
        %5262 = vmatpush.msra.mxu0 0.0
        %5263 = vmatpush.msra.mxu0 0.0
        %5264 = vmatpush.msra.mxu0 0.0
        %5265 = vmatpush.msra.mxu0 0.0
        %v5266 = vand.u32 %v4956, 4294901760
        %v5267 = vsub.f32 %v4956, %v5266
        %v5268 = vand.u32 %v5267, 4294901760
        %5269 = vmatpush.msra.mxu0 %v5268
        %v5270 = vand.u32 %v4955, 4294901760
        %v5271 = vsub.f32 %v4955, %v5270
        %v5272 = vand.u32 %v5271, 4294901760
        %5273 = vmatpush.msra.mxu0 %v5272
        %v5274 = vand.u32 %v4954, 4294901760
        %v5275 = vsub.f32 %v4954, %v5274
        %v5276 = vand.u32 %v5275, 4294901760
        %5277 = vmatpush.msra.mxu0 %v5276
        %v5278 = vand.u32 %v4953, 4294901760
        %v5279 = vsub.f32 %v4953, %v5278
        %v5280 = vand.u32 %v5279, 4294901760
        %5281 = vmatpush.msra.mxu0 %v5280
        %v5282 = vand.u32 %v4952, 4294901760
        %v5283 = vsub.f32 %v4952, %v5282
        %v5284 = vand.u32 %v5283, 4294901760
        %5285 = vmatpush.msra.mxu0 %v5284
        %v5286 = vand.u32 %v4951, 4294901760
        %v5287 = vsub.f32 %v4951, %v5286
        %v5288 = vand.u32 %v5287, 4294901760
        %5289 = vmatpush.msra.mxu0 %v5288
        %v5290 = vand.u32 %v4950, 4294901760
        %v5291 = vsub.f32 %v4950, %v5290
        %v5292 = vand.u32 %v5291, 4294901760
        %5293 = vmatpush.msra.mxu0 %v5292
        %v5294 = vand.u32 %v4949, 4294901760
        %v5295 = vsub.f32 %v4949, %v5294
        %v5296 = vand.u32 %v5295, 4294901760
        %5297 = vmatpush.msra.mxu0 %v5296
        %v5298 = vand.u32 %v4948, 4294901760
        %v5299 = vsub.f32 %v4948, %v5298
        %v5300 = vand.u32 %v5299, 4294901760
        %5301 = vmatpush.msra.mxu0 %v5300
        %v5302 = vand.u32 %v4947, 4294901760
        %v5303 = vsub.f32 %v4947, %v5302
        %v5304 = vand.u32 %v5303, 4294901760
        %5305 = vmatpush.msra.mxu0 %v5304
        %v5306 = vand.u32 %v4946, 4294901760
        %v5307 = vsub.f32 %v4946, %v5306
        %v5308 = vand.u32 %v5307, 4294901760
        %5309 = vmatpush.msra.mxu0 %v5308
        %v5310 = vand.u32 %v4945, 4294901760
        %v5311 = vsub.f32 %v4945, %v5310
        %v5312 = vand.u32 %v5311, 4294901760
        %5313 = vmatpush.msra.mxu0 %v5312
        %v5314 = vand.u32 %v4983, 4294901760
        %5315 = vmatmul.f32.gmra.mxu0 %v5314
        %v5316 = vpop.f32.mrf.mxu0
        %v5317 = vadd.f32 %v5242, %v5316
        %v5318 = vand.u32 %v4986, 4294901760
        %5319 = vmatmul.f32.gmra.mxu0 %v5318
        %v5320 = vpop.f32.mrf.mxu0
        %v5321 = vadd.f32 %v5248, %v5320
        %v5322 = vand.u32 %v4989, 4294901760
        %5323 = vmatmul.f32.gmra.mxu0 %v5322
        %v5324 = vpop.f32.mrf.mxu0
        %v5325 = vadd.f32 %v5254, %v5324
        %v5326 = vand.u32 %v4992, 4294901760
        %5327 = vmatmul.f32.gmra.mxu0 %v5326
        %v5328 = vpop.f32.mrf.mxu0
        %v5329 = vadd.f32 %v5260, %v5328
        %5330 = vdwg.mxu0
        %5331 = vmatpush.msra.mxu0 0.0
        %5332 = vmatpush.msra.mxu0 0.0
        %5333 = vmatpush.msra.mxu0 0.0
        %5334 = vmatpush.msra.mxu0 0.0
        %v5335 = vand.u32 %v4956, 4294901760
        %5336 = vmatpush.msra.mxu0 %v5335
        %v5337 = vand.u32 %v4955, 4294901760
        %5338 = vmatpush.msra.mxu0 %v5337
        %v5339 = vand.u32 %v4954, 4294901760
        %5340 = vmatpush.msra.mxu0 %v5339
        %v5341 = vand.u32 %v4953, 4294901760
        %5342 = vmatpush.msra.mxu0 %v5341
        %v5343 = vand.u32 %v4952, 4294901760
        %5344 = vmatpush.msra.mxu0 %v5343
        %v5345 = vand.u32 %v4951, 4294901760
        %5346 = vmatpush.msra.mxu0 %v5345
        %v5347 = vand.u32 %v4950, 4294901760
        %5348 = vmatpush.msra.mxu0 %v5347
        %v5349 = vand.u32 %v4949, 4294901760
        %5350 = vmatpush.msra.mxu0 %v5349
        %v5351 = vand.u32 %v4948, 4294901760
        %5352 = vmatpush.msra.mxu0 %v5351
        %v5353 = vand.u32 %v4947, 4294901760
        %5354 = vmatpush.msra.mxu0 %v5353
        %v5355 = vand.u32 %v4946, 4294901760
        %5356 = vmatpush.msra.mxu0 %v5355
        %v5357 = vand.u32 %v4945, 4294901760
        %5358 = vmatpush.msra.mxu0 %v5357
        %v5359 = vand.u32 %v4983, 4294901760
        %5360 = vmatmul.f32.gmra.mxu0 %v5359
        %v5361 = vpop.f32.mrf.mxu0
        %v5362 = vadd.f32 %v5317, %v5361
        %v5363 = vand.u32 %v4986, 4294901760
        %5364 = vmatmul.f32.gmra.mxu0 %v5363
        %v5365 = vpop.f32.mrf.mxu0
        %v5366 = vadd.f32 %v5321, %v5365
        %v5367 = vand.u32 %v4989, 4294901760
        %5368 = vmatmul.f32.gmra.mxu0 %v5367
        %v5369 = vpop.f32.mrf.mxu0
        %v5370 = vadd.f32 %v5325, %v5369
        %v5371 = vand.u32 %v4992, 4294901760
        %5372 = vmatmul.f32.gmra.mxu0 %v5371
        %v5373 = vpop.f32.mrf.mxu0
        %v5374 = vadd.f32 %v5329, %v5373
        %5375 = vdwg.mxu0
        %v5376 = vmax.f32 %v5362, 0.0
        %v5377 = vmax.f32 %v5366, 0.0
        %v5378 = vmax.f32 %v5370, 0.0
        %v5379 = vmax.f32 %v5374, 0.0
        %v5380 = vld [vmem:[%s7] sm:$0xff]
        %v5381 = vld [vmem:[%s7 + $0x8] sm:$0x3]
        %v5382 = vld [vmem:[%s8] sm:$0xff]
        %v5383 = vld [vmem:[%s8 + $0x8] sm:$0x3]
        %5385 = vset.pattern.permute.xlu0 0
        %5386 = vperm.xlu0 %5385, %v5382
        %v5387 = vpop.permute.xlu0 %5386
        %5390 = vset.pattern.permute.xlu0 0
        %5391 = vperm.xlu0 %5390, %v5383
        %v5392 = vpop.permute.xlu0 %5391
        %vm5394 = vcmask 261120
        %v5396 = vsel %vm5394, %v5380, 0
        %v5399 = vsel %vm5394, %v5381, 0
        %5401 = vmatpush.msra.mxu0 0.0
        %5402 = vmatpush.msra.mxu0 0.0
        %5403 = vmatpush.msra.mxu0 0.0
        %5404 = vmatpush.msra.mxu0 0.0
        %5405 = vmatpush.msra.mxu0 0.0
        %5406 = vmatpush.msra.mxu0 0.0
        %5407 = vmatpush.msra.mxu0 0.0
        %5408 = vmatpush.msra.mxu0 0.0
        %5409 = vmatpush.msra.mxu0 0.0
        %5410 = vmatpush.msra.mxu0 0.0
        %5411 = vmatpush.msra.mxu0 0.0
        %5412 = vmatpush.msra.mxu0 0.0
        %v5413 = vand.u32 %v5379, 4294901760
        %5414 = vmatpush.msra.mxu0 %v5413
        %v5415 = vand.u32 %v5378, 4294901760
        %5416 = vmatpush.msra.mxu0 %v5415
        %v5417 = vand.u32 %v5377, 4294901760
        %5418 = vmatpush.msra.mxu0 %v5417
        %v5419 = vand.u32 %v5376, 4294901760
        %5420 = vmatpush.msra.mxu0 %v5419
        %v5421 = vand.u32 %v5396, 4294901760
        %v5422 = vsub.f32 %v5396, %v5421
        %v5423 = vand.u32 %v5422, 4294901760
        %v5424 = vsub.f32 %v5422, %v5423
        %v5425 = vand.u32 %v5424, 4294901760
        %5426 = vmatmul.f32.gmra.mxu0 %v5425
        %v5427 = vpop.f32.mrf.mxu0
        %v5428 = vadd.f32 %v5387, %v5427
        %v5429 = vand.u32 %v5399, 4294901760
        %v5430 = vsub.f32 %v5399, %v5429
        %v5431 = vand.u32 %v5430, 4294901760
        %v5432 = vsub.f32 %v5430, %v5431
        %v5433 = vand.u32 %v5432, 4294901760
        %5434 = vmatmul.f32.gmra.mxu0 %v5433
        %v5435 = vpop.f32.mrf.mxu0
        %v5436 = vadd.f32 %v5392, %v5435
        %5437 = vdwg.mxu0
        %5438 = vmatpush.msra.mxu0 0.0
        %5439 = vmatpush.msra.mxu0 0.0
        %5440 = vmatpush.msra.mxu0 0.0
        %5441 = vmatpush.msra.mxu0 0.0
        %5442 = vmatpush.msra.mxu0 0.0
        %5443 = vmatpush.msra.mxu0 0.0
        %5444 = vmatpush.msra.mxu0 0.0
        %5445 = vmatpush.msra.mxu0 0.0
        %5446 = vmatpush.msra.mxu0 0.0
        %5447 = vmatpush.msra.mxu0 0.0
        %5448 = vmatpush.msra.mxu0 0.0
        %5449 = vmatpush.msra.mxu0 0.0
        %v5450 = vand.u32 %v5379, 4294901760
        %v5451 = vsub.f32 %v5379, %v5450
        %v5452 = vand.u32 %v5451, 4294901760
        %v5453 = vsub.f32 %v5451, %v5452
        %v5454 = vand.u32 %v5453, 4294901760
        %5455 = vmatpush.msra.mxu0 %v5454
        %v5456 = vand.u32 %v5378, 4294901760
        %v5457 = vsub.f32 %v5378, %v5456
        %v5458 = vand.u32 %v5457, 4294901760
        %v5459 = vsub.f32 %v5457, %v5458
        %v5460 = vand.u32 %v5459, 4294901760
        %5461 = vmatpush.msra.mxu0 %v5460
        %v5462 = vand.u32 %v5377, 4294901760
        %v5463 = vsub.f32 %v5377, %v5462
        %v5464 = vand.u32 %v5463, 4294901760
        %v5465 = vsub.f32 %v5463, %v5464
        %v5466 = vand.u32 %v5465, 4294901760
        %5467 = vmatpush.msra.mxu0 %v5466
        %v5468 = vand.u32 %v5376, 4294901760
        %v5469 = vsub.f32 %v5376, %v5468
        %v5470 = vand.u32 %v5469, 4294901760
        %v5471 = vsub.f32 %v5469, %v5470
        %v5472 = vand.u32 %v5471, 4294901760
        %5473 = vmatpush.msra.mxu0 %v5472
        %v5474 = vand.u32 %v5396, 4294901760
        %5475 = vmatmul.f32.gmra.mxu0 %v5474
        %v5476 = vpop.f32.mrf.mxu0
        %v5477 = vadd.f32 %v5428, %v5476
        %v5478 = vand.u32 %v5399, 4294901760
        %5479 = vmatmul.f32.gmra.mxu0 %v5478
        %v5480 = vpop.f32.mrf.mxu0
        %v5481 = vadd.f32 %v5436, %v5480
        %5482 = vdwg.mxu0
        %5483 = vmatpush.msra.mxu0 0.0
        %5484 = vmatpush.msra.mxu0 0.0
        %5485 = vmatpush.msra.mxu0 0.0
        %5486 = vmatpush.msra.mxu0 0.0
        %5487 = vmatpush.msra.mxu0 0.0
        %5488 = vmatpush.msra.mxu0 0.0
        %5489 = vmatpush.msra.mxu0 0.0
        %5490 = vmatpush.msra.mxu0 0.0
        %5491 = vmatpush.msra.mxu0 0.0
        %5492 = vmatpush.msra.mxu0 0.0
        %5493 = vmatpush.msra.mxu0 0.0
        %5494 = vmatpush.msra.mxu0 0.0
        %v5495 = vand.u32 %v5379, 4294901760
        %v5496 = vsub.f32 %v5379, %v5495
        %5497 = vmatpush.msra.mxu0 %v5496
        %v5498 = vand.u32 %v5378, 4294901760
        %v5499 = vsub.f32 %v5378, %v5498
        %5500 = vmatpush.msra.mxu0 %v5499
        %v5501 = vand.u32 %v5377, 4294901760
        %v5502 = vsub.f32 %v5377, %v5501
        %5503 = vmatpush.msra.mxu0 %v5502
        %v5504 = vand.u32 %v5376, 4294901760
        %v5505 = vsub.f32 %v5376, %v5504
        %5506 = vmatpush.msra.mxu0 %v5505
        %v5507 = vand.u32 %v5396, 4294901760
        %v5508 = vsub.f32 %v5396, %v5507
        %5509 = vmatmul.f32.gmra.mxu0 %v5508
        %v5510 = vpop.f32.mrf.mxu0
        %v5511 = vadd.f32 %v5477, %v5510
        %v5512 = vand.u32 %v5399, 4294901760
        %v5513 = vsub.f32 %v5399, %v5512
        %5514 = vmatmul.f32.gmra.mxu0 %v5513
        %v5515 = vpop.f32.mrf.mxu0
        %v5516 = vadd.f32 %v5481, %v5515
        %5517 = vdwg.mxu0
        %5518 = vmatpush.msra.mxu0 0.0
        %5519 = vmatpush.msra.mxu0 0.0
        %5520 = vmatpush.msra.mxu0 0.0
        %5521 = vmatpush.msra.mxu0 0.0
        %5522 = vmatpush.msra.mxu0 0.0
        %5523 = vmatpush.msra.mxu0 0.0
        %5524 = vmatpush.msra.mxu0 0.0
        %5525 = vmatpush.msra.mxu0 0.0
        %5526 = vmatpush.msra.mxu0 0.0
        %5527 = vmatpush.msra.mxu0 0.0
        %5528 = vmatpush.msra.mxu0 0.0
        %5529 = vmatpush.msra.mxu0 0.0
        %v5530 = vand.u32 %v5379, 4294901760
        %5531 = vmatpush.msra.mxu0 %v5530
        %v5532 = vand.u32 %v5378, 4294901760
        %5533 = vmatpush.msra.mxu0 %v5532
        %v5534 = vand.u32 %v5377, 4294901760
        %5535 = vmatpush.msra.mxu0 %v5534
        %v5536 = vand.u32 %v5376, 4294901760
        %5537 = vmatpush.msra.mxu0 %v5536
        %v5538 = vand.u32 %v5396, 4294901760
        %v5539 = vsub.f32 %v5396, %v5538
        %v5540 = vand.u32 %v5539, 4294901760
        %5541 = vmatmul.f32.gmra.mxu0 %v5540
        %v5542 = vpop.f32.mrf.mxu0
        %v5543 = vadd.f32 %v5511, %v5542
        %v5544 = vand.u32 %v5399, 4294901760
        %v5545 = vsub.f32 %v5399, %v5544
        %v5546 = vand.u32 %v5545, 4294901760
        %5547 = vmatmul.f32.gmra.mxu0 %v5546
        %v5548 = vpop.f32.mrf.mxu0
        %v5549 = vadd.f32 %v5516, %v5548
        %5550 = vdwg.mxu0
        %5551 = vmatpush.msra.mxu0 0.0
        %5552 = vmatpush.msra.mxu0 0.0
        %5553 = vmatpush.msra.mxu0 0.0
        %5554 = vmatpush.msra.mxu0 0.0
        %5555 = vmatpush.msra.mxu0 0.0
        %5556 = vmatpush.msra.mxu0 0.0
        %5557 = vmatpush.msra.mxu0 0.0
        %5558 = vmatpush.msra.mxu0 0.0
        %5559 = vmatpush.msra.mxu0 0.0
        %5560 = vmatpush.msra.mxu0 0.0
        %5561 = vmatpush.msra.mxu0 0.0
        %5562 = vmatpush.msra.mxu0 0.0
        %v5563 = vand.u32 %v5379, 4294901760
        %v5564 = vsub.f32 %v5379, %v5563
        %v5565 = vand.u32 %v5564, 4294901760
        %5566 = vmatpush.msra.mxu0 %v5565
        %v5567 = vand.u32 %v5378, 4294901760
        %v5568 = vsub.f32 %v5378, %v5567
        %v5569 = vand.u32 %v5568, 4294901760
        %5570 = vmatpush.msra.mxu0 %v5569
        %v5571 = vand.u32 %v5377, 4294901760
        %v5572 = vsub.f32 %v5377, %v5571
        %v5573 = vand.u32 %v5572, 4294901760
        %5574 = vmatpush.msra.mxu0 %v5573
        %v5575 = vand.u32 %v5376, 4294901760
        %v5576 = vsub.f32 %v5376, %v5575
        %v5577 = vand.u32 %v5576, 4294901760
        %5578 = vmatpush.msra.mxu0 %v5577
        %v5579 = vand.u32 %v5396, 4294901760
        %5580 = vmatmul.f32.gmra.mxu0 %v5579
        %v5581 = vpop.f32.mrf.mxu0
        %v5582 = vadd.f32 %v5543, %v5581
        %v5583 = vand.u32 %v5399, 4294901760
        %5584 = vmatmul.f32.gmra.mxu0 %v5583
        %v5585 = vpop.f32.mrf.mxu0
        %v5586 = vadd.f32 %v5549, %v5585
        %5587 = vdwg.mxu0
        %5588 = vmatpush.msra.mxu0 0.0
        %5589 = vmatpush.msra.mxu0 0.0
        %5590 = vmatpush.msra.mxu0 0.0
        %5591 = vmatpush.msra.mxu0 0.0
        %5592 = vmatpush.msra.mxu0 0.0
        %5593 = vmatpush.msra.mxu0 0.0
        %5594 = vmatpush.msra.mxu0 0.0
        %5595 = vmatpush.msra.mxu0 0.0
        %5596 = vmatpush.msra.mxu0 0.0
        %5597 = vmatpush.msra.mxu0 0.0
        %5598 = vmatpush.msra.mxu0 0.0
        %5599 = vmatpush.msra.mxu0 0.0
        %v5600 = vand.u32 %v5379, 4294901760
        %5601 = vmatpush.msra.mxu0 %v5600
        %v5602 = vand.u32 %v5378, 4294901760
        %5603 = vmatpush.msra.mxu0 %v5602
        %v5604 = vand.u32 %v5377, 4294901760
        %5605 = vmatpush.msra.mxu0 %v5604
        %v5606 = vand.u32 %v5376, 4294901760
        %5607 = vmatpush.msra.mxu0 %v5606
        %v5608 = vand.u32 %v5396, 4294901760
        %5609 = vmatmul.f32.gmra.mxu0 %v5608
        %v5610 = vpop.f32.mrf.mxu0
        %v5611 = vadd.f32 %v5582, %v5610
        %v5612 = vand.u32 %v5399, 4294901760
        %5613 = vmatmul.f32.gmra.mxu0 %v5612
        %v5614 = vpop.f32.mrf.mxu0
        %v5615 = vadd.f32 %v5586, %v5614
        %5616 = vdwg.mxu0
        %vm5617 = vcmask 1041408
        %v5618 = vsel %vm5617, %v5615, -inf
        %v5619 = vmax.f32 %v5611, %v5618
        %v5620 = vrot.slane %v5619, 4
        %v5621 = vmax.f32 %v5619, %v5620
        %v5622 = vrot.slane %v5621, 2
        %v5623 = vmax.f32 %v5621, %v5622
        %v5624 = vrot.slane %v5623, 1
        %v5625 = vmax.f32 %v5623, %v5624
        %v5626 = vsub.f32 %v5611, %v5625
        %v5627 = vsub.f32 %v5615, %v5625
        %v5628 = vmul.f32 %v5626, 1.442695
        %v5629 = vpow.pop %v5628
        %v5630 = vmul.f32 %v5627, 1.442695
        %v5631 = vpow.pop %v5630
        %v5632 = vsel %vm5617, %v5631, 0.0
        %v5633 = vadd.f32 %v5629, %v5632
        %v5634 = vrot.slane %v5633, 4
        %v5635 = vadd.f32 %v5633, %v5634
        %v5636 = vrot.slane %v5635, 2
        %v5637 = vadd.f32 %v5635, %v5636
        %v5638 = vrot.slane %v5637, 1
        %v5639 = vadd.f32 %v5637, %v5638
        %v5640 = vlog2.pop %v5639
        %v5641 = vmul.f32 %v5640, 0.6931472
        %v5642 = vsub.f32 %v5626, %v5641
        %v5643 = vsub.f32 %v5627, %v5641
        %5644 = vst [vmem:[%s861] sm:$0xff] %v5642
        %5645 = vst [vmem:[%s861 + $0x8] sm:$0x3] %v5643
        %s5646 = sand.u32 %s228, 1
        %s5647 = scalar_lea.sflag [#allocation10], %s5646
        %s5648 = sand.u32 %s228, 1
        %s5649 = smul.addr %s5648, 16
        %s5650 = scalar_lea.vmem [#allocation17], %s5649
        // Predicated region
        $region132: #{tpu_custom_call.1} parent=89 // pred_check
          %p5651 = pneg %p238
        $region133: #{tpu_custom_call.1} parent=89 // pred_check_branch
          %5653 = sbr.rel (%p5651) target = $region135
        $region134: #{tpu_custom_call.1} parent=89 // pred_region
          %5655 = vsyncadd %s5647, 0
          %s5656 = smul.addr %s26, 8
          %s5657 = scalar_lea.hbm %s9, %s5656
          %s5658 = sshll.u32 %s5650, 4
          %s5659 = int_to_ptr.vmem [resolvable:$true] %s5658
          %s5660 = sshll.u32 %s5657, 4
          %s5661 = int_to_ptr.hbm [resolvable:$true] %s5660
          %5666 = dma.vmem_to_hbm [thread:$0]  %s5659, 256, %s5661, %s5647, 128, 256, 8
        $region135: #{tpu_custom_call.1} parent=89 // pred_fallthru
          _
      $region90: #{tpu_custom_call.1} parent=5 // pred_fallthru
        _
      %p5667 = scmp.le.s32.totalorder 2, %s21
      // Predicated region
      $region136: #{tpu_custom_call.1} parent=5 // pred_check
        %p5668 = pneg %p5667
      $region137: #{tpu_custom_call.1} parent=5 // pred_check_branch
        %5670 = sbr.rel (%p5668) target = $region139
      $region138: #{tpu_custom_call.1} parent=5 // pred_region
        %s5671 = ssub.s32 %s21, 2
        // Predicated region
        $region140: #{tpu_custom_call.1} parent=138 // pred_check
          %p5672 = pneg %p244
        $region141: #{tpu_custom_call.1} parent=138 // pred_check_branch
          %5674 = sbr.rel (%p5672) target = $region143
        $region142: #{tpu_custom_call.1} parent=138 // pred_region
          %s5675 = sand.u32 %s229, 1
          %s5676 = scalar_lea.sflag [#allocation10], %s5675
          %s5677 = sand.u32 %s229, 1
          %s5678 = smul.addr %s5677, 16
          %s5679 = scalar_lea.vmem [#allocation17], %s5678
          %5681 = dma.done %s5676, 256
        $region143: #{tpu_custom_call.1} parent=138 // pred_fallthru
          _
      $region139: #{tpu_custom_call.1} parent=5 // pred_fallthru
        _
    $region6: #{tpu_custom_call.1} parent=1 // loop_footer
      %s25 = sadd.s32 1, %s21
    $region7: #{tpu_custom_call.1} parent=1 // loop_footer_branch
      %20 = sbr.rel target = $region3
    $region8: #{tpu_custom_call.1} parent=1 // loop_exit
      _
    %5682 = vsyncpa [#allocation10], 1
    %s5683 = scalar_lea.sflag [#allocation10], 1
    %5684 = vsyncpa %s5683, 1
    %5685 = vsyncpa [#allocation11], 1
    %s5686 = scalar_lea.sflag [#allocation11], 1
    %5687 = vsyncpa %s5686, 1
    %5688 = vsyncpa [#allocation13], 1
    %5689 = vsyncpa [#allocation16], 1

</llo_original>
